<compile_context>
chip_gen: v7x
topology: tpu7x:2x2x1
jax: 0.10.0
libtpu: 0.0.40
codegen_flags: <defaults>
</compile_context>

<pallas_src>
import functools

import jax
import jax.numpy as jnp
from jax.experimental import pallas as pl
from jax.experimental.pallas import tpu as pltpu

# Hidden sizes dictated by the module definition.
H_FC1 = 100
H_RNN1 = 50
H_RNN2 = 32
H_RNN3 = 16

GATE_STRIDE = 128          # each gate padded to a full 128-lane group
GATE_W = 3 * GATE_STRIDE   # fused width for (r, z, n)


def _dot_bf16(a_bf16, b_bf16):
    """MXU matmul: pre-cast bf16 inputs, f32 accumulation."""
    return jnp.dot(a_bf16, b_bf16, preferred_element_type=jnp.float32)


def _forward_kernel(T, Bp,
                    x_ref, w1t_ref, b1_ref,
                    g1_wih, g1_whh, g1_b,
                    g2a_wih, g2a_whh, g2a_b,
                    g2b_wih, g2b_whh, g2b_b,
                    g3a_wih, g3a_whh, g3a_b,
                    g3b_wih, g3b_whh, g3b_b,
                    g3c_wih, g3c_whh, g3c_b,
                    w2t_ref, b2_ref,
                    out_ref,
                    gi_s, s1, s2a, s2b, s3a, s3b):
    """Whole network in one kernel invocation. x_ref is (T*Bp, D) f32."""

    def gru_layer(seq_f32, wih_ref, whh_ref, bias_ref, hid, seq_out_ref,
                  out_sigmoid):
        # Fused, time-batched input-to-hidden projection for all 3 gates.
        # Biases: r/z gates folded (bih+bhh), n gate only bih; stored to VMEM
        # scratch so only an (8, 384) slice is live per recurrence step.
        seq_bf = seq_f32.astype(jnp.bfloat16)             # cast once per layer
        b = bias_ref[...]                                  # (2, GATE_W) f32
        gi_s[...] = _dot_bf16(seq_bf, wih_ref[...]) + b[0:1, :]
        b_hn = b[1:2, 0:hid]                               # bhh_n, stays inside r*(...)
        u = whh_ref[...]                                   # (hid, GATE_W) bf16, fused Whh

        h = jnp.zeros((Bp, hid), jnp.float32)
        for t in range(T):                                 # static unroll, T small
            lo = t * Bp
            gi = gi_s[lo:lo + Bp, :]                       # (Bp, GATE_W) from VMEM
            h_bf = h.astype(jnp.bfloat16)                  # single cast per step
            gh = _dot_bf16(h_bf, u)                        # ONE fused MXU dot / step
            r = jax.nn.sigmoid(gi[:, 0:hid] + gh[:, 0:hid])
            z = jax.nn.sigmoid(gi[:, GATE_STRIDE:GATE_STRIDE + hid]
                               + gh[:, GATE_STRIDE:GATE_STRIDE + hid])
            n = jnp.tanh(gi[:, 2 * GATE_STRIDE:2 * GATE_STRIDE + hid]
                         + r * (gh[:, 2 * GATE_STRIDE:2 * GATE_STRIDE + hid]
                                + b_hn))
            h = (1.0 - z) * n + z * h
            if seq_out_ref is not None:
                seq_out_ref[lo:lo + Bp, :] = (
                    jax.nn.sigmoid(h) if out_sigmoid else h)
        return h

    x = x_ref[...]                                         # (T*Bp, D) f32

    # fc1 + leaky_relu (negative_slope=0.01, PyTorch default), time-batched.
    a = jax.nn.leaky_relu(
        _dot_bf16(x.astype(jnp.bfloat16), w1t_ref[...]) + b1_ref[...])

    # rnn1 (1 layer, hidden 50); sigmoid fused into the scratch write.
    gru_layer(a, g1_wih, g1_whh, g1_b, H_RNN1, s1, True)

    # rnn2 (2 layers, hidden 32); sigmoid fused into the last layer's write.
    gru_layer(s1[...], g2a_wih, g2a_whh, g2a_b, H_RNN2, s2a, False)
    gru_layer(s2a[...], g2b_wih, g2b_whh, g2b_b, H_RNN2, s2b, True)

    # rnn3 (3 layers, hidden 16); only the last step of the last layer is used.
    gru_layer(s2b[...], g3a_wih, g3a_whh, g3a_b, H_RNN3, s3a, False)
    gru_layer(s3a[...], g3b_wih, g3b_whh, g3b_b, H_RNN3, s3b, False)
    h_last = gru_layer(s3b[...], g3c_wih, g3c_whh, g3c_b, H_RNN3, None, False)
    y_last = jax.nn.sigmoid(h_last)

    # fc2 on the LAST timestep only (x[:, -1, :] in the PyTorch module).
    out_ref[...] = jax.nn.leaky_relu(
        _dot_bf16(y_last.astype(jnp.bfloat16), w2t_ref[...]) + b2_ref[...])


# ---------------- one-time weight packing (outside the per-call path) -------

def pack_params(params):
    """Transpose / gate-split / 128-lane pad / bias-fold / bf16-cast once."""

    def pack_gru(layer, hid):
        wih, whh = layer["wih"], layer["whh"]              # (3h, in), (3h, h)
        bih, bhh = layer["bih"], layer["bhh"]              # (3h,)
        in_dim = wih.shape[1]
        wih_f = jnp.zeros((in_dim, GATE_W), jnp.float32)
        whh_f = jnp.zeros((hid, GATE_W), jnp.float32)
        bias = jnp.zeros((2, GATE_W), jnp.float32)
        gi_bias = [bih[0:hid] + bhh[0:hid],                # r gate (folded)
                   bih[hid:2 * hid] + bhh[hid:2 * hid],    # z gate (folded)
                   bih[2 * hid:]]                          # n gate input bias
        for g in range(3):
            sl = slice(g * GATE_STRIDE, g * GATE_STRIDE + hid)
            wih_f = wih_f.at[:, sl].set(wih[g * hid:(g + 1) * hid].T)
            whh_f = whh_f.at[:, sl].set(whh[g * hid:(g + 1) * hid].T)
            bias = bias.at[0, sl].set(gi_bias[g])
        bias = bias.at[1, 0:hid].set(bhh[2 * hid:])        # bhh_n (row 1)
        # Padding lanes of wih_f/whh_f/bias are exactly zero, so padded
        # output lanes never leak into the sigmoid/tanh inputs.
        return [wih_f.astype(jnp.bfloat16), whh_f.astype(jnp.bfloat16), bias]

    packed = [params["fc1_w"].T.astype(jnp.bfloat16),
              params["fc1_b"].reshape(1, -1).astype(jnp.float32)]
    for layer, hid in [(params["rnn1"][0], H_RNN1),
                       (params["rnn2"][0], H_RNN2), (params["rnn2"][1], H_RNN2),
                       (params["rnn3"][0], H_RNN3), (params["rnn3"][1], H_RNN3),
                       (params["rnn3"][2], H_RNN3)]:
        packed += pack_gru(layer, hid)
    packed += [params["fc2_w"].T.astype(jnp.bfloat16),
               params["fc2_b"].reshape(1, -1).astype(jnp.float32)]
    return packed


# ---------------- per-call wrapper ------------------------------------------

@jax.jit
def sleep_stage_forward(x, packed):
    """x: (B, T, dim_input) float32, packed: pack_params(params) -> (B, dim_output)."""
    B, T, D = x.shape
    n_out = packed[-1].shape[-1]
    Bp = max(8, ((B + 7) // 8) * 8)                        # pad batch to sublanes

    # (B,T,D) -> (T,B,D) -> pad batch -> flatten time into the matmul M dim.
    x_t = jnp.transpose(x, (1, 0, 2))
    x_t = jnp.pad(x_t, ((0, 0), (0, Bp - B), (0, 0)))
    x_flat = x_t.reshape(T * Bp, D)

    inputs = [x_flat] + list(packed)
    in_specs = [pl.BlockSpec(a.shape, lambda i, nd=a.ndim: (0,) * nd)
                for a in inputs]

    TB = T * Bp
    out = pl.pallas_call(
        functools.partial(_forward_kernel, T, Bp),
        out_shape=jax.ShapeDtypeStruct((Bp, n_out), jnp.float32),
        grid=(1,),
        in_specs=in_specs,
        out_specs=pl.BlockSpec((Bp, n_out), lambda i: (0, 0)),
        scratch_shapes=[
            pltpu.VMEM((TB, GATE_W), jnp.float32),   # fused gi, reused per layer
            pltpu.VMEM((TB, H_RNN1), jnp.float32),   # sigmoid(rnn1 out)
            pltpu.VMEM((TB, H_RNN2), jnp.float32),   # rnn2 layer-0 out
            pltpu.VMEM((TB, H_RNN2), jnp.float32),   # sigmoid(rnn2 out)
            pltpu.VMEM((TB, H_RNN3), jnp.float32),   # rnn3 layer-0 out
            pltpu.VMEM((TB, H_RNN3), jnp.float32),   # rnn3 layer-1 out
        ],
        compiler_params=pltpu.CompilerParams(
            dimension_semantics=("arbitrary",)),
    )(*inputs)
    return out[:B]


# ---------------- deterministic parameter initialization --------------------

def _init_linear(key, out_f, in_f):
    bound = 1.0 / jnp.sqrt(jnp.float32(in_f))
    kw, kb = jax.random.split(key)
    w = jax.random.uniform(kw, (out_f, in_f), jnp.float32, -bound, bound)
    b = jax.random.uniform(kb, (out_f,), jnp.float32, -bound, bound)
    return w, b


def _init_gru_layer(key, in_f, hid):
    bound = 1.0 / jnp.sqrt(jnp.float32(hid))
    k1, k2, k3, k4 = jax.random.split(key, 4)
    return dict(
        wih=jax.random.uniform(k1, (3 * hid, in_f), jnp.float32, -bound, bound),
        whh=jax.random.uniform(k2, (3 * hid, hid), jnp.float32, -bound, bound),
        bih=jax.random.uniform(k3, (3 * hid,), jnp.float32, -bound, bound),
        bhh=jax.random.uniform(k4, (3 * hid,), jnp.float32, -bound, bound),
    )


def init_params(key, dim_input, dim_output):
    ks = jax.random.split(key, 8)
    params = {}
    params["fc1_w"], params["fc1_b"] = _init_linear(ks[0], H_FC1, dim_input)
    params["rnn1"] = [_init_gru_layer(ks[1], H_FC1, H_RNN1)]
    params["rnn2"] = [_init_gru_layer(ks[2], H_RNN1, H_RNN2),
                      _init_gru_layer(ks[3], H_RNN2, H_RNN2)]
    params["rnn3"] = [_init_gru_layer(ks[4], H_RNN2, H_RNN3),
                      _init_gru_layer(ks[5], H_RNN3, H_RNN3),
                      _init_gru_layer(ks[6], H_RNN3, H_RNN3)]
    params["fc2_w"], params["fc2_b"] = _init_linear(ks[7], dim_output, H_RNN3)
    return params


# ---------------- pure-JAX reference (inference semantics) ------------------
# Same bf16-in / f32-accumulate matmul policy as the kernel so the comparison
# isolates the Pallas implementation, not the MXU precision choice.

def _mxu_dot(a, b):
    return jnp.dot(a.astype(jnp.bfloat16), b.astype(jnp.bfloat16),
                   preferred_element_type=jnp.float32)


def _gru_layer_ref(seq, layer, hid):
    B, T, _ = seq.shape
    h = jnp.zeros((B, hid), jnp.float32)
    outs = []
    for t in range(T):
        xt = seq[:, t, :]
        gi = _mxu_dot(xt, layer["wih"].T) + layer["bih"]
        gh = _mxu_dot(h, layer["whh"].T) + layer["bhh"]
        r = jax.nn.sigmoid(gi[:, :hid] + gh[:, :hid])
        z = jax.nn.sigmoid(gi[:, hid:2 * hid] + gh[:, hid:2 * hid])
        n = jnp.tanh(gi[:, 2 * hid:] + r * gh[:, 2 * hid:])
        h = (1.0 - z) * n + z * h
        outs.append(h)
    return jnp.stack(outs, axis=1)


def reference_forward(x, params):
    y = jax.nn.leaky_relu(_mxu_dot(x, params["fc1_w"].T) + params["fc1_b"])
    y = _gru_layer_ref(y, params["rnn1"][0], H_RNN1)
    y = jax.nn.sigmoid(y)
    y = _gru_layer_ref(y, params["rnn2"][0], H_RNN2)
    y = _gru_layer_ref(y, params["rnn2"][1], H_RNN2)
    y = jax.nn.sigmoid(y)
    y = _gru_layer_ref(y, params["rnn3"][0], H_RNN3)
    y = _gru_layer_ref(y, params["rnn3"][1], H_RNN3)
    y = _gru_layer_ref(y, params["rnn3"][2], H_RNN3)
    y = jax.nn.sigmoid(y)
    return jax.nn.leaky_relu(
        _mxu_dot(y[:, -1, :], params["fc2_w"].T) + params["fc2_b"])


if __name__ == "__main__":
    key = jax.random.PRNGKey(0)
    dim_input, dim_output = 20, 5
    batch, seq = 2, 8

    kx, kp = jax.random.split(key)
    x = jax.random.normal(kx, (batch, seq, dim_input), jnp.float32)
    params = init_params(kp, dim_input, dim_output)

    # One-time weight packing (kept out of the per-call forward path).
    packed = pack_params(params)
    packed = [jax.block_until_ready(a) for a in packed]

    out = sleep_stage_forward(x, packed)
    out = jax.block_until_ready(out)

    ref = reference_forward(x, params)
    assert out.shape == (batch, dim_output)
    assert jnp.allclose(out, ref, rtol=2e-3, atol=2e-3), (out, ref)

    print("KERNEL_OK")
</pallas_src>

<mosaic_0001>
module attributes {stable_mosaic.version = 11 : i64} {
  func.func @_forward_kernel(%arg0: i32, %arg1: memref<64x20xf32, #tpu.memory_space<vmem>>, %arg2: memref<20x100xbf16, #tpu.memory_space<vmem>>, %arg3: memref<1x100xf32, #tpu.memory_space<vmem>>, %arg4: memref<100x384xbf16, #tpu.memory_space<vmem>>, %arg5: memref<50x384xbf16, #tpu.memory_space<vmem>>, %arg6: memref<2x384xf32, #tpu.memory_space<vmem>>, %arg7: memref<50x384xbf16, #tpu.memory_space<vmem>>, %arg8: memref<32x384xbf16, #tpu.memory_space<vmem>>, %arg9: memref<2x384xf32, #tpu.memory_space<vmem>>, %arg10: memref<32x384xbf16, #tpu.memory_space<vmem>>, %arg11: memref<32x384xbf16, #tpu.memory_space<vmem>>, %arg12: memref<2x384xf32, #tpu.memory_space<vmem>>, %arg13: memref<32x384xbf16, #tpu.memory_space<vmem>>, %arg14: memref<16x384xbf16, #tpu.memory_space<vmem>>, %arg15: memref<2x384xf32, #tpu.memory_space<vmem>>, %arg16: memref<16x384xbf16, #tpu.memory_space<vmem>>, %arg17: memref<16x384xbf16, #tpu.memory_space<vmem>>, %arg18: memref<2x384xf32, #tpu.memory_space<vmem>>, %arg19: memref<16x384xbf16, #tpu.memory_space<vmem>>, %arg20: memref<16x384xbf16, #tpu.memory_space<vmem>>, %arg21: memref<2x384xf32, #tpu.memory_space<vmem>>, %arg22: memref<16x5xbf16, #tpu.memory_space<vmem>>, %arg23: memref<1x5xf32, #tpu.memory_space<vmem>>, %arg24: memref<8x5xf32, #tpu.memory_space<vmem>>, %arg25: memref<64x384xf32, #tpu.memory_space<vmem>>, %arg26: memref<64x50xf32, #tpu.memory_space<vmem>>, %arg27: memref<64x32xf32, #tpu.memory_space<vmem>>, %arg28: memref<64x32xf32, #tpu.memory_space<vmem>>, %arg29: memref<64x16xf32, #tpu.memory_space<vmem>>, %arg30: memref<64x16xf32, #tpu.memory_space<vmem>>) attributes {dimension_semantics = [#tpu.dimension_semantics<arbitrary>], iteration_bounds = array<i64: 1>, scalar_prefetch = 0 : i64, scratch_operands = 6 : i64, tpu.core_type = #tpu.core_type<tc>, window_params = [{pipeline_mode = #tpu.pipeline_mode<synchronous>, transform_indices = @transform_0, window_bounds = array<i64: 64, 20>}, {pipeline_mode = #tpu.pipeline_mode<synchronous>, transform_indices = @transform_1, window_bounds = array<i64: 20, 100>}, {pipeline_mode = #tpu.pipeline_mode<synchronous>, transform_indices = @transform_2, window_bounds = array<i64: 1, 100>}, {pipeline_mode = #tpu.pipeline_mode<synchronous>, transform_indices = @transform_3, window_bounds = array<i64: 100, 384>}, {pipeline_mode = #tpu.pipeline_mode<synchronous>, transform_indices = @transform_4, window_bounds = array<i64: 50, 384>}, {pipeline_mode = #tpu.pipeline_mode<synchronous>, transform_indices = @transform_5, window_bounds = array<i64: 2, 384>}, {pipeline_mode = #tpu.pipeline_mode<synchronous>, transform_indices = @transform_6, window_bounds = array<i64: 50, 384>}, {pipeline_mode = #tpu.pipeline_mode<synchronous>, transform_indices = @transform_7, window_bounds = array<i64: 32, 384>}, {pipeline_mode = #tpu.pipeline_mode<synchronous>, transform_indices = @transform_8, window_bounds = array<i64: 2, 384>}, {pipeline_mode = #tpu.pipeline_mode<synchronous>, transform_indices = @transform_9, window_bounds = array<i64: 32, 384>}, {pipeline_mode = #tpu.pipeline_mode<synchronous>, transform_indices = @transform_10, window_bounds = array<i64: 32, 384>}, {pipeline_mode = #tpu.pipeline_mode<synchronous>, transform_indices = @transform_11, window_bounds = array<i64: 2, 384>}, {pipeline_mode = #tpu.pipeline_mode<synchronous>, transform_indices = @transform_12, window_bounds = array<i64: 32, 384>}, {pipeline_mode = #tpu.pipeline_mode<synchronous>, transform_indices = @transform_13, window_bounds = array<i64: 16, 384>}, {pipeline_mode = #tpu.pipeline_mode<synchronous>, transform_indices = @transform_14, window_bounds = array<i64: 2, 384>}, {pipeline_mode = #tpu.pipeline_mode<synchronous>, transform_indices = @transform_15, window_bounds = array<i64: 16, 384>}, {pipeline_mode = #tpu.pipeline_mode<synchronous>, transform_indices = @transform_16, window_bounds = array<i64: 16, 384>}, {pipeline_mode = #tpu.pipeline_mode<synchronous>, transform_indices = @transform_17, window_bounds = array<i64: 2, 384>}, {pipeline_mode = #tpu.pipeline_mode<synchronous>, transform_indices = @transform_18, window_bounds = array<i64: 16, 384>}, {pipeline_mode = #tpu.pipeline_mode<synchronous>, transform_indices = @transform_19, window_bounds = array<i64: 16, 384>}, {pipeline_mode = #tpu.pipeline_mode<synchronous>, transform_indices = @transform_20, window_bounds = array<i64: 2, 384>}, {pipeline_mode = #tpu.pipeline_mode<synchronous>, transform_indices = @transform_21, window_bounds = array<i64: 16, 5>}, {pipeline_mode = #tpu.pipeline_mode<synchronous>, transform_indices = @transform_22, window_bounds = array<i64: 1, 5>}, {pipeline_mode = #tpu.pipeline_mode<synchronous>, transform_indices = @transform_23, window_bounds = array<i64: 8, 5>}]} {
    %c0 = arith.constant 0 : index
    %c0_0 = arith.constant 0 : index
    %0 = vector.load %arg1[%c0, %c0_0] : memref<64x20xf32, #tpu.memory_space<vmem>>, vector<64x20xf32>
    %1 = arith.truncf %0 : vector<64x20xf32> to vector<64x20xbf16>
    %c0_1 = arith.constant 0 : index
    %c0_2 = arith.constant 0 : index
    %2 = vector.load %arg2[%c0_1, %c0_2] : memref<20x100xbf16, #tpu.memory_space<vmem>>, vector<20x100xbf16>
    %cst = arith.constant dense<0.000000e+00> : vector<64x100xf32>
    %3 = tpu.matmul %1, %2, %cst {dimension_numbers = #tpu.dot_dimension_numbers<[1], [0], [0], [1], [0, 0, 1, 1], [], []>} : vector<64x20xbf16>, vector<20x100xbf16>, vector<64x100xf32> -> vector<64x100xf32>
    %c0_3 = arith.constant 0 : index
    %c0_4 = arith.constant 0 : index
    %4 = vector.load %arg3[%c0_3, %c0_4] : memref<1x100xf32, #tpu.memory_space<vmem>>, vector<1x100xf32>
    %5 = vector.broadcast %4 : vector<1x100xf32> to vector<64x100xf32>
    %6 = arith.addf %3, %5 : vector<64x100xf32>
    %cst_5 = arith.constant 0.000000e+00 : f32
    %7 = vector.broadcast %cst_5 : f32 to vector<64x100xf32>
    %8 = arith.cmpf oge, %6, %7 : vector<64x100xf32>
    %cst_6 = arith.constant 0.00999999977 : f32
    %9 = vector.broadcast %cst_6 : f32 to vector<64x100xf32>
    %10 = arith.mulf %9, %6 : vector<64x100xf32>
    %11 = arith.select %8, %6, %10 : vector<64x100xi1>, vector<64x100xf32>
    %12 = arith.truncf %11 : vector<64x100xf32> to vector<64x100xbf16>
    %c0_7 = arith.constant 0 : index
    %c0_8 = arith.constant 0 : index
    %13 = vector.load %arg6[%c0_7, %c0_8] : memref<2x384xf32, #tpu.memory_space<vmem>>, vector<2x384xf32>
    %c0_9 = arith.constant 0 : index
    %c0_10 = arith.constant 0 : index
    %14 = vector.load %arg4[%c0_9, %c0_10] : memref<100x384xbf16, #tpu.memory_space<vmem>>, vector<100x384xbf16>
    %cst_11 = arith.constant dense<0.000000e+00> : vector<64x384xf32>
    %15 = tpu.matmul %12, %14, %cst_11 {dimension_numbers = #tpu.dot_dimension_numbers<[1], [0], [0], [1], [0, 0, 1, 1], [], []>} : vector<64x100xbf16>, vector<100x384xbf16>, vector<64x384xf32> -> vector<64x384xf32>
    %16 = vector.extract_strided_slice %13 {offsets = [0, 0], sizes = [1, 384], strides = [1, 1]} : vector<2x384xf32> to vector<1x384xf32>
    %17 = vector.broadcast %16 : vector<1x384xf32> to vector<64x384xf32>
    %18 = arith.addf %15, %17 : vector<64x384xf32>
    %c0_12 = arith.constant 0 : index
    %c0_13 = arith.constant 0 : index
    %19 = vector.load %arg25[%c0_12, %c0_13] : memref<64x384xf32, #tpu.memory_space<vmem>>, vector<64x384xf32>
    tpu.vector_store %arg25[%c0_12, %c0_13], %18 {strides = array<i32>} : memref<64x384xf32, #tpu.memory_space<vmem>>, vector<64x384xf32>,
    %20 = vector.extract_strided_slice %13 {offsets = [1, 0], sizes = [1, 50], strides = [1, 1]} : vector<2x384xf32> to vector<1x50xf32>
    %c0_14 = arith.constant 0 : index
    %c0_15 = arith.constant 0 : index
    %21 = vector.load %arg5[%c0_14, %c0_15] : memref<50x384xbf16, #tpu.memory_space<vmem>>, vector<50x384xbf16>
    %cst_16 = arith.constant 0.000000e+00 : f32
    %22 = vector.broadcast %cst_16 : f32 to vector<8x50xf32>
    %c0_17 = arith.constant 0 : index
    %c0_18 = arith.constant 0 : index
    %23 = vector.load %arg25[%c0_17, %c0_18] : memref<64x384xf32, #tpu.memory_space<vmem>>, vector<8x384xf32>
    %24 = arith.truncf %22 : vector<8x50xf32> to vector<8x50xbf16>
    %cst_19 = arith.constant dense<0.000000e+00> : vector<8x384xf32>
    %25 = tpu.matmul %24, %21, %cst_19 {dimension_numbers = #tpu.dot_dimension_numbers<[1], [0], [0], [1], [0, 0, 1, 1], [], []>} : vector<8x50xbf16>, vector<50x384xbf16>, vector<8x384xf32> -> vector<8x384xf32>
    %26 = vector.extract_strided_slice %23 {offsets = [0, 0], sizes = [8, 50], strides = [1, 1]} : vector<8x384xf32> to vector<8x50xf32>
    %27 = vector.extract_strided_slice %25 {offsets = [0, 0], sizes = [8, 50], strides = [1, 1]} : vector<8x384xf32> to vector<8x50xf32>
    %28 = arith.addf %26, %27 : vector<8x50xf32>
    %29 = arith.negf %28 : vector<8x50xf32>
    %30 = math.exp %29 : vector<8x50xf32>
    %cst_20 = arith.constant 1.000000e+00 : f32
    %31 = vector.broadcast %cst_20 : f32 to vector<8x50xf32>
    %32 = arith.addf %31, %30 : vector<8x50xf32>
    %33 = arith.divf %31, %32 : vector<8x50xf32>
    %34 = vector.extract_strided_slice %23 {offsets = [0, 128], sizes = [8, 50], strides = [1, 1]} : vector<8x384xf32> to vector<8x50xf32>
    %35 = vector.extract_strided_slice %25 {offsets = [0, 128], sizes = [8, 50], strides = [1, 1]} : vector<8x384xf32> to vector<8x50xf32>
    %36 = arith.addf %34, %35 : vector<8x50xf32>
    %37 = arith.negf %36 : vector<8x50xf32>
    %38 = math.exp %37 : vector<8x50xf32>
    %cst_21 = arith.constant 1.000000e+00 : f32
    %39 = vector.broadcast %cst_21 : f32 to vector<8x50xf32>
    %40 = arith.addf %39, %38 : vector<8x50xf32>
    %41 = arith.divf %39, %40 : vector<8x50xf32>
    %42 = vector.extract_strided_slice %23 {offsets = [0, 256], sizes = [8, 50], strides = [1, 1]} : vector<8x384xf32> to vector<8x50xf32>
    %43 = vector.extract_strided_slice %25 {offsets = [0, 256], sizes = [8, 50], strides = [1, 1]} : vector<8x384xf32> to vector<8x50xf32>
    %44 = vector.broadcast %20 : vector<1x50xf32> to vector<8x50xf32>
    %45 = arith.addf %43, %44 : vector<8x50xf32>
    %46 = arith.mulf %33, %45 : vector<8x50xf32>
    %47 = arith.addf %42, %46 : vector<8x50xf32>
    %48 = math.tanh %47 : vector<8x50xf32>
    %cst_22 = arith.constant 1.000000e+00 : f32
    %49 = vector.broadcast %cst_22 : f32 to vector<8x50xf32>
    %50 = arith.subf %49, %41 : vector<8x50xf32>
    %51 = arith.mulf %50, %48 : vector<8x50xf32>
    %52 = arith.mulf %41, %22 : vector<8x50xf32>
    %53 = arith.addf %51, %52 : vector<8x50xf32>
    %54 = arith.negf %53 : vector<8x50xf32>
    %55 = math.exp %54 : vector<8x50xf32>
    %cst_23 = arith.constant 1.000000e+00 : f32
    %56 = vector.broadcast %cst_23 : f32 to vector<8x50xf32>
    %57 = arith.addf %56, %55 : vector<8x50xf32>
    %58 = arith.divf %56, %57 : vector<8x50xf32>
    %c0_24 = arith.constant 0 : index
    %c0_25 = arith.constant 0 : index
    %59 = vector.load %arg26[%c0_24, %c0_25] : memref<64x50xf32, #tpu.memory_space<vmem>>, vector<8x50xf32>
    tpu.vector_store %arg26[%c0_24, %c0_25], %58 {strides = array<i32>} : memref<64x50xf32, #tpu.memory_space<vmem>>, vector<8x50xf32>,
    %c8 = arith.constant 8 : index
    %c0_26 = arith.constant 0 : index
    %60 = vector.load %arg25[%c8, %c0_26] : memref<64x384xf32, #tpu.memory_space<vmem>>, vector<8x384xf32>
    %61 = arith.truncf %53 : vector<8x50xf32> to vector<8x50xbf16>
    %cst_27 = arith.constant dense<0.000000e+00> : vector<8x384xf32>
    %62 = tpu.matmul %61, %21, %cst_27 {dimension_numbers = #tpu.dot_dimension_numbers<[1], [0], [0], [1], [0, 0, 1, 1], [], []>} : vector<8x50xbf16>, vector<50x384xbf16>, vector<8x384xf32> -> vector<8x384xf32>
    %63 = vector.extract_strided_slice %60 {offsets = [0, 0], sizes = [8, 50], strides = [1, 1]} : vector<8x384xf32> to vector<8x50xf32>
    %64 = vector.extract_strided_slice %62 {offsets = [0, 0], sizes = [8, 50], strides = [1, 1]} : vector<8x384xf32> to vector<8x50xf32>
    %65 = arith.addf %63, %64 : vector<8x50xf32>
    %66 = arith.negf %65 : vector<8x50xf32>
    %67 = math.exp %66 : vector<8x50xf32>
    %cst_28 = arith.constant 1.000000e+00 : f32
    %68 = vector.broadcast %cst_28 : f32 to vector<8x50xf32>
    %69 = arith.addf %68, %67 : vector<8x50xf32>
    %70 = arith.divf %68, %69 : vector<8x50xf32>
    %71 = vector.extract_strided_slice %60 {offsets = [0, 128], sizes = [8, 50], strides = [1, 1]} : vector<8x384xf32> to vector<8x50xf32>
    %72 = vector.extract_strided_slice %62 {offsets = [0, 128], sizes = [8, 50], strides = [1, 1]} : vector<8x384xf32> to vector<8x50xf32>
    %73 = arith.addf %71, %72 : vector<8x50xf32>
    %74 = arith.negf %73 : vector<8x50xf32>
    %75 = math.exp %74 : vector<8x50xf32>
    %cst_29 = arith.constant 1.000000e+00 : f32
    %76 = vector.broadcast %cst_29 : f32 to vector<8x50xf32>
    %77 = arith.addf %76, %75 : vector<8x50xf32>
    %78 = arith.divf %76, %77 : vector<8x50xf32>
    %79 = vector.extract_strided_slice %60 {offsets = [0, 256], sizes = [8, 50], strides = [1, 1]} : vector<8x384xf32> to vector<8x50xf32>
    %80 = vector.extract_strided_slice %62 {offsets = [0, 256], sizes = [8, 50], strides = [1, 1]} : vector<8x384xf32> to vector<8x50xf32>
    %81 = vector.broadcast %20 : vector<1x50xf32> to vector<8x50xf32>
    %82 = arith.addf %80, %81 : vector<8x50xf32>
    %83 = arith.mulf %70, %82 : vector<8x50xf32>
    %84 = arith.addf %79, %83 : vector<8x50xf32>
    %85 = math.tanh %84 : vector<8x50xf32>
    %cst_30 = arith.constant 1.000000e+00 : f32
    %86 = vector.broadcast %cst_30 : f32 to vector<8x50xf32>
    %87 = arith.subf %86, %78 : vector<8x50xf32>
    %88 = arith.mulf %87, %85 : vector<8x50xf32>
    %89 = arith.mulf %78, %53 : vector<8x50xf32>
    %90 = arith.addf %88, %89 : vector<8x50xf32>
    %91 = arith.negf %90 : vector<8x50xf32>
    %92 = math.exp %91 : vector<8x50xf32>
    %cst_31 = arith.constant 1.000000e+00 : f32
    %93 = vector.broadcast %cst_31 : f32 to vector<8x50xf32>
    %94 = arith.addf %93, %92 : vector<8x50xf32>
    %95 = arith.divf %93, %94 : vector<8x50xf32>
    %c8_32 = arith.constant 8 : index
    %c0_33 = arith.constant 0 : index
    %96 = vector.load %arg26[%c8_32, %c0_33] : memref<64x50xf32, #tpu.memory_space<vmem>>, vector<8x50xf32>
    tpu.vector_store %arg26[%c8_32, %c0_33], %95 {strides = array<i32>} : memref<64x50xf32, #tpu.memory_space<vmem>>, vector<8x50xf32>,
    %c16 = arith.constant 16 : index
    %c0_34 = arith.constant 0 : index
    %97 = vector.load %arg25[%c16, %c0_34] : memref<64x384xf32, #tpu.memory_space<vmem>>, vector<8x384xf32>
    %98 = arith.truncf %90 : vector<8x50xf32> to vector<8x50xbf16>
    %cst_35 = arith.constant dense<0.000000e+00> : vector<8x384xf32>
    %99 = tpu.matmul %98, %21, %cst_35 {dimension_numbers = #tpu.dot_dimension_numbers<[1], [0], [0], [1], [0, 0, 1, 1], [], []>} : vector<8x50xbf16>, vector<50x384xbf16>, vector<8x384xf32> -> vector<8x384xf32>
    %100 = vector.extract_strided_slice %97 {offsets = [0, 0], sizes = [8, 50], strides = [1, 1]} : vector<8x384xf32> to vector<8x50xf32>
    %101 = vector.extract_strided_slice %99 {offsets = [0, 0], sizes = [8, 50], strides = [1, 1]} : vector<8x384xf32> to vector<8x50xf32>
    %102 = arith.addf %100, %101 : vector<8x50xf32>
    %103 = arith.negf %102 : vector<8x50xf32>
    %104 = math.exp %103 : vector<8x50xf32>
    %cst_36 = arith.constant 1.000000e+00 : f32
    %105 = vector.broadcast %cst_36 : f32 to vector<8x50xf32>
    %106 = arith.addf %105, %104 : vector<8x50xf32>
    %107 = arith.divf %105, %106 : vector<8x50xf32>
    %108 = vector.extract_strided_slice %97 {offsets = [0, 128], sizes = [8, 50], strides = [1, 1]} : vector<8x384xf32> to vector<8x50xf32>
    %109 = vector.extract_strided_slice %99 {offsets = [0, 128], sizes = [8, 50], strides = [1, 1]} : vector<8x384xf32> to vector<8x50xf32>
    %110 = arith.addf %108, %109 : vector<8x50xf32>
    %111 = arith.negf %110 : vector<8x50xf32>
    %112 = math.exp %111 : vector<8x50xf32>
    %cst_37 = arith.constant 1.000000e+00 : f32
    %113 = vector.broadcast %cst_37 : f32 to vector<8x50xf32>
    %114 = arith.addf %113, %112 : vector<8x50xf32>
    %115 = arith.divf %113, %114 : vector<8x50xf32>
    %116 = vector.extract_strided_slice %97 {offsets = [0, 256], sizes = [8, 50], strides = [1, 1]} : vector<8x384xf32> to vector<8x50xf32>
    %117 = vector.extract_strided_slice %99 {offsets = [0, 256], sizes = [8, 50], strides = [1, 1]} : vector<8x384xf32> to vector<8x50xf32>
    %118 = vector.broadcast %20 : vector<1x50xf32> to vector<8x50xf32>
    %119 = arith.addf %117, %118 : vector<8x50xf32>
    %120 = arith.mulf %107, %119 : vector<8x50xf32>
    %121 = arith.addf %116, %120 : vector<8x50xf32>
    %122 = math.tanh %121 : vector<8x50xf32>
    %cst_38 = arith.constant 1.000000e+00 : f32
    %123 = vector.broadcast %cst_38 : f32 to vector<8x50xf32>
    %124 = arith.subf %123, %115 : vector<8x50xf32>
    %125 = arith.mulf %124, %122 : vector<8x50xf32>
    %126 = arith.mulf %115, %90 : vector<8x50xf32>
    %127 = arith.addf %125, %126 : vector<8x50xf32>
    %128 = arith.negf %127 : vector<8x50xf32>
    %129 = math.exp %128 : vector<8x50xf32>
    %cst_39 = arith.constant 1.000000e+00 : f32
    %130 = vector.broadcast %cst_39 : f32 to vector<8x50xf32>
    %131 = arith.addf %130, %129 : vector<8x50xf32>
    %132 = arith.divf %130, %131 : vector<8x50xf32>
    %c16_40 = arith.constant 16 : index
    %c0_41 = arith.constant 0 : index
    %133 = vector.load %arg26[%c16_40, %c0_41] : memref<64x50xf32, #tpu.memory_space<vmem>>, vector<8x50xf32>
    tpu.vector_store %arg26[%c16_40, %c0_41], %132 {strides = array<i32>} : memref<64x50xf32, #tpu.memory_space<vmem>>, vector<8x50xf32>,
    %c24 = arith.constant 24 : index
    %c0_42 = arith.constant 0 : index
    %134 = vector.load %arg25[%c24, %c0_42] : memref<64x384xf32, #tpu.memory_space<vmem>>, vector<8x384xf32>
    %135 = arith.truncf %127 : vector<8x50xf32> to vector<8x50xbf16>
    %cst_43 = arith.constant dense<0.000000e+00> : vector<8x384xf32>
    %136 = tpu.matmul %135, %21, %cst_43 {dimension_numbers = #tpu.dot_dimension_numbers<[1], [0], [0], [1], [0, 0, 1, 1], [], []>} : vector<8x50xbf16>, vector<50x384xbf16>, vector<8x384xf32> -> vector<8x384xf32>
    %137 = vector.extract_strided_slice %134 {offsets = [0, 0], sizes = [8, 50], strides = [1, 1]} : vector<8x384xf32> to vector<8x50xf32>
    %138 = vector.extract_strided_slice %136 {offsets = [0, 0], sizes = [8, 50], strides = [1, 1]} : vector<8x384xf32> to vector<8x50xf32>
    %139 = arith.addf %137, %138 : vector<8x50xf32>
    %140 = arith.negf %139 : vector<8x50xf32>
    %141 = math.exp %140 : vector<8x50xf32>
    %cst_44 = arith.constant 1.000000e+00 : f32
    %142 = vector.broadcast %cst_44 : f32 to vector<8x50xf32>
    %143 = arith.addf %142, %141 : vector<8x50xf32>
    %144 = arith.divf %142, %143 : vector<8x50xf32>
    %145 = vector.extract_strided_slice %134 {offsets = [0, 128], sizes = [8, 50], strides = [1, 1]} : vector<8x384xf32> to vector<8x50xf32>
    %146 = vector.extract_strided_slice %136 {offsets = [0, 128], sizes = [8, 50], strides = [1, 1]} : vector<8x384xf32> to vector<8x50xf32>
    %147 = arith.addf %145, %146 : vector<8x50xf32>
    %148 = arith.negf %147 : vector<8x50xf32>
    %149 = math.exp %148 : vector<8x50xf32>
    %cst_45 = arith.constant 1.000000e+00 : f32
    %150 = vector.broadcast %cst_45 : f32 to vector<8x50xf32>
    %151 = arith.addf %150, %149 : vector<8x50xf32>
    %152 = arith.divf %150, %151 : vector<8x50xf32>
    %153 = vector.extract_strided_slice %134 {offsets = [0, 256], sizes = [8, 50], strides = [1, 1]} : vector<8x384xf32> to vector<8x50xf32>
    %154 = vector.extract_strided_slice %136 {offsets = [0, 256], sizes = [8, 50], strides = [1, 1]} : vector<8x384xf32> to vector<8x50xf32>
    %155 = vector.broadcast %20 : vector<1x50xf32> to vector<8x50xf32>
    %156 = arith.addf %154, %155 : vector<8x50xf32>
    %157 = arith.mulf %144, %156 : vector<8x50xf32>
    %158 = arith.addf %153, %157 : vector<8x50xf32>
    %159 = math.tanh %158 : vector<8x50xf32>
    %cst_46 = arith.constant 1.000000e+00 : f32
    %160 = vector.broadcast %cst_46 : f32 to vector<8x50xf32>
    %161 = arith.subf %160, %152 : vector<8x50xf32>
    %162 = arith.mulf %161, %159 : vector<8x50xf32>
    %163 = arith.mulf %152, %127 : vector<8x50xf32>
    %164 = arith.addf %162, %163 : vector<8x50xf32>
    %165 = arith.negf %164 : vector<8x50xf32>
    %166 = math.exp %165 : vector<8x50xf32>
    %cst_47 = arith.constant 1.000000e+00 : f32
    %167 = vector.broadcast %cst_47 : f32 to vector<8x50xf32>
    %168 = arith.addf %167, %166 : vector<8x50xf32>
    %169 = arith.divf %167, %168 : vector<8x50xf32>
    %c24_48 = arith.constant 24 : index
    %c0_49 = arith.constant 0 : index
    %170 = vector.load %arg26[%c24_48, %c0_49] : memref<64x50xf32, #tpu.memory_space<vmem>>, vector<8x50xf32>
    tpu.vector_store %arg26[%c24_48, %c0_49], %169 {strides = array<i32>} : memref<64x50xf32, #tpu.memory_space<vmem>>, vector<8x50xf32>,
    %c32 = arith.constant 32 : index
    %c0_50 = arith.constant 0 : index
    %171 = vector.load %arg25[%c32, %c0_50] : memref<64x384xf32, #tpu.memory_space<vmem>>, vector<8x384xf32>
    %172 = arith.truncf %164 : vector<8x50xf32> to vector<8x50xbf16>
    %cst_51 = arith.constant dense<0.000000e+00> : vector<8x384xf32>
    %173 = tpu.matmul %172, %21, %cst_51 {dimension_numbers = #tpu.dot_dimension_numbers<[1], [0], [0], [1], [0, 0, 1, 1], [], []>} : vector<8x50xbf16>, vector<50x384xbf16>, vector<8x384xf32> -> vector<8x384xf32>
    %174 = vector.extract_strided_slice %171 {offsets = [0, 0], sizes = [8, 50], strides = [1, 1]} : vector<8x384xf32> to vector<8x50xf32>
    %175 = vector.extract_strided_slice %173 {offsets = [0, 0], sizes = [8, 50], strides = [1, 1]} : vector<8x384xf32> to vector<8x50xf32>
    %176 = arith.addf %174, %175 : vector<8x50xf32>
    %177 = arith.negf %176 : vector<8x50xf32>
    %178 = math.exp %177 : vector<8x50xf32>
    %cst_52 = arith.constant 1.000000e+00 : f32
    %179 = vector.broadcast %cst_52 : f32 to vector<8x50xf32>
    %180 = arith.addf %179, %178 : vector<8x50xf32>
    %181 = arith.divf %179, %180 : vector<8x50xf32>
    %182 = vector.extract_strided_slice %171 {offsets = [0, 128], sizes = [8, 50], strides = [1, 1]} : vector<8x384xf32> to vector<8x50xf32>
    %183 = vector.extract_strided_slice %173 {offsets = [0, 128], sizes = [8, 50], strides = [1, 1]} : vector<8x384xf32> to vector<8x50xf32>
    %184 = arith.addf %182, %183 : vector<8x50xf32>
    %185 = arith.negf %184 : vector<8x50xf32>
    %186 = math.exp %185 : vector<8x50xf32>
    %cst_53 = arith.constant 1.000000e+00 : f32
    %187 = vector.broadcast %cst_53 : f32 to vector<8x50xf32>
    %188 = arith.addf %187, %186 : vector<8x50xf32>
    %189 = arith.divf %187, %188 : vector<8x50xf32>
    %190 = vector.extract_strided_slice %171 {offsets = [0, 256], sizes = [8, 50], strides = [1, 1]} : vector<8x384xf32> to vector<8x50xf32>
    %191 = vector.extract_strided_slice %173 {offsets = [0, 256], sizes = [8, 50], strides = [1, 1]} : vector<8x384xf32> to vector<8x50xf32>
    %192 = vector.broadcast %20 : vector<1x50xf32> to vector<8x50xf32>
    %193 = arith.addf %191, %192 : vector<8x50xf32>
    %194 = arith.mulf %181, %193 : vector<8x50xf32>
    %195 = arith.addf %190, %194 : vector<8x50xf32>
    %196 = math.tanh %195 : vector<8x50xf32>
    %cst_54 = arith.constant 1.000000e+00 : f32
    %197 = vector.broadcast %cst_54 : f32 to vector<8x50xf32>
    %198 = arith.subf %197, %189 : vector<8x50xf32>
    %199 = arith.mulf %198, %196 : vector<8x50xf32>
    %200 = arith.mulf %189, %164 : vector<8x50xf32>
    %201 = arith.addf %199, %200 : vector<8x50xf32>
    %202 = arith.negf %201 : vector<8x50xf32>
    %203 = math.exp %202 : vector<8x50xf32>
    %cst_55 = arith.constant 1.000000e+00 : f32
    %204 = vector.broadcast %cst_55 : f32 to vector<8x50xf32>
    %205 = arith.addf %204, %203 : vector<8x50xf32>
    %206 = arith.divf %204, %205 : vector<8x50xf32>
    %c32_56 = arith.constant 32 : index
    %c0_57 = arith.constant 0 : index
    %207 = vector.load %arg26[%c32_56, %c0_57] : memref<64x50xf32, #tpu.memory_space<vmem>>, vector<8x50xf32>
    tpu.vector_store %arg26[%c32_56, %c0_57], %206 {strides = array<i32>} : memref<64x50xf32, #tpu.memory_space<vmem>>, vector<8x50xf32>,
    %c40 = arith.constant 40 : index
    %c0_58 = arith.constant 0 : index
    %208 = vector.load %arg25[%c40, %c0_58] : memref<64x384xf32, #tpu.memory_space<vmem>>, vector<8x384xf32>
    %209 = arith.truncf %201 : vector<8x50xf32> to vector<8x50xbf16>
    %cst_59 = arith.constant dense<0.000000e+00> : vector<8x384xf32>
    %210 = tpu.matmul %209, %21, %cst_59 {dimension_numbers = #tpu.dot_dimension_numbers<[1], [0], [0], [1], [0, 0, 1, 1], [], []>} : vector<8x50xbf16>, vector<50x384xbf16>, vector<8x384xf32> -> vector<8x384xf32>
    %211 = vector.extract_strided_slice %208 {offsets = [0, 0], sizes = [8, 50], strides = [1, 1]} : vector<8x384xf32> to vector<8x50xf32>
    %212 = vector.extract_strided_slice %210 {offsets = [0, 0], sizes = [8, 50], strides = [1, 1]} : vector<8x384xf32> to vector<8x50xf32>
    %213 = arith.addf %211, %212 : vector<8x50xf32>
    %214 = arith.negf %213 : vector<8x50xf32>
    %215 = math.exp %214 : vector<8x50xf32>
    %cst_60 = arith.constant 1.000000e+00 : f32
    %216 = vector.broadcast %cst_60 : f32 to vector<8x50xf32>
    %217 = arith.addf %216, %215 : vector<8x50xf32>
    %218 = arith.divf %216, %217 : vector<8x50xf32>
    %219 = vector.extract_strided_slice %208 {offsets = [0, 128], sizes = [8, 50], strides = [1, 1]} : vector<8x384xf32> to vector<8x50xf32>
    %220 = vector.extract_strided_slice %210 {offsets = [0, 128], sizes = [8, 50], strides = [1, 1]} : vector<8x384xf32> to vector<8x50xf32>
    %221 = arith.addf %219, %220 : vector<8x50xf32>
    %222 = arith.negf %221 : vector<8x50xf32>
    %223 = math.exp %222 : vector<8x50xf32>
    %cst_61 = arith.constant 1.000000e+00 : f32
    %224 = vector.broadcast %cst_61 : f32 to vector<8x50xf32>
    %225 = arith.addf %224, %223 : vector<8x50xf32>
    %226 = arith.divf %224, %225 : vector<8x50xf32>
    %227 = vector.extract_strided_slice %208 {offsets = [0, 256], sizes = [8, 50], strides = [1, 1]} : vector<8x384xf32> to vector<8x50xf32>
    %228 = vector.extract_strided_slice %210 {offsets = [0, 256], sizes = [8, 50], strides = [1, 1]} : vector<8x384xf32> to vector<8x50xf32>
    %229 = vector.broadcast %20 : vector<1x50xf32> to vector<8x50xf32>
    %230 = arith.addf %228, %229 : vector<8x50xf32>
    %231 = arith.mulf %218, %230 : vector<8x50xf32>
    %232 = arith.addf %227, %231 : vector<8x50xf32>
    %233 = math.tanh %232 : vector<8x50xf32>
    %cst_62 = arith.constant 1.000000e+00 : f32
    %234 = vector.broadcast %cst_62 : f32 to vector<8x50xf32>
    %235 = arith.subf %234, %226 : vector<8x50xf32>
    %236 = arith.mulf %235, %233 : vector<8x50xf32>
    %237 = arith.mulf %226, %201 : vector<8x50xf32>
    %238 = arith.addf %236, %237 : vector<8x50xf32>
    %239 = arith.negf %238 : vector<8x50xf32>
    %240 = math.exp %239 : vector<8x50xf32>
    %cst_63 = arith.constant 1.000000e+00 : f32
    %241 = vector.broadcast %cst_63 : f32 to vector<8x50xf32>
    %242 = arith.addf %241, %240 : vector<8x50xf32>
    %243 = arith.divf %241, %242 : vector<8x50xf32>
    %c40_64 = arith.constant 40 : index
    %c0_65 = arith.constant 0 : index
    %244 = vector.load %arg26[%c40_64, %c0_65] : memref<64x50xf32, #tpu.memory_space<vmem>>, vector<8x50xf32>
    tpu.vector_store %arg26[%c40_64, %c0_65], %243 {strides = array<i32>} : memref<64x50xf32, #tpu.memory_space<vmem>>, vector<8x50xf32>,
    %c48 = arith.constant 48 : index
    %c0_66 = arith.constant 0 : index
    %245 = vector.load %arg25[%c48, %c0_66] : memref<64x384xf32, #tpu.memory_space<vmem>>, vector<8x384xf32>
    %246 = arith.truncf %238 : vector<8x50xf32> to vector<8x50xbf16>
    %cst_67 = arith.constant dense<0.000000e+00> : vector<8x384xf32>
    %247 = tpu.matmul %246, %21, %cst_67 {dimension_numbers = #tpu.dot_dimension_numbers<[1], [0], [0], [1], [0, 0, 1, 1], [], []>} : vector<8x50xbf16>, vector<50x384xbf16>, vector<8x384xf32> -> vector<8x384xf32>
    %248 = vector.extract_strided_slice %245 {offsets = [0, 0], sizes = [8, 50], strides = [1, 1]} : vector<8x384xf32> to vector<8x50xf32>
    %249 = vector.extract_strided_slice %247 {offsets = [0, 0], sizes = [8, 50], strides = [1, 1]} : vector<8x384xf32> to vector<8x50xf32>
    %250 = arith.addf %248, %249 : vector<8x50xf32>
    %251 = arith.negf %250 : vector<8x50xf32>
    %252 = math.exp %251 : vector<8x50xf32>
    %cst_68 = arith.constant 1.000000e+00 : f32
    %253 = vector.broadcast %cst_68 : f32 to vector<8x50xf32>
    %254 = arith.addf %253, %252 : vector<8x50xf32>
    %255 = arith.divf %253, %254 : vector<8x50xf32>
    %256 = vector.extract_strided_slice %245 {offsets = [0, 128], sizes = [8, 50], strides = [1, 1]} : vector<8x384xf32> to vector<8x50xf32>
    %257 = vector.extract_strided_slice %247 {offsets = [0, 128], sizes = [8, 50], strides = [1, 1]} : vector<8x384xf32> to vector<8x50xf32>
    %258 = arith.addf %256, %257 : vector<8x50xf32>
    %259 = arith.negf %258 : vector<8x50xf32>
    %260 = math.exp %259 : vector<8x50xf32>
    %cst_69 = arith.constant 1.000000e+00 : f32
    %261 = vector.broadcast %cst_69 : f32 to vector<8x50xf32>
    %262 = arith.addf %261, %260 : vector<8x50xf32>
    %263 = arith.divf %261, %262 : vector<8x50xf32>
    %264 = vector.extract_strided_slice %245 {offsets = [0, 256], sizes = [8, 50], strides = [1, 1]} : vector<8x384xf32> to vector<8x50xf32>
    %265 = vector.extract_strided_slice %247 {offsets = [0, 256], sizes = [8, 50], strides = [1, 1]} : vector<8x384xf32> to vector<8x50xf32>
    %266 = vector.broadcast %20 : vector<1x50xf32> to vector<8x50xf32>
    %267 = arith.addf %265, %266 : vector<8x50xf32>
    %268 = arith.mulf %255, %267 : vector<8x50xf32>
    %269 = arith.addf %264, %268 : vector<8x50xf32>
    %270 = math.tanh %269 : vector<8x50xf32>
    %cst_70 = arith.constant 1.000000e+00 : f32
    %271 = vector.broadcast %cst_70 : f32 to vector<8x50xf32>
    %272 = arith.subf %271, %263 : vector<8x50xf32>
    %273 = arith.mulf %272, %270 : vector<8x50xf32>
    %274 = arith.mulf %263, %238 : vector<8x50xf32>
    %275 = arith.addf %273, %274 : vector<8x50xf32>
    %276 = arith.negf %275 : vector<8x50xf32>
    %277 = math.exp %276 : vector<8x50xf32>
    %cst_71 = arith.constant 1.000000e+00 : f32
    %278 = vector.broadcast %cst_71 : f32 to vector<8x50xf32>
    %279 = arith.addf %278, %277 : vector<8x50xf32>
    %280 = arith.divf %278, %279 : vector<8x50xf32>
    %c48_72 = arith.constant 48 : index
    %c0_73 = arith.constant 0 : index
    %281 = vector.load %arg26[%c48_72, %c0_73] : memref<64x50xf32, #tpu.memory_space<vmem>>, vector<8x50xf32>
    tpu.vector_store %arg26[%c48_72, %c0_73], %280 {strides = array<i32>} : memref<64x50xf32, #tpu.memory_space<vmem>>, vector<8x50xf32>,
    %c56 = arith.constant 56 : index
    %c0_74 = arith.constant 0 : index
    %282 = vector.load %arg25[%c56, %c0_74] : memref<64x384xf32, #tpu.memory_space<vmem>>, vector<8x384xf32>
    %283 = arith.truncf %275 : vector<8x50xf32> to vector<8x50xbf16>
    %cst_75 = arith.constant dense<0.000000e+00> : vector<8x384xf32>
    %284 = tpu.matmul %283, %21, %cst_75 {dimension_numbers = #tpu.dot_dimension_numbers<[1], [0], [0], [1], [0, 0, 1, 1], [], []>} : vector<8x50xbf16>, vector<50x384xbf16>, vector<8x384xf32> -> vector<8x384xf32>
    %285 = vector.extract_strided_slice %282 {offsets = [0, 0], sizes = [8, 50], strides = [1, 1]} : vector<8x384xf32> to vector<8x50xf32>
    %286 = vector.extract_strided_slice %284 {offsets = [0, 0], sizes = [8, 50], strides = [1, 1]} : vector<8x384xf32> to vector<8x50xf32>
    %287 = arith.addf %285, %286 : vector<8x50xf32>
    %288 = arith.negf %287 : vector<8x50xf32>
    %289 = math.exp %288 : vector<8x50xf32>
    %cst_76 = arith.constant 1.000000e+00 : f32
    %290 = vector.broadcast %cst_76 : f32 to vector<8x50xf32>
    %291 = arith.addf %290, %289 : vector<8x50xf32>
    %292 = arith.divf %290, %291 : vector<8x50xf32>
    %293 = vector.extract_strided_slice %282 {offsets = [0, 128], sizes = [8, 50], strides = [1, 1]} : vector<8x384xf32> to vector<8x50xf32>
    %294 = vector.extract_strided_slice %284 {offsets = [0, 128], sizes = [8, 50], strides = [1, 1]} : vector<8x384xf32> to vector<8x50xf32>
    %295 = arith.addf %293, %294 : vector<8x50xf32>
    %296 = arith.negf %295 : vector<8x50xf32>
    %297 = math.exp %296 : vector<8x50xf32>
    %cst_77 = arith.constant 1.000000e+00 : f32
    %298 = vector.broadcast %cst_77 : f32 to vector<8x50xf32>
    %299 = arith.addf %298, %297 : vector<8x50xf32>
    %300 = arith.divf %298, %299 : vector<8x50xf32>
    %301 = vector.extract_strided_slice %282 {offsets = [0, 256], sizes = [8, 50], strides = [1, 1]} : vector<8x384xf32> to vector<8x50xf32>
    %302 = vector.extract_strided_slice %284 {offsets = [0, 256], sizes = [8, 50], strides = [1, 1]} : vector<8x384xf32> to vector<8x50xf32>
    %303 = vector.broadcast %20 : vector<1x50xf32> to vector<8x50xf32>
    %304 = arith.addf %302, %303 : vector<8x50xf32>
    %305 = arith.mulf %292, %304 : vector<8x50xf32>
    %306 = arith.addf %301, %305 : vector<8x50xf32>
    %307 = math.tanh %306 : vector<8x50xf32>
    %cst_78 = arith.constant 1.000000e+00 : f32
    %308 = vector.broadcast %cst_78 : f32 to vector<8x50xf32>
    %309 = arith.subf %308, %300 : vector<8x50xf32>
    %310 = arith.mulf %309, %307 : vector<8x50xf32>
    %311 = arith.mulf %300, %275 : vector<8x50xf32>
    %312 = arith.addf %310, %311 : vector<8x50xf32>
    %313 = arith.negf %312 : vector<8x50xf32>
    %314 = math.exp %313 : vector<8x50xf32>
    %cst_79 = arith.constant 1.000000e+00 : f32
    %315 = vector.broadcast %cst_79 : f32 to vector<8x50xf32>
    %316 = arith.addf %315, %314 : vector<8x50xf32>
    %317 = arith.divf %315, %316 : vector<8x50xf32>
    %c56_80 = arith.constant 56 : index
    %c0_81 = arith.constant 0 : index
    %318 = vector.load %arg26[%c56_80, %c0_81] : memref<64x50xf32, #tpu.memory_space<vmem>>, vector<8x50xf32>
    tpu.vector_store %arg26[%c56_80, %c0_81], %317 {strides = array<i32>} : memref<64x50xf32, #tpu.memory_space<vmem>>, vector<8x50xf32>,
    %c0_82 = arith.constant 0 : index
    %c0_83 = arith.constant 0 : index
    %319 = vector.load %arg26[%c0_82, %c0_83] : memref<64x50xf32, #tpu.memory_space<vmem>>, vector<64x50xf32>
    %320 = arith.truncf %319 : vector<64x50xf32> to vector<64x50xbf16>
    %c0_84 = arith.constant 0 : index
    %c0_85 = arith.constant 0 : index
    %321 = vector.load %arg9[%c0_84, %c0_85] : memref<2x384xf32, #tpu.memory_space<vmem>>, vector<2x384xf32>
    %c0_86 = arith.constant 0 : index
    %c0_87 = arith.constant 0 : index
    %322 = vector.load %arg7[%c0_86, %c0_87] : memref<50x384xbf16, #tpu.memory_space<vmem>>, vector<50x384xbf16>
    %cst_88 = arith.constant dense<0.000000e+00> : vector<64x384xf32>
    %323 = tpu.matmul %320, %322, %cst_88 {dimension_numbers = #tpu.dot_dimension_numbers<[1], [0], [0], [1], [0, 0, 1, 1], [], []>} : vector<64x50xbf16>, vector<50x384xbf16>, vector<64x384xf32> -> vector<64x384xf32>
    %324 = vector.extract_strided_slice %321 {offsets = [0, 0], sizes = [1, 384], strides = [1, 1]} : vector<2x384xf32> to vector<1x384xf32>
    %325 = vector.broadcast %324 : vector<1x384xf32> to vector<64x384xf32>
    %326 = arith.addf %323, %325 : vector<64x384xf32>
    %c0_89 = arith.constant 0 : index
    %c0_90 = arith.constant 0 : index
    %327 = vector.load %arg25[%c0_89, %c0_90] : memref<64x384xf32, #tpu.memory_space<vmem>>, vector<64x384xf32>
    tpu.vector_store %arg25[%c0_89, %c0_90], %326 {strides = array<i32>} : memref<64x384xf32, #tpu.memory_space<vmem>>, vector<64x384xf32>,
    %328 = vector.extract_strided_slice %321 {offsets = [1, 0], sizes = [1, 32], strides = [1, 1]} : vector<2x384xf32> to vector<1x32xf32>
    %c0_91 = arith.constant 0 : index
    %c0_92 = arith.constant 0 : index
    %329 = vector.load %arg8[%c0_91, %c0_92] : memref<32x384xbf16, #tpu.memory_space<vmem>>, vector<32x384xbf16>
    %cst_93 = arith.constant 0.000000e+00 : f32
    %330 = vector.broadcast %cst_93 : f32 to vector<8x32xf32>
    %c0_94 = arith.constant 0 : index
    %c0_95 = arith.constant 0 : index
    %331 = vector.load %arg25[%c0_94, %c0_95] : memref<64x384xf32, #tpu.memory_space<vmem>>, vector<8x384xf32>
    %332 = arith.truncf %330 : vector<8x32xf32> to vector<8x32xbf16>
    %cst_96 = arith.constant dense<0.000000e+00> : vector<8x384xf32>
    %333 = tpu.matmul %332, %329, %cst_96 {dimension_numbers = #tpu.dot_dimension_numbers<[1], [0], [0], [1], [0, 0, 1, 1], [], []>} : vector<8x32xbf16>, vector<32x384xbf16>, vector<8x384xf32> -> vector<8x384xf32>
    %334 = vector.extract_strided_slice %331 {offsets = [0, 0], sizes = [8, 32], strides = [1, 1]} : vector<8x384xf32> to vector<8x32xf32>
    %335 = vector.extract_strided_slice %333 {offsets = [0, 0], sizes = [8, 32], strides = [1, 1]} : vector<8x384xf32> to vector<8x32xf32>
    %336 = arith.addf %334, %335 : vector<8x32xf32>
    %337 = arith.negf %336 : vector<8x32xf32>
    %338 = math.exp %337 : vector<8x32xf32>
    %cst_97 = arith.constant 1.000000e+00 : f32
    %339 = vector.broadcast %cst_97 : f32 to vector<8x32xf32>
    %340 = arith.addf %339, %338 : vector<8x32xf32>
    %341 = arith.divf %339, %340 : vector<8x32xf32>
    %342 = vector.extract_strided_slice %331 {offsets = [0, 128], sizes = [8, 32], strides = [1, 1]} : vector<8x384xf32> to vector<8x32xf32>
    %343 = vector.extract_strided_slice %333 {offsets = [0, 128], sizes = [8, 32], strides = [1, 1]} : vector<8x384xf32> to vector<8x32xf32>
    %344 = arith.addf %342, %343 : vector<8x32xf32>
    %345 = arith.negf %344 : vector<8x32xf32>
    %346 = math.exp %345 : vector<8x32xf32>
    %cst_98 = arith.constant 1.000000e+00 : f32
    %347 = vector.broadcast %cst_98 : f32 to vector<8x32xf32>
    %348 = arith.addf %347, %346 : vector<8x32xf32>
    %349 = arith.divf %347, %348 : vector<8x32xf32>
    %350 = vector.extract_strided_slice %331 {offsets = [0, 256], sizes = [8, 32], strides = [1, 1]} : vector<8x384xf32> to vector<8x32xf32>
    %351 = vector.extract_strided_slice %333 {offsets = [0, 256], sizes = [8, 32], strides = [1, 1]} : vector<8x384xf32> to vector<8x32xf32>
    %352 = vector.broadcast %328 : vector<1x32xf32> to vector<8x32xf32>
    %353 = arith.addf %351, %352 : vector<8x32xf32>
    %354 = arith.mulf %341, %353 : vector<8x32xf32>
    %355 = arith.addf %350, %354 : vector<8x32xf32>
    %356 = math.tanh %355 : vector<8x32xf32>
    %cst_99 = arith.constant 1.000000e+00 : f32
    %357 = vector.broadcast %cst_99 : f32 to vector<8x32xf32>
    %358 = arith.subf %357, %349 : vector<8x32xf32>
    %359 = arith.mulf %358, %356 : vector<8x32xf32>
    %360 = arith.mulf %349, %330 : vector<8x32xf32>
    %361 = arith.addf %359, %360 : vector<8x32xf32>
    %c0_100 = arith.constant 0 : index
    %c0_101 = arith.constant 0 : index
    %362 = vector.load %arg27[%c0_100, %c0_101] : memref<64x32xf32, #tpu.memory_space<vmem>>, vector<8x32xf32>
    tpu.vector_store %arg27[%c0_100, %c0_101], %361 {strides = array<i32>} : memref<64x32xf32, #tpu.memory_space<vmem>>, vector<8x32xf32>,
    %c8_102 = arith.constant 8 : index
    %c0_103 = arith.constant 0 : index
    %363 = vector.load %arg25[%c8_102, %c0_103] : memref<64x384xf32, #tpu.memory_space<vmem>>, vector<8x384xf32>
    %364 = arith.truncf %361 : vector<8x32xf32> to vector<8x32xbf16>
    %cst_104 = arith.constant dense<0.000000e+00> : vector<8x384xf32>
    %365 = tpu.matmul %364, %329, %cst_104 {dimension_numbers = #tpu.dot_dimension_numbers<[1], [0], [0], [1], [0, 0, 1, 1], [], []>} : vector<8x32xbf16>, vector<32x384xbf16>, vector<8x384xf32> -> vector<8x384xf32>
    %366 = vector.extract_strided_slice %363 {offsets = [0, 0], sizes = [8, 32], strides = [1, 1]} : vector<8x384xf32> to vector<8x32xf32>
    %367 = vector.extract_strided_slice %365 {offsets = [0, 0], sizes = [8, 32], strides = [1, 1]} : vector<8x384xf32> to vector<8x32xf32>
    %368 = arith.addf %366, %367 : vector<8x32xf32>
    %369 = arith.negf %368 : vector<8x32xf32>
    %370 = math.exp %369 : vector<8x32xf32>
    %cst_105 = arith.constant 1.000000e+00 : f32
    %371 = vector.broadcast %cst_105 : f32 to vector<8x32xf32>
    %372 = arith.addf %371, %370 : vector<8x32xf32>
    %373 = arith.divf %371, %372 : vector<8x32xf32>
    %374 = vector.extract_strided_slice %363 {offsets = [0, 128], sizes = [8, 32], strides = [1, 1]} : vector<8x384xf32> to vector<8x32xf32>
    %375 = vector.extract_strided_slice %365 {offsets = [0, 128], sizes = [8, 32], strides = [1, 1]} : vector<8x384xf32> to vector<8x32xf32>
    %376 = arith.addf %374, %375 : vector<8x32xf32>
    %377 = arith.negf %376 : vector<8x32xf32>
    %378 = math.exp %377 : vector<8x32xf32>
    %cst_106 = arith.constant 1.000000e+00 : f32
    %379 = vector.broadcast %cst_106 : f32 to vector<8x32xf32>
    %380 = arith.addf %379, %378 : vector<8x32xf32>
    %381 = arith.divf %379, %380 : vector<8x32xf32>
    %382 = vector.extract_strided_slice %363 {offsets = [0, 256], sizes = [8, 32], strides = [1, 1]} : vector<8x384xf32> to vector<8x32xf32>
    %383 = vector.extract_strided_slice %365 {offsets = [0, 256], sizes = [8, 32], strides = [1, 1]} : vector<8x384xf32> to vector<8x32xf32>
    %384 = vector.broadcast %328 : vector<1x32xf32> to vector<8x32xf32>
    %385 = arith.addf %383, %384 : vector<8x32xf32>
    %386 = arith.mulf %373, %385 : vector<8x32xf32>
    %387 = arith.addf %382, %386 : vector<8x32xf32>
    %388 = math.tanh %387 : vector<8x32xf32>
    %cst_107 = arith.constant 1.000000e+00 : f32
    %389 = vector.broadcast %cst_107 : f32 to vector<8x32xf32>
    %390 = arith.subf %389, %381 : vector<8x32xf32>
    %391 = arith.mulf %390, %388 : vector<8x32xf32>
    %392 = arith.mulf %381, %361 : vector<8x32xf32>
    %393 = arith.addf %391, %392 : vector<8x32xf32>
    %c8_108 = arith.constant 8 : index
    %c0_109 = arith.constant 0 : index
    %394 = vector.load %arg27[%c8_108, %c0_109] : memref<64x32xf32, #tpu.memory_space<vmem>>, vector<8x32xf32>
    tpu.vector_store %arg27[%c8_108, %c0_109], %393 {strides = array<i32>} : memref<64x32xf32, #tpu.memory_space<vmem>>, vector<8x32xf32>,
    %c16_110 = arith.constant 16 : index
    %c0_111 = arith.constant 0 : index
    %395 = vector.load %arg25[%c16_110, %c0_111] : memref<64x384xf32, #tpu.memory_space<vmem>>, vector<8x384xf32>
    %396 = arith.truncf %393 : vector<8x32xf32> to vector<8x32xbf16>
    %cst_112 = arith.constant dense<0.000000e+00> : vector<8x384xf32>
    %397 = tpu.matmul %396, %329, %cst_112 {dimension_numbers = #tpu.dot_dimension_numbers<[1], [0], [0], [1], [0, 0, 1, 1], [], []>} : vector<8x32xbf16>, vector<32x384xbf16>, vector<8x384xf32> -> vector<8x384xf32>
    %398 = vector.extract_strided_slice %395 {offsets = [0, 0], sizes = [8, 32], strides = [1, 1]} : vector<8x384xf32> to vector<8x32xf32>
    %399 = vector.extract_strided_slice %397 {offsets = [0, 0], sizes = [8, 32], strides = [1, 1]} : vector<8x384xf32> to vector<8x32xf32>
    %400 = arith.addf %398, %399 : vector<8x32xf32>
    %401 = arith.negf %400 : vector<8x32xf32>
    %402 = math.exp %401 : vector<8x32xf32>
    %cst_113 = arith.constant 1.000000e+00 : f32
    %403 = vector.broadcast %cst_113 : f32 to vector<8x32xf32>
    %404 = arith.addf %403, %402 : vector<8x32xf32>
    %405 = arith.divf %403, %404 : vector<8x32xf32>
    %406 = vector.extract_strided_slice %395 {offsets = [0, 128], sizes = [8, 32], strides = [1, 1]} : vector<8x384xf32> to vector<8x32xf32>
    %407 = vector.extract_strided_slice %397 {offsets = [0, 128], sizes = [8, 32], strides = [1, 1]} : vector<8x384xf32> to vector<8x32xf32>
    %408 = arith.addf %406, %407 : vector<8x32xf32>
    %409 = arith.negf %408 : vector<8x32xf32>
    %410 = math.exp %409 : vector<8x32xf32>
    %cst_114 = arith.constant 1.000000e+00 : f32
    %411 = vector.broadcast %cst_114 : f32 to vector<8x32xf32>
    %412 = arith.addf %411, %410 : vector<8x32xf32>
    %413 = arith.divf %411, %412 : vector<8x32xf32>
    %414 = vector.extract_strided_slice %395 {offsets = [0, 256], sizes = [8, 32], strides = [1, 1]} : vector<8x384xf32> to vector<8x32xf32>
    %415 = vector.extract_strided_slice %397 {offsets = [0, 256], sizes = [8, 32], strides = [1, 1]} : vector<8x384xf32> to vector<8x32xf32>
    %416 = vector.broadcast %328 : vector<1x32xf32> to vector<8x32xf32>
    %417 = arith.addf %415, %416 : vector<8x32xf32>
    %418 = arith.mulf %405, %417 : vector<8x32xf32>
    %419 = arith.addf %414, %418 : vector<8x32xf32>
    %420 = math.tanh %419 : vector<8x32xf32>
    %cst_115 = arith.constant 1.000000e+00 : f32
    %421 = vector.broadcast %cst_115 : f32 to vector<8x32xf32>
    %422 = arith.subf %421, %413 : vector<8x32xf32>
    %423 = arith.mulf %422, %420 : vector<8x32xf32>
    %424 = arith.mulf %413, %393 : vector<8x32xf32>
    %425 = arith.addf %423, %424 : vector<8x32xf32>
    %c16_116 = arith.constant 16 : index
    %c0_117 = arith.constant 0 : index
    %426 = vector.load %arg27[%c16_116, %c0_117] : memref<64x32xf32, #tpu.memory_space<vmem>>, vector<8x32xf32>
    tpu.vector_store %arg27[%c16_116, %c0_117], %425 {strides = array<i32>} : memref<64x32xf32, #tpu.memory_space<vmem>>, vector<8x32xf32>,
    %c24_118 = arith.constant 24 : index
    %c0_119 = arith.constant 0 : index
    %427 = vector.load %arg25[%c24_118, %c0_119] : memref<64x384xf32, #tpu.memory_space<vmem>>, vector<8x384xf32>
    %428 = arith.truncf %425 : vector<8x32xf32> to vector<8x32xbf16>
    %cst_120 = arith.constant dense<0.000000e+00> : vector<8x384xf32>
    %429 = tpu.matmul %428, %329, %cst_120 {dimension_numbers = #tpu.dot_dimension_numbers<[1], [0], [0], [1], [0, 0, 1, 1], [], []>} : vector<8x32xbf16>, vector<32x384xbf16>, vector<8x384xf32> -> vector<8x384xf32>
    %430 = vector.extract_strided_slice %427 {offsets = [0, 0], sizes = [8, 32], strides = [1, 1]} : vector<8x384xf32> to vector<8x32xf32>
    %431 = vector.extract_strided_slice %429 {offsets = [0, 0], sizes = [8, 32], strides = [1, 1]} : vector<8x384xf32> to vector<8x32xf32>
    %432 = arith.addf %430, %431 : vector<8x32xf32>
    %433 = arith.negf %432 : vector<8x32xf32>
    %434 = math.exp %433 : vector<8x32xf32>
    %cst_121 = arith.constant 1.000000e+00 : f32
    %435 = vector.broadcast %cst_121 : f32 to vector<8x32xf32>
    %436 = arith.addf %435, %434 : vector<8x32xf32>
    %437 = arith.divf %435, %436 : vector<8x32xf32>
    %438 = vector.extract_strided_slice %427 {offsets = [0, 128], sizes = [8, 32], strides = [1, 1]} : vector<8x384xf32> to vector<8x32xf32>
    %439 = vector.extract_strided_slice %429 {offsets = [0, 128], sizes = [8, 32], strides = [1, 1]} : vector<8x384xf32> to vector<8x32xf32>
    %440 = arith.addf %438, %439 : vector<8x32xf32>
    %441 = arith.negf %440 : vector<8x32xf32>
    %442 = math.exp %441 : vector<8x32xf32>
    %cst_122 = arith.constant 1.000000e+00 : f32
    %443 = vector.broadcast %cst_122 : f32 to vector<8x32xf32>
    %444 = arith.addf %443, %442 : vector<8x32xf32>
    %445 = arith.divf %443, %444 : vector<8x32xf32>
    %446 = vector.extract_strided_slice %427 {offsets = [0, 256], sizes = [8, 32], strides = [1, 1]} : vector<8x384xf32> to vector<8x32xf32>
    %447 = vector.extract_strided_slice %429 {offsets = [0, 256], sizes = [8, 32], strides = [1, 1]} : vector<8x384xf32> to vector<8x32xf32>
    %448 = vector.broadcast %328 : vector<1x32xf32> to vector<8x32xf32>
    %449 = arith.addf %447, %448 : vector<8x32xf32>
    %450 = arith.mulf %437, %449 : vector<8x32xf32>
    %451 = arith.addf %446, %450 : vector<8x32xf32>
    %452 = math.tanh %451 : vector<8x32xf32>
    %cst_123 = arith.constant 1.000000e+00 : f32
    %453 = vector.broadcast %cst_123 : f32 to vector<8x32xf32>
    %454 = arith.subf %453, %445 : vector<8x32xf32>
    %455 = arith.mulf %454, %452 : vector<8x32xf32>
    %456 = arith.mulf %445, %425 : vector<8x32xf32>
    %457 = arith.addf %455, %456 : vector<8x32xf32>
    %c24_124 = arith.constant 24 : index
    %c0_125 = arith.constant 0 : index
    %458 = vector.load %arg27[%c24_124, %c0_125] : memref<64x32xf32, #tpu.memory_space<vmem>>, vector<8x32xf32>
    tpu.vector_store %arg27[%c24_124, %c0_125], %457 {strides = array<i32>} : memref<64x32xf32, #tpu.memory_space<vmem>>, vector<8x32xf32>,
    %c32_126 = arith.constant 32 : index
    %c0_127 = arith.constant 0 : index
    %459 = vector.load %arg25[%c32_126, %c0_127] : memref<64x384xf32, #tpu.memory_space<vmem>>, vector<8x384xf32>
    %460 = arith.truncf %457 : vector<8x32xf32> to vector<8x32xbf16>
    %cst_128 = arith.constant dense<0.000000e+00> : vector<8x384xf32>
    %461 = tpu.matmul %460, %329, %cst_128 {dimension_numbers = #tpu.dot_dimension_numbers<[1], [0], [0], [1], [0, 0, 1, 1], [], []>} : vector<8x32xbf16>, vector<32x384xbf16>, vector<8x384xf32> -> vector<8x384xf32>
    %462 = vector.extract_strided_slice %459 {offsets = [0, 0], sizes = [8, 32], strides = [1, 1]} : vector<8x384xf32> to vector<8x32xf32>
    %463 = vector.extract_strided_slice %461 {offsets = [0, 0], sizes = [8, 32], strides = [1, 1]} : vector<8x384xf32> to vector<8x32xf32>
    %464 = arith.addf %462, %463 : vector<8x32xf32>
    %465 = arith.negf %464 : vector<8x32xf32>
    %466 = math.exp %465 : vector<8x32xf32>
    %cst_129 = arith.constant 1.000000e+00 : f32
    %467 = vector.broadcast %cst_129 : f32 to vector<8x32xf32>
    %468 = arith.addf %467, %466 : vector<8x32xf32>
    %469 = arith.divf %467, %468 : vector<8x32xf32>
    %470 = vector.extract_strided_slice %459 {offsets = [0, 128], sizes = [8, 32], strides = [1, 1]} : vector<8x384xf32> to vector<8x32xf32>
    %471 = vector.extract_strided_slice %461 {offsets = [0, 128], sizes = [8, 32], strides = [1, 1]} : vector<8x384xf32> to vector<8x32xf32>
    %472 = arith.addf %470, %471 : vector<8x32xf32>
    %473 = arith.negf %472 : vector<8x32xf32>
    %474 = math.exp %473 : vector<8x32xf32>
    %cst_130 = arith.constant 1.000000e+00 : f32
    %475 = vector.broadcast %cst_130 : f32 to vector<8x32xf32>
    %476 = arith.addf %475, %474 : vector<8x32xf32>
    %477 = arith.divf %475, %476 : vector<8x32xf32>
    %478 = vector.extract_strided_slice %459 {offsets = [0, 256], sizes = [8, 32], strides = [1, 1]} : vector<8x384xf32> to vector<8x32xf32>
    %479 = vector.extract_strided_slice %461 {offsets = [0, 256], sizes = [8, 32], strides = [1, 1]} : vector<8x384xf32> to vector<8x32xf32>
    %480 = vector.broadcast %328 : vector<1x32xf32> to vector<8x32xf32>
    %481 = arith.addf %479, %480 : vector<8x32xf32>
    %482 = arith.mulf %469, %481 : vector<8x32xf32>
    %483 = arith.addf %478, %482 : vector<8x32xf32>
    %484 = math.tanh %483 : vector<8x32xf32>
    %cst_131 = arith.constant 1.000000e+00 : f32
    %485 = vector.broadcast %cst_131 : f32 to vector<8x32xf32>
    %486 = arith.subf %485, %477 : vector<8x32xf32>
    %487 = arith.mulf %486, %484 : vector<8x32xf32>
    %488 = arith.mulf %477, %457 : vector<8x32xf32>
    %489 = arith.addf %487, %488 : vector<8x32xf32>
    %c32_132 = arith.constant 32 : index
    %c0_133 = arith.constant 0 : index
    %490 = vector.load %arg27[%c32_132, %c0_133] : memref<64x32xf32, #tpu.memory_space<vmem>>, vector<8x32xf32>
    tpu.vector_store %arg27[%c32_132, %c0_133], %489 {strides = array<i32>} : memref<64x32xf32, #tpu.memory_space<vmem>>, vector<8x32xf32>,
    %c40_134 = arith.constant 40 : index
    %c0_135 = arith.constant 0 : index
    %491 = vector.load %arg25[%c40_134, %c0_135] : memref<64x384xf32, #tpu.memory_space<vmem>>, vector<8x384xf32>
    %492 = arith.truncf %489 : vector<8x32xf32> to vector<8x32xbf16>
    %cst_136 = arith.constant dense<0.000000e+00> : vector<8x384xf32>
    %493 = tpu.matmul %492, %329, %cst_136 {dimension_numbers = #tpu.dot_dimension_numbers<[1], [0], [0], [1], [0, 0, 1, 1], [], []>} : vector<8x32xbf16>, vector<32x384xbf16>, vector<8x384xf32> -> vector<8x384xf32>
    %494 = vector.extract_strided_slice %491 {offsets = [0, 0], sizes = [8, 32], strides = [1, 1]} : vector<8x384xf32> to vector<8x32xf32>
    %495 = vector.extract_strided_slice %493 {offsets = [0, 0], sizes = [8, 32], strides = [1, 1]} : vector<8x384xf32> to vector<8x32xf32>
    %496 = arith.addf %494, %495 : vector<8x32xf32>
    %497 = arith.negf %496 : vector<8x32xf32>
    %498 = math.exp %497 : vector<8x32xf32>
    %cst_137 = arith.constant 1.000000e+00 : f32
    %499 = vector.broadcast %cst_137 : f32 to vector<8x32xf32>
    %500 = arith.addf %499, %498 : vector<8x32xf32>
    %501 = arith.divf %499, %500 : vector<8x32xf32>
    %502 = vector.extract_strided_slice %491 {offsets = [0, 128], sizes = [8, 32], strides = [1, 1]} : vector<8x384xf32> to vector<8x32xf32>
    %503 = vector.extract_strided_slice %493 {offsets = [0, 128], sizes = [8, 32], strides = [1, 1]} : vector<8x384xf32> to vector<8x32xf32>
    %504 = arith.addf %502, %503 : vector<8x32xf32>
    %505 = arith.negf %504 : vector<8x32xf32>
    %506 = math.exp %505 : vector<8x32xf32>
    %cst_138 = arith.constant 1.000000e+00 : f32
    %507 = vector.broadcast %cst_138 : f32 to vector<8x32xf32>
    %508 = arith.addf %507, %506 : vector<8x32xf32>
    %509 = arith.divf %507, %508 : vector<8x32xf32>
    %510 = vector.extract_strided_slice %491 {offsets = [0, 256], sizes = [8, 32], strides = [1, 1]} : vector<8x384xf32> to vector<8x32xf32>
    %511 = vector.extract_strided_slice %493 {offsets = [0, 256], sizes = [8, 32], strides = [1, 1]} : vector<8x384xf32> to vector<8x32xf32>
    %512 = vector.broadcast %328 : vector<1x32xf32> to vector<8x32xf32>
    %513 = arith.addf %511, %512 : vector<8x32xf32>
    %514 = arith.mulf %501, %513 : vector<8x32xf32>
    %515 = arith.addf %510, %514 : vector<8x32xf32>
    %516 = math.tanh %515 : vector<8x32xf32>
    %cst_139 = arith.constant 1.000000e+00 : f32
    %517 = vector.broadcast %cst_139 : f32 to vector<8x32xf32>
    %518 = arith.subf %517, %509 : vector<8x32xf32>
    %519 = arith.mulf %518, %516 : vector<8x32xf32>
    %520 = arith.mulf %509, %489 : vector<8x32xf32>
    %521 = arith.addf %519, %520 : vector<8x32xf32>
    %c40_140 = arith.constant 40 : index
    %c0_141 = arith.constant 0 : index
    %522 = vector.load %arg27[%c40_140, %c0_141] : memref<64x32xf32, #tpu.memory_space<vmem>>, vector<8x32xf32>
    tpu.vector_store %arg27[%c40_140, %c0_141], %521 {strides = array<i32>} : memref<64x32xf32, #tpu.memory_space<vmem>>, vector<8x32xf32>,
    %c48_142 = arith.constant 48 : index
    %c0_143 = arith.constant 0 : index
    %523 = vector.load %arg25[%c48_142, %c0_143] : memref<64x384xf32, #tpu.memory_space<vmem>>, vector<8x384xf32>
    %524 = arith.truncf %521 : vector<8x32xf32> to vector<8x32xbf16>
    %cst_144 = arith.constant dense<0.000000e+00> : vector<8x384xf32>
    %525 = tpu.matmul %524, %329, %cst_144 {dimension_numbers = #tpu.dot_dimension_numbers<[1], [0], [0], [1], [0, 0, 1, 1], [], []>} : vector<8x32xbf16>, vector<32x384xbf16>, vector<8x384xf32> -> vector<8x384xf32>
    %526 = vector.extract_strided_slice %523 {offsets = [0, 0], sizes = [8, 32], strides = [1, 1]} : vector<8x384xf32> to vector<8x32xf32>
    %527 = vector.extract_strided_slice %525 {offsets = [0, 0], sizes = [8, 32], strides = [1, 1]} : vector<8x384xf32> to vector<8x32xf32>
    %528 = arith.addf %526, %527 : vector<8x32xf32>
    %529 = arith.negf %528 : vector<8x32xf32>
    %530 = math.exp %529 : vector<8x32xf32>
    %cst_145 = arith.constant 1.000000e+00 : f32
    %531 = vector.broadcast %cst_145 : f32 to vector<8x32xf32>
    %532 = arith.addf %531, %530 : vector<8x32xf32>
    %533 = arith.divf %531, %532 : vector<8x32xf32>
    %534 = vector.extract_strided_slice %523 {offsets = [0, 128], sizes = [8, 32], strides = [1, 1]} : vector<8x384xf32> to vector<8x32xf32>
    %535 = vector.extract_strided_slice %525 {offsets = [0, 128], sizes = [8, 32], strides = [1, 1]} : vector<8x384xf32> to vector<8x32xf32>
    %536 = arith.addf %534, %535 : vector<8x32xf32>
    %537 = arith.negf %536 : vector<8x32xf32>
    %538 = math.exp %537 : vector<8x32xf32>
    %cst_146 = arith.constant 1.000000e+00 : f32
    %539 = vector.broadcast %cst_146 : f32 to vector<8x32xf32>
    %540 = arith.addf %539, %538 : vector<8x32xf32>
    %541 = arith.divf %539, %540 : vector<8x32xf32>
    %542 = vector.extract_strided_slice %523 {offsets = [0, 256], sizes = [8, 32], strides = [1, 1]} : vector<8x384xf32> to vector<8x32xf32>
    %543 = vector.extract_strided_slice %525 {offsets = [0, 256], sizes = [8, 32], strides = [1, 1]} : vector<8x384xf32> to vector<8x32xf32>
    %544 = vector.broadcast %328 : vector<1x32xf32> to vector<8x32xf32>
    %545 = arith.addf %543, %544 : vector<8x32xf32>
    %546 = arith.mulf %533, %545 : vector<8x32xf32>
    %547 = arith.addf %542, %546 : vector<8x32xf32>
    %548 = math.tanh %547 : vector<8x32xf32>
    %cst_147 = arith.constant 1.000000e+00 : f32
    %549 = vector.broadcast %cst_147 : f32 to vector<8x32xf32>
    %550 = arith.subf %549, %541 : vector<8x32xf32>
    %551 = arith.mulf %550, %548 : vector<8x32xf32>
    %552 = arith.mulf %541, %521 : vector<8x32xf32>
    %553 = arith.addf %551, %552 : vector<8x32xf32>
    %c48_148 = arith.constant 48 : index
    %c0_149 = arith.constant 0 : index
    %554 = vector.load %arg27[%c48_148, %c0_149] : memref<64x32xf32, #tpu.memory_space<vmem>>, vector<8x32xf32>
    tpu.vector_store %arg27[%c48_148, %c0_149], %553 {strides = array<i32>} : memref<64x32xf32, #tpu.memory_space<vmem>>, vector<8x32xf32>,
    %c56_150 = arith.constant 56 : index
    %c0_151 = arith.constant 0 : index
    %555 = vector.load %arg25[%c56_150, %c0_151] : memref<64x384xf32, #tpu.memory_space<vmem>>, vector<8x384xf32>
    %556 = arith.truncf %553 : vector<8x32xf32> to vector<8x32xbf16>
    %cst_152 = arith.constant dense<0.000000e+00> : vector<8x384xf32>
    %557 = tpu.matmul %556, %329, %cst_152 {dimension_numbers = #tpu.dot_dimension_numbers<[1], [0], [0], [1], [0, 0, 1, 1], [], []>} : vector<8x32xbf16>, vector<32x384xbf16>, vector<8x384xf32> -> vector<8x384xf32>
    %558 = vector.extract_strided_slice %555 {offsets = [0, 0], sizes = [8, 32], strides = [1, 1]} : vector<8x384xf32> to vector<8x32xf32>
    %559 = vector.extract_strided_slice %557 {offsets = [0, 0], sizes = [8, 32], strides = [1, 1]} : vector<8x384xf32> to vector<8x32xf32>
    %560 = arith.addf %558, %559 : vector<8x32xf32>
    %561 = arith.negf %560 : vector<8x32xf32>
    %562 = math.exp %561 : vector<8x32xf32>
    %cst_153 = arith.constant 1.000000e+00 : f32
    %563 = vector.broadcast %cst_153 : f32 to vector<8x32xf32>
    %564 = arith.addf %563, %562 : vector<8x32xf32>
    %565 = arith.divf %563, %564 : vector<8x32xf32>
    %566 = vector.extract_strided_slice %555 {offsets = [0, 128], sizes = [8, 32], strides = [1, 1]} : vector<8x384xf32> to vector<8x32xf32>
    %567 = vector.extract_strided_slice %557 {offsets = [0, 128], sizes = [8, 32], strides = [1, 1]} : vector<8x384xf32> to vector<8x32xf32>
    %568 = arith.addf %566, %567 : vector<8x32xf32>
    %569 = arith.negf %568 : vector<8x32xf32>
    %570 = math.exp %569 : vector<8x32xf32>
    %cst_154 = arith.constant 1.000000e+00 : f32
    %571 = vector.broadcast %cst_154 : f32 to vector<8x32xf32>
    %572 = arith.addf %571, %570 : vector<8x32xf32>
    %573 = arith.divf %571, %572 : vector<8x32xf32>
    %574 = vector.extract_strided_slice %555 {offsets = [0, 256], sizes = [8, 32], strides = [1, 1]} : vector<8x384xf32> to vector<8x32xf32>
    %575 = vector.extract_strided_slice %557 {offsets = [0, 256], sizes = [8, 32], strides = [1, 1]} : vector<8x384xf32> to vector<8x32xf32>
    %576 = vector.broadcast %328 : vector<1x32xf32> to vector<8x32xf32>
    %577 = arith.addf %575, %576 : vector<8x32xf32>
    %578 = arith.mulf %565, %577 : vector<8x32xf32>
    %579 = arith.addf %574, %578 : vector<8x32xf32>
    %580 = math.tanh %579 : vector<8x32xf32>
    %cst_155 = arith.constant 1.000000e+00 : f32
    %581 = vector.broadcast %cst_155 : f32 to vector<8x32xf32>
    %582 = arith.subf %581, %573 : vector<8x32xf32>
    %583 = arith.mulf %582, %580 : vector<8x32xf32>
    %584 = arith.mulf %573, %553 : vector<8x32xf32>
    %585 = arith.addf %583, %584 : vector<8x32xf32>
    %c56_156 = arith.constant 56 : index
    %c0_157 = arith.constant 0 : index
    %586 = vector.load %arg27[%c56_156, %c0_157] : memref<64x32xf32, #tpu.memory_space<vmem>>, vector<8x32xf32>
    tpu.vector_store %arg27[%c56_156, %c0_157], %585 {strides = array<i32>} : memref<64x32xf32, #tpu.memory_space<vmem>>, vector<8x32xf32>,
    %c0_158 = arith.constant 0 : index
    %c0_159 = arith.constant 0 : index
    %587 = vector.load %arg27[%c0_158, %c0_159] : memref<64x32xf32, #tpu.memory_space<vmem>>, vector<64x32xf32>
    %588 = arith.truncf %587 : vector<64x32xf32> to vector<64x32xbf16>
    %c0_160 = arith.constant 0 : index
    %c0_161 = arith.constant 0 : index
    %589 = vector.load %arg12[%c0_160, %c0_161] : memref<2x384xf32, #tpu.memory_space<vmem>>, vector<2x384xf32>
    %c0_162 = arith.constant 0 : index
    %c0_163 = arith.constant 0 : index
    %590 = vector.load %arg10[%c0_162, %c0_163] : memref<32x384xbf16, #tpu.memory_space<vmem>>, vector<32x384xbf16>
    %cst_164 = arith.constant dense<0.000000e+00> : vector<64x384xf32>
    %591 = tpu.matmul %588, %590, %cst_164 {dimension_numbers = #tpu.dot_dimension_numbers<[1], [0], [0], [1], [0, 0, 1, 1], [], []>} : vector<64x32xbf16>, vector<32x384xbf16>, vector<64x384xf32> -> vector<64x384xf32>
    %592 = vector.extract_strided_slice %589 {offsets = [0, 0], sizes = [1, 384], strides = [1, 1]} : vector<2x384xf32> to vector<1x384xf32>
    %593 = vector.broadcast %592 : vector<1x384xf32> to vector<64x384xf32>
    %594 = arith.addf %591, %593 : vector<64x384xf32>
    %c0_165 = arith.constant 0 : index
    %c0_166 = arith.constant 0 : index
    %595 = vector.load %arg25[%c0_165, %c0_166] : memref<64x384xf32, #tpu.memory_space<vmem>>, vector<64x384xf32>
    tpu.vector_store %arg25[%c0_165, %c0_166], %594 {strides = array<i32>} : memref<64x384xf32, #tpu.memory_space<vmem>>, vector<64x384xf32>,
    %596 = vector.extract_strided_slice %589 {offsets = [1, 0], sizes = [1, 32], strides = [1, 1]} : vector<2x384xf32> to vector<1x32xf32>
    %c0_167 = arith.constant 0 : index
    %c0_168 = arith.constant 0 : index
    %597 = vector.load %arg11[%c0_167, %c0_168] : memref<32x384xbf16, #tpu.memory_space<vmem>>, vector<32x384xbf16>
    %cst_169 = arith.constant 0.000000e+00 : f32
    %598 = vector.broadcast %cst_169 : f32 to vector<8x32xf32>
    %c0_170 = arith.constant 0 : index
    %c0_171 = arith.constant 0 : index
    %599 = vector.load %arg25[%c0_170, %c0_171] : memref<64x384xf32, #tpu.memory_space<vmem>>, vector<8x384xf32>
    %600 = arith.truncf %598 : vector<8x32xf32> to vector<8x32xbf16>
    %cst_172 = arith.constant dense<0.000000e+00> : vector<8x384xf32>
    %601 = tpu.matmul %600, %597, %cst_172 {dimension_numbers = #tpu.dot_dimension_numbers<[1], [0], [0], [1], [0, 0, 1, 1], [], []>} : vector<8x32xbf16>, vector<32x384xbf16>, vector<8x384xf32> -> vector<8x384xf32>
    %602 = vector.extract_strided_slice %599 {offsets = [0, 0], sizes = [8, 32], strides = [1, 1]} : vector<8x384xf32> to vector<8x32xf32>
    %603 = vector.extract_strided_slice %601 {offsets = [0, 0], sizes = [8, 32], strides = [1, 1]} : vector<8x384xf32> to vector<8x32xf32>
    %604 = arith.addf %602, %603 : vector<8x32xf32>
    %605 = arith.negf %604 : vector<8x32xf32>
    %606 = math.exp %605 : vector<8x32xf32>
    %cst_173 = arith.constant 1.000000e+00 : f32
    %607 = vector.broadcast %cst_173 : f32 to vector<8x32xf32>
    %608 = arith.addf %607, %606 : vector<8x32xf32>
    %609 = arith.divf %607, %608 : vector<8x32xf32>
    %610 = vector.extract_strided_slice %599 {offsets = [0, 128], sizes = [8, 32], strides = [1, 1]} : vector<8x384xf32> to vector<8x32xf32>
    %611 = vector.extract_strided_slice %601 {offsets = [0, 128], sizes = [8, 32], strides = [1, 1]} : vector<8x384xf32> to vector<8x32xf32>
    %612 = arith.addf %610, %611 : vector<8x32xf32>
    %613 = arith.negf %612 : vector<8x32xf32>
    %614 = math.exp %613 : vector<8x32xf32>
    %cst_174 = arith.constant 1.000000e+00 : f32
    %615 = vector.broadcast %cst_174 : f32 to vector<8x32xf32>
    %616 = arith.addf %615, %614 : vector<8x32xf32>
    %617 = arith.divf %615, %616 : vector<8x32xf32>
    %618 = vector.extract_strided_slice %599 {offsets = [0, 256], sizes = [8, 32], strides = [1, 1]} : vector<8x384xf32> to vector<8x32xf32>
    %619 = vector.extract_strided_slice %601 {offsets = [0, 256], sizes = [8, 32], strides = [1, 1]} : vector<8x384xf32> to vector<8x32xf32>
    %620 = vector.broadcast %596 : vector<1x32xf32> to vector<8x32xf32>
    %621 = arith.addf %619, %620 : vector<8x32xf32>
    %622 = arith.mulf %609, %621 : vector<8x32xf32>
    %623 = arith.addf %618, %622 : vector<8x32xf32>
    %624 = math.tanh %623 : vector<8x32xf32>
    %cst_175 = arith.constant 1.000000e+00 : f32
    %625 = vector.broadcast %cst_175 : f32 to vector<8x32xf32>
    %626 = arith.subf %625, %617 : vector<8x32xf32>
    %627 = arith.mulf %626, %624 : vector<8x32xf32>
    %628 = arith.mulf %617, %598 : vector<8x32xf32>
    %629 = arith.addf %627, %628 : vector<8x32xf32>
    %630 = arith.negf %629 : vector<8x32xf32>
    %631 = math.exp %630 : vector<8x32xf32>
    %cst_176 = arith.constant 1.000000e+00 : f32
    %632 = vector.broadcast %cst_176 : f32 to vector<8x32xf32>
    %633 = arith.addf %632, %631 : vector<8x32xf32>
    %634 = arith.divf %632, %633 : vector<8x32xf32>
    %c0_177 = arith.constant 0 : index
    %c0_178 = arith.constant 0 : index
    %635 = vector.load %arg28[%c0_177, %c0_178] : memref<64x32xf32, #tpu.memory_space<vmem>>, vector<8x32xf32>
    tpu.vector_store %arg28[%c0_177, %c0_178], %634 {strides = array<i32>} : memref<64x32xf32, #tpu.memory_space<vmem>>, vector<8x32xf32>,
    %c8_179 = arith.constant 8 : index
    %c0_180 = arith.constant 0 : index
    %636 = vector.load %arg25[%c8_179, %c0_180] : memref<64x384xf32, #tpu.memory_space<vmem>>, vector<8x384xf32>
    %637 = arith.truncf %629 : vector<8x32xf32> to vector<8x32xbf16>
    %cst_181 = arith.constant dense<0.000000e+00> : vector<8x384xf32>
    %638 = tpu.matmul %637, %597, %cst_181 {dimension_numbers = #tpu.dot_dimension_numbers<[1], [0], [0], [1], [0, 0, 1, 1], [], []>} : vector<8x32xbf16>, vector<32x384xbf16>, vector<8x384xf32> -> vector<8x384xf32>
    %639 = vector.extract_strided_slice %636 {offsets = [0, 0], sizes = [8, 32], strides = [1, 1]} : vector<8x384xf32> to vector<8x32xf32>
    %640 = vector.extract_strided_slice %638 {offsets = [0, 0], sizes = [8, 32], strides = [1, 1]} : vector<8x384xf32> to vector<8x32xf32>
    %641 = arith.addf %639, %640 : vector<8x32xf32>
    %642 = arith.negf %641 : vector<8x32xf32>
    %643 = math.exp %642 : vector<8x32xf32>
    %cst_182 = arith.constant 1.000000e+00 : f32
    %644 = vector.broadcast %cst_182 : f32 to vector<8x32xf32>
    %645 = arith.addf %644, %643 : vector<8x32xf32>
    %646 = arith.divf %644, %645 : vector<8x32xf32>
    %647 = vector.extract_strided_slice %636 {offsets = [0, 128], sizes = [8, 32], strides = [1, 1]} : vector<8x384xf32> to vector<8x32xf32>
    %648 = vector.extract_strided_slice %638 {offsets = [0, 128], sizes = [8, 32], strides = [1, 1]} : vector<8x384xf32> to vector<8x32xf32>
    %649 = arith.addf %647, %648 : vector<8x32xf32>
    %650 = arith.negf %649 : vector<8x32xf32>
    %651 = math.exp %650 : vector<8x32xf32>
    %cst_183 = arith.constant 1.000000e+00 : f32
    %652 = vector.broadcast %cst_183 : f32 to vector<8x32xf32>
    %653 = arith.addf %652, %651 : vector<8x32xf32>
    %654 = arith.divf %652, %653 : vector<8x32xf32>
    %655 = vector.extract_strided_slice %636 {offsets = [0, 256], sizes = [8, 32], strides = [1, 1]} : vector<8x384xf32> to vector<8x32xf32>
    %656 = vector.extract_strided_slice %638 {offsets = [0, 256], sizes = [8, 32], strides = [1, 1]} : vector<8x384xf32> to vector<8x32xf32>
    %657 = vector.broadcast %596 : vector<1x32xf32> to vector<8x32xf32>
    %658 = arith.addf %656, %657 : vector<8x32xf32>
    %659 = arith.mulf %646, %658 : vector<8x32xf32>
    %660 = arith.addf %655, %659 : vector<8x32xf32>
    %661 = math.tanh %660 : vector<8x32xf32>
    %cst_184 = arith.constant 1.000000e+00 : f32
    %662 = vector.broadcast %cst_184 : f32 to vector<8x32xf32>
    %663 = arith.subf %662, %654 : vector<8x32xf32>
    %664 = arith.mulf %663, %661 : vector<8x32xf32>
    %665 = arith.mulf %654, %629 : vector<8x32xf32>
    %666 = arith.addf %664, %665 : vector<8x32xf32>
    %667 = arith.negf %666 : vector<8x32xf32>
    %668 = math.exp %667 : vector<8x32xf32>
    %cst_185 = arith.constant 1.000000e+00 : f32
    %669 = vector.broadcast %cst_185 : f32 to vector<8x32xf32>
    %670 = arith.addf %669, %668 : vector<8x32xf32>
    %671 = arith.divf %669, %670 : vector<8x32xf32>
    %c8_186 = arith.constant 8 : index
    %c0_187 = arith.constant 0 : index
    %672 = vector.load %arg28[%c8_186, %c0_187] : memref<64x32xf32, #tpu.memory_space<vmem>>, vector<8x32xf32>
    tpu.vector_store %arg28[%c8_186, %c0_187], %671 {strides = array<i32>} : memref<64x32xf32, #tpu.memory_space<vmem>>, vector<8x32xf32>,
    %c16_188 = arith.constant 16 : index
    %c0_189 = arith.constant 0 : index
    %673 = vector.load %arg25[%c16_188, %c0_189] : memref<64x384xf32, #tpu.memory_space<vmem>>, vector<8x384xf32>
    %674 = arith.truncf %666 : vector<8x32xf32> to vector<8x32xbf16>
    %cst_190 = arith.constant dense<0.000000e+00> : vector<8x384xf32>
    %675 = tpu.matmul %674, %597, %cst_190 {dimension_numbers = #tpu.dot_dimension_numbers<[1], [0], [0], [1], [0, 0, 1, 1], [], []>} : vector<8x32xbf16>, vector<32x384xbf16>, vector<8x384xf32> -> vector<8x384xf32>
    %676 = vector.extract_strided_slice %673 {offsets = [0, 0], sizes = [8, 32], strides = [1, 1]} : vector<8x384xf32> to vector<8x32xf32>
    %677 = vector.extract_strided_slice %675 {offsets = [0, 0], sizes = [8, 32], strides = [1, 1]} : vector<8x384xf32> to vector<8x32xf32>
    %678 = arith.addf %676, %677 : vector<8x32xf32>
    %679 = arith.negf %678 : vector<8x32xf32>
    %680 = math.exp %679 : vector<8x32xf32>
    %cst_191 = arith.constant 1.000000e+00 : f32
    %681 = vector.broadcast %cst_191 : f32 to vector<8x32xf32>
    %682 = arith.addf %681, %680 : vector<8x32xf32>
    %683 = arith.divf %681, %682 : vector<8x32xf32>
    %684 = vector.extract_strided_slice %673 {offsets = [0, 128], sizes = [8, 32], strides = [1, 1]} : vector<8x384xf32> to vector<8x32xf32>
    %685 = vector.extract_strided_slice %675 {offsets = [0, 128], sizes = [8, 32], strides = [1, 1]} : vector<8x384xf32> to vector<8x32xf32>
    %686 = arith.addf %684, %685 : vector<8x32xf32>
    %687 = arith.negf %686 : vector<8x32xf32>
    %688 = math.exp %687 : vector<8x32xf32>
    %cst_192 = arith.constant 1.000000e+00 : f32
    %689 = vector.broadcast %cst_192 : f32 to vector<8x32xf32>
    %690 = arith.addf %689, %688 : vector<8x32xf32>
    %691 = arith.divf %689, %690 : vector<8x32xf32>
    %692 = vector.extract_strided_slice %673 {offsets = [0, 256], sizes = [8, 32], strides = [1, 1]} : vector<8x384xf32> to vector<8x32xf32>
    %693 = vector.extract_strided_slice %675 {offsets = [0, 256], sizes = [8, 32], strides = [1, 1]} : vector<8x384xf32> to vector<8x32xf32>
    %694 = vector.broadcast %596 : vector<1x32xf32> to vector<8x32xf32>
    %695 = arith.addf %693, %694 : vector<8x32xf32>
    %696 = arith.mulf %683, %695 : vector<8x32xf32>
    %697 = arith.addf %692, %696 : vector<8x32xf32>
    %698 = math.tanh %697 : vector<8x32xf32>
    %cst_193 = arith.constant 1.000000e+00 : f32
    %699 = vector.broadcast %cst_193 : f32 to vector<8x32xf32>
    %700 = arith.subf %699, %691 : vector<8x32xf32>
    %701 = arith.mulf %700, %698 : vector<8x32xf32>
    %702 = arith.mulf %691, %666 : vector<8x32xf32>
    %703 = arith.addf %701, %702 : vector<8x32xf32>
    %704 = arith.negf %703 : vector<8x32xf32>
    %705 = math.exp %704 : vector<8x32xf32>
    %cst_194 = arith.constant 1.000000e+00 : f32
    %706 = vector.broadcast %cst_194 : f32 to vector<8x32xf32>
    %707 = arith.addf %706, %705 : vector<8x32xf32>
    %708 = arith.divf %706, %707 : vector<8x32xf32>
    %c16_195 = arith.constant 16 : index
    %c0_196 = arith.constant 0 : index
    %709 = vector.load %arg28[%c16_195, %c0_196] : memref<64x32xf32, #tpu.memory_space<vmem>>, vector<8x32xf32>
    tpu.vector_store %arg28[%c16_195, %c0_196], %708 {strides = array<i32>} : memref<64x32xf32, #tpu.memory_space<vmem>>, vector<8x32xf32>,
    %c24_197 = arith.constant 24 : index
    %c0_198 = arith.constant 0 : index
    %710 = vector.load %arg25[%c24_197, %c0_198] : memref<64x384xf32, #tpu.memory_space<vmem>>, vector<8x384xf32>
    %711 = arith.truncf %703 : vector<8x32xf32> to vector<8x32xbf16>
    %cst_199 = arith.constant dense<0.000000e+00> : vector<8x384xf32>
    %712 = tpu.matmul %711, %597, %cst_199 {dimension_numbers = #tpu.dot_dimension_numbers<[1], [0], [0], [1], [0, 0, 1, 1], [], []>} : vector<8x32xbf16>, vector<32x384xbf16>, vector<8x384xf32> -> vector<8x384xf32>
    %713 = vector.extract_strided_slice %710 {offsets = [0, 0], sizes = [8, 32], strides = [1, 1]} : vector<8x384xf32> to vector<8x32xf32>
    %714 = vector.extract_strided_slice %712 {offsets = [0, 0], sizes = [8, 32], strides = [1, 1]} : vector<8x384xf32> to vector<8x32xf32>
    %715 = arith.addf %713, %714 : vector<8x32xf32>
    %716 = arith.negf %715 : vector<8x32xf32>
    %717 = math.exp %716 : vector<8x32xf32>
    %cst_200 = arith.constant 1.000000e+00 : f32
    %718 = vector.broadcast %cst_200 : f32 to vector<8x32xf32>
    %719 = arith.addf %718, %717 : vector<8x32xf32>
    %720 = arith.divf %718, %719 : vector<8x32xf32>
    %721 = vector.extract_strided_slice %710 {offsets = [0, 128], sizes = [8, 32], strides = [1, 1]} : vector<8x384xf32> to vector<8x32xf32>
    %722 = vector.extract_strided_slice %712 {offsets = [0, 128], sizes = [8, 32], strides = [1, 1]} : vector<8x384xf32> to vector<8x32xf32>
    %723 = arith.addf %721, %722 : vector<8x32xf32>
    %724 = arith.negf %723 : vector<8x32xf32>
    %725 = math.exp %724 : vector<8x32xf32>
    %cst_201 = arith.constant 1.000000e+00 : f32
    %726 = vector.broadcast %cst_201 : f32 to vector<8x32xf32>
    %727 = arith.addf %726, %725 : vector<8x32xf32>
    %728 = arith.divf %726, %727 : vector<8x32xf32>
    %729 = vector.extract_strided_slice %710 {offsets = [0, 256], sizes = [8, 32], strides = [1, 1]} : vector<8x384xf32> to vector<8x32xf32>
    %730 = vector.extract_strided_slice %712 {offsets = [0, 256], sizes = [8, 32], strides = [1, 1]} : vector<8x384xf32> to vector<8x32xf32>
    %731 = vector.broadcast %596 : vector<1x32xf32> to vector<8x32xf32>
    %732 = arith.addf %730, %731 : vector<8x32xf32>
    %733 = arith.mulf %720, %732 : vector<8x32xf32>
    %734 = arith.addf %729, %733 : vector<8x32xf32>
    %735 = math.tanh %734 : vector<8x32xf32>
    %cst_202 = arith.constant 1.000000e+00 : f32
    %736 = vector.broadcast %cst_202 : f32 to vector<8x32xf32>
    %737 = arith.subf %736, %728 : vector<8x32xf32>
    %738 = arith.mulf %737, %735 : vector<8x32xf32>
    %739 = arith.mulf %728, %703 : vector<8x32xf32>
    %740 = arith.addf %738, %739 : vector<8x32xf32>
    %741 = arith.negf %740 : vector<8x32xf32>
    %742 = math.exp %741 : vector<8x32xf32>
    %cst_203 = arith.constant 1.000000e+00 : f32
    %743 = vector.broadcast %cst_203 : f32 to vector<8x32xf32>
    %744 = arith.addf %743, %742 : vector<8x32xf32>
    %745 = arith.divf %743, %744 : vector<8x32xf32>
    %c24_204 = arith.constant 24 : index
    %c0_205 = arith.constant 0 : index
    %746 = vector.load %arg28[%c24_204, %c0_205] : memref<64x32xf32, #tpu.memory_space<vmem>>, vector<8x32xf32>
    tpu.vector_store %arg28[%c24_204, %c0_205], %745 {strides = array<i32>} : memref<64x32xf32, #tpu.memory_space<vmem>>, vector<8x32xf32>,
    %c32_206 = arith.constant 32 : index
    %c0_207 = arith.constant 0 : index
    %747 = vector.load %arg25[%c32_206, %c0_207] : memref<64x384xf32, #tpu.memory_space<vmem>>, vector<8x384xf32>
    %748 = arith.truncf %740 : vector<8x32xf32> to vector<8x32xbf16>
    %cst_208 = arith.constant dense<0.000000e+00> : vector<8x384xf32>
    %749 = tpu.matmul %748, %597, %cst_208 {dimension_numbers = #tpu.dot_dimension_numbers<[1], [0], [0], [1], [0, 0, 1, 1], [], []>} : vector<8x32xbf16>, vector<32x384xbf16>, vector<8x384xf32> -> vector<8x384xf32>
    %750 = vector.extract_strided_slice %747 {offsets = [0, 0], sizes = [8, 32], strides = [1, 1]} : vector<8x384xf32> to vector<8x32xf32>
    %751 = vector.extract_strided_slice %749 {offsets = [0, 0], sizes = [8, 32], strides = [1, 1]} : vector<8x384xf32> to vector<8x32xf32>
    %752 = arith.addf %750, %751 : vector<8x32xf32>
    %753 = arith.negf %752 : vector<8x32xf32>
    %754 = math.exp %753 : vector<8x32xf32>
    %cst_209 = arith.constant 1.000000e+00 : f32
    %755 = vector.broadcast %cst_209 : f32 to vector<8x32xf32>
    %756 = arith.addf %755, %754 : vector<8x32xf32>
    %757 = arith.divf %755, %756 : vector<8x32xf32>
    %758 = vector.extract_strided_slice %747 {offsets = [0, 128], sizes = [8, 32], strides = [1, 1]} : vector<8x384xf32> to vector<8x32xf32>
    %759 = vector.extract_strided_slice %749 {offsets = [0, 128], sizes = [8, 32], strides = [1, 1]} : vector<8x384xf32> to vector<8x32xf32>
    %760 = arith.addf %758, %759 : vector<8x32xf32>
    %761 = arith.negf %760 : vector<8x32xf32>
    %762 = math.exp %761 : vector<8x32xf32>
    %cst_210 = arith.constant 1.000000e+00 : f32
    %763 = vector.broadcast %cst_210 : f32 to vector<8x32xf32>
    %764 = arith.addf %763, %762 : vector<8x32xf32>
    %765 = arith.divf %763, %764 : vector<8x32xf32>
    %766 = vector.extract_strided_slice %747 {offsets = [0, 256], sizes = [8, 32], strides = [1, 1]} : vector<8x384xf32> to vector<8x32xf32>
    %767 = vector.extract_strided_slice %749 {offsets = [0, 256], sizes = [8, 32], strides = [1, 1]} : vector<8x384xf32> to vector<8x32xf32>
    %768 = vector.broadcast %596 : vector<1x32xf32> to vector<8x32xf32>
    %769 = arith.addf %767, %768 : vector<8x32xf32>
    %770 = arith.mulf %757, %769 : vector<8x32xf32>
    %771 = arith.addf %766, %770 : vector<8x32xf32>
    %772 = math.tanh %771 : vector<8x32xf32>
    %cst_211 = arith.constant 1.000000e+00 : f32
    %773 = vector.broadcast %cst_211 : f32 to vector<8x32xf32>
    %774 = arith.subf %773, %765 : vector<8x32xf32>
    %775 = arith.mulf %774, %772 : vector<8x32xf32>
    %776 = arith.mulf %765, %740 : vector<8x32xf32>
    %777 = arith.addf %775, %776 : vector<8x32xf32>
    %778 = arith.negf %777 : vector<8x32xf32>
    %779 = math.exp %778 : vector<8x32xf32>
    %cst_212 = arith.constant 1.000000e+00 : f32
    %780 = vector.broadcast %cst_212 : f32 to vector<8x32xf32>
    %781 = arith.addf %780, %779 : vector<8x32xf32>
    %782 = arith.divf %780, %781 : vector<8x32xf32>
    %c32_213 = arith.constant 32 : index
    %c0_214 = arith.constant 0 : index
    %783 = vector.load %arg28[%c32_213, %c0_214] : memref<64x32xf32, #tpu.memory_space<vmem>>, vector<8x32xf32>
    tpu.vector_store %arg28[%c32_213, %c0_214], %782 {strides = array<i32>} : memref<64x32xf32, #tpu.memory_space<vmem>>, vector<8x32xf32>,
    %c40_215 = arith.constant 40 : index
    %c0_216 = arith.constant 0 : index
    %784 = vector.load %arg25[%c40_215, %c0_216] : memref<64x384xf32, #tpu.memory_space<vmem>>, vector<8x384xf32>
    %785 = arith.truncf %777 : vector<8x32xf32> to vector<8x32xbf16>
    %cst_217 = arith.constant dense<0.000000e+00> : vector<8x384xf32>
    %786 = tpu.matmul %785, %597, %cst_217 {dimension_numbers = #tpu.dot_dimension_numbers<[1], [0], [0], [1], [0, 0, 1, 1], [], []>} : vector<8x32xbf16>, vector<32x384xbf16>, vector<8x384xf32> -> vector<8x384xf32>
    %787 = vector.extract_strided_slice %784 {offsets = [0, 0], sizes = [8, 32], strides = [1, 1]} : vector<8x384xf32> to vector<8x32xf32>
    %788 = vector.extract_strided_slice %786 {offsets = [0, 0], sizes = [8, 32], strides = [1, 1]} : vector<8x384xf32> to vector<8x32xf32>
    %789 = arith.addf %787, %788 : vector<8x32xf32>
    %790 = arith.negf %789 : vector<8x32xf32>
    %791 = math.exp %790 : vector<8x32xf32>
    %cst_218 = arith.constant 1.000000e+00 : f32
    %792 = vector.broadcast %cst_218 : f32 to vector<8x32xf32>
    %793 = arith.addf %792, %791 : vector<8x32xf32>
    %794 = arith.divf %792, %793 : vector<8x32xf32>
    %795 = vector.extract_strided_slice %784 {offsets = [0, 128], sizes = [8, 32], strides = [1, 1]} : vector<8x384xf32> to vector<8x32xf32>
    %796 = vector.extract_strided_slice %786 {offsets = [0, 128], sizes = [8, 32], strides = [1, 1]} : vector<8x384xf32> to vector<8x32xf32>
    %797 = arith.addf %795, %796 : vector<8x32xf32>
    %798 = arith.negf %797 : vector<8x32xf32>
    %799 = math.exp %798 : vector<8x32xf32>
    %cst_219 = arith.constant 1.000000e+00 : f32
    %800 = vector.broadcast %cst_219 : f32 to vector<8x32xf32>
    %801 = arith.addf %800, %799 : vector<8x32xf32>
    %802 = arith.divf %800, %801 : vector<8x32xf32>
    %803 = vector.extract_strided_slice %784 {offsets = [0, 256], sizes = [8, 32], strides = [1, 1]} : vector<8x384xf32> to vector<8x32xf32>
    %804 = vector.extract_strided_slice %786 {offsets = [0, 256], sizes = [8, 32], strides = [1, 1]} : vector<8x384xf32> to vector<8x32xf32>
    %805 = vector.broadcast %596 : vector<1x32xf32> to vector<8x32xf32>
    %806 = arith.addf %804, %805 : vector<8x32xf32>
    %807 = arith.mulf %794, %806 : vector<8x32xf32>
    %808 = arith.addf %803, %807 : vector<8x32xf32>
    %809 = math.tanh %808 : vector<8x32xf32>
    %cst_220 = arith.constant 1.000000e+00 : f32
    %810 = vector.broadcast %cst_220 : f32 to vector<8x32xf32>
    %811 = arith.subf %810, %802 : vector<8x32xf32>
    %812 = arith.mulf %811, %809 : vector<8x32xf32>
    %813 = arith.mulf %802, %777 : vector<8x32xf32>
    %814 = arith.addf %812, %813 : vector<8x32xf32>
    %815 = arith.negf %814 : vector<8x32xf32>
    %816 = math.exp %815 : vector<8x32xf32>
    %cst_221 = arith.constant 1.000000e+00 : f32
    %817 = vector.broadcast %cst_221 : f32 to vector<8x32xf32>
    %818 = arith.addf %817, %816 : vector<8x32xf32>
    %819 = arith.divf %817, %818 : vector<8x32xf32>
    %c40_222 = arith.constant 40 : index
    %c0_223 = arith.constant 0 : index
    %820 = vector.load %arg28[%c40_222, %c0_223] : memref<64x32xf32, #tpu.memory_space<vmem>>, vector<8x32xf32>
    tpu.vector_store %arg28[%c40_222, %c0_223], %819 {strides = array<i32>} : memref<64x32xf32, #tpu.memory_space<vmem>>, vector<8x32xf32>,
    %c48_224 = arith.constant 48 : index
    %c0_225 = arith.constant 0 : index
    %821 = vector.load %arg25[%c48_224, %c0_225] : memref<64x384xf32, #tpu.memory_space<vmem>>, vector<8x384xf32>
    %822 = arith.truncf %814 : vector<8x32xf32> to vector<8x32xbf16>
    %cst_226 = arith.constant dense<0.000000e+00> : vector<8x384xf32>
    %823 = tpu.matmul %822, %597, %cst_226 {dimension_numbers = #tpu.dot_dimension_numbers<[1], [0], [0], [1], [0, 0, 1, 1], [], []>} : vector<8x32xbf16>, vector<32x384xbf16>, vector<8x384xf32> -> vector<8x384xf32>
    %824 = vector.extract_strided_slice %821 {offsets = [0, 0], sizes = [8, 32], strides = [1, 1]} : vector<8x384xf32> to vector<8x32xf32>
    %825 = vector.extract_strided_slice %823 {offsets = [0, 0], sizes = [8, 32], strides = [1, 1]} : vector<8x384xf32> to vector<8x32xf32>
    %826 = arith.addf %824, %825 : vector<8x32xf32>
    %827 = arith.negf %826 : vector<8x32xf32>
    %828 = math.exp %827 : vector<8x32xf32>
    %cst_227 = arith.constant 1.000000e+00 : f32
    %829 = vector.broadcast %cst_227 : f32 to vector<8x32xf32>
    %830 = arith.addf %829, %828 : vector<8x32xf32>
    %831 = arith.divf %829, %830 : vector<8x32xf32>
    %832 = vector.extract_strided_slice %821 {offsets = [0, 128], sizes = [8, 32], strides = [1, 1]} : vector<8x384xf32> to vector<8x32xf32>
    %833 = vector.extract_strided_slice %823 {offsets = [0, 128], sizes = [8, 32], strides = [1, 1]} : vector<8x384xf32> to vector<8x32xf32>
    %834 = arith.addf %832, %833 : vector<8x32xf32>
    %835 = arith.negf %834 : vector<8x32xf32>
    %836 = math.exp %835 : vector<8x32xf32>
    %cst_228 = arith.constant 1.000000e+00 : f32
    %837 = vector.broadcast %cst_228 : f32 to vector<8x32xf32>
    %838 = arith.addf %837, %836 : vector<8x32xf32>
    %839 = arith.divf %837, %838 : vector<8x32xf32>
    %840 = vector.extract_strided_slice %821 {offsets = [0, 256], sizes = [8, 32], strides = [1, 1]} : vector<8x384xf32> to vector<8x32xf32>
    %841 = vector.extract_strided_slice %823 {offsets = [0, 256], sizes = [8, 32], strides = [1, 1]} : vector<8x384xf32> to vector<8x32xf32>
    %842 = vector.broadcast %596 : vector<1x32xf32> to vector<8x32xf32>
    %843 = arith.addf %841, %842 : vector<8x32xf32>
    %844 = arith.mulf %831, %843 : vector<8x32xf32>
    %845 = arith.addf %840, %844 : vector<8x32xf32>
    %846 = math.tanh %845 : vector<8x32xf32>
    %cst_229 = arith.constant 1.000000e+00 : f32
    %847 = vector.broadcast %cst_229 : f32 to vector<8x32xf32>
    %848 = arith.subf %847, %839 : vector<8x32xf32>
    %849 = arith.mulf %848, %846 : vector<8x32xf32>
    %850 = arith.mulf %839, %814 : vector<8x32xf32>
    %851 = arith.addf %849, %850 : vector<8x32xf32>
    %852 = arith.negf %851 : vector<8x32xf32>
    %853 = math.exp %852 : vector<8x32xf32>
    %cst_230 = arith.constant 1.000000e+00 : f32
    %854 = vector.broadcast %cst_230 : f32 to vector<8x32xf32>
    %855 = arith.addf %854, %853 : vector<8x32xf32>
    %856 = arith.divf %854, %855 : vector<8x32xf32>
    %c48_231 = arith.constant 48 : index
    %c0_232 = arith.constant 0 : index
    %857 = vector.load %arg28[%c48_231, %c0_232] : memref<64x32xf32, #tpu.memory_space<vmem>>, vector<8x32xf32>
    tpu.vector_store %arg28[%c48_231, %c0_232], %856 {strides = array<i32>} : memref<64x32xf32, #tpu.memory_space<vmem>>, vector<8x32xf32>,
    %c56_233 = arith.constant 56 : index
    %c0_234 = arith.constant 0 : index
    %858 = vector.load %arg25[%c56_233, %c0_234] : memref<64x384xf32, #tpu.memory_space<vmem>>, vector<8x384xf32>
    %859 = arith.truncf %851 : vector<8x32xf32> to vector<8x32xbf16>
    %cst_235 = arith.constant dense<0.000000e+00> : vector<8x384xf32>
    %860 = tpu.matmul %859, %597, %cst_235 {dimension_numbers = #tpu.dot_dimension_numbers<[1], [0], [0], [1], [0, 0, 1, 1], [], []>} : vector<8x32xbf16>, vector<32x384xbf16>, vector<8x384xf32> -> vector<8x384xf32>
    %861 = vector.extract_strided_slice %858 {offsets = [0, 0], sizes = [8, 32], strides = [1, 1]} : vector<8x384xf32> to vector<8x32xf32>
    %862 = vector.extract_strided_slice %860 {offsets = [0, 0], sizes = [8, 32], strides = [1, 1]} : vector<8x384xf32> to vector<8x32xf32>
    %863 = arith.addf %861, %862 : vector<8x32xf32>
    %864 = arith.negf %863 : vector<8x32xf32>
    %865 = math.exp %864 : vector<8x32xf32>
    %cst_236 = arith.constant 1.000000e+00 : f32
    %866 = vector.broadcast %cst_236 : f32 to vector<8x32xf32>
    %867 = arith.addf %866, %865 : vector<8x32xf32>
    %868 = arith.divf %866, %867 : vector<8x32xf32>
    %869 = vector.extract_strided_slice %858 {offsets = [0, 128], sizes = [8, 32], strides = [1, 1]} : vector<8x384xf32> to vector<8x32xf32>
    %870 = vector.extract_strided_slice %860 {offsets = [0, 128], sizes = [8, 32], strides = [1, 1]} : vector<8x384xf32> to vector<8x32xf32>
    %871 = arith.addf %869, %870 : vector<8x32xf32>
    %872 = arith.negf %871 : vector<8x32xf32>
    %873 = math.exp %872 : vector<8x32xf32>
    %cst_237 = arith.constant 1.000000e+00 : f32
    %874 = vector.broadcast %cst_237 : f32 to vector<8x32xf32>
    %875 = arith.addf %874, %873 : vector<8x32xf32>
    %876 = arith.divf %874, %875 : vector<8x32xf32>
    %877 = vector.extract_strided_slice %858 {offsets = [0, 256], sizes = [8, 32], strides = [1, 1]} : vector<8x384xf32> to vector<8x32xf32>
    %878 = vector.extract_strided_slice %860 {offsets = [0, 256], sizes = [8, 32], strides = [1, 1]} : vector<8x384xf32> to vector<8x32xf32>
    %879 = vector.broadcast %596 : vector<1x32xf32> to vector<8x32xf32>
    %880 = arith.addf %878, %879 : vector<8x32xf32>
    %881 = arith.mulf %868, %880 : vector<8x32xf32>
    %882 = arith.addf %877, %881 : vector<8x32xf32>
    %883 = math.tanh %882 : vector<8x32xf32>
    %cst_238 = arith.constant 1.000000e+00 : f32
    %884 = vector.broadcast %cst_238 : f32 to vector<8x32xf32>
    %885 = arith.subf %884, %876 : vector<8x32xf32>
    %886 = arith.mulf %885, %883 : vector<8x32xf32>
    %887 = arith.mulf %876, %851 : vector<8x32xf32>
    %888 = arith.addf %886, %887 : vector<8x32xf32>
    %889 = arith.negf %888 : vector<8x32xf32>
    %890 = math.exp %889 : vector<8x32xf32>
    %cst_239 = arith.constant 1.000000e+00 : f32
    %891 = vector.broadcast %cst_239 : f32 to vector<8x32xf32>
    %892 = arith.addf %891, %890 : vector<8x32xf32>
    %893 = arith.divf %891, %892 : vector<8x32xf32>
    %c56_240 = arith.constant 56 : index
    %c0_241 = arith.constant 0 : index
    %894 = vector.load %arg28[%c56_240, %c0_241] : memref<64x32xf32, #tpu.memory_space<vmem>>, vector<8x32xf32>
    tpu.vector_store %arg28[%c56_240, %c0_241], %893 {strides = array<i32>} : memref<64x32xf32, #tpu.memory_space<vmem>>, vector<8x32xf32>,
    %c0_242 = arith.constant 0 : index
    %c0_243 = arith.constant 0 : index
    %895 = vector.load %arg28[%c0_242, %c0_243] : memref<64x32xf32, #tpu.memory_space<vmem>>, vector<64x32xf32>
    %896 = arith.truncf %895 : vector<64x32xf32> to vector<64x32xbf16>
    %c0_244 = arith.constant 0 : index
    %c0_245 = arith.constant 0 : index
    %897 = vector.load %arg15[%c0_244, %c0_245] : memref<2x384xf32, #tpu.memory_space<vmem>>, vector<2x384xf32>
    %c0_246 = arith.constant 0 : index
    %c0_247 = arith.constant 0 : index
    %898 = vector.load %arg13[%c0_246, %c0_247] : memref<32x384xbf16, #tpu.memory_space<vmem>>, vector<32x384xbf16>
    %cst_248 = arith.constant dense<0.000000e+00> : vector<64x384xf32>
    %899 = tpu.matmul %896, %898, %cst_248 {dimension_numbers = #tpu.dot_dimension_numbers<[1], [0], [0], [1], [0, 0, 1, 1], [], []>} : vector<64x32xbf16>, vector<32x384xbf16>, vector<64x384xf32> -> vector<64x384xf32>
    %900 = vector.extract_strided_slice %897 {offsets = [0, 0], sizes = [1, 384], strides = [1, 1]} : vector<2x384xf32> to vector<1x384xf32>
    %901 = vector.broadcast %900 : vector<1x384xf32> to vector<64x384xf32>
    %902 = arith.addf %899, %901 : vector<64x384xf32>
    %c0_249 = arith.constant 0 : index
    %c0_250 = arith.constant 0 : index
    %903 = vector.load %arg25[%c0_249, %c0_250] : memref<64x384xf32, #tpu.memory_space<vmem>>, vector<64x384xf32>
    tpu.vector_store %arg25[%c0_249, %c0_250], %902 {strides = array<i32>} : memref<64x384xf32, #tpu.memory_space<vmem>>, vector<64x384xf32>,
    %904 = vector.extract_strided_slice %897 {offsets = [1, 0], sizes = [1, 16], strides = [1, 1]} : vector<2x384xf32> to vector<1x16xf32>
    %c0_251 = arith.constant 0 : index
    %c0_252 = arith.constant 0 : index
    %905 = vector.load %arg14[%c0_251, %c0_252] : memref<16x384xbf16, #tpu.memory_space<vmem>>, vector<16x384xbf16>
    %cst_253 = arith.constant 0.000000e+00 : f32
    %906 = vector.broadcast %cst_253 : f32 to vector<8x16xf32>
    %c0_254 = arith.constant 0 : index
    %c0_255 = arith.constant 0 : index
    %907 = vector.load %arg25[%c0_254, %c0_255] : memref<64x384xf32, #tpu.memory_space<vmem>>, vector<8x384xf32>
    %908 = arith.truncf %906 : vector<8x16xf32> to vector<8x16xbf16>
    %cst_256 = arith.constant dense<0.000000e+00> : vector<8x384xf32>
    %909 = tpu.matmul %908, %905, %cst_256 {dimension_numbers = #tpu.dot_dimension_numbers<[1], [0], [0], [1], [0, 0, 1, 1], [], []>} : vector<8x16xbf16>, vector<16x384xbf16>, vector<8x384xf32> -> vector<8x384xf32>
    %910 = vector.extract_strided_slice %907 {offsets = [0, 0], sizes = [8, 16], strides = [1, 1]} : vector<8x384xf32> to vector<8x16xf32>
    %911 = vector.extract_strided_slice %909 {offsets = [0, 0], sizes = [8, 16], strides = [1, 1]} : vector<8x384xf32> to vector<8x16xf32>
    %912 = arith.addf %910, %911 : vector<8x16xf32>
    %913 = arith.negf %912 : vector<8x16xf32>
    %914 = math.exp %913 : vector<8x16xf32>
    %cst_257 = arith.constant 1.000000e+00 : f32
    %915 = vector.broadcast %cst_257 : f32 to vector<8x16xf32>
    %916 = arith.addf %915, %914 : vector<8x16xf32>
    %917 = arith.divf %915, %916 : vector<8x16xf32>
    %918 = vector.extract_strided_slice %907 {offsets = [0, 128], sizes = [8, 16], strides = [1, 1]} : vector<8x384xf32> to vector<8x16xf32>
    %919 = vector.extract_strided_slice %909 {offsets = [0, 128], sizes = [8, 16], strides = [1, 1]} : vector<8x384xf32> to vector<8x16xf32>
    %920 = arith.addf %918, %919 : vector<8x16xf32>
    %921 = arith.negf %920 : vector<8x16xf32>
    %922 = math.exp %921 : vector<8x16xf32>
    %cst_258 = arith.constant 1.000000e+00 : f32
    %923 = vector.broadcast %cst_258 : f32 to vector<8x16xf32>
    %924 = arith.addf %923, %922 : vector<8x16xf32>
    %925 = arith.divf %923, %924 : vector<8x16xf32>
    %926 = vector.extract_strided_slice %907 {offsets = [0, 256], sizes = [8, 16], strides = [1, 1]} : vector<8x384xf32> to vector<8x16xf32>
    %927 = vector.extract_strided_slice %909 {offsets = [0, 256], sizes = [8, 16], strides = [1, 1]} : vector<8x384xf32> to vector<8x16xf32>
    %928 = vector.broadcast %904 : vector<1x16xf32> to vector<8x16xf32>
    %929 = arith.addf %927, %928 : vector<8x16xf32>
    %930 = arith.mulf %917, %929 : vector<8x16xf32>
    %931 = arith.addf %926, %930 : vector<8x16xf32>
    %932 = math.tanh %931 : vector<8x16xf32>
    %cst_259 = arith.constant 1.000000e+00 : f32
    %933 = vector.broadcast %cst_259 : f32 to vector<8x16xf32>
    %934 = arith.subf %933, %925 : vector<8x16xf32>
    %935 = arith.mulf %934, %932 : vector<8x16xf32>
    %936 = arith.mulf %925, %906 : vector<8x16xf32>
    %937 = arith.addf %935, %936 : vector<8x16xf32>
    %c0_260 = arith.constant 0 : index
    %c0_261 = arith.constant 0 : index
    %938 = vector.load %arg29[%c0_260, %c0_261] : memref<64x16xf32, #tpu.memory_space<vmem>>, vector<8x16xf32>
    tpu.vector_store %arg29[%c0_260, %c0_261], %937 {strides = array<i32>} : memref<64x16xf32, #tpu.memory_space<vmem>>, vector<8x16xf32>,
    %c8_262 = arith.constant 8 : index
    %c0_263 = arith.constant 0 : index
    %939 = vector.load %arg25[%c8_262, %c0_263] : memref<64x384xf32, #tpu.memory_space<vmem>>, vector<8x384xf32>
    %940 = arith.truncf %937 : vector<8x16xf32> to vector<8x16xbf16>
    %cst_264 = arith.constant dense<0.000000e+00> : vector<8x384xf32>
    %941 = tpu.matmul %940, %905, %cst_264 {dimension_numbers = #tpu.dot_dimension_numbers<[1], [0], [0], [1], [0, 0, 1, 1], [], []>} : vector<8x16xbf16>, vector<16x384xbf16>, vector<8x384xf32> -> vector<8x384xf32>
    %942 = vector.extract_strided_slice %939 {offsets = [0, 0], sizes = [8, 16], strides = [1, 1]} : vector<8x384xf32> to vector<8x16xf32>
    %943 = vector.extract_strided_slice %941 {offsets = [0, 0], sizes = [8, 16], strides = [1, 1]} : vector<8x384xf32> to vector<8x16xf32>
    %944 = arith.addf %942, %943 : vector<8x16xf32>
    %945 = arith.negf %944 : vector<8x16xf32>
    %946 = math.exp %945 : vector<8x16xf32>
    %cst_265 = arith.constant 1.000000e+00 : f32
    %947 = vector.broadcast %cst_265 : f32 to vector<8x16xf32>
    %948 = arith.addf %947, %946 : vector<8x16xf32>
    %949 = arith.divf %947, %948 : vector<8x16xf32>
    %950 = vector.extract_strided_slice %939 {offsets = [0, 128], sizes = [8, 16], strides = [1, 1]} : vector<8x384xf32> to vector<8x16xf32>
    %951 = vector.extract_strided_slice %941 {offsets = [0, 128], sizes = [8, 16], strides = [1, 1]} : vector<8x384xf32> to vector<8x16xf32>
    %952 = arith.addf %950, %951 : vector<8x16xf32>
    %953 = arith.negf %952 : vector<8x16xf32>
    %954 = math.exp %953 : vector<8x16xf32>
    %cst_266 = arith.constant 1.000000e+00 : f32
    %955 = vector.broadcast %cst_266 : f32 to vector<8x16xf32>
    %956 = arith.addf %955, %954 : vector<8x16xf32>
    %957 = arith.divf %955, %956 : vector<8x16xf32>
    %958 = vector.extract_strided_slice %939 {offsets = [0, 256], sizes = [8, 16], strides = [1, 1]} : vector<8x384xf32> to vector<8x16xf32>
    %959 = vector.extract_strided_slice %941 {offsets = [0, 256], sizes = [8, 16], strides = [1, 1]} : vector<8x384xf32> to vector<8x16xf32>
    %960 = vector.broadcast %904 : vector<1x16xf32> to vector<8x16xf32>
    %961 = arith.addf %959, %960 : vector<8x16xf32>
    %962 = arith.mulf %949, %961 : vector<8x16xf32>
    %963 = arith.addf %958, %962 : vector<8x16xf32>
    %964 = math.tanh %963 : vector<8x16xf32>
    %cst_267 = arith.constant 1.000000e+00 : f32
    %965 = vector.broadcast %cst_267 : f32 to vector<8x16xf32>
    %966 = arith.subf %965, %957 : vector<8x16xf32>
    %967 = arith.mulf %966, %964 : vector<8x16xf32>
    %968 = arith.mulf %957, %937 : vector<8x16xf32>
    %969 = arith.addf %967, %968 : vector<8x16xf32>
    %c8_268 = arith.constant 8 : index
    %c0_269 = arith.constant 0 : index
    %970 = vector.load %arg29[%c8_268, %c0_269] : memref<64x16xf32, #tpu.memory_space<vmem>>, vector<8x16xf32>
    tpu.vector_store %arg29[%c8_268, %c0_269], %969 {strides = array<i32>} : memref<64x16xf32, #tpu.memory_space<vmem>>, vector<8x16xf32>,
    %c16_270 = arith.constant 16 : index
    %c0_271 = arith.constant 0 : index
    %971 = vector.load %arg25[%c16_270, %c0_271] : memref<64x384xf32, #tpu.memory_space<vmem>>, vector<8x384xf32>
    %972 = arith.truncf %969 : vector<8x16xf32> to vector<8x16xbf16>
    %cst_272 = arith.constant dense<0.000000e+00> : vector<8x384xf32>
    %973 = tpu.matmul %972, %905, %cst_272 {dimension_numbers = #tpu.dot_dimension_numbers<[1], [0], [0], [1], [0, 0, 1, 1], [], []>} : vector<8x16xbf16>, vector<16x384xbf16>, vector<8x384xf32> -> vector<8x384xf32>
    %974 = vector.extract_strided_slice %971 {offsets = [0, 0], sizes = [8, 16], strides = [1, 1]} : vector<8x384xf32> to vector<8x16xf32>
    %975 = vector.extract_strided_slice %973 {offsets = [0, 0], sizes = [8, 16], strides = [1, 1]} : vector<8x384xf32> to vector<8x16xf32>
    %976 = arith.addf %974, %975 : vector<8x16xf32>
    %977 = arith.negf %976 : vector<8x16xf32>
    %978 = math.exp %977 : vector<8x16xf32>
    %cst_273 = arith.constant 1.000000e+00 : f32
    %979 = vector.broadcast %cst_273 : f32 to vector<8x16xf32>
    %980 = arith.addf %979, %978 : vector<8x16xf32>
    %981 = arith.divf %979, %980 : vector<8x16xf32>
    %982 = vector.extract_strided_slice %971 {offsets = [0, 128], sizes = [8, 16], strides = [1, 1]} : vector<8x384xf32> to vector<8x16xf32>
    %983 = vector.extract_strided_slice %973 {offsets = [0, 128], sizes = [8, 16], strides = [1, 1]} : vector<8x384xf32> to vector<8x16xf32>
    %984 = arith.addf %982, %983 : vector<8x16xf32>
    %985 = arith.negf %984 : vector<8x16xf32>
    %986 = math.exp %985 : vector<8x16xf32>
    %cst_274 = arith.constant 1.000000e+00 : f32
    %987 = vector.broadcast %cst_274 : f32 to vector<8x16xf32>
    %988 = arith.addf %987, %986 : vector<8x16xf32>
    %989 = arith.divf %987, %988 : vector<8x16xf32>
    %990 = vector.extract_strided_slice %971 {offsets = [0, 256], sizes = [8, 16], strides = [1, 1]} : vector<8x384xf32> to vector<8x16xf32>
    %991 = vector.extract_strided_slice %973 {offsets = [0, 256], sizes = [8, 16], strides = [1, 1]} : vector<8x384xf32> to vector<8x16xf32>
    %992 = vector.broadcast %904 : vector<1x16xf32> to vector<8x16xf32>
    %993 = arith.addf %991, %992 : vector<8x16xf32>
    %994 = arith.mulf %981, %993 : vector<8x16xf32>
    %995 = arith.addf %990, %994 : vector<8x16xf32>
    %996 = math.tanh %995 : vector<8x16xf32>
    %cst_275 = arith.constant 1.000000e+00 : f32
    %997 = vector.broadcast %cst_275 : f32 to vector<8x16xf32>
    %998 = arith.subf %997, %989 : vector<8x16xf32>
    %999 = arith.mulf %998, %996 : vector<8x16xf32>
    %1000 = arith.mulf %989, %969 : vector<8x16xf32>
    %1001 = arith.addf %999, %1000 : vector<8x16xf32>
    %c16_276 = arith.constant 16 : index
    %c0_277 = arith.constant 0 : index
    %1002 = vector.load %arg29[%c16_276, %c0_277] : memref<64x16xf32, #tpu.memory_space<vmem>>, vector<8x16xf32>
    tpu.vector_store %arg29[%c16_276, %c0_277], %1001 {strides = array<i32>} : memref<64x16xf32, #tpu.memory_space<vmem>>, vector<8x16xf32>,
    %c24_278 = arith.constant 24 : index
    %c0_279 = arith.constant 0 : index
    %1003 = vector.load %arg25[%c24_278, %c0_279] : memref<64x384xf32, #tpu.memory_space<vmem>>, vector<8x384xf32>
    %1004 = arith.truncf %1001 : vector<8x16xf32> to vector<8x16xbf16>
    %cst_280 = arith.constant dense<0.000000e+00> : vector<8x384xf32>
    %1005 = tpu.matmul %1004, %905, %cst_280 {dimension_numbers = #tpu.dot_dimension_numbers<[1], [0], [0], [1], [0, 0, 1, 1], [], []>} : vector<8x16xbf16>, vector<16x384xbf16>, vector<8x384xf32> -> vector<8x384xf32>
    %1006 = vector.extract_strided_slice %1003 {offsets = [0, 0], sizes = [8, 16], strides = [1, 1]} : vector<8x384xf32> to vector<8x16xf32>
    %1007 = vector.extract_strided_slice %1005 {offsets = [0, 0], sizes = [8, 16], strides = [1, 1]} : vector<8x384xf32> to vector<8x16xf32>
    %1008 = arith.addf %1006, %1007 : vector<8x16xf32>
    %1009 = arith.negf %1008 : vector<8x16xf32>
    %1010 = math.exp %1009 : vector<8x16xf32>
    %cst_281 = arith.constant 1.000000e+00 : f32
    %1011 = vector.broadcast %cst_281 : f32 to vector<8x16xf32>
    %1012 = arith.addf %1011, %1010 : vector<8x16xf32>
    %1013 = arith.divf %1011, %1012 : vector<8x16xf32>
    %1014 = vector.extract_strided_slice %1003 {offsets = [0, 128], sizes = [8, 16], strides = [1, 1]} : vector<8x384xf32> to vector<8x16xf32>
    %1015 = vector.extract_strided_slice %1005 {offsets = [0, 128], sizes = [8, 16], strides = [1, 1]} : vector<8x384xf32> to vector<8x16xf32>
    %1016 = arith.addf %1014, %1015 : vector<8x16xf32>
    %1017 = arith.negf %1016 : vector<8x16xf32>
    %1018 = math.exp %1017 : vector<8x16xf32>
    %cst_282 = arith.constant 1.000000e+00 : f32
    %1019 = vector.broadcast %cst_282 : f32 to vector<8x16xf32>
    %1020 = arith.addf %1019, %1018 : vector<8x16xf32>
    %1021 = arith.divf %1019, %1020 : vector<8x16xf32>
    %1022 = vector.extract_strided_slice %1003 {offsets = [0, 256], sizes = [8, 16], strides = [1, 1]} : vector<8x384xf32> to vector<8x16xf32>
    %1023 = vector.extract_strided_slice %1005 {offsets = [0, 256], sizes = [8, 16], strides = [1, 1]} : vector<8x384xf32> to vector<8x16xf32>
    %1024 = vector.broadcast %904 : vector<1x16xf32> to vector<8x16xf32>
    %1025 = arith.addf %1023, %1024 : vector<8x16xf32>
    %1026 = arith.mulf %1013, %1025 : vector<8x16xf32>
    %1027 = arith.addf %1022, %1026 : vector<8x16xf32>
    %1028 = math.tanh %1027 : vector<8x16xf32>
    %cst_283 = arith.constant 1.000000e+00 : f32
    %1029 = vector.broadcast %cst_283 : f32 to vector<8x16xf32>
    %1030 = arith.subf %1029, %1021 : vector<8x16xf32>
    %1031 = arith.mulf %1030, %1028 : vector<8x16xf32>
    %1032 = arith.mulf %1021, %1001 : vector<8x16xf32>
    %1033 = arith.addf %1031, %1032 : vector<8x16xf32>
    %c24_284 = arith.constant 24 : index
    %c0_285 = arith.constant 0 : index
    %1034 = vector.load %arg29[%c24_284, %c0_285] : memref<64x16xf32, #tpu.memory_space<vmem>>, vector<8x16xf32>
    tpu.vector_store %arg29[%c24_284, %c0_285], %1033 {strides = array<i32>} : memref<64x16xf32, #tpu.memory_space<vmem>>, vector<8x16xf32>,
    %c32_286 = arith.constant 32 : index
    %c0_287 = arith.constant 0 : index
    %1035 = vector.load %arg25[%c32_286, %c0_287] : memref<64x384xf32, #tpu.memory_space<vmem>>, vector<8x384xf32>
    %1036 = arith.truncf %1033 : vector<8x16xf32> to vector<8x16xbf16>
    %cst_288 = arith.constant dense<0.000000e+00> : vector<8x384xf32>
    %1037 = tpu.matmul %1036, %905, %cst_288 {dimension_numbers = #tpu.dot_dimension_numbers<[1], [0], [0], [1], [0, 0, 1, 1], [], []>} : vector<8x16xbf16>, vector<16x384xbf16>, vector<8x384xf32> -> vector<8x384xf32>
    %1038 = vector.extract_strided_slice %1035 {offsets = [0, 0], sizes = [8, 16], strides = [1, 1]} : vector<8x384xf32> to vector<8x16xf32>
    %1039 = vector.extract_strided_slice %1037 {offsets = [0, 0], sizes = [8, 16], strides = [1, 1]} : vector<8x384xf32> to vector<8x16xf32>
    %1040 = arith.addf %1038, %1039 : vector<8x16xf32>
    %1041 = arith.negf %1040 : vector<8x16xf32>
    %1042 = math.exp %1041 : vector<8x16xf32>
    %cst_289 = arith.constant 1.000000e+00 : f32
    %1043 = vector.broadcast %cst_289 : f32 to vector<8x16xf32>
    %1044 = arith.addf %1043, %1042 : vector<8x16xf32>
    %1045 = arith.divf %1043, %1044 : vector<8x16xf32>
    %1046 = vector.extract_strided_slice %1035 {offsets = [0, 128], sizes = [8, 16], strides = [1, 1]} : vector<8x384xf32> to vector<8x16xf32>
    %1047 = vector.extract_strided_slice %1037 {offsets = [0, 128], sizes = [8, 16], strides = [1, 1]} : vector<8x384xf32> to vector<8x16xf32>
    %1048 = arith.addf %1046, %1047 : vector<8x16xf32>
    %1049 = arith.negf %1048 : vector<8x16xf32>
    %1050 = math.exp %1049 : vector<8x16xf32>
    %cst_290 = arith.constant 1.000000e+00 : f32
    %1051 = vector.broadcast %cst_290 : f32 to vector<8x16xf32>
    %1052 = arith.addf %1051, %1050 : vector<8x16xf32>
    %1053 = arith.divf %1051, %1052 : vector<8x16xf32>
    %1054 = vector.extract_strided_slice %1035 {offsets = [0, 256], sizes = [8, 16], strides = [1, 1]} : vector<8x384xf32> to vector<8x16xf32>
    %1055 = vector.extract_strided_slice %1037 {offsets = [0, 256], sizes = [8, 16], strides = [1, 1]} : vector<8x384xf32> to vector<8x16xf32>
    %1056 = vector.broadcast %904 : vector<1x16xf32> to vector<8x16xf32>
    %1057 = arith.addf %1055, %1056 : vector<8x16xf32>
    %1058 = arith.mulf %1045, %1057 : vector<8x16xf32>
    %1059 = arith.addf %1054, %1058 : vector<8x16xf32>
    %1060 = math.tanh %1059 : vector<8x16xf32>
    %cst_291 = arith.constant 1.000000e+00 : f32
    %1061 = vector.broadcast %cst_291 : f32 to vector<8x16xf32>
    %1062 = arith.subf %1061, %1053 : vector<8x16xf32>
    %1063 = arith.mulf %1062, %1060 : vector<8x16xf32>
    %1064 = arith.mulf %1053, %1033 : vector<8x16xf32>
    %1065 = arith.addf %1063, %1064 : vector<8x16xf32>
    %c32_292 = arith.constant 32 : index
    %c0_293 = arith.constant 0 : index
    %1066 = vector.load %arg29[%c32_292, %c0_293] : memref<64x16xf32, #tpu.memory_space<vmem>>, vector<8x16xf32>
    tpu.vector_store %arg29[%c32_292, %c0_293], %1065 {strides = array<i32>} : memref<64x16xf32, #tpu.memory_space<vmem>>, vector<8x16xf32>,
    %c40_294 = arith.constant 40 : index
    %c0_295 = arith.constant 0 : index
    %1067 = vector.load %arg25[%c40_294, %c0_295] : memref<64x384xf32, #tpu.memory_space<vmem>>, vector<8x384xf32>
    %1068 = arith.truncf %1065 : vector<8x16xf32> to vector<8x16xbf16>
    %cst_296 = arith.constant dense<0.000000e+00> : vector<8x384xf32>
    %1069 = tpu.matmul %1068, %905, %cst_296 {dimension_numbers = #tpu.dot_dimension_numbers<[1], [0], [0], [1], [0, 0, 1, 1], [], []>} : vector<8x16xbf16>, vector<16x384xbf16>, vector<8x384xf32> -> vector<8x384xf32>
    %1070 = vector.extract_strided_slice %1067 {offsets = [0, 0], sizes = [8, 16], strides = [1, 1]} : vector<8x384xf32> to vector<8x16xf32>
    %1071 = vector.extract_strided_slice %1069 {offsets = [0, 0], sizes = [8, 16], strides = [1, 1]} : vector<8x384xf32> to vector<8x16xf32>
    %1072 = arith.addf %1070, %1071 : vector<8x16xf32>
    %1073 = arith.negf %1072 : vector<8x16xf32>
    %1074 = math.exp %1073 : vector<8x16xf32>
    %cst_297 = arith.constant 1.000000e+00 : f32
    %1075 = vector.broadcast %cst_297 : f32 to vector<8x16xf32>
    %1076 = arith.addf %1075, %1074 : vector<8x16xf32>
    %1077 = arith.divf %1075, %1076 : vector<8x16xf32>
    %1078 = vector.extract_strided_slice %1067 {offsets = [0, 128], sizes = [8, 16], strides = [1, 1]} : vector<8x384xf32> to vector<8x16xf32>
    %1079 = vector.extract_strided_slice %1069 {offsets = [0, 128], sizes = [8, 16], strides = [1, 1]} : vector<8x384xf32> to vector<8x16xf32>
    %1080 = arith.addf %1078, %1079 : vector<8x16xf32>
    %1081 = arith.negf %1080 : vector<8x16xf32>
    %1082 = math.exp %1081 : vector<8x16xf32>
    %cst_298 = arith.constant 1.000000e+00 : f32
    %1083 = vector.broadcast %cst_298 : f32 to vector<8x16xf32>
    %1084 = arith.addf %1083, %1082 : vector<8x16xf32>
    %1085 = arith.divf %1083, %1084 : vector<8x16xf32>
    %1086 = vector.extract_strided_slice %1067 {offsets = [0, 256], sizes = [8, 16], strides = [1, 1]} : vector<8x384xf32> to vector<8x16xf32>
    %1087 = vector.extract_strided_slice %1069 {offsets = [0, 256], sizes = [8, 16], strides = [1, 1]} : vector<8x384xf32> to vector<8x16xf32>
    %1088 = vector.broadcast %904 : vector<1x16xf32> to vector<8x16xf32>
    %1089 = arith.addf %1087, %1088 : vector<8x16xf32>
    %1090 = arith.mulf %1077, %1089 : vector<8x16xf32>
    %1091 = arith.addf %1086, %1090 : vector<8x16xf32>
    %1092 = math.tanh %1091 : vector<8x16xf32>
    %cst_299 = arith.constant 1.000000e+00 : f32
    %1093 = vector.broadcast %cst_299 : f32 to vector<8x16xf32>
    %1094 = arith.subf %1093, %1085 : vector<8x16xf32>
    %1095 = arith.mulf %1094, %1092 : vector<8x16xf32>
    %1096 = arith.mulf %1085, %1065 : vector<8x16xf32>
    %1097 = arith.addf %1095, %1096 : vector<8x16xf32>
    %c40_300 = arith.constant 40 : index
    %c0_301 = arith.constant 0 : index
    %1098 = vector.load %arg29[%c40_300, %c0_301] : memref<64x16xf32, #tpu.memory_space<vmem>>, vector<8x16xf32>
    tpu.vector_store %arg29[%c40_300, %c0_301], %1097 {strides = array<i32>} : memref<64x16xf32, #tpu.memory_space<vmem>>, vector<8x16xf32>,
    %c48_302 = arith.constant 48 : index
    %c0_303 = arith.constant 0 : index
    %1099 = vector.load %arg25[%c48_302, %c0_303] : memref<64x384xf32, #tpu.memory_space<vmem>>, vector<8x384xf32>
    %1100 = arith.truncf %1097 : vector<8x16xf32> to vector<8x16xbf16>
    %cst_304 = arith.constant dense<0.000000e+00> : vector<8x384xf32>
    %1101 = tpu.matmul %1100, %905, %cst_304 {dimension_numbers = #tpu.dot_dimension_numbers<[1], [0], [0], [1], [0, 0, 1, 1], [], []>} : vector<8x16xbf16>, vector<16x384xbf16>, vector<8x384xf32> -> vector<8x384xf32>
    %1102 = vector.extract_strided_slice %1099 {offsets = [0, 0], sizes = [8, 16], strides = [1, 1]} : vector<8x384xf32> to vector<8x16xf32>
    %1103 = vector.extract_strided_slice %1101 {offsets = [0, 0], sizes = [8, 16], strides = [1, 1]} : vector<8x384xf32> to vector<8x16xf32>
    %1104 = arith.addf %1102, %1103 : vector<8x16xf32>
    %1105 = arith.negf %1104 : vector<8x16xf32>
    %1106 = math.exp %1105 : vector<8x16xf32>
    %cst_305 = arith.constant 1.000000e+00 : f32
    %1107 = vector.broadcast %cst_305 : f32 to vector<8x16xf32>
    %1108 = arith.addf %1107, %1106 : vector<8x16xf32>
    %1109 = arith.divf %1107, %1108 : vector<8x16xf32>
    %1110 = vector.extract_strided_slice %1099 {offsets = [0, 128], sizes = [8, 16], strides = [1, 1]} : vector<8x384xf32> to vector<8x16xf32>
    %1111 = vector.extract_strided_slice %1101 {offsets = [0, 128], sizes = [8, 16], strides = [1, 1]} : vector<8x384xf32> to vector<8x16xf32>
    %1112 = arith.addf %1110, %1111 : vector<8x16xf32>
    %1113 = arith.negf %1112 : vector<8x16xf32>
    %1114 = math.exp %1113 : vector<8x16xf32>
    %cst_306 = arith.constant 1.000000e+00 : f32
    %1115 = vector.broadcast %cst_306 : f32 to vector<8x16xf32>
    %1116 = arith.addf %1115, %1114 : vector<8x16xf32>
    %1117 = arith.divf %1115, %1116 : vector<8x16xf32>
    %1118 = vector.extract_strided_slice %1099 {offsets = [0, 256], sizes = [8, 16], strides = [1, 1]} : vector<8x384xf32> to vector<8x16xf32>
    %1119 = vector.extract_strided_slice %1101 {offsets = [0, 256], sizes = [8, 16], strides = [1, 1]} : vector<8x384xf32> to vector<8x16xf32>
    %1120 = vector.broadcast %904 : vector<1x16xf32> to vector<8x16xf32>
    %1121 = arith.addf %1119, %1120 : vector<8x16xf32>
    %1122 = arith.mulf %1109, %1121 : vector<8x16xf32>
    %1123 = arith.addf %1118, %1122 : vector<8x16xf32>
    %1124 = math.tanh %1123 : vector<8x16xf32>
    %cst_307 = arith.constant 1.000000e+00 : f32
    %1125 = vector.broadcast %cst_307 : f32 to vector<8x16xf32>
    %1126 = arith.subf %1125, %1117 : vector<8x16xf32>
    %1127 = arith.mulf %1126, %1124 : vector<8x16xf32>
    %1128 = arith.mulf %1117, %1097 : vector<8x16xf32>
    %1129 = arith.addf %1127, %1128 : vector<8x16xf32>
    %c48_308 = arith.constant 48 : index
    %c0_309 = arith.constant 0 : index
    %1130 = vector.load %arg29[%c48_308, %c0_309] : memref<64x16xf32, #tpu.memory_space<vmem>>, vector<8x16xf32>
    tpu.vector_store %arg29[%c48_308, %c0_309], %1129 {strides = array<i32>} : memref<64x16xf32, #tpu.memory_space<vmem>>, vector<8x16xf32>,
    %c56_310 = arith.constant 56 : index
    %c0_311 = arith.constant 0 : index
    %1131 = vector.load %arg25[%c56_310, %c0_311] : memref<64x384xf32, #tpu.memory_space<vmem>>, vector<8x384xf32>
    %1132 = arith.truncf %1129 : vector<8x16xf32> to vector<8x16xbf16>
    %cst_312 = arith.constant dense<0.000000e+00> : vector<8x384xf32>
    %1133 = tpu.matmul %1132, %905, %cst_312 {dimension_numbers = #tpu.dot_dimension_numbers<[1], [0], [0], [1], [0, 0, 1, 1], [], []>} : vector<8x16xbf16>, vector<16x384xbf16>, vector<8x384xf32> -> vector<8x384xf32>
    %1134 = vector.extract_strided_slice %1131 {offsets = [0, 0], sizes = [8, 16], strides = [1, 1]} : vector<8x384xf32> to vector<8x16xf32>
    %1135 = vector.extract_strided_slice %1133 {offsets = [0, 0], sizes = [8, 16], strides = [1, 1]} : vector<8x384xf32> to vector<8x16xf32>
    %1136 = arith.addf %1134, %1135 : vector<8x16xf32>
    %1137 = arith.negf %1136 : vector<8x16xf32>
    %1138 = math.exp %1137 : vector<8x16xf32>
    %cst_313 = arith.constant 1.000000e+00 : f32
    %1139 = vector.broadcast %cst_313 : f32 to vector<8x16xf32>
    %1140 = arith.addf %1139, %1138 : vector<8x16xf32>
    %1141 = arith.divf %1139, %1140 : vector<8x16xf32>
    %1142 = vector.extract_strided_slice %1131 {offsets = [0, 128], sizes = [8, 16], strides = [1, 1]} : vector<8x384xf32> to vector<8x16xf32>
    %1143 = vector.extract_strided_slice %1133 {offsets = [0, 128], sizes = [8, 16], strides = [1, 1]} : vector<8x384xf32> to vector<8x16xf32>
    %1144 = arith.addf %1142, %1143 : vector<8x16xf32>
    %1145 = arith.negf %1144 : vector<8x16xf32>
    %1146 = math.exp %1145 : vector<8x16xf32>
    %cst_314 = arith.constant 1.000000e+00 : f32
    %1147 = vector.broadcast %cst_314 : f32 to vector<8x16xf32>
    %1148 = arith.addf %1147, %1146 : vector<8x16xf32>
    %1149 = arith.divf %1147, %1148 : vector<8x16xf32>
    %1150 = vector.extract_strided_slice %1131 {offsets = [0, 256], sizes = [8, 16], strides = [1, 1]} : vector<8x384xf32> to vector<8x16xf32>
    %1151 = vector.extract_strided_slice %1133 {offsets = [0, 256], sizes = [8, 16], strides = [1, 1]} : vector<8x384xf32> to vector<8x16xf32>
    %1152 = vector.broadcast %904 : vector<1x16xf32> to vector<8x16xf32>
    %1153 = arith.addf %1151, %1152 : vector<8x16xf32>
    %1154 = arith.mulf %1141, %1153 : vector<8x16xf32>
    %1155 = arith.addf %1150, %1154 : vector<8x16xf32>
    %1156 = math.tanh %1155 : vector<8x16xf32>
    %cst_315 = arith.constant 1.000000e+00 : f32
    %1157 = vector.broadcast %cst_315 : f32 to vector<8x16xf32>
    %1158 = arith.subf %1157, %1149 : vector<8x16xf32>
    %1159 = arith.mulf %1158, %1156 : vector<8x16xf32>
    %1160 = arith.mulf %1149, %1129 : vector<8x16xf32>
    %1161 = arith.addf %1159, %1160 : vector<8x16xf32>
    %c56_316 = arith.constant 56 : index
    %c0_317 = arith.constant 0 : index
    %1162 = vector.load %arg29[%c56_316, %c0_317] : memref<64x16xf32, #tpu.memory_space<vmem>>, vector<8x16xf32>
    tpu.vector_store %arg29[%c56_316, %c0_317], %1161 {strides = array<i32>} : memref<64x16xf32, #tpu.memory_space<vmem>>, vector<8x16xf32>,
    %c0_318 = arith.constant 0 : index
    %c0_319 = arith.constant 0 : index
    %1163 = vector.load %arg29[%c0_318, %c0_319] : memref<64x16xf32, #tpu.memory_space<vmem>>, vector<64x16xf32>
    %1164 = arith.truncf %1163 : vector<64x16xf32> to vector<64x16xbf16>
    %c0_320 = arith.constant 0 : index
    %c0_321 = arith.constant 0 : index
    %1165 = vector.load %arg18[%c0_320, %c0_321] : memref<2x384xf32, #tpu.memory_space<vmem>>, vector<2x384xf32>
    %c0_322 = arith.constant 0 : index
    %c0_323 = arith.constant 0 : index
    %1166 = vector.load %arg16[%c0_322, %c0_323] : memref<16x384xbf16, #tpu.memory_space<vmem>>, vector<16x384xbf16>
    %cst_324 = arith.constant dense<0.000000e+00> : vector<64x384xf32>
    %1167 = tpu.matmul %1164, %1166, %cst_324 {dimension_numbers = #tpu.dot_dimension_numbers<[1], [0], [0], [1], [0, 0, 1, 1], [], []>} : vector<64x16xbf16>, vector<16x384xbf16>, vector<64x384xf32> -> vector<64x384xf32>
    %1168 = vector.extract_strided_slice %1165 {offsets = [0, 0], sizes = [1, 384], strides = [1, 1]} : vector<2x384xf32> to vector<1x384xf32>
    %1169 = vector.broadcast %1168 : vector<1x384xf32> to vector<64x384xf32>
    %1170 = arith.addf %1167, %1169 : vector<64x384xf32>
    %c0_325 = arith.constant 0 : index
    %c0_326 = arith.constant 0 : index
    %1171 = vector.load %arg25[%c0_325, %c0_326] : memref<64x384xf32, #tpu.memory_space<vmem>>, vector<64x384xf32>
    tpu.vector_store %arg25[%c0_325, %c0_326], %1170 {strides = array<i32>} : memref<64x384xf32, #tpu.memory_space<vmem>>, vector<64x384xf32>,
    %1172 = vector.extract_strided_slice %1165 {offsets = [1, 0], sizes = [1, 16], strides = [1, 1]} : vector<2x384xf32> to vector<1x16xf32>
    %c0_327 = arith.constant 0 : index
    %c0_328 = arith.constant 0 : index
    %1173 = vector.load %arg17[%c0_327, %c0_328] : memref<16x384xbf16, #tpu.memory_space<vmem>>, vector<16x384xbf16>
    %cst_329 = arith.constant 0.000000e+00 : f32
    %1174 = vector.broadcast %cst_329 : f32 to vector<8x16xf32>
    %c0_330 = arith.constant 0 : index
    %c0_331 = arith.constant 0 : index
    %1175 = vector.load %arg25[%c0_330, %c0_331] : memref<64x384xf32, #tpu.memory_space<vmem>>, vector<8x384xf32>
    %1176 = arith.truncf %1174 : vector<8x16xf32> to vector<8x16xbf16>
    %cst_332 = arith.constant dense<0.000000e+00> : vector<8x384xf32>
    %1177 = tpu.matmul %1176, %1173, %cst_332 {dimension_numbers = #tpu.dot_dimension_numbers<[1], [0], [0], [1], [0, 0, 1, 1], [], []>} : vector<8x16xbf16>, vector<16x384xbf16>, vector<8x384xf32> -> vector<8x384xf32>
    %1178 = vector.extract_strided_slice %1175 {offsets = [0, 0], sizes = [8, 16], strides = [1, 1]} : vector<8x384xf32> to vector<8x16xf32>
    %1179 = vector.extract_strided_slice %1177 {offsets = [0, 0], sizes = [8, 16], strides = [1, 1]} : vector<8x384xf32> to vector<8x16xf32>
    %1180 = arith.addf %1178, %1179 : vector<8x16xf32>
    %1181 = arith.negf %1180 : vector<8x16xf32>
    %1182 = math.exp %1181 : vector<8x16xf32>
    %cst_333 = arith.constant 1.000000e+00 : f32
    %1183 = vector.broadcast %cst_333 : f32 to vector<8x16xf32>
    %1184 = arith.addf %1183, %1182 : vector<8x16xf32>
    %1185 = arith.divf %1183, %1184 : vector<8x16xf32>
    %1186 = vector.extract_strided_slice %1175 {offsets = [0, 128], sizes = [8, 16], strides = [1, 1]} : vector<8x384xf32> to vector<8x16xf32>
    %1187 = vector.extract_strided_slice %1177 {offsets = [0, 128], sizes = [8, 16], strides = [1, 1]} : vector<8x384xf32> to vector<8x16xf32>
    %1188 = arith.addf %1186, %1187 : vector<8x16xf32>
    %1189 = arith.negf %1188 : vector<8x16xf32>
    %1190 = math.exp %1189 : vector<8x16xf32>
    %cst_334 = arith.constant 1.000000e+00 : f32
    %1191 = vector.broadcast %cst_334 : f32 to vector<8x16xf32>
    %1192 = arith.addf %1191, %1190 : vector<8x16xf32>
    %1193 = arith.divf %1191, %1192 : vector<8x16xf32>
    %1194 = vector.extract_strided_slice %1175 {offsets = [0, 256], sizes = [8, 16], strides = [1, 1]} : vector<8x384xf32> to vector<8x16xf32>
    %1195 = vector.extract_strided_slice %1177 {offsets = [0, 256], sizes = [8, 16], strides = [1, 1]} : vector<8x384xf32> to vector<8x16xf32>
    %1196 = vector.broadcast %1172 : vector<1x16xf32> to vector<8x16xf32>
    %1197 = arith.addf %1195, %1196 : vector<8x16xf32>
    %1198 = arith.mulf %1185, %1197 : vector<8x16xf32>
    %1199 = arith.addf %1194, %1198 : vector<8x16xf32>
    %1200 = math.tanh %1199 : vector<8x16xf32>
    %cst_335 = arith.constant 1.000000e+00 : f32
    %1201 = vector.broadcast %cst_335 : f32 to vector<8x16xf32>
    %1202 = arith.subf %1201, %1193 : vector<8x16xf32>
    %1203 = arith.mulf %1202, %1200 : vector<8x16xf32>
    %1204 = arith.mulf %1193, %1174 : vector<8x16xf32>
    %1205 = arith.addf %1203, %1204 : vector<8x16xf32>
    %c0_336 = arith.constant 0 : index
    %c0_337 = arith.constant 0 : index
    %1206 = vector.load %arg30[%c0_336, %c0_337] : memref<64x16xf32, #tpu.memory_space<vmem>>, vector<8x16xf32>
    tpu.vector_store %arg30[%c0_336, %c0_337], %1205 {strides = array<i32>} : memref<64x16xf32, #tpu.memory_space<vmem>>, vector<8x16xf32>,
    %c8_338 = arith.constant 8 : index
    %c0_339 = arith.constant 0 : index
    %1207 = vector.load %arg25[%c8_338, %c0_339] : memref<64x384xf32, #tpu.memory_space<vmem>>, vector<8x384xf32>
    %1208 = arith.truncf %1205 : vector<8x16xf32> to vector<8x16xbf16>
    %cst_340 = arith.constant dense<0.000000e+00> : vector<8x384xf32>
    %1209 = tpu.matmul %1208, %1173, %cst_340 {dimension_numbers = #tpu.dot_dimension_numbers<[1], [0], [0], [1], [0, 0, 1, 1], [], []>} : vector<8x16xbf16>, vector<16x384xbf16>, vector<8x384xf32> -> vector<8x384xf32>
    %1210 = vector.extract_strided_slice %1207 {offsets = [0, 0], sizes = [8, 16], strides = [1, 1]} : vector<8x384xf32> to vector<8x16xf32>
    %1211 = vector.extract_strided_slice %1209 {offsets = [0, 0], sizes = [8, 16], strides = [1, 1]} : vector<8x384xf32> to vector<8x16xf32>
    %1212 = arith.addf %1210, %1211 : vector<8x16xf32>
    %1213 = arith.negf %1212 : vector<8x16xf32>
    %1214 = math.exp %1213 : vector<8x16xf32>
    %cst_341 = arith.constant 1.000000e+00 : f32
    %1215 = vector.broadcast %cst_341 : f32 to vector<8x16xf32>
    %1216 = arith.addf %1215, %1214 : vector<8x16xf32>
    %1217 = arith.divf %1215, %1216 : vector<8x16xf32>
    %1218 = vector.extract_strided_slice %1207 {offsets = [0, 128], sizes = [8, 16], strides = [1, 1]} : vector<8x384xf32> to vector<8x16xf32>
    %1219 = vector.extract_strided_slice %1209 {offsets = [0, 128], sizes = [8, 16], strides = [1, 1]} : vector<8x384xf32> to vector<8x16xf32>
    %1220 = arith.addf %1218, %1219 : vector<8x16xf32>
    %1221 = arith.negf %1220 : vector<8x16xf32>
    %1222 = math.exp %1221 : vector<8x16xf32>
    %cst_342 = arith.constant 1.000000e+00 : f32
    %1223 = vector.broadcast %cst_342 : f32 to vector<8x16xf32>
    %1224 = arith.addf %1223, %1222 : vector<8x16xf32>
    %1225 = arith.divf %1223, %1224 : vector<8x16xf32>
    %1226 = vector.extract_strided_slice %1207 {offsets = [0, 256], sizes = [8, 16], strides = [1, 1]} : vector<8x384xf32> to vector<8x16xf32>
    %1227 = vector.extract_strided_slice %1209 {offsets = [0, 256], sizes = [8, 16], strides = [1, 1]} : vector<8x384xf32> to vector<8x16xf32>
    %1228 = vector.broadcast %1172 : vector<1x16xf32> to vector<8x16xf32>
    %1229 = arith.addf %1227, %1228 : vector<8x16xf32>
    %1230 = arith.mulf %1217, %1229 : vector<8x16xf32>
    %1231 = arith.addf %1226, %1230 : vector<8x16xf32>
    %1232 = math.tanh %1231 : vector<8x16xf32>
    %cst_343 = arith.constant 1.000000e+00 : f32
    %1233 = vector.broadcast %cst_343 : f32 to vector<8x16xf32>
    %1234 = arith.subf %1233, %1225 : vector<8x16xf32>
    %1235 = arith.mulf %1234, %1232 : vector<8x16xf32>
    %1236 = arith.mulf %1225, %1205 : vector<8x16xf32>
    %1237 = arith.addf %1235, %1236 : vector<8x16xf32>
    %c8_344 = arith.constant 8 : index
    %c0_345 = arith.constant 0 : index
    %1238 = vector.load %arg30[%c8_344, %c0_345] : memref<64x16xf32, #tpu.memory_space<vmem>>, vector<8x16xf32>
    tpu.vector_store %arg30[%c8_344, %c0_345], %1237 {strides = array<i32>} : memref<64x16xf32, #tpu.memory_space<vmem>>, vector<8x16xf32>,
    %c16_346 = arith.constant 16 : index
    %c0_347 = arith.constant 0 : index
    %1239 = vector.load %arg25[%c16_346, %c0_347] : memref<64x384xf32, #tpu.memory_space<vmem>>, vector<8x384xf32>
    %1240 = arith.truncf %1237 : vector<8x16xf32> to vector<8x16xbf16>
    %cst_348 = arith.constant dense<0.000000e+00> : vector<8x384xf32>
    %1241 = tpu.matmul %1240, %1173, %cst_348 {dimension_numbers = #tpu.dot_dimension_numbers<[1], [0], [0], [1], [0, 0, 1, 1], [], []>} : vector<8x16xbf16>, vector<16x384xbf16>, vector<8x384xf32> -> vector<8x384xf32>
    %1242 = vector.extract_strided_slice %1239 {offsets = [0, 0], sizes = [8, 16], strides = [1, 1]} : vector<8x384xf32> to vector<8x16xf32>
    %1243 = vector.extract_strided_slice %1241 {offsets = [0, 0], sizes = [8, 16], strides = [1, 1]} : vector<8x384xf32> to vector<8x16xf32>
    %1244 = arith.addf %1242, %1243 : vector<8x16xf32>
    %1245 = arith.negf %1244 : vector<8x16xf32>
    %1246 = math.exp %1245 : vector<8x16xf32>
    %cst_349 = arith.constant 1.000000e+00 : f32
    %1247 = vector.broadcast %cst_349 : f32 to vector<8x16xf32>
    %1248 = arith.addf %1247, %1246 : vector<8x16xf32>
    %1249 = arith.divf %1247, %1248 : vector<8x16xf32>
    %1250 = vector.extract_strided_slice %1239 {offsets = [0, 128], sizes = [8, 16], strides = [1, 1]} : vector<8x384xf32> to vector<8x16xf32>
    %1251 = vector.extract_strided_slice %1241 {offsets = [0, 128], sizes = [8, 16], strides = [1, 1]} : vector<8x384xf32> to vector<8x16xf32>
    %1252 = arith.addf %1250, %1251 : vector<8x16xf32>
    %1253 = arith.negf %1252 : vector<8x16xf32>
    %1254 = math.exp %1253 : vector<8x16xf32>
    %cst_350 = arith.constant 1.000000e+00 : f32
    %1255 = vector.broadcast %cst_350 : f32 to vector<8x16xf32>
    %1256 = arith.addf %1255, %1254 : vector<8x16xf32>
    %1257 = arith.divf %1255, %1256 : vector<8x16xf32>
    %1258 = vector.extract_strided_slice %1239 {offsets = [0, 256], sizes = [8, 16], strides = [1, 1]} : vector<8x384xf32> to vector<8x16xf32>
    %1259 = vector.extract_strided_slice %1241 {offsets = [0, 256], sizes = [8, 16], strides = [1, 1]} : vector<8x384xf32> to vector<8x16xf32>
    %1260 = vector.broadcast %1172 : vector<1x16xf32> to vector<8x16xf32>
    %1261 = arith.addf %1259, %1260 : vector<8x16xf32>
    %1262 = arith.mulf %1249, %1261 : vector<8x16xf32>
    %1263 = arith.addf %1258, %1262 : vector<8x16xf32>
    %1264 = math.tanh %1263 : vector<8x16xf32>
    %cst_351 = arith.constant 1.000000e+00 : f32
    %1265 = vector.broadcast %cst_351 : f32 to vector<8x16xf32>
    %1266 = arith.subf %1265, %1257 : vector<8x16xf32>
    %1267 = arith.mulf %1266, %1264 : vector<8x16xf32>
    %1268 = arith.mulf %1257, %1237 : vector<8x16xf32>
    %1269 = arith.addf %1267, %1268 : vector<8x16xf32>
    %c16_352 = arith.constant 16 : index
    %c0_353 = arith.constant 0 : index
    %1270 = vector.load %arg30[%c16_352, %c0_353] : memref<64x16xf32, #tpu.memory_space<vmem>>, vector<8x16xf32>
    tpu.vector_store %arg30[%c16_352, %c0_353], %1269 {strides = array<i32>} : memref<64x16xf32, #tpu.memory_space<vmem>>, vector<8x16xf32>,
    %c24_354 = arith.constant 24 : index
    %c0_355 = arith.constant 0 : index
    %1271 = vector.load %arg25[%c24_354, %c0_355] : memref<64x384xf32, #tpu.memory_space<vmem>>, vector<8x384xf32>
    %1272 = arith.truncf %1269 : vector<8x16xf32> to vector<8x16xbf16>
    %cst_356 = arith.constant dense<0.000000e+00> : vector<8x384xf32>
    %1273 = tpu.matmul %1272, %1173, %cst_356 {dimension_numbers = #tpu.dot_dimension_numbers<[1], [0], [0], [1], [0, 0, 1, 1], [], []>} : vector<8x16xbf16>, vector<16x384xbf16>, vector<8x384xf32> -> vector<8x384xf32>
    %1274 = vector.extract_strided_slice %1271 {offsets = [0, 0], sizes = [8, 16], strides = [1, 1]} : vector<8x384xf32> to vector<8x16xf32>
    %1275 = vector.extract_strided_slice %1273 {offsets = [0, 0], sizes = [8, 16], strides = [1, 1]} : vector<8x384xf32> to vector<8x16xf32>
    %1276 = arith.addf %1274, %1275 : vector<8x16xf32>
    %1277 = arith.negf %1276 : vector<8x16xf32>
    %1278 = math.exp %1277 : vector<8x16xf32>
    %cst_357 = arith.constant 1.000000e+00 : f32
    %1279 = vector.broadcast %cst_357 : f32 to vector<8x16xf32>
    %1280 = arith.addf %1279, %1278 : vector<8x16xf32>
    %1281 = arith.divf %1279, %1280 : vector<8x16xf32>
    %1282 = vector.extract_strided_slice %1271 {offsets = [0, 128], sizes = [8, 16], strides = [1, 1]} : vector<8x384xf32> to vector<8x16xf32>
    %1283 = vector.extract_strided_slice %1273 {offsets = [0, 128], sizes = [8, 16], strides = [1, 1]} : vector<8x384xf32> to vector<8x16xf32>
    %1284 = arith.addf %1282, %1283 : vector<8x16xf32>
    %1285 = arith.negf %1284 : vector<8x16xf32>
    %1286 = math.exp %1285 : vector<8x16xf32>
    %cst_358 = arith.constant 1.000000e+00 : f32
    %1287 = vector.broadcast %cst_358 : f32 to vector<8x16xf32>
    %1288 = arith.addf %1287, %1286 : vector<8x16xf32>
    %1289 = arith.divf %1287, %1288 : vector<8x16xf32>
    %1290 = vector.extract_strided_slice %1271 {offsets = [0, 256], sizes = [8, 16], strides = [1, 1]} : vector<8x384xf32> to vector<8x16xf32>
    %1291 = vector.extract_strided_slice %1273 {offsets = [0, 256], sizes = [8, 16], strides = [1, 1]} : vector<8x384xf32> to vector<8x16xf32>
    %1292 = vector.broadcast %1172 : vector<1x16xf32> to vector<8x16xf32>
    %1293 = arith.addf %1291, %1292 : vector<8x16xf32>
    %1294 = arith.mulf %1281, %1293 : vector<8x16xf32>
    %1295 = arith.addf %1290, %1294 : vector<8x16xf32>
    %1296 = math.tanh %1295 : vector<8x16xf32>
    %cst_359 = arith.constant 1.000000e+00 : f32
    %1297 = vector.broadcast %cst_359 : f32 to vector<8x16xf32>
    %1298 = arith.subf %1297, %1289 : vector<8x16xf32>
    %1299 = arith.mulf %1298, %1296 : vector<8x16xf32>
    %1300 = arith.mulf %1289, %1269 : vector<8x16xf32>
    %1301 = arith.addf %1299, %1300 : vector<8x16xf32>
    %c24_360 = arith.constant 24 : index
    %c0_361 = arith.constant 0 : index
    %1302 = vector.load %arg30[%c24_360, %c0_361] : memref<64x16xf32, #tpu.memory_space<vmem>>, vector<8x16xf32>
    tpu.vector_store %arg30[%c24_360, %c0_361], %1301 {strides = array<i32>} : memref<64x16xf32, #tpu.memory_space<vmem>>, vector<8x16xf32>,
    %c32_362 = arith.constant 32 : index
    %c0_363 = arith.constant 0 : index
    %1303 = vector.load %arg25[%c32_362, %c0_363] : memref<64x384xf32, #tpu.memory_space<vmem>>, vector<8x384xf32>
    %1304 = arith.truncf %1301 : vector<8x16xf32> to vector<8x16xbf16>
    %cst_364 = arith.constant dense<0.000000e+00> : vector<8x384xf32>
    %1305 = tpu.matmul %1304, %1173, %cst_364 {dimension_numbers = #tpu.dot_dimension_numbers<[1], [0], [0], [1], [0, 0, 1, 1], [], []>} : vector<8x16xbf16>, vector<16x384xbf16>, vector<8x384xf32> -> vector<8x384xf32>
    %1306 = vector.extract_strided_slice %1303 {offsets = [0, 0], sizes = [8, 16], strides = [1, 1]} : vector<8x384xf32> to vector<8x16xf32>
    %1307 = vector.extract_strided_slice %1305 {offsets = [0, 0], sizes = [8, 16], strides = [1, 1]} : vector<8x384xf32> to vector<8x16xf32>
    %1308 = arith.addf %1306, %1307 : vector<8x16xf32>
    %1309 = arith.negf %1308 : vector<8x16xf32>
    %1310 = math.exp %1309 : vector<8x16xf32>
    %cst_365 = arith.constant 1.000000e+00 : f32
    %1311 = vector.broadcast %cst_365 : f32 to vector<8x16xf32>
    %1312 = arith.addf %1311, %1310 : vector<8x16xf32>
    %1313 = arith.divf %1311, %1312 : vector<8x16xf32>
    %1314 = vector.extract_strided_slice %1303 {offsets = [0, 128], sizes = [8, 16], strides = [1, 1]} : vector<8x384xf32> to vector<8x16xf32>
    %1315 = vector.extract_strided_slice %1305 {offsets = [0, 128], sizes = [8, 16], strides = [1, 1]} : vector<8x384xf32> to vector<8x16xf32>
    %1316 = arith.addf %1314, %1315 : vector<8x16xf32>
    %1317 = arith.negf %1316 : vector<8x16xf32>
    %1318 = math.exp %1317 : vector<8x16xf32>
    %cst_366 = arith.constant 1.000000e+00 : f32
    %1319 = vector.broadcast %cst_366 : f32 to vector<8x16xf32>
    %1320 = arith.addf %1319, %1318 : vector<8x16xf32>
    %1321 = arith.divf %1319, %1320 : vector<8x16xf32>
    %1322 = vector.extract_strided_slice %1303 {offsets = [0, 256], sizes = [8, 16], strides = [1, 1]} : vector<8x384xf32> to vector<8x16xf32>
    %1323 = vector.extract_strided_slice %1305 {offsets = [0, 256], sizes = [8, 16], strides = [1, 1]} : vector<8x384xf32> to vector<8x16xf32>
    %1324 = vector.broadcast %1172 : vector<1x16xf32> to vector<8x16xf32>
    %1325 = arith.addf %1323, %1324 : vector<8x16xf32>
    %1326 = arith.mulf %1313, %1325 : vector<8x16xf32>
    %1327 = arith.addf %1322, %1326 : vector<8x16xf32>
    %1328 = math.tanh %1327 : vector<8x16xf32>
    %cst_367 = arith.constant 1.000000e+00 : f32
    %1329 = vector.broadcast %cst_367 : f32 to vector<8x16xf32>
    %1330 = arith.subf %1329, %1321 : vector<8x16xf32>
    %1331 = arith.mulf %1330, %1328 : vector<8x16xf32>
    %1332 = arith.mulf %1321, %1301 : vector<8x16xf32>
    %1333 = arith.addf %1331, %1332 : vector<8x16xf32>
    %c32_368 = arith.constant 32 : index
    %c0_369 = arith.constant 0 : index
    %1334 = vector.load %arg30[%c32_368, %c0_369] : memref<64x16xf32, #tpu.memory_space<vmem>>, vector<8x16xf32>
    tpu.vector_store %arg30[%c32_368, %c0_369], %1333 {strides = array<i32>} : memref<64x16xf32, #tpu.memory_space<vmem>>, vector<8x16xf32>,
    %c40_370 = arith.constant 40 : index
    %c0_371 = arith.constant 0 : index
    %1335 = vector.load %arg25[%c40_370, %c0_371] : memref<64x384xf32, #tpu.memory_space<vmem>>, vector<8x384xf32>
    %1336 = arith.truncf %1333 : vector<8x16xf32> to vector<8x16xbf16>
    %cst_372 = arith.constant dense<0.000000e+00> : vector<8x384xf32>
    %1337 = tpu.matmul %1336, %1173, %cst_372 {dimension_numbers = #tpu.dot_dimension_numbers<[1], [0], [0], [1], [0, 0, 1, 1], [], []>} : vector<8x16xbf16>, vector<16x384xbf16>, vector<8x384xf32> -> vector<8x384xf32>
    %1338 = vector.extract_strided_slice %1335 {offsets = [0, 0], sizes = [8, 16], strides = [1, 1]} : vector<8x384xf32> to vector<8x16xf32>
    %1339 = vector.extract_strided_slice %1337 {offsets = [0, 0], sizes = [8, 16], strides = [1, 1]} : vector<8x384xf32> to vector<8x16xf32>
    %1340 = arith.addf %1338, %1339 : vector<8x16xf32>
    %1341 = arith.negf %1340 : vector<8x16xf32>
    %1342 = math.exp %1341 : vector<8x16xf32>
    %cst_373 = arith.constant 1.000000e+00 : f32
    %1343 = vector.broadcast %cst_373 : f32 to vector<8x16xf32>
    %1344 = arith.addf %1343, %1342 : vector<8x16xf32>
    %1345 = arith.divf %1343, %1344 : vector<8x16xf32>
    %1346 = vector.extract_strided_slice %1335 {offsets = [0, 128], sizes = [8, 16], strides = [1, 1]} : vector<8x384xf32> to vector<8x16xf32>
    %1347 = vector.extract_strided_slice %1337 {offsets = [0, 128], sizes = [8, 16], strides = [1, 1]} : vector<8x384xf32> to vector<8x16xf32>
    %1348 = arith.addf %1346, %1347 : vector<8x16xf32>
    %1349 = arith.negf %1348 : vector<8x16xf32>
    %1350 = math.exp %1349 : vector<8x16xf32>
    %cst_374 = arith.constant 1.000000e+00 : f32
    %1351 = vector.broadcast %cst_374 : f32 to vector<8x16xf32>
    %1352 = arith.addf %1351, %1350 : vector<8x16xf32>
    %1353 = arith.divf %1351, %1352 : vector<8x16xf32>
    %1354 = vector.extract_strided_slice %1335 {offsets = [0, 256], sizes = [8, 16], strides = [1, 1]} : vector<8x384xf32> to vector<8x16xf32>
    %1355 = vector.extract_strided_slice %1337 {offsets = [0, 256], sizes = [8, 16], strides = [1, 1]} : vector<8x384xf32> to vector<8x16xf32>
    %1356 = vector.broadcast %1172 : vector<1x16xf32> to vector<8x16xf32>
    %1357 = arith.addf %1355, %1356 : vector<8x16xf32>
    %1358 = arith.mulf %1345, %1357 : vector<8x16xf32>
    %1359 = arith.addf %1354, %1358 : vector<8x16xf32>
    %1360 = math.tanh %1359 : vector<8x16xf32>
    %cst_375 = arith.constant 1.000000e+00 : f32
    %1361 = vector.broadcast %cst_375 : f32 to vector<8x16xf32>
    %1362 = arith.subf %1361, %1353 : vector<8x16xf32>
    %1363 = arith.mulf %1362, %1360 : vector<8x16xf32>
    %1364 = arith.mulf %1353, %1333 : vector<8x16xf32>
    %1365 = arith.addf %1363, %1364 : vector<8x16xf32>
    %c40_376 = arith.constant 40 : index
    %c0_377 = arith.constant 0 : index
    %1366 = vector.load %arg30[%c40_376, %c0_377] : memref<64x16xf32, #tpu.memory_space<vmem>>, vector<8x16xf32>
    tpu.vector_store %arg30[%c40_376, %c0_377], %1365 {strides = array<i32>} : memref<64x16xf32, #tpu.memory_space<vmem>>, vector<8x16xf32>,
    %c48_378 = arith.constant 48 : index
    %c0_379 = arith.constant 0 : index
    %1367 = vector.load %arg25[%c48_378, %c0_379] : memref<64x384xf32, #tpu.memory_space<vmem>>, vector<8x384xf32>
    %1368 = arith.truncf %1365 : vector<8x16xf32> to vector<8x16xbf16>
    %cst_380 = arith.constant dense<0.000000e+00> : vector<8x384xf32>
    %1369 = tpu.matmul %1368, %1173, %cst_380 {dimension_numbers = #tpu.dot_dimension_numbers<[1], [0], [0], [1], [0, 0, 1, 1], [], []>} : vector<8x16xbf16>, vector<16x384xbf16>, vector<8x384xf32> -> vector<8x384xf32>
    %1370 = vector.extract_strided_slice %1367 {offsets = [0, 0], sizes = [8, 16], strides = [1, 1]} : vector<8x384xf32> to vector<8x16xf32>
    %1371 = vector.extract_strided_slice %1369 {offsets = [0, 0], sizes = [8, 16], strides = [1, 1]} : vector<8x384xf32> to vector<8x16xf32>
    %1372 = arith.addf %1370, %1371 : vector<8x16xf32>
    %1373 = arith.negf %1372 : vector<8x16xf32>
    %1374 = math.exp %1373 : vector<8x16xf32>
    %cst_381 = arith.constant 1.000000e+00 : f32
    %1375 = vector.broadcast %cst_381 : f32 to vector<8x16xf32>
    %1376 = arith.addf %1375, %1374 : vector<8x16xf32>
    %1377 = arith.divf %1375, %1376 : vector<8x16xf32>
    %1378 = vector.extract_strided_slice %1367 {offsets = [0, 128], sizes = [8, 16], strides = [1, 1]} : vector<8x384xf32> to vector<8x16xf32>
    %1379 = vector.extract_strided_slice %1369 {offsets = [0, 128], sizes = [8, 16], strides = [1, 1]} : vector<8x384xf32> to vector<8x16xf32>
    %1380 = arith.addf %1378, %1379 : vector<8x16xf32>
    %1381 = arith.negf %1380 : vector<8x16xf32>
    %1382 = math.exp %1381 : vector<8x16xf32>
    %cst_382 = arith.constant 1.000000e+00 : f32
    %1383 = vector.broadcast %cst_382 : f32 to vector<8x16xf32>
    %1384 = arith.addf %1383, %1382 : vector<8x16xf32>
    %1385 = arith.divf %1383, %1384 : vector<8x16xf32>
    %1386 = vector.extract_strided_slice %1367 {offsets = [0, 256], sizes = [8, 16], strides = [1, 1]} : vector<8x384xf32> to vector<8x16xf32>
    %1387 = vector.extract_strided_slice %1369 {offsets = [0, 256], sizes = [8, 16], strides = [1, 1]} : vector<8x384xf32> to vector<8x16xf32>
    %1388 = vector.broadcast %1172 : vector<1x16xf32> to vector<8x16xf32>
    %1389 = arith.addf %1387, %1388 : vector<8x16xf32>
    %1390 = arith.mulf %1377, %1389 : vector<8x16xf32>
    %1391 = arith.addf %1386, %1390 : vector<8x16xf32>
    %1392 = math.tanh %1391 : vector<8x16xf32>
    %cst_383 = arith.constant 1.000000e+00 : f32
    %1393 = vector.broadcast %cst_383 : f32 to vector<8x16xf32>
    %1394 = arith.subf %1393, %1385 : vector<8x16xf32>
    %1395 = arith.mulf %1394, %1392 : vector<8x16xf32>
    %1396 = arith.mulf %1385, %1365 : vector<8x16xf32>
    %1397 = arith.addf %1395, %1396 : vector<8x16xf32>
    %c48_384 = arith.constant 48 : index
    %c0_385 = arith.constant 0 : index
    %1398 = vector.load %arg30[%c48_384, %c0_385] : memref<64x16xf32, #tpu.memory_space<vmem>>, vector<8x16xf32>
    tpu.vector_store %arg30[%c48_384, %c0_385], %1397 {strides = array<i32>} : memref<64x16xf32, #tpu.memory_space<vmem>>, vector<8x16xf32>,
    %c56_386 = arith.constant 56 : index
    %c0_387 = arith.constant 0 : index
    %1399 = vector.load %arg25[%c56_386, %c0_387] : memref<64x384xf32, #tpu.memory_space<vmem>>, vector<8x384xf32>
    %1400 = arith.truncf %1397 : vector<8x16xf32> to vector<8x16xbf16>
    %cst_388 = arith.constant dense<0.000000e+00> : vector<8x384xf32>
    %1401 = tpu.matmul %1400, %1173, %cst_388 {dimension_numbers = #tpu.dot_dimension_numbers<[1], [0], [0], [1], [0, 0, 1, 1], [], []>} : vector<8x16xbf16>, vector<16x384xbf16>, vector<8x384xf32> -> vector<8x384xf32>
    %1402 = vector.extract_strided_slice %1399 {offsets = [0, 0], sizes = [8, 16], strides = [1, 1]} : vector<8x384xf32> to vector<8x16xf32>
    %1403 = vector.extract_strided_slice %1401 {offsets = [0, 0], sizes = [8, 16], strides = [1, 1]} : vector<8x384xf32> to vector<8x16xf32>
    %1404 = arith.addf %1402, %1403 : vector<8x16xf32>
    %1405 = arith.negf %1404 : vector<8x16xf32>
    %1406 = math.exp %1405 : vector<8x16xf32>
    %cst_389 = arith.constant 1.000000e+00 : f32
    %1407 = vector.broadcast %cst_389 : f32 to vector<8x16xf32>
    %1408 = arith.addf %1407, %1406 : vector<8x16xf32>
    %1409 = arith.divf %1407, %1408 : vector<8x16xf32>
    %1410 = vector.extract_strided_slice %1399 {offsets = [0, 128], sizes = [8, 16], strides = [1, 1]} : vector<8x384xf32> to vector<8x16xf32>
    %1411 = vector.extract_strided_slice %1401 {offsets = [0, 128], sizes = [8, 16], strides = [1, 1]} : vector<8x384xf32> to vector<8x16xf32>
    %1412 = arith.addf %1410, %1411 : vector<8x16xf32>
    %1413 = arith.negf %1412 : vector<8x16xf32>
    %1414 = math.exp %1413 : vector<8x16xf32>
    %cst_390 = arith.constant 1.000000e+00 : f32
    %1415 = vector.broadcast %cst_390 : f32 to vector<8x16xf32>
    %1416 = arith.addf %1415, %1414 : vector<8x16xf32>
    %1417 = arith.divf %1415, %1416 : vector<8x16xf32>
    %1418 = vector.extract_strided_slice %1399 {offsets = [0, 256], sizes = [8, 16], strides = [1, 1]} : vector<8x384xf32> to vector<8x16xf32>
    %1419 = vector.extract_strided_slice %1401 {offsets = [0, 256], sizes = [8, 16], strides = [1, 1]} : vector<8x384xf32> to vector<8x16xf32>
    %1420 = vector.broadcast %1172 : vector<1x16xf32> to vector<8x16xf32>
    %1421 = arith.addf %1419, %1420 : vector<8x16xf32>
    %1422 = arith.mulf %1409, %1421 : vector<8x16xf32>
    %1423 = arith.addf %1418, %1422 : vector<8x16xf32>
    %1424 = math.tanh %1423 : vector<8x16xf32>
    %cst_391 = arith.constant 1.000000e+00 : f32
    %1425 = vector.broadcast %cst_391 : f32 to vector<8x16xf32>
    %1426 = arith.subf %1425, %1417 : vector<8x16xf32>
    %1427 = arith.mulf %1426, %1424 : vector<8x16xf32>
    %1428 = arith.mulf %1417, %1397 : vector<8x16xf32>
    %1429 = arith.addf %1427, %1428 : vector<8x16xf32>
    %c56_392 = arith.constant 56 : index
    %c0_393 = arith.constant 0 : index
    %1430 = vector.load %arg30[%c56_392, %c0_393] : memref<64x16xf32, #tpu.memory_space<vmem>>, vector<8x16xf32>
    tpu.vector_store %arg30[%c56_392, %c0_393], %1429 {strides = array<i32>} : memref<64x16xf32, #tpu.memory_space<vmem>>, vector<8x16xf32>,
    %c0_394 = arith.constant 0 : index
    %c0_395 = arith.constant 0 : index
    %1431 = vector.load %arg30[%c0_394, %c0_395] : memref<64x16xf32, #tpu.memory_space<vmem>>, vector<64x16xf32>
    %1432 = arith.truncf %1431 : vector<64x16xf32> to vector<64x16xbf16>
    %c0_396 = arith.constant 0 : index
    %c0_397 = arith.constant 0 : index
    %1433 = vector.load %arg21[%c0_396, %c0_397] : memref<2x384xf32, #tpu.memory_space<vmem>>, vector<2x384xf32>
    %c0_398 = arith.constant 0 : index
    %c0_399 = arith.constant 0 : index
    %1434 = vector.load %arg19[%c0_398, %c0_399] : memref<16x384xbf16, #tpu.memory_space<vmem>>, vector<16x384xbf16>
    %cst_400 = arith.constant dense<0.000000e+00> : vector<64x384xf32>
    %1435 = tpu.matmul %1432, %1434, %cst_400 {dimension_numbers = #tpu.dot_dimension_numbers<[1], [0], [0], [1], [0, 0, 1, 1], [], []>} : vector<64x16xbf16>, vector<16x384xbf16>, vector<64x384xf32> -> vector<64x384xf32>
    %1436 = vector.extract_strided_slice %1433 {offsets = [0, 0], sizes = [1, 384], strides = [1, 1]} : vector<2x384xf32> to vector<1x384xf32>
    %1437 = vector.broadcast %1436 : vector<1x384xf32> to vector<64x384xf32>
    %1438 = arith.addf %1435, %1437 : vector<64x384xf32>
    %c0_401 = arith.constant 0 : index
    %c0_402 = arith.constant 0 : index
    %1439 = vector.load %arg25[%c0_401, %c0_402] : memref<64x384xf32, #tpu.memory_space<vmem>>, vector<64x384xf32>
    tpu.vector_store %arg25[%c0_401, %c0_402], %1438 {strides = array<i32>} : memref<64x384xf32, #tpu.memory_space<vmem>>, vector<64x384xf32>,
    %1440 = vector.extract_strided_slice %1433 {offsets = [1, 0], sizes = [1, 16], strides = [1, 1]} : vector<2x384xf32> to vector<1x16xf32>
    %c0_403 = arith.constant 0 : index
    %c0_404 = arith.constant 0 : index
    %1441 = vector.load %arg20[%c0_403, %c0_404] : memref<16x384xbf16, #tpu.memory_space<vmem>>, vector<16x384xbf16>
    %cst_405 = arith.constant 0.000000e+00 : f32
    %1442 = vector.broadcast %cst_405 : f32 to vector<8x16xf32>
    %c0_406 = arith.constant 0 : index
    %c0_407 = arith.constant 0 : index
    %1443 = vector.load %arg25[%c0_406, %c0_407] : memref<64x384xf32, #tpu.memory_space<vmem>>, vector<8x384xf32>
    %1444 = arith.truncf %1442 : vector<8x16xf32> to vector<8x16xbf16>
    %cst_408 = arith.constant dense<0.000000e+00> : vector<8x384xf32>
    %1445 = tpu.matmul %1444, %1441, %cst_408 {dimension_numbers = #tpu.dot_dimension_numbers<[1], [0], [0], [1], [0, 0, 1, 1], [], []>} : vector<8x16xbf16>, vector<16x384xbf16>, vector<8x384xf32> -> vector<8x384xf32>
    %1446 = vector.extract_strided_slice %1443 {offsets = [0, 0], sizes = [8, 16], strides = [1, 1]} : vector<8x384xf32> to vector<8x16xf32>
    %1447 = vector.extract_strided_slice %1445 {offsets = [0, 0], sizes = [8, 16], strides = [1, 1]} : vector<8x384xf32> to vector<8x16xf32>
    %1448 = arith.addf %1446, %1447 : vector<8x16xf32>
    %1449 = arith.negf %1448 : vector<8x16xf32>
    %1450 = math.exp %1449 : vector<8x16xf32>
    %cst_409 = arith.constant 1.000000e+00 : f32
    %1451 = vector.broadcast %cst_409 : f32 to vector<8x16xf32>
    %1452 = arith.addf %1451, %1450 : vector<8x16xf32>
    %1453 = arith.divf %1451, %1452 : vector<8x16xf32>
    %1454 = vector.extract_strided_slice %1443 {offsets = [0, 128], sizes = [8, 16], strides = [1, 1]} : vector<8x384xf32> to vector<8x16xf32>
    %1455 = vector.extract_strided_slice %1445 {offsets = [0, 128], sizes = [8, 16], strides = [1, 1]} : vector<8x384xf32> to vector<8x16xf32>
    %1456 = arith.addf %1454, %1455 : vector<8x16xf32>
    %1457 = arith.negf %1456 : vector<8x16xf32>
    %1458 = math.exp %1457 : vector<8x16xf32>
    %cst_410 = arith.constant 1.000000e+00 : f32
    %1459 = vector.broadcast %cst_410 : f32 to vector<8x16xf32>
    %1460 = arith.addf %1459, %1458 : vector<8x16xf32>
    %1461 = arith.divf %1459, %1460 : vector<8x16xf32>
    %1462 = vector.extract_strided_slice %1443 {offsets = [0, 256], sizes = [8, 16], strides = [1, 1]} : vector<8x384xf32> to vector<8x16xf32>
    %1463 = vector.extract_strided_slice %1445 {offsets = [0, 256], sizes = [8, 16], strides = [1, 1]} : vector<8x384xf32> to vector<8x16xf32>
    %1464 = vector.broadcast %1440 : vector<1x16xf32> to vector<8x16xf32>
    %1465 = arith.addf %1463, %1464 : vector<8x16xf32>
    %1466 = arith.mulf %1453, %1465 : vector<8x16xf32>
    %1467 = arith.addf %1462, %1466 : vector<8x16xf32>
    %1468 = math.tanh %1467 : vector<8x16xf32>
    %cst_411 = arith.constant 1.000000e+00 : f32
    %1469 = vector.broadcast %cst_411 : f32 to vector<8x16xf32>
    %1470 = arith.subf %1469, %1461 : vector<8x16xf32>
    %1471 = arith.mulf %1470, %1468 : vector<8x16xf32>
    %1472 = arith.mulf %1461, %1442 : vector<8x16xf32>
    %1473 = arith.addf %1471, %1472 : vector<8x16xf32>
    %c8_412 = arith.constant 8 : index
    %c0_413 = arith.constant 0 : index
    %1474 = vector.load %arg25[%c8_412, %c0_413] : memref<64x384xf32, #tpu.memory_space<vmem>>, vector<8x384xf32>
    %1475 = arith.truncf %1473 : vector<8x16xf32> to vector<8x16xbf16>
    %cst_414 = arith.constant dense<0.000000e+00> : vector<8x384xf32>
    %1476 = tpu.matmul %1475, %1441, %cst_414 {dimension_numbers = #tpu.dot_dimension_numbers<[1], [0], [0], [1], [0, 0, 1, 1], [], []>} : vector<8x16xbf16>, vector<16x384xbf16>, vector<8x384xf32> -> vector<8x384xf32>
    %1477 = vector.extract_strided_slice %1474 {offsets = [0, 0], sizes = [8, 16], strides = [1, 1]} : vector<8x384xf32> to vector<8x16xf32>
    %1478 = vector.extract_strided_slice %1476 {offsets = [0, 0], sizes = [8, 16], strides = [1, 1]} : vector<8x384xf32> to vector<8x16xf32>
    %1479 = arith.addf %1477, %1478 : vector<8x16xf32>
    %1480 = arith.negf %1479 : vector<8x16xf32>
    %1481 = math.exp %1480 : vector<8x16xf32>
    %cst_415 = arith.constant 1.000000e+00 : f32
    %1482 = vector.broadcast %cst_415 : f32 to vector<8x16xf32>
    %1483 = arith.addf %1482, %1481 : vector<8x16xf32>
    %1484 = arith.divf %1482, %1483 : vector<8x16xf32>
    %1485 = vector.extract_strided_slice %1474 {offsets = [0, 128], sizes = [8, 16], strides = [1, 1]} : vector<8x384xf32> to vector<8x16xf32>
    %1486 = vector.extract_strided_slice %1476 {offsets = [0, 128], sizes = [8, 16], strides = [1, 1]} : vector<8x384xf32> to vector<8x16xf32>
    %1487 = arith.addf %1485, %1486 : vector<8x16xf32>
    %1488 = arith.negf %1487 : vector<8x16xf32>
    %1489 = math.exp %1488 : vector<8x16xf32>
    %cst_416 = arith.constant 1.000000e+00 : f32
    %1490 = vector.broadcast %cst_416 : f32 to vector<8x16xf32>
    %1491 = arith.addf %1490, %1489 : vector<8x16xf32>
    %1492 = arith.divf %1490, %1491 : vector<8x16xf32>
    %1493 = vector.extract_strided_slice %1474 {offsets = [0, 256], sizes = [8, 16], strides = [1, 1]} : vector<8x384xf32> to vector<8x16xf32>
    %1494 = vector.extract_strided_slice %1476 {offsets = [0, 256], sizes = [8, 16], strides = [1, 1]} : vector<8x384xf32> to vector<8x16xf32>
    %1495 = vector.broadcast %1440 : vector<1x16xf32> to vector<8x16xf32>
    %1496 = arith.addf %1494, %1495 : vector<8x16xf32>
    %1497 = arith.mulf %1484, %1496 : vector<8x16xf32>
    %1498 = arith.addf %1493, %1497 : vector<8x16xf32>
    %1499 = math.tanh %1498 : vector<8x16xf32>
    %cst_417 = arith.constant 1.000000e+00 : f32
    %1500 = vector.broadcast %cst_417 : f32 to vector<8x16xf32>
    %1501 = arith.subf %1500, %1492 : vector<8x16xf32>
    %1502 = arith.mulf %1501, %1499 : vector<8x16xf32>
    %1503 = arith.mulf %1492, %1473 : vector<8x16xf32>
    %1504 = arith.addf %1502, %1503 : vector<8x16xf32>
    %c16_418 = arith.constant 16 : index
    %c0_419 = arith.constant 0 : index
    %1505 = vector.load %arg25[%c16_418, %c0_419] : memref<64x384xf32, #tpu.memory_space<vmem>>, vector<8x384xf32>
    %1506 = arith.truncf %1504 : vector<8x16xf32> to vector<8x16xbf16>
    %cst_420 = arith.constant dense<0.000000e+00> : vector<8x384xf32>
    %1507 = tpu.matmul %1506, %1441, %cst_420 {dimension_numbers = #tpu.dot_dimension_numbers<[1], [0], [0], [1], [0, 0, 1, 1], [], []>} : vector<8x16xbf16>, vector<16x384xbf16>, vector<8x384xf32> -> vector<8x384xf32>
    %1508 = vector.extract_strided_slice %1505 {offsets = [0, 0], sizes = [8, 16], strides = [1, 1]} : vector<8x384xf32> to vector<8x16xf32>
    %1509 = vector.extract_strided_slice %1507 {offsets = [0, 0], sizes = [8, 16], strides = [1, 1]} : vector<8x384xf32> to vector<8x16xf32>
    %1510 = arith.addf %1508, %1509 : vector<8x16xf32>
    %1511 = arith.negf %1510 : vector<8x16xf32>
    %1512 = math.exp %1511 : vector<8x16xf32>
    %cst_421 = arith.constant 1.000000e+00 : f32
    %1513 = vector.broadcast %cst_421 : f32 to vector<8x16xf32>
    %1514 = arith.addf %1513, %1512 : vector<8x16xf32>
    %1515 = arith.divf %1513, %1514 : vector<8x16xf32>
    %1516 = vector.extract_strided_slice %1505 {offsets = [0, 128], sizes = [8, 16], strides = [1, 1]} : vector<8x384xf32> to vector<8x16xf32>
    %1517 = vector.extract_strided_slice %1507 {offsets = [0, 128], sizes = [8, 16], strides = [1, 1]} : vector<8x384xf32> to vector<8x16xf32>
    %1518 = arith.addf %1516, %1517 : vector<8x16xf32>
    %1519 = arith.negf %1518 : vector<8x16xf32>
    %1520 = math.exp %1519 : vector<8x16xf32>
    %cst_422 = arith.constant 1.000000e+00 : f32
    %1521 = vector.broadcast %cst_422 : f32 to vector<8x16xf32>
    %1522 = arith.addf %1521, %1520 : vector<8x16xf32>
    %1523 = arith.divf %1521, %1522 : vector<8x16xf32>
    %1524 = vector.extract_strided_slice %1505 {offsets = [0, 256], sizes = [8, 16], strides = [1, 1]} : vector<8x384xf32> to vector<8x16xf32>
    %1525 = vector.extract_strided_slice %1507 {offsets = [0, 256], sizes = [8, 16], strides = [1, 1]} : vector<8x384xf32> to vector<8x16xf32>
    %1526 = vector.broadcast %1440 : vector<1x16xf32> to vector<8x16xf32>
    %1527 = arith.addf %1525, %1526 : vector<8x16xf32>
    %1528 = arith.mulf %1515, %1527 : vector<8x16xf32>
    %1529 = arith.addf %1524, %1528 : vector<8x16xf32>
    %1530 = math.tanh %1529 : vector<8x16xf32>
    %cst_423 = arith.constant 1.000000e+00 : f32
    %1531 = vector.broadcast %cst_423 : f32 to vector<8x16xf32>
    %1532 = arith.subf %1531, %1523 : vector<8x16xf32>
    %1533 = arith.mulf %1532, %1530 : vector<8x16xf32>
    %1534 = arith.mulf %1523, %1504 : vector<8x16xf32>
    %1535 = arith.addf %1533, %1534 : vector<8x16xf32>
    %c24_424 = arith.constant 24 : index
    %c0_425 = arith.constant 0 : index
    %1536 = vector.load %arg25[%c24_424, %c0_425] : memref<64x384xf32, #tpu.memory_space<vmem>>, vector<8x384xf32>
    %1537 = arith.truncf %1535 : vector<8x16xf32> to vector<8x16xbf16>
    %cst_426 = arith.constant dense<0.000000e+00> : vector<8x384xf32>
    %1538 = tpu.matmul %1537, %1441, %cst_426 {dimension_numbers = #tpu.dot_dimension_numbers<[1], [0], [0], [1], [0, 0, 1, 1], [], []>} : vector<8x16xbf16>, vector<16x384xbf16>, vector<8x384xf32> -> vector<8x384xf32>
    %1539 = vector.extract_strided_slice %1536 {offsets = [0, 0], sizes = [8, 16], strides = [1, 1]} : vector<8x384xf32> to vector<8x16xf32>
    %1540 = vector.extract_strided_slice %1538 {offsets = [0, 0], sizes = [8, 16], strides = [1, 1]} : vector<8x384xf32> to vector<8x16xf32>
    %1541 = arith.addf %1539, %1540 : vector<8x16xf32>
    %1542 = arith.negf %1541 : vector<8x16xf32>
    %1543 = math.exp %1542 : vector<8x16xf32>
    %cst_427 = arith.constant 1.000000e+00 : f32
    %1544 = vector.broadcast %cst_427 : f32 to vector<8x16xf32>
    %1545 = arith.addf %1544, %1543 : vector<8x16xf32>
    %1546 = arith.divf %1544, %1545 : vector<8x16xf32>
    %1547 = vector.extract_strided_slice %1536 {offsets = [0, 128], sizes = [8, 16], strides = [1, 1]} : vector<8x384xf32> to vector<8x16xf32>
    %1548 = vector.extract_strided_slice %1538 {offsets = [0, 128], sizes = [8, 16], strides = [1, 1]} : vector<8x384xf32> to vector<8x16xf32>
    %1549 = arith.addf %1547, %1548 : vector<8x16xf32>
    %1550 = arith.negf %1549 : vector<8x16xf32>
    %1551 = math.exp %1550 : vector<8x16xf32>
    %cst_428 = arith.constant 1.000000e+00 : f32
    %1552 = vector.broadcast %cst_428 : f32 to vector<8x16xf32>
    %1553 = arith.addf %1552, %1551 : vector<8x16xf32>
    %1554 = arith.divf %1552, %1553 : vector<8x16xf32>
    %1555 = vector.extract_strided_slice %1536 {offsets = [0, 256], sizes = [8, 16], strides = [1, 1]} : vector<8x384xf32> to vector<8x16xf32>
    %1556 = vector.extract_strided_slice %1538 {offsets = [0, 256], sizes = [8, 16], strides = [1, 1]} : vector<8x384xf32> to vector<8x16xf32>
    %1557 = vector.broadcast %1440 : vector<1x16xf32> to vector<8x16xf32>
    %1558 = arith.addf %1556, %1557 : vector<8x16xf32>
    %1559 = arith.mulf %1546, %1558 : vector<8x16xf32>
    %1560 = arith.addf %1555, %1559 : vector<8x16xf32>
    %1561 = math.tanh %1560 : vector<8x16xf32>
    %cst_429 = arith.constant 1.000000e+00 : f32
    %1562 = vector.broadcast %cst_429 : f32 to vector<8x16xf32>
    %1563 = arith.subf %1562, %1554 : vector<8x16xf32>
    %1564 = arith.mulf %1563, %1561 : vector<8x16xf32>
    %1565 = arith.mulf %1554, %1535 : vector<8x16xf32>
    %1566 = arith.addf %1564, %1565 : vector<8x16xf32>
    %c32_430 = arith.constant 32 : index
    %c0_431 = arith.constant 0 : index
    %1567 = vector.load %arg25[%c32_430, %c0_431] : memref<64x384xf32, #tpu.memory_space<vmem>>, vector<8x384xf32>
    %1568 = arith.truncf %1566 : vector<8x16xf32> to vector<8x16xbf16>
    %cst_432 = arith.constant dense<0.000000e+00> : vector<8x384xf32>
    %1569 = tpu.matmul %1568, %1441, %cst_432 {dimension_numbers = #tpu.dot_dimension_numbers<[1], [0], [0], [1], [0, 0, 1, 1], [], []>} : vector<8x16xbf16>, vector<16x384xbf16>, vector<8x384xf32> -> vector<8x384xf32>
    %1570 = vector.extract_strided_slice %1567 {offsets = [0, 0], sizes = [8, 16], strides = [1, 1]} : vector<8x384xf32> to vector<8x16xf32>
    %1571 = vector.extract_strided_slice %1569 {offsets = [0, 0], sizes = [8, 16], strides = [1, 1]} : vector<8x384xf32> to vector<8x16xf32>
    %1572 = arith.addf %1570, %1571 : vector<8x16xf32>
    %1573 = arith.negf %1572 : vector<8x16xf32>
    %1574 = math.exp %1573 : vector<8x16xf32>
    %cst_433 = arith.constant 1.000000e+00 : f32
    %1575 = vector.broadcast %cst_433 : f32 to vector<8x16xf32>
    %1576 = arith.addf %1575, %1574 : vector<8x16xf32>
    %1577 = arith.divf %1575, %1576 : vector<8x16xf32>
    %1578 = vector.extract_strided_slice %1567 {offsets = [0, 128], sizes = [8, 16], strides = [1, 1]} : vector<8x384xf32> to vector<8x16xf32>
    %1579 = vector.extract_strided_slice %1569 {offsets = [0, 128], sizes = [8, 16], strides = [1, 1]} : vector<8x384xf32> to vector<8x16xf32>
    %1580 = arith.addf %1578, %1579 : vector<8x16xf32>
    %1581 = arith.negf %1580 : vector<8x16xf32>
    %1582 = math.exp %1581 : vector<8x16xf32>
    %cst_434 = arith.constant 1.000000e+00 : f32
    %1583 = vector.broadcast %cst_434 : f32 to vector<8x16xf32>
    %1584 = arith.addf %1583, %1582 : vector<8x16xf32>
    %1585 = arith.divf %1583, %1584 : vector<8x16xf32>
    %1586 = vector.extract_strided_slice %1567 {offsets = [0, 256], sizes = [8, 16], strides = [1, 1]} : vector<8x384xf32> to vector<8x16xf32>
    %1587 = vector.extract_strided_slice %1569 {offsets = [0, 256], sizes = [8, 16], strides = [1, 1]} : vector<8x384xf32> to vector<8x16xf32>
    %1588 = vector.broadcast %1440 : vector<1x16xf32> to vector<8x16xf32>
    %1589 = arith.addf %1587, %1588 : vector<8x16xf32>
    %1590 = arith.mulf %1577, %1589 : vector<8x16xf32>
    %1591 = arith.addf %1586, %1590 : vector<8x16xf32>
    %1592 = math.tanh %1591 : vector<8x16xf32>
    %cst_435 = arith.constant 1.000000e+00 : f32
    %1593 = vector.broadcast %cst_435 : f32 to vector<8x16xf32>
    %1594 = arith.subf %1593, %1585 : vector<8x16xf32>
    %1595 = arith.mulf %1594, %1592 : vector<8x16xf32>
    %1596 = arith.mulf %1585, %1566 : vector<8x16xf32>
    %1597 = arith.addf %1595, %1596 : vector<8x16xf32>
    %c40_436 = arith.constant 40 : index
    %c0_437 = arith.constant 0 : index
    %1598 = vector.load %arg25[%c40_436, %c0_437] : memref<64x384xf32, #tpu.memory_space<vmem>>, vector<8x384xf32>
    %1599 = arith.truncf %1597 : vector<8x16xf32> to vector<8x16xbf16>
    %cst_438 = arith.constant dense<0.000000e+00> : vector<8x384xf32>
    %1600 = tpu.matmul %1599, %1441, %cst_438 {dimension_numbers = #tpu.dot_dimension_numbers<[1], [0], [0], [1], [0, 0, 1, 1], [], []>} : vector<8x16xbf16>, vector<16x384xbf16>, vector<8x384xf32> -> vector<8x384xf32>
    %1601 = vector.extract_strided_slice %1598 {offsets = [0, 0], sizes = [8, 16], strides = [1, 1]} : vector<8x384xf32> to vector<8x16xf32>
    %1602 = vector.extract_strided_slice %1600 {offsets = [0, 0], sizes = [8, 16], strides = [1, 1]} : vector<8x384xf32> to vector<8x16xf32>
    %1603 = arith.addf %1601, %1602 : vector<8x16xf32>
    %1604 = arith.negf %1603 : vector<8x16xf32>
    %1605 = math.exp %1604 : vector<8x16xf32>
    %cst_439 = arith.constant 1.000000e+00 : f32
    %1606 = vector.broadcast %cst_439 : f32 to vector<8x16xf32>
    %1607 = arith.addf %1606, %1605 : vector<8x16xf32>
    %1608 = arith.divf %1606, %1607 : vector<8x16xf32>
    %1609 = vector.extract_strided_slice %1598 {offsets = [0, 128], sizes = [8, 16], strides = [1, 1]} : vector<8x384xf32> to vector<8x16xf32>
    %1610 = vector.extract_strided_slice %1600 {offsets = [0, 128], sizes = [8, 16], strides = [1, 1]} : vector<8x384xf32> to vector<8x16xf32>
    %1611 = arith.addf %1609, %1610 : vector<8x16xf32>
    %1612 = arith.negf %1611 : vector<8x16xf32>
    %1613 = math.exp %1612 : vector<8x16xf32>
    %cst_440 = arith.constant 1.000000e+00 : f32
    %1614 = vector.broadcast %cst_440 : f32 to vector<8x16xf32>
    %1615 = arith.addf %1614, %1613 : vector<8x16xf32>
    %1616 = arith.divf %1614, %1615 : vector<8x16xf32>
    %1617 = vector.extract_strided_slice %1598 {offsets = [0, 256], sizes = [8, 16], strides = [1, 1]} : vector<8x384xf32> to vector<8x16xf32>
    %1618 = vector.extract_strided_slice %1600 {offsets = [0, 256], sizes = [8, 16], strides = [1, 1]} : vector<8x384xf32> to vector<8x16xf32>
    %1619 = vector.broadcast %1440 : vector<1x16xf32> to vector<8x16xf32>
    %1620 = arith.addf %1618, %1619 : vector<8x16xf32>
    %1621 = arith.mulf %1608, %1620 : vector<8x16xf32>
    %1622 = arith.addf %1617, %1621 : vector<8x16xf32>
    %1623 = math.tanh %1622 : vector<8x16xf32>
    %cst_441 = arith.constant 1.000000e+00 : f32
    %1624 = vector.broadcast %cst_441 : f32 to vector<8x16xf32>
    %1625 = arith.subf %1624, %1616 : vector<8x16xf32>
    %1626 = arith.mulf %1625, %1623 : vector<8x16xf32>
    %1627 = arith.mulf %1616, %1597 : vector<8x16xf32>
    %1628 = arith.addf %1626, %1627 : vector<8x16xf32>
    %c48_442 = arith.constant 48 : index
    %c0_443 = arith.constant 0 : index
    %1629 = vector.load %arg25[%c48_442, %c0_443] : memref<64x384xf32, #tpu.memory_space<vmem>>, vector<8x384xf32>
    %1630 = arith.truncf %1628 : vector<8x16xf32> to vector<8x16xbf16>
    %cst_444 = arith.constant dense<0.000000e+00> : vector<8x384xf32>
    %1631 = tpu.matmul %1630, %1441, %cst_444 {dimension_numbers = #tpu.dot_dimension_numbers<[1], [0], [0], [1], [0, 0, 1, 1], [], []>} : vector<8x16xbf16>, vector<16x384xbf16>, vector<8x384xf32> -> vector<8x384xf32>
    %1632 = vector.extract_strided_slice %1629 {offsets = [0, 0], sizes = [8, 16], strides = [1, 1]} : vector<8x384xf32> to vector<8x16xf32>
    %1633 = vector.extract_strided_slice %1631 {offsets = [0, 0], sizes = [8, 16], strides = [1, 1]} : vector<8x384xf32> to vector<8x16xf32>
    %1634 = arith.addf %1632, %1633 : vector<8x16xf32>
    %1635 = arith.negf %1634 : vector<8x16xf32>
    %1636 = math.exp %1635 : vector<8x16xf32>
    %cst_445 = arith.constant 1.000000e+00 : f32
    %1637 = vector.broadcast %cst_445 : f32 to vector<8x16xf32>
    %1638 = arith.addf %1637, %1636 : vector<8x16xf32>
    %1639 = arith.divf %1637, %1638 : vector<8x16xf32>
    %1640 = vector.extract_strided_slice %1629 {offsets = [0, 128], sizes = [8, 16], strides = [1, 1]} : vector<8x384xf32> to vector<8x16xf32>
    %1641 = vector.extract_strided_slice %1631 {offsets = [0, 128], sizes = [8, 16], strides = [1, 1]} : vector<8x384xf32> to vector<8x16xf32>
    %1642 = arith.addf %1640, %1641 : vector<8x16xf32>
    %1643 = arith.negf %1642 : vector<8x16xf32>
    %1644 = math.exp %1643 : vector<8x16xf32>
    %cst_446 = arith.constant 1.000000e+00 : f32
    %1645 = vector.broadcast %cst_446 : f32 to vector<8x16xf32>
    %1646 = arith.addf %1645, %1644 : vector<8x16xf32>
    %1647 = arith.divf %1645, %1646 : vector<8x16xf32>
    %1648 = vector.extract_strided_slice %1629 {offsets = [0, 256], sizes = [8, 16], strides = [1, 1]} : vector<8x384xf32> to vector<8x16xf32>
    %1649 = vector.extract_strided_slice %1631 {offsets = [0, 256], sizes = [8, 16], strides = [1, 1]} : vector<8x384xf32> to vector<8x16xf32>
    %1650 = vector.broadcast %1440 : vector<1x16xf32> to vector<8x16xf32>
    %1651 = arith.addf %1649, %1650 : vector<8x16xf32>
    %1652 = arith.mulf %1639, %1651 : vector<8x16xf32>
    %1653 = arith.addf %1648, %1652 : vector<8x16xf32>
    %1654 = math.tanh %1653 : vector<8x16xf32>
    %cst_447 = arith.constant 1.000000e+00 : f32
    %1655 = vector.broadcast %cst_447 : f32 to vector<8x16xf32>
    %1656 = arith.subf %1655, %1647 : vector<8x16xf32>
    %1657 = arith.mulf %1656, %1654 : vector<8x16xf32>
    %1658 = arith.mulf %1647, %1628 : vector<8x16xf32>
    %1659 = arith.addf %1657, %1658 : vector<8x16xf32>
    %c56_448 = arith.constant 56 : index
    %c0_449 = arith.constant 0 : index
    %1660 = vector.load %arg25[%c56_448, %c0_449] : memref<64x384xf32, #tpu.memory_space<vmem>>, vector<8x384xf32>
    %1661 = arith.truncf %1659 : vector<8x16xf32> to vector<8x16xbf16>
    %cst_450 = arith.constant dense<0.000000e+00> : vector<8x384xf32>
    %1662 = tpu.matmul %1661, %1441, %cst_450 {dimension_numbers = #tpu.dot_dimension_numbers<[1], [0], [0], [1], [0, 0, 1, 1], [], []>} : vector<8x16xbf16>, vector<16x384xbf16>, vector<8x384xf32> -> vector<8x384xf32>
    %1663 = vector.extract_strided_slice %1660 {offsets = [0, 0], sizes = [8, 16], strides = [1, 1]} : vector<8x384xf32> to vector<8x16xf32>
    %1664 = vector.extract_strided_slice %1662 {offsets = [0, 0], sizes = [8, 16], strides = [1, 1]} : vector<8x384xf32> to vector<8x16xf32>
    %1665 = arith.addf %1663, %1664 : vector<8x16xf32>
    %1666 = arith.negf %1665 : vector<8x16xf32>
    %1667 = math.exp %1666 : vector<8x16xf32>
    %cst_451 = arith.constant 1.000000e+00 : f32
    %1668 = vector.broadcast %cst_451 : f32 to vector<8x16xf32>
    %1669 = arith.addf %1668, %1667 : vector<8x16xf32>
    %1670 = arith.divf %1668, %1669 : vector<8x16xf32>
    %1671 = vector.extract_strided_slice %1660 {offsets = [0, 128], sizes = [8, 16], strides = [1, 1]} : vector<8x384xf32> to vector<8x16xf32>
    %1672 = vector.extract_strided_slice %1662 {offsets = [0, 128], sizes = [8, 16], strides = [1, 1]} : vector<8x384xf32> to vector<8x16xf32>
    %1673 = arith.addf %1671, %1672 : vector<8x16xf32>
    %1674 = arith.negf %1673 : vector<8x16xf32>
    %1675 = math.exp %1674 : vector<8x16xf32>
    %cst_452 = arith.constant 1.000000e+00 : f32
    %1676 = vector.broadcast %cst_452 : f32 to vector<8x16xf32>
    %1677 = arith.addf %1676, %1675 : vector<8x16xf32>
    %1678 = arith.divf %1676, %1677 : vector<8x16xf32>
    %1679 = vector.extract_strided_slice %1660 {offsets = [0, 256], sizes = [8, 16], strides = [1, 1]} : vector<8x384xf32> to vector<8x16xf32>
    %1680 = vector.extract_strided_slice %1662 {offsets = [0, 256], sizes = [8, 16], strides = [1, 1]} : vector<8x384xf32> to vector<8x16xf32>
    %1681 = vector.broadcast %1440 : vector<1x16xf32> to vector<8x16xf32>
    %1682 = arith.addf %1680, %1681 : vector<8x16xf32>
    %1683 = arith.mulf %1670, %1682 : vector<8x16xf32>
    %1684 = arith.addf %1679, %1683 : vector<8x16xf32>
    %1685 = math.tanh %1684 : vector<8x16xf32>
    %cst_453 = arith.constant 1.000000e+00 : f32
    %1686 = vector.broadcast %cst_453 : f32 to vector<8x16xf32>
    %1687 = arith.subf %1686, %1678 : vector<8x16xf32>
    %1688 = arith.mulf %1687, %1685 : vector<8x16xf32>
    %1689 = arith.mulf %1678, %1659 : vector<8x16xf32>
    %1690 = arith.addf %1688, %1689 : vector<8x16xf32>
    %1691 = arith.negf %1690 : vector<8x16xf32>
    %1692 = math.exp %1691 : vector<8x16xf32>
    %cst_454 = arith.constant 1.000000e+00 : f32
    %1693 = vector.broadcast %cst_454 : f32 to vector<8x16xf32>
    %1694 = arith.addf %1693, %1692 : vector<8x16xf32>
    %1695 = arith.divf %1693, %1694 : vector<8x16xf32>
    %1696 = arith.truncf %1695 : vector<8x16xf32> to vector<8x16xbf16>
    %c0_455 = arith.constant 0 : index
    %c0_456 = arith.constant 0 : index
    %1697 = vector.load %arg22[%c0_455, %c0_456] : memref<16x5xbf16, #tpu.memory_space<vmem>>, vector<16x5xbf16>
    %cst_457 = arith.constant dense<0.000000e+00> : vector<8x5xf32>
    %1698 = tpu.matmul %1696, %1697, %cst_457 {dimension_numbers = #tpu.dot_dimension_numbers<[1], [0], [0], [1], [0, 0, 1, 1], [], []>} : vector<8x16xbf16>, vector<16x5xbf16>, vector<8x5xf32> -> vector<8x5xf32>
    %c0_458 = arith.constant 0 : index
    %c0_459 = arith.constant 0 : index
    %1699 = vector.load %arg23[%c0_458, %c0_459] : memref<1x5xf32, #tpu.memory_space<vmem>>, vector<1x5xf32>
    %1700 = vector.broadcast %1699 : vector<1x5xf32> to vector<8x5xf32>
    %1701 = arith.addf %1698, %1700 : vector<8x5xf32>
    %cst_460 = arith.constant 0.000000e+00 : f32
    %1702 = vector.broadcast %cst_460 : f32 to vector<8x5xf32>
    %1703 = arith.cmpf oge, %1701, %1702 : vector<8x5xf32>
    %cst_461 = arith.constant 0.00999999977 : f32
    %1704 = vector.broadcast %cst_461 : f32 to vector<8x5xf32>
    %1705 = arith.mulf %1704, %1701 : vector<8x5xf32>
    %1706 = arith.select %1703, %1701, %1705 : vector<8x5xi1>, vector<8x5xf32>
    %c0_462 = arith.constant 0 : index
    %c0_463 = arith.constant 0 : index
    %1707 = vector.load %arg24[%c0_462, %c0_463] : memref<8x5xf32, #tpu.memory_space<vmem>>, vector<8x5xf32>
    tpu.vector_store %arg24[%c0_462, %c0_463], %1706 {strides = array<i32>} : memref<8x5xf32, #tpu.memory_space<vmem>>, vector<8x5xf32>,
    return
  }
  func.func @transform_0(%arg0: i32) -> (i32, i32) {
    %c0_i32 = arith.constant 0 : i32
    %c0_i32_0 = arith.constant 0 : i32
    %c0_i32_1 = arith.constant 0 : i32
    return %c0_i32, %c0_i32_0 : i32, i32
  }
  func.func @transform_1(%arg0: i32) -> (i32, i32) {
    %c0_i32 = arith.constant 0 : i32
    %c0_i32_0 = arith.constant 0 : i32
    %c0_i32_1 = arith.constant 0 : i32
    return %c0_i32, %c0_i32_0 : i32, i32
  }
  func.func @transform_2(%arg0: i32) -> (i32, i32) {
    %c0_i32 = arith.constant 0 : i32
    %c0_i32_0 = arith.constant 0 : i32
    %c0_i32_1 = arith.constant 0 : i32
    return %c0_i32, %c0_i32_0 : i32, i32
  }
  func.func @transform_3(%arg0: i32) -> (i32, i32) {
    %c0_i32 = arith.constant 0 : i32
    %c0_i32_0 = arith.constant 0 : i32
    %c0_i32_1 = arith.constant 0 : i32
    return %c0_i32, %c0_i32_0 : i32, i32
  }
  func.func @transform_4(%arg0: i32) -> (i32, i32) {
    %c0_i32 = arith.constant 0 : i32
    %c0_i32_0 = arith.constant 0 : i32
    %c0_i32_1 = arith.constant 0 : i32
    return %c0_i32, %c0_i32_0 : i32, i32
  }
  func.func @transform_5(%arg0: i32) -> (i32, i32) {
    %c0_i32 = arith.constant 0 : i32
    %c0_i32_0 = arith.constant 0 : i32
    %c0_i32_1 = arith.constant 0 : i32
    return %c0_i32, %c0_i32_0 : i32, i32
  }
  func.func @transform_6(%arg0: i32) -> (i32, i32) {
    %c0_i32 = arith.constant 0 : i32
    %c0_i32_0 = arith.constant 0 : i32
    %c0_i32_1 = arith.constant 0 : i32
    return %c0_i32, %c0_i32_0 : i32, i32
  }
  func.func @transform_7(%arg0: i32) -> (i32, i32) {
    %c0_i32 = arith.constant 0 : i32
    %c0_i32_0 = arith.constant 0 : i32
    %c0_i32_1 = arith.constant 0 : i32
    return %c0_i32, %c0_i32_0 : i32, i32
  }
  func.func @transform_8(%arg0: i32) -> (i32, i32) {
    %c0_i32 = arith.constant 0 : i32
    %c0_i32_0 = arith.constant 0 : i32
    %c0_i32_1 = arith.constant 0 : i32
    return %c0_i32, %c0_i32_0 : i32, i32
  }
  func.func @transform_9(%arg0: i32) -> (i32, i32) {
    %c0_i32 = arith.constant 0 : i32
    %c0_i32_0 = arith.constant 0 : i32
    %c0_i32_1 = arith.constant 0 : i32
    return %c0_i32, %c0_i32_0 : i32, i32
  }
  func.func @transform_10(%arg0: i32) -> (i32, i32) {
    %c0_i32 = arith.constant 0 : i32
    %c0_i32_0 = arith.constant 0 : i32
    %c0_i32_1 = arith.constant 0 : i32
    return %c0_i32, %c0_i32_0 : i32, i32
  }
  func.func @transform_11(%arg0: i32) -> (i32, i32) {
    %c0_i32 = arith.constant 0 : i32
    %c0_i32_0 = arith.constant 0 : i32
    %c0_i32_1 = arith.constant 0 : i32
    return %c0_i32, %c0_i32_0 : i32, i32
  }
  func.func @transform_12(%arg0: i32) -> (i32, i32) {
    %c0_i32 = arith.constant 0 : i32
    %c0_i32_0 = arith.constant 0 : i32
    %c0_i32_1 = arith.constant 0 : i32
    return %c0_i32, %c0_i32_0 : i32, i32
  }
  func.func @transform_13(%arg0: i32) -> (i32, i32) {
    %c0_i32 = arith.constant 0 : i32
    %c0_i32_0 = arith.constant 0 : i32
    %c0_i32_1 = arith.constant 0 : i32
    return %c0_i32, %c0_i32_0 : i32, i32
  }
  func.func @transform_14(%arg0: i32) -> (i32, i32) {
    %c0_i32 = arith.constant 0 : i32
    %c0_i32_0 = arith.constant 0 : i32
    %c0_i32_1 = arith.constant 0 : i32
    return %c0_i32, %c0_i32_0 : i32, i32
  }
  func.func @transform_15(%arg0: i32) -> (i32, i32) {
    %c0_i32 = arith.constant 0 : i32
    %c0_i32_0 = arith.constant 0 : i32
    %c0_i32_1 = arith.constant 0 : i32
    return %c0_i32, %c0_i32_0 : i32, i32
  }
  func.func @transform_16(%arg0: i32) -> (i32, i32) {
    %c0_i32 = arith.constant 0 : i32
    %c0_i32_0 = arith.constant 0 : i32
    %c0_i32_1 = arith.constant 0 : i32
    return %c0_i32, %c0_i32_0 : i32, i32
  }
  func.func @transform_17(%arg0: i32) -> (i32, i32) {
    %c0_i32 = arith.constant 0 : i32
    %c0_i32_0 = arith.constant 0 : i32
    %c0_i32_1 = arith.constant 0 : i32
    return %c0_i32, %c0_i32_0 : i32, i32
  }
  func.func @transform_18(%arg0: i32) -> (i32, i32) {
    %c0_i32 = arith.constant 0 : i32
    %c0_i32_0 = arith.constant 0 : i32
    %c0_i32_1 = arith.constant 0 : i32
    return %c0_i32, %c0_i32_0 : i32, i32
  }
  func.func @transform_19(%arg0: i32) -> (i32, i32) {
    %c0_i32 = arith.constant 0 : i32
    %c0_i32_0 = arith.constant 0 : i32
    %c0_i32_1 = arith.constant 0 : i32
    return %c0_i32, %c0_i32_0 : i32, i32
  }
  func.func @transform_20(%arg0: i32) -> (i32, i32) {
    %c0_i32 = arith.constant 0 : i32
    %c0_i32_0 = arith.constant 0 : i32
    %c0_i32_1 = arith.constant 0 : i32
    return %c0_i32, %c0_i32_0 : i32, i32
  }
  func.func @transform_21(%arg0: i32) -> (i32, i32) {
    %c0_i32 = arith.constant 0 : i32
    %c0_i32_0 = arith.constant 0 : i32
    %c0_i32_1 = arith.constant 0 : i32
    return %c0_i32, %c0_i32_0 : i32, i32
  }
  func.func @transform_22(%arg0: i32) -> (i32, i32) {
    %c0_i32 = arith.constant 0 : i32
    %c0_i32_0 = arith.constant 0 : i32
    %c0_i32_1 = arith.constant 0 : i32
    return %c0_i32, %c0_i32_0 : i32, i32
  }
  func.func @transform_23(%arg0: i32) -> (i32, i32) {
    %c0_i32 = arith.constant 0 : i32
    %c0_i32_0 = arith.constant 0 : i32
    %c0_i32_1 = arith.constant 0 : i32
    return %c0_i32, %c0_i32_0 : i32, i32
  }
}

</mosaic_0001>

<llo_original>
// kernel: sleep_stage_forward.1
$region0: #{sleep_stage_forward.1}
  #allocation0 [shape = 'u32[]', space=smem, size = 0x4, offset = 0x4, fixed_abs, tag = 'smem constant byte address 0x4 - core index']
  #allocation1 [shape = 'u32[144,128]{1,0:T(1,128)}', space=vmem, size = 0x12000, scoped, tag = 'internal scratch']
  #allocation2 [shape = 'f32[64,384]{1,0:T(8,128)}', space=vmem, size = 0x18000, scoped, tag = 'scratch operand']
  #allocation3 [shape = 'f32[64,50]{1,0:T(8,128)}', space=vmem, size = 0x8000, scoped, tag = 'scratch operand']
  #allocation4 [shape = 'f32[64,32]{1,0:T(8,128)}', space=vmem, size = 0x8000, scoped, tag = 'scratch operand']
  #allocation5 [shape = 'f32[64,32]{1,0:T(8,128)}', space=vmem, size = 0x8000, scoped, tag = 'scratch operand']
  #allocation6 [shape = 'f32[64,16]{1,0:T(8,128)}', space=vmem, size = 0x8000, scoped, tag = 'scratch operand']
  #allocation7 [shape = 'f32[64,16]{1,0:T(8,128)}', space=vmem, size = 0x8000, scoped, tag = 'scratch operand']
  %s0 = inlined_call_operand.vmem [shape: f32[64,20], index: 0, kind: input, shape index: {}]
  %s1 = inlined_call_operand.hbm [shape: bf16[20,100], index: 1, kind: input, shape index: {}]
  %s2 = inlined_call_operand.hbm [shape: f32[1,100], index: 2, kind: input, shape index: {}]
  %s3 = inlined_call_operand.hbm [shape: bf16[100,384], index: 3, kind: input, shape index: {}]
  %s4 = inlined_call_operand.vmem [shape: bf16[50,384], index: 4, kind: input, shape index: {}]
  %s5 = inlined_call_operand.hbm [shape: f32[2,384], index: 5, kind: input, shape index: {}]
  %s6 = inlined_call_operand.hbm [shape: bf16[50,384], index: 6, kind: input, shape index: {}]
  %s7 = inlined_call_operand.vmem [shape: bf16[32,384], index: 7, kind: input, shape index: {}]
  %s8 = inlined_call_operand.hbm [shape: f32[2,384], index: 8, kind: input, shape index: {}]
  %s9 = inlined_call_operand.hbm [shape: bf16[32,384], index: 9, kind: input, shape index: {}]
  %s10 = inlined_call_operand.hbm [shape: bf16[32,384], index: 10, kind: input, shape index: {}]
  %s11 = inlined_call_operand.hbm [shape: f32[2,384], index: 11, kind: input, shape index: {}]
  %s12 = inlined_call_operand.vmem [shape: bf16[32,384], index: 12, kind: input, shape index: {}]
  %s13 = inlined_call_operand.hbm [shape: bf16[16,384], index: 13, kind: input, shape index: {}]
  %s14 = inlined_call_operand.hbm [shape: f32[2,384], index: 14, kind: input, shape index: {}]
  %s15 = inlined_call_operand.hbm [shape: bf16[16,384], index: 15, kind: input, shape index: {}]
  %s16 = inlined_call_operand.hbm [shape: bf16[16,384], index: 16, kind: input, shape index: {}]
  %s17 = inlined_call_operand.hbm [shape: f32[2,384], index: 17, kind: input, shape index: {}]
  %s18 = inlined_call_operand.hbm [shape: bf16[16,384], index: 18, kind: input, shape index: {}]
  %s19 = inlined_call_operand.hbm [shape: bf16[16,384], index: 19, kind: input, shape index: {}]
  %s20 = inlined_call_operand.hbm [shape: f32[2,384], index: 20, kind: input, shape index: {}]
  %s21 = inlined_call_operand.vmem [shape: bf16[16,5], index: 21, kind: input, shape index: {}]
  %s22 = inlined_call_operand.hbm [shape: f32[1,5], index: 22, kind: input, shape index: {}]
  %s23 = inlined_call_operand.vmem [shape: f32[8,5], index: 23, kind: output, shape index: {}]
  %s24 = sld [smem:[#allocation0]]
  $region174: #{sleep_stage_forward.1} parent=0
    _
  %s26 = ssub.s32 1, %s24
  %s27 = scalar_select 0, %s26, %s24
  $region1: #{sleep_stage_forward.1} parent=0
    #allocation8 [shape = 'u8[6144]{0}', space=vmem, size = 0x1800, scoped, tag = 'input window, operand 1, single buffered']
    #allocation9 [shape = 's32[1]{0}', space=sflag, size = 0x4, scoped, tag = 'scoped memory for sleep_stage_forward.1']
    #allocation10 [shape = 'u8[512]{0}', space=vmem, size = 0x400, scoped, tag = 'input window, operand 2, single buffered']
    #allocation11 [shape = 's32[1]{0}', space=sflag, size = 0x4, scoped, tag = 'scoped memory for sleep_stage_forward.1']
    #allocation12 [shape = 'u8[79872]{0}', space=vmem, size = 0x13800, scoped, tag = 'input window, operand 3, single buffered']
    #allocation13 [shape = 'u8[3072]{0}', space=vmem, size = 0xc00, scoped, tag = 'input window, operand 5, single buffered']
    #allocation14 [shape = 's32[1]{0}', space=sflag, size = 0x4, scoped, tag = 'scoped memory for sleep_stage_forward.1']
    #allocation15 [shape = 'u8[43008]{0}', space=vmem, size = 0xa800, scoped, tag = 'input window, operand 6, single buffered']
    #allocation16 [shape = 'u8[3072]{0}', space=vmem, size = 0xc00, scoped, tag = 'input window, operand 8, single buffered']
    #allocation17 [shape = 's32[1]{0}', space=sflag, size = 0x4, scoped, tag = 'scoped memory for sleep_stage_forward.1']
    #allocation18 [shape = 'u8[24576]{0}', space=vmem, size = 0x6000, scoped, tag = 'input window, operand 9, single buffered']
    #allocation19 [shape = 'u8[24576]{0}', space=vmem, size = 0x6000, scoped, tag = 'input window, operand 10, single buffered']
    #allocation20 [shape = 's32[1]{0}', space=sflag, size = 0x4, scoped, tag = 'scoped memory for sleep_stage_forward.1']
    #allocation21 [shape = 'u8[3072]{0}', space=vmem, size = 0xc00, scoped, tag = 'input window, operand 11, single buffered']
    #allocation22 [shape = 'u8[12288]{0}', space=vmem, size = 0x3000, scoped, tag = 'input window, operand 13, single buffered']
    #allocation23 [shape = 's32[1]{0}', space=sflag, size = 0x4, scoped, tag = 'scoped memory for sleep_stage_forward.1']
    #allocation24 [shape = 'u8[3072]{0}', space=vmem, size = 0xc00, scoped, tag = 'input window, operand 14, single buffered']
    #allocation25 [shape = 'u8[12288]{0}', space=vmem, size = 0x3000, scoped, tag = 'input window, operand 15, single buffered']
    #allocation26 [shape = 's32[1]{0}', space=sflag, size = 0x4, scoped, tag = 'scoped memory for sleep_stage_forward.1']
    #allocation27 [shape = 'u8[12288]{0}', space=vmem, size = 0x3000, scoped, tag = 'input window, operand 16, single buffered']
    #allocation28 [shape = 'u8[3072]{0}', space=vmem, size = 0xc00, scoped, tag = 'input window, operand 17, single buffered']
    #allocation29 [shape = 's32[1]{0}', space=sflag, size = 0x4, scoped, tag = 'scoped memory for sleep_stage_forward.1']
    #allocation30 [shape = 'u8[12288]{0}', space=vmem, size = 0x3000, scoped, tag = 'input window, operand 18, single buffered']
    #allocation31 [shape = 'u8[12288]{0}', space=vmem, size = 0x3000, scoped, tag = 'input window, operand 19, single buffered']
    #allocation32 [shape = 's32[1]{0}', space=sflag, size = 0x4, scoped, tag = 'scoped memory for sleep_stage_forward.1']
    #allocation33 [shape = 'u8[3072]{0}', space=vmem, size = 0xc00, scoped, tag = 'input window, operand 20, single buffered']
    #allocation34 [shape = 'u8[512]{0}', space=vmem, size = 0x400, scoped, tag = 'input window, operand 22, single buffered']
    #allocation35 [shape = 's32[1]{0}', space=sflag, size = 0x4, scoped, tag = 'scoped memory for sleep_stage_forward.1']
    %28 = vsyncpa [#allocation9], 0
    %29 = vsyncpa [#allocation11], 0
    %30 = vsyncpa [#allocation14], 0
    %31 = vsyncpa [#allocation17], 0
    %32 = vsyncpa [#allocation20], 0
    %33 = vsyncpa [#allocation23], 0
    %34 = vsyncpa [#allocation26], 0
    %35 = vsyncpa [#allocation29], 0
    %36 = vsyncpa [#allocation32], 0
    %37 = vsyncpa [#allocation35], 0
    // Predicated region
    $region2: #{sleep_stage_forward.1} parent=1 // pred_check
      _
    $region3: #{sleep_stage_forward.1} parent=1 // pred_check_branch
      %39 = sbr.rel (0) target = $region5
    $region4: #{sleep_stage_forward.1} parent=1 // pred_region
      _
    $region5: #{sleep_stage_forward.1} parent=1 // pred_fallthru
      _
    // Predicated region
    $region6: #{sleep_stage_forward.1} parent=1 // pred_check
      _
    $region7: #{sleep_stage_forward.1} parent=1 // pred_check_branch
      %41 = sbr.rel (0) target = $region9
    $region8: #{sleep_stage_forward.1} parent=1 // pred_region
      %s43 = ssub.s32 192, 192
      %44 = vsyncadd [#allocation9], %s43
      %s45 = sshll.u32 [#allocation8], 4
      %s46 = int_to_ptr.vmem [resolvable:$true] %s45
      %51 = dma.hbm_to_vmem [thread:$0]  %s1, 192, %s46, [#allocation9], 64, 64, 4
    $region9: #{sleep_stage_forward.1} parent=1 // pred_fallthru
      _
    // Predicated region
    $region10: #{sleep_stage_forward.1} parent=1 // pred_check
      _
    $region11: #{sleep_stage_forward.1} parent=1 // pred_check_branch
      %53 = sbr.rel (0) target = $region13
    $region12: #{sleep_stage_forward.1} parent=1 // pred_region
      %s55 = ssub.s32 16, 16
      %56 = vsyncadd [#allocation11], %s55
      %s58 = sshll.u32 [#allocation10], 4
      %s59 = int_to_ptr.vmem [resolvable:$true] %s58
      %61 = dma.hbm_to_vmem [thread:$0]  %s2, 16, %s59, [#allocation11]
    $region13: #{sleep_stage_forward.1} parent=1 // pred_fallthru
      _
    // Predicated region
    $region14: #{sleep_stage_forward.1} parent=1 // pred_check
      _
    $region15: #{sleep_stage_forward.1} parent=1 // pred_check_branch
      %63 = sbr.rel (0) target = $region17
    $region16: #{sleep_stage_forward.1} parent=1 // pred_region
      %s65 = ssub.s32 2496, 2496
      %66 = vsyncadd [#allocation11], %s65
      %s67 = sshll.u32 [#allocation12], 4
      %s68 = int_to_ptr.vmem [resolvable:$true] %s67
      %73 = dma.hbm_to_vmem [thread:$0]  %s3, 2496, %s68, [#allocation11], 192, 192, 12
    $region17: #{sleep_stage_forward.1} parent=1 // pred_fallthru
      _
    // Predicated region
    $region18: #{sleep_stage_forward.1} parent=1 // pred_check
      _
    $region19: #{sleep_stage_forward.1} parent=1 // pred_check_branch
      %75 = sbr.rel (0) target = $region21
    $region20: #{sleep_stage_forward.1} parent=1 // pred_region
      _
    $region21: #{sleep_stage_forward.1} parent=1 // pred_fallthru
      _
    // Predicated region
    $region22: #{sleep_stage_forward.1} parent=1 // pred_check
      _
    $region23: #{sleep_stage_forward.1} parent=1 // pred_check_branch
      %77 = sbr.rel (0) target = $region25
    $region24: #{sleep_stage_forward.1} parent=1 // pred_region
      %s79 = ssub.s32 96, 96
      %80 = vsyncadd [#allocation14], %s79
      %s82 = sshll.u32 [#allocation13], 4
      %s83 = int_to_ptr.vmem [resolvable:$true] %s82
      %85 = dma.hbm_to_vmem [thread:$0]  %s5, 96, %s83, [#allocation14]
    $region25: #{sleep_stage_forward.1} parent=1 // pred_fallthru
      _
    // Predicated region
    $region26: #{sleep_stage_forward.1} parent=1 // pred_check
      _
    $region27: #{sleep_stage_forward.1} parent=1 // pred_check_branch
      %87 = sbr.rel (0) target = $region29
    $region28: #{sleep_stage_forward.1} parent=1 // pred_region
      %s89 = ssub.s32 1344, 1344
      %90 = vsyncadd [#allocation14], %s89
      %s91 = sshll.u32 [#allocation15], 4
      %s92 = int_to_ptr.vmem [resolvable:$true] %s91
      %97 = dma.hbm_to_vmem [thread:$0]  %s6, 1344, %s92, [#allocation14], 192, 192, 12
    $region29: #{sleep_stage_forward.1} parent=1 // pred_fallthru
      _
    // Predicated region
    $region30: #{sleep_stage_forward.1} parent=1 // pred_check
      _
    $region31: #{sleep_stage_forward.1} parent=1 // pred_check_branch
      %99 = sbr.rel (0) target = $region33
    $region32: #{sleep_stage_forward.1} parent=1 // pred_region
      _
    $region33: #{sleep_stage_forward.1} parent=1 // pred_fallthru
      _
    // Predicated region
    $region34: #{sleep_stage_forward.1} parent=1 // pred_check
      _
    $region35: #{sleep_stage_forward.1} parent=1 // pred_check_branch
      %101 = sbr.rel (0) target = $region37
    $region36: #{sleep_stage_forward.1} parent=1 // pred_region
      %s103 = ssub.s32 96, 96
      %104 = vsyncadd [#allocation17], %s103
      %s106 = sshll.u32 [#allocation16], 4
      %s107 = int_to_ptr.vmem [resolvable:$true] %s106
      %109 = dma.hbm_to_vmem [thread:$0]  %s8, 96, %s107, [#allocation17]
    $region37: #{sleep_stage_forward.1} parent=1 // pred_fallthru
      _
    // Predicated region
    $region38: #{sleep_stage_forward.1} parent=1 // pred_check
      _
    $region39: #{sleep_stage_forward.1} parent=1 // pred_check_branch
      %111 = sbr.rel (0) target = $region41
    $region40: #{sleep_stage_forward.1} parent=1 // pred_region
      %s113 = ssub.s32 768, 768
      %114 = vsyncadd [#allocation17], %s113
      %s115 = sshll.u32 [#allocation18], 4
      %s116 = int_to_ptr.vmem [resolvable:$true] %s115
      %121 = dma.hbm_to_vmem [thread:$0]  %s9, 768, %s116, [#allocation17], 192, 192, 12
    $region41: #{sleep_stage_forward.1} parent=1 // pred_fallthru
      _
    // Predicated region
    $region42: #{sleep_stage_forward.1} parent=1 // pred_check
      _
    $region43: #{sleep_stage_forward.1} parent=1 // pred_check_branch
      %123 = sbr.rel (0) target = $region45
    $region44: #{sleep_stage_forward.1} parent=1 // pred_region
      %s125 = ssub.s32 768, 768
      %126 = vsyncadd [#allocation20], %s125
      %s127 = sshll.u32 [#allocation19], 4
      %s128 = int_to_ptr.vmem [resolvable:$true] %s127
      %133 = dma.hbm_to_vmem [thread:$0]  %s10, 768, %s128, [#allocation20], 192, 192, 12
    $region45: #{sleep_stage_forward.1} parent=1 // pred_fallthru
      _
    // Predicated region
    $region46: #{sleep_stage_forward.1} parent=1 // pred_check
      _
    $region47: #{sleep_stage_forward.1} parent=1 // pred_check_branch
      %135 = sbr.rel (0) target = $region49
    $region48: #{sleep_stage_forward.1} parent=1 // pred_region
      %s137 = ssub.s32 96, 96
      %138 = vsyncadd [#allocation20], %s137
      %s140 = sshll.u32 [#allocation21], 4
      %s141 = int_to_ptr.vmem [resolvable:$true] %s140
      %143 = dma.hbm_to_vmem [thread:$0]  %s11, 96, %s141, [#allocation20]
    $region49: #{sleep_stage_forward.1} parent=1 // pred_fallthru
      _
    // Predicated region
    $region50: #{sleep_stage_forward.1} parent=1 // pred_check
      _
    $region51: #{sleep_stage_forward.1} parent=1 // pred_check_branch
      %145 = sbr.rel (0) target = $region53
    $region52: #{sleep_stage_forward.1} parent=1 // pred_region
      _
    $region53: #{sleep_stage_forward.1} parent=1 // pred_fallthru
      _
    // Predicated region
    $region54: #{sleep_stage_forward.1} parent=1 // pred_check
      _
    $region55: #{sleep_stage_forward.1} parent=1 // pred_check_branch
      %147 = sbr.rel (0) target = $region57
    $region56: #{sleep_stage_forward.1} parent=1 // pred_region
      %s149 = ssub.s32 384, 384
      %150 = vsyncadd [#allocation23], %s149
      %s151 = sshll.u32 [#allocation22], 4
      %s152 = int_to_ptr.vmem [resolvable:$true] %s151
      %157 = dma.hbm_to_vmem [thread:$0]  %s13, 384, %s152, [#allocation23], 192, 192, 12
    $region57: #{sleep_stage_forward.1} parent=1 // pred_fallthru
      _
    // Predicated region
    $region58: #{sleep_stage_forward.1} parent=1 // pred_check
      _
    $region59: #{sleep_stage_forward.1} parent=1 // pred_check_branch
      %159 = sbr.rel (0) target = $region61
    $region60: #{sleep_stage_forward.1} parent=1 // pred_region
      %s161 = ssub.s32 96, 96
      %162 = vsyncadd [#allocation23], %s161
      %s164 = sshll.u32 [#allocation24], 4
      %s165 = int_to_ptr.vmem [resolvable:$true] %s164
      %167 = dma.hbm_to_vmem [thread:$0]  %s14, 96, %s165, [#allocation23]
    $region61: #{sleep_stage_forward.1} parent=1 // pred_fallthru
      _
    // Predicated region
    $region62: #{sleep_stage_forward.1} parent=1 // pred_check
      _
    $region63: #{sleep_stage_forward.1} parent=1 // pred_check_branch
      %169 = sbr.rel (0) target = $region65
    $region64: #{sleep_stage_forward.1} parent=1 // pred_region
      %s171 = ssub.s32 384, 384
      %172 = vsyncadd [#allocation26], %s171
      %s173 = sshll.u32 [#allocation25], 4
      %s174 = int_to_ptr.vmem [resolvable:$true] %s173
      %179 = dma.hbm_to_vmem [thread:$0]  %s15, 384, %s174, [#allocation26], 192, 192, 12
    $region65: #{sleep_stage_forward.1} parent=1 // pred_fallthru
      _
    // Predicated region
    $region66: #{sleep_stage_forward.1} parent=1 // pred_check
      _
    $region67: #{sleep_stage_forward.1} parent=1 // pred_check_branch
      %181 = sbr.rel (0) target = $region69
    $region68: #{sleep_stage_forward.1} parent=1 // pred_region
      %s183 = ssub.s32 384, 384
      %184 = vsyncadd [#allocation26], %s183
      %s185 = sshll.u32 [#allocation27], 4
      %s186 = int_to_ptr.vmem [resolvable:$true] %s185
      %191 = dma.hbm_to_vmem [thread:$0]  %s16, 384, %s186, [#allocation26], 192, 192, 12
    $region69: #{sleep_stage_forward.1} parent=1 // pred_fallthru
      _
    // Predicated region
    $region70: #{sleep_stage_forward.1} parent=1 // pred_check
      _
    $region71: #{sleep_stage_forward.1} parent=1 // pred_check_branch
      %193 = sbr.rel (0) target = $region73
    $region72: #{sleep_stage_forward.1} parent=1 // pred_region
      %s195 = ssub.s32 96, 96
      %196 = vsyncadd [#allocation29], %s195
      %s198 = sshll.u32 [#allocation28], 4
      %s199 = int_to_ptr.vmem [resolvable:$true] %s198
      %201 = dma.hbm_to_vmem [thread:$0]  %s17, 96, %s199, [#allocation29]
    $region73: #{sleep_stage_forward.1} parent=1 // pred_fallthru
      _
    // Predicated region
    $region74: #{sleep_stage_forward.1} parent=1 // pred_check
      _
    $region75: #{sleep_stage_forward.1} parent=1 // pred_check_branch
      %203 = sbr.rel (0) target = $region77
    $region76: #{sleep_stage_forward.1} parent=1 // pred_region
      %s205 = ssub.s32 384, 384
      %206 = vsyncadd [#allocation29], %s205
      %s207 = sshll.u32 [#allocation30], 4
      %s208 = int_to_ptr.vmem [resolvable:$true] %s207
      %213 = dma.hbm_to_vmem [thread:$0]  %s18, 384, %s208, [#allocation29], 192, 192, 12
    $region77: #{sleep_stage_forward.1} parent=1 // pred_fallthru
      _
    // Predicated region
    $region78: #{sleep_stage_forward.1} parent=1 // pred_check
      _
    $region79: #{sleep_stage_forward.1} parent=1 // pred_check_branch
      %215 = sbr.rel (0) target = $region81
    $region80: #{sleep_stage_forward.1} parent=1 // pred_region
      %s217 = ssub.s32 384, 384
      %218 = vsyncadd [#allocation32], %s217
      %s219 = sshll.u32 [#allocation31], 4
      %s220 = int_to_ptr.vmem [resolvable:$true] %s219
      %225 = dma.hbm_to_vmem [thread:$0]  %s19, 384, %s220, [#allocation32], 192, 192, 12
    $region81: #{sleep_stage_forward.1} parent=1 // pred_fallthru
      _
    // Predicated region
    $region82: #{sleep_stage_forward.1} parent=1 // pred_check
      _
    $region83: #{sleep_stage_forward.1} parent=1 // pred_check_branch
      %227 = sbr.rel (0) target = $region85
    $region84: #{sleep_stage_forward.1} parent=1 // pred_region
      %s229 = ssub.s32 96, 96
      %230 = vsyncadd [#allocation32], %s229
      %s232 = sshll.u32 [#allocation33], 4
      %s233 = int_to_ptr.vmem [resolvable:$true] %s232
      %235 = dma.hbm_to_vmem [thread:$0]  %s20, 96, %s233, [#allocation32]
    $region85: #{sleep_stage_forward.1} parent=1 // pred_fallthru
      _
    // Predicated region
    $region86: #{sleep_stage_forward.1} parent=1 // pred_check
      _
    $region87: #{sleep_stage_forward.1} parent=1 // pred_check_branch
      %237 = sbr.rel (0) target = $region89
    $region88: #{sleep_stage_forward.1} parent=1 // pred_region
      _
    $region89: #{sleep_stage_forward.1} parent=1 // pred_fallthru
      _
    // Predicated region
    $region90: #{sleep_stage_forward.1} parent=1 // pred_check
      _
    $region91: #{sleep_stage_forward.1} parent=1 // pred_check_branch
      %239 = sbr.rel (0) target = $region93
    $region92: #{sleep_stage_forward.1} parent=1 // pred_region
      %s241 = ssub.s32 16, 16
      %242 = vsyncadd [#allocation35], %s241
      %s244 = sshll.u32 [#allocation34], 4
      %s245 = int_to_ptr.vmem [resolvable:$true] %s244
      %247 = dma.hbm_to_vmem [thread:$0]  %s22, 16, %s245, [#allocation35]
    $region93: #{sleep_stage_forward.1} parent=1 // pred_fallthru
      _
    // Predicated region
    $region94: #{sleep_stage_forward.1} parent=1 // pred_check
      _
    $region95: #{sleep_stage_forward.1} parent=1 // pred_check_branch
      %249 = sbr.rel (0) target = $region97
    $region96: #{sleep_stage_forward.1} parent=1 // pred_region
      %250 = dma.done [#allocation9], 192
    $region97: #{sleep_stage_forward.1} parent=1 // pred_fallthru
      _
    // Predicated region
    $region98: #{sleep_stage_forward.1} parent=1 // pred_check
      _
    $region99: #{sleep_stage_forward.1} parent=1 // pred_check_branch
      %252 = sbr.rel (0) target = $region101
    $region100: #{sleep_stage_forward.1} parent=1 // pred_region
      %253 = dma.done [#allocation11], 16
    $region101: #{sleep_stage_forward.1} parent=1 // pred_fallthru
      _
    // Predicated region
    $region102: #{sleep_stage_forward.1} parent=1 // pred_check
      _
    $region103: #{sleep_stage_forward.1} parent=1 // pred_check_branch
      %255 = sbr.rel (0) target = $region105
    $region104: #{sleep_stage_forward.1} parent=1 // pred_region
      %256 = dma.done [#allocation11], 2496
    $region105: #{sleep_stage_forward.1} parent=1 // pred_fallthru
      _
    // Predicated region
    $region106: #{sleep_stage_forward.1} parent=1 // pred_check
      _
    $region107: #{sleep_stage_forward.1} parent=1 // pred_check_branch
      %258 = sbr.rel (0) target = $region109
    $region108: #{sleep_stage_forward.1} parent=1 // pred_region
      %259 = dma.done [#allocation14], 96
    $region109: #{sleep_stage_forward.1} parent=1 // pred_fallthru
      _
    // Predicated region
    $region110: #{sleep_stage_forward.1} parent=1 // pred_check
      _
    $region111: #{sleep_stage_forward.1} parent=1 // pred_check_branch
      %261 = sbr.rel (0) target = $region113
    $region112: #{sleep_stage_forward.1} parent=1 // pred_region
      %262 = dma.done [#allocation14], 1344
    $region113: #{sleep_stage_forward.1} parent=1 // pred_fallthru
      _
    // Predicated region
    $region114: #{sleep_stage_forward.1} parent=1 // pred_check
      _
    $region115: #{sleep_stage_forward.1} parent=1 // pred_check_branch
      %264 = sbr.rel (0) target = $region117
    $region116: #{sleep_stage_forward.1} parent=1 // pred_region
      %265 = dma.done [#allocation17], 96
    $region117: #{sleep_stage_forward.1} parent=1 // pred_fallthru
      _
    // Predicated region
    $region118: #{sleep_stage_forward.1} parent=1 // pred_check
      _
    $region119: #{sleep_stage_forward.1} parent=1 // pred_check_branch
      %267 = sbr.rel (0) target = $region121
    $region120: #{sleep_stage_forward.1} parent=1 // pred_region
      %268 = dma.done [#allocation17], 768
    $region121: #{sleep_stage_forward.1} parent=1 // pred_fallthru
      _
    // Predicated region
    $region122: #{sleep_stage_forward.1} parent=1 // pred_check
      _
    $region123: #{sleep_stage_forward.1} parent=1 // pred_check_branch
      %270 = sbr.rel (0) target = $region125
    $region124: #{sleep_stage_forward.1} parent=1 // pred_region
      %271 = dma.done [#allocation20], 768
    $region125: #{sleep_stage_forward.1} parent=1 // pred_fallthru
      _
    // Predicated region
    $region126: #{sleep_stage_forward.1} parent=1 // pred_check
      _
    $region127: #{sleep_stage_forward.1} parent=1 // pred_check_branch
      %273 = sbr.rel (0) target = $region129
    $region128: #{sleep_stage_forward.1} parent=1 // pred_region
      %274 = dma.done [#allocation20], 96
    $region129: #{sleep_stage_forward.1} parent=1 // pred_fallthru
      _
    // Predicated region
    $region130: #{sleep_stage_forward.1} parent=1 // pred_check
      _
    $region131: #{sleep_stage_forward.1} parent=1 // pred_check_branch
      %276 = sbr.rel (0) target = $region133
    $region132: #{sleep_stage_forward.1} parent=1 // pred_region
      %277 = dma.done [#allocation23], 384
    $region133: #{sleep_stage_forward.1} parent=1 // pred_fallthru
      _
    // Predicated region
    $region134: #{sleep_stage_forward.1} parent=1 // pred_check
      _
    $region135: #{sleep_stage_forward.1} parent=1 // pred_check_branch
      %279 = sbr.rel (0) target = $region137
    $region136: #{sleep_stage_forward.1} parent=1 // pred_region
      %280 = dma.done [#allocation23], 96
    $region137: #{sleep_stage_forward.1} parent=1 // pred_fallthru
      _
    // Predicated region
    $region138: #{sleep_stage_forward.1} parent=1 // pred_check
      _
    $region139: #{sleep_stage_forward.1} parent=1 // pred_check_branch
      %282 = sbr.rel (0) target = $region141
    $region140: #{sleep_stage_forward.1} parent=1 // pred_region
      %283 = dma.done [#allocation26], 384
    $region141: #{sleep_stage_forward.1} parent=1 // pred_fallthru
      _
    // Predicated region
    $region142: #{sleep_stage_forward.1} parent=1 // pred_check
      _
    $region143: #{sleep_stage_forward.1} parent=1 // pred_check_branch
      %285 = sbr.rel (0) target = $region145
    $region144: #{sleep_stage_forward.1} parent=1 // pred_region
      %286 = dma.done [#allocation26], 384
    $region145: #{sleep_stage_forward.1} parent=1 // pred_fallthru
      _
    // Predicated region
    $region146: #{sleep_stage_forward.1} parent=1 // pred_check
      _
    $region147: #{sleep_stage_forward.1} parent=1 // pred_check_branch
      %288 = sbr.rel (0) target = $region149
    $region148: #{sleep_stage_forward.1} parent=1 // pred_region
      %289 = dma.done [#allocation29], 96
    $region149: #{sleep_stage_forward.1} parent=1 // pred_fallthru
      _
    // Predicated region
    $region150: #{sleep_stage_forward.1} parent=1 // pred_check
      _
    $region151: #{sleep_stage_forward.1} parent=1 // pred_check_branch
      %291 = sbr.rel (0) target = $region153
    $region152: #{sleep_stage_forward.1} parent=1 // pred_region
      %292 = dma.done [#allocation29], 384
    $region153: #{sleep_stage_forward.1} parent=1 // pred_fallthru
      _
    // Predicated region
    $region154: #{sleep_stage_forward.1} parent=1 // pred_check
      _
    $region155: #{sleep_stage_forward.1} parent=1 // pred_check_branch
      %294 = sbr.rel (0) target = $region157
    $region156: #{sleep_stage_forward.1} parent=1 // pred_region
      %295 = dma.done [#allocation32], 384
    $region157: #{sleep_stage_forward.1} parent=1 // pred_fallthru
      _
    // Predicated region
    $region158: #{sleep_stage_forward.1} parent=1 // pred_check
      _
    $region159: #{sleep_stage_forward.1} parent=1 // pred_check_branch
      %297 = sbr.rel (0) target = $region161
    $region160: #{sleep_stage_forward.1} parent=1 // pred_region
      %298 = dma.done [#allocation32], 96
    $region161: #{sleep_stage_forward.1} parent=1 // pred_fallthru
      _
    // Predicated region
    $region162: #{sleep_stage_forward.1} parent=1 // pred_check
      _
    $region163: #{sleep_stage_forward.1} parent=1 // pred_check_branch
      %300 = sbr.rel (0) target = $region165
    $region164: #{sleep_stage_forward.1} parent=1 // pred_region
      %301 = dma.done [#allocation35], 16
    $region165: #{sleep_stage_forward.1} parent=1 // pred_fallthru
      _
    %v303 = vld [vmem:[%s0] sm:$0xff]
    %v304 = vld [vmem:[%s0 + $0x8] sm:$0xff]
    %v305 = vld [vmem:[%s0 + $0x10] sm:$0xff]
    %v306 = vld [vmem:[%s0 + $0x18] sm:$0xff]
    %v307 = vld [vmem:[%s0 + $0x20] sm:$0xff]
    %v308 = vld [vmem:[%s0 + $0x28] sm:$0xff]
    %v309 = vld [vmem:[%s0 + $0x30] sm:$0xff]
    %v310 = vld [vmem:[%s0 + $0x38] sm:$0xff]
    %v311 = vpack.c.bf16 %v304, %v303
    %v312 = vpack.c.bf16 %v306, %v305
    %v313 = vpack.c.bf16 %v308, %v307
    %v314 = vpack.c.bf16 %v310, %v309
    %v315 = vld [vmem:[#allocation8] sm:$0xf]
    %v316 = vld [vmem:[#allocation8 + $0x4] sm:$0xf]
    %v317 = vld [vmem:[#allocation8 + $0x8] sm:$0x3]
    %v318 = vld [vmem:[#allocation10] sm:$0x1]
    %v320 = vlaneseq
    %v321 = vshrl.u32 %v320, 7
    %v322 = vsub.s32 0, %v321
    %v323 = vrot.slane %v318, %v322
    %v328 = vunpack.c.l.b16 %v315
    %v329 = vunpack.c.l.b16 %v316
    %v330 = vunpack.c.l.b16 %v317
    %v331 = vpack.c.b16 %v329, %v328
    %v332 = vpack.c.b16 %v330, %v330
    %vm334 = vcmask 162816
    %v336 = vsel %vm334, %v311, 0
    %v339 = vsel %vm334, %v312, 0
    %v342 = vsel %vm334, %v313, 0
    %v345 = vsel %vm334, %v314, 0
    %vm347 = vcmask 1041408
    %v349 = vsel %vm347, %v332, 0
    %351 = vmatprep.subr.bf16.mxu0 0
    %352 = vmatpush1.bf16.msra.mxu0 %v331
    %353 = vmatprep.subr.bf16.mxu0 0
    %354 = vmatpush1.bf16.msra.mxu0 %v349
    %355 = vmatprep.subr.bf16.mxu0 0
    %356 = vmatpush1.bf16.msra.mxu0 0
    %357 = vmatprep.subr.bf16.mxu0 0
    %358 = vmatpush1.bf16.msra.mxu0 0
    %359 = vmatprep.subr.bf16.mxu0 0
    %360 = vmatpush1.bf16.msra.mxu0 0
    %361 = vmatprep.subr.bf16.mxu0 0
    %362 = vmatpush1.bf16.msra.mxu0 0
    %363 = vmatprep.subr.bf16.mxu0 0
    %364 = vmatpush1.bf16.msra.mxu0 0
    %365 = vmatprep.subr.bf16.mxu0 0
    %366 = vmatpush1.bf16.msra.mxu0 0
    %367 = vmatprep.subr.bf16.mxu0 0
    %368 = vmatpush1.bf16.msra.mxu0 0
    %369 = vmatprep.subr.bf16.mxu0 0
    %370 = vmatpush1.bf16.msra.mxu0 0
    %371 = vmatprep.subr.bf16.mxu0 0
    %372 = vmatpush1.bf16.msra.mxu0 0
    %373 = vmatprep.subr.bf16.mxu0 0
    %374 = vmatpush1.bf16.msra.mxu0 0
    %375 = vmatprep.subr.bf16.mxu0 0
    %376 = vmatpush1.bf16.msra.mxu0 0
    %377 = vmatprep.subr.bf16.mxu0 0
    %378 = vmatpush1.bf16.msra.mxu0 0
    %379 = vmatprep.subr.bf16.mxu0 0
    %380 = vmatpush1.bf16.msra.mxu0 0
    %381 = vmatprep.subr.bf16.mxu0 0
    %382 = vmatpush1.bf16.msra.mxu0 0
    %383 = vmatprep.mubr.bf16.mxu0 0
    %384 = vmatmul.mubr.bf16.gmra.mrb[0].mxu0 %v336
    %v385 = vpop.f32.mrb[0].mxu0
    %v386 = vadd.f32 %v323, %v385
    %v387 = vpop.f32.mrb[0].mxu0
    %v388 = vpop.f32.mrb[0].mxu0
    %v389 = vadd.f32 %v323, %v388
    %v390 = vpop.f32.mrb[0].mxu0
    %391 = vmatprep.mubr.bf16.mxu0 0
    %392 = vmatmul.mubr.bf16.gmra.mrb[0].mxu0 %v339
    %v393 = vpop.f32.mrb[0].mxu0
    %v394 = vadd.f32 %v323, %v393
    %v395 = vpop.f32.mrb[0].mxu0
    %v396 = vpop.f32.mrb[0].mxu0
    %v397 = vadd.f32 %v323, %v396
    %v398 = vpop.f32.mrb[0].mxu0
    %399 = vmatprep.mubr.bf16.mxu0 0
    %400 = vmatmul.mubr.bf16.gmra.mrb[0].mxu0 %v342
    %v401 = vpop.f32.mrb[0].mxu0
    %v402 = vadd.f32 %v323, %v401
    %v403 = vpop.f32.mrb[0].mxu0
    %v404 = vpop.f32.mrb[0].mxu0
    %v405 = vadd.f32 %v323, %v404
    %v406 = vpop.f32.mrb[0].mxu0
    %407 = vmatprep.mubr.bf16.mxu0 0
    %408 = vmatmul.mubr.bf16.gmra.mrb[0].mxu0 %v345
    %v409 = vpop.f32.mrb[0].mxu0
    %v410 = vadd.f32 %v323, %v409
    %v411 = vpop.f32.mrb[0].mxu0
    %v412 = vpop.f32.mrb[0].mxu0
    %v413 = vadd.f32 %v323, %v412
    %v414 = vpop.f32.mrb[0].mxu0
    %415 = vdwg.mxu0
    %vm416 = vcmp.ge.f32.partialorder %v386, 0.0
    %vm417 = vcmp.ge.f32.partialorder %v389, 0.0
    %vm418 = vcmp.ge.f32.partialorder %v394, 0.0
    %vm419 = vcmp.ge.f32.partialorder %v397, 0.0
    %vm420 = vcmp.ge.f32.partialorder %v402, 0.0
    %vm421 = vcmp.ge.f32.partialorder %v405, 0.0
    %vm422 = vcmp.ge.f32.partialorder %v410, 0.0
    %vm423 = vcmp.ge.f32.partialorder %v413, 0.0
    %v424 = vmul.f32 %v386, 0.01
    %v425 = vmul.f32 %v389, 0.01
    %v426 = vmul.f32 %v394, 0.01
    %v427 = vmul.f32 %v397, 0.01
    %v428 = vmul.f32 %v402, 0.01
    %v429 = vmul.f32 %v405, 0.01
    %v430 = vmul.f32 %v410, 0.01
    %v431 = vmul.f32 %v413, 0.01
    %v432 = vsel %vm416, %v386, %v424
    %v433 = vsel %vm417, %v389, %v425
    %v434 = vsel %vm418, %v394, %v426
    %v435 = vsel %vm419, %v397, %v427
    %v436 = vsel %vm420, %v402, %v428
    %v437 = vsel %vm421, %v405, %v429
    %v438 = vsel %vm422, %v410, %v430
    %v439 = vsel %vm423, %v413, %v431
    %v440 = vpack.c.bf16 %v433, %v432
    %v441 = vpack.c.bf16 %v435, %v434
    %v442 = vpack.c.bf16 %v437, %v436
    %v443 = vpack.c.bf16 %v439, %v438
    %v444 = vld [vmem:[#allocation13] sm:$0x3f]
    %v445 = vld [vmem:[#allocation12] sm:$0xff]
    %v446 = vld [vmem:[#allocation12 + $0x8] sm:$0xf]
    %v447 = vld [vmem:[#allocation12 + $0xc] sm:$0xff]
    %v448 = vld [vmem:[#allocation12 + $0x14] sm:$0xf]
    %v449 = vld [vmem:[#allocation12 + $0x18] sm:$0xff]
    %v450 = vld [vmem:[#allocation12 + $0x20] sm:$0xf]
    %v451 = vld [vmem:[#allocation12 + $0x24] sm:$0xff]
    %v452 = vld [vmem:[#allocation12 + $0x2c] sm:$0xf]
    %v453 = vld [vmem:[#allocation12 + $0x30] sm:$0xff]
    %v454 = vld [vmem:[#allocation12 + $0x38] sm:$0xf]
    %v455 = vld [vmem:[#allocation12 + $0x3c] sm:$0xff]
    %v456 = vld [vmem:[#allocation12 + $0x44] sm:$0xf]
    %v457 = vld [vmem:[#allocation12 + $0x48] sm:$0xff]
    %v458 = vld [vmem:[#allocation12 + $0x50] sm:$0xf]
    %v459 = vld [vmem:[#allocation12 + $0x54] sm:$0xff]
    %v460 = vld [vmem:[#allocation12 + $0x5c] sm:$0xf]
    %v461 = vld [vmem:[#allocation12 + $0x60] sm:$0xff]
    %v462 = vld [vmem:[#allocation12 + $0x68] sm:$0xf]
    %v463 = vld [vmem:[#allocation12 + $0x6c] sm:$0xff]
    %v464 = vld [vmem:[#allocation12 + $0x74] sm:$0xf]
    %v465 = vld [vmem:[#allocation12 + $0x78] sm:$0xff]
    %v466 = vld [vmem:[#allocation12 + $0x80] sm:$0xf]
    %v467 = vld [vmem:[#allocation12 + $0x84] sm:$0xff]
    %v468 = vld [vmem:[#allocation12 + $0x8c] sm:$0xf]
    %v469 = vld [vmem:[#allocation12 + $0x90] sm:$0x33]
    %v470 = vld [vmem:[#allocation12 + $0x98] sm:$0x3]
    %v472 = vlaneseq
    %v473 = vshrl.u32 %v472, 7
    %v474 = vsub.s32 0, %v473
    %v475 = vrot.slane %v444, %v474
    %v476 = vlaneseq
    %v477 = vshrl.u32 %v476, 7
    %v478 = vsub.s32 2, %v477
    %v479 = vrot.slane %v444, %v478
    %v480 = vlaneseq
    %v481 = vshrl.u32 %v480, 7
    %v482 = vsub.s32 4, %v481
    %v483 = vrot.slane %v444, %v482
    %v487 = vlaneseq
    %v488 = vshrl.u32 %v487, 7
    %v489 = vsub.s32 0, %v488
    %v490 = vrot.slane %v475, %v489
    %v491 = vlaneseq
    %v492 = vshrl.u32 %v491, 7
    %v493 = vsub.s32 0, %v492
    %v494 = vrot.slane %v479, %v493
    %v495 = vlaneseq
    %v496 = vshrl.u32 %v495, 7
    %v497 = vsub.s32 0, %v496
    %v498 = vrot.slane %v483, %v497
    %v525 = vunpack.c.l.b16 %v445
    %v526 = vunpack.c.h.b16 %v445
    %v527 = vunpack.c.l.b16 %v446
    %v528 = vunpack.c.l.b16 %v447
    %v529 = vunpack.c.h.b16 %v447
    %v530 = vunpack.c.l.b16 %v448
    %v531 = vunpack.c.l.b16 %v449
    %v532 = vunpack.c.h.b16 %v449
    %v533 = vunpack.c.l.b16 %v450
    %v534 = vunpack.c.l.b16 %v451
    %v535 = vunpack.c.h.b16 %v451
    %v536 = vunpack.c.l.b16 %v452
    %v537 = vunpack.c.l.b16 %v453
    %v538 = vunpack.c.h.b16 %v453
    %v539 = vunpack.c.l.b16 %v454
    %v540 = vunpack.c.l.b16 %v455
    %v541 = vunpack.c.h.b16 %v455
    %v542 = vunpack.c.l.b16 %v456
    %v543 = vunpack.c.l.b16 %v457
    %v544 = vunpack.c.h.b16 %v457
    %v545 = vunpack.c.l.b16 %v458
    %v546 = vunpack.c.l.b16 %v459
    %v547 = vunpack.c.h.b16 %v459
    %v548 = vunpack.c.l.b16 %v460
    %v549 = vunpack.c.l.b16 %v461
    %v550 = vunpack.c.h.b16 %v461
    %v551 = vunpack.c.l.b16 %v462
    %v552 = vunpack.c.l.b16 %v463
    %v553 = vunpack.c.h.b16 %v463
    %v554 = vunpack.c.l.b16 %v464
    %v555 = vunpack.c.l.b16 %v465
    %v556 = vunpack.c.h.b16 %v465
    %v557 = vunpack.c.l.b16 %v466
    %v558 = vunpack.c.l.b16 %v467
    %v559 = vunpack.c.h.b16 %v467
    %v560 = vunpack.c.l.b16 %v468
    %v561 = vunpack.c.l.b16 %v469
    %v562 = vunpack.c.h.b16 %v469
    %v563 = vunpack.c.l.b16 %v470
    %v564 = vpack.c.b16 %v528, %v525
    %v565 = vpack.c.b16 %v529, %v526
    %v566 = vpack.c.b16 %v530, %v527
    %v567 = vpack.c.b16 %v534, %v531
    %v568 = vpack.c.b16 %v535, %v532
    %v569 = vpack.c.b16 %v536, %v533
    %v570 = vpack.c.b16 %v540, %v537
    %v571 = vpack.c.b16 %v541, %v538
    %v572 = vpack.c.b16 %v542, %v539
    %v573 = vpack.c.b16 %v546, %v543
    %v574 = vpack.c.b16 %v547, %v544
    %v575 = vpack.c.b16 %v548, %v545
    %v576 = vpack.c.b16 %v552, %v549
    %v577 = vpack.c.b16 %v553, %v550
    %v578 = vpack.c.b16 %v554, %v551
    %v579 = vpack.c.b16 %v558, %v555
    %v580 = vpack.c.b16 %v559, %v556
    %v581 = vpack.c.b16 %v560, %v557
    %v582 = vpack.c.b16 %v561, %v561
    %v583 = vpack.c.b16 %v562, %v562
    %v584 = vpack.c.b16 %v563, %v563
    %vm603 = vcmask 818176
    %v605 = vsel %vm603, %v440, 0
    %v608 = vsel %vm603, %v441, 0
    %v611 = vsel %vm603, %v442, 0
    %v614 = vsel %vm603, %v443, 0
    %v617 = vsel %vm347, %v582, 0
    %v620 = vsel %vm347, %v583, 0
    %v623 = vsel %vm347, %v584, 0
    %625 = vmatprep.subr.bf16.mxu0 %v565
    %626 = vmatpush1.bf16.msra.mxu0 %v564
    %627 = vmatprep.subr.bf16.mxu0 %v568
    %628 = vmatpush1.bf16.msra.mxu0 %v567
    %629 = vmatprep.subr.bf16.mxu0 %v571
    %630 = vmatpush1.bf16.msra.mxu0 %v570
    %631 = vmatprep.subr.bf16.mxu0 %v574
    %632 = vmatpush1.bf16.msra.mxu0 %v573
    %633 = vmatprep.subr.bf16.mxu0 %v577
    %634 = vmatpush1.bf16.msra.mxu0 %v576
    %635 = vmatprep.subr.bf16.mxu0 %v580
    %636 = vmatpush1.bf16.msra.mxu0 %v579
    %637 = vmatprep.subr.bf16.mxu0 %v620
    %638 = vmatpush1.bf16.msra.mxu0 %v617
    %639 = vmatprep.subr.bf16.mxu0 0
    %640 = vmatpush1.bf16.msra.mxu0 0
    %641 = vmatprep.subr.bf16.mxu0 0
    %642 = vmatpush1.bf16.msra.mxu0 0
    %643 = vmatprep.subr.bf16.mxu0 0
    %644 = vmatpush1.bf16.msra.mxu0 0
    %645 = vmatprep.subr.bf16.mxu0 0
    %646 = vmatpush1.bf16.msra.mxu0 0
    %647 = vmatprep.subr.bf16.mxu0 0
    %648 = vmatpush1.bf16.msra.mxu0 0
    %649 = vmatprep.subr.bf16.mxu0 0
    %650 = vmatpush1.bf16.msra.mxu0 0
    %651 = vmatprep.subr.bf16.mxu0 0
    %652 = vmatpush1.bf16.msra.mxu0 0
    %653 = vmatprep.subr.bf16.mxu0 0
    %654 = vmatpush1.bf16.msra.mxu0 0
    %655 = vmatprep.subr.bf16.mxu0 0
    %656 = vmatpush1.bf16.msra.mxu0 0
    %657 = vmatprep.mubr.bf16.mxu0 0
    %658 = vmatmul.mubr.bf16.gmra.mrb[0].mxu0 %v605
    %v659 = vpop.f32.mrb[0].mxu0
    %v660 = vadd.f32 %v490, %v659
    %v661 = vpop.f32.mrb[0].mxu0
    %v662 = vadd.f32 %v494, %v661
    %v663 = vpop.f32.mrb[0].mxu0
    %v664 = vadd.f32 %v490, %v663
    %v665 = vpop.f32.mrb[0].mxu0
    %v666 = vadd.f32 %v494, %v665
    %667 = vmatprep.mubr.bf16.mxu0 0
    %668 = vmatmul.mubr.bf16.gmra.mrb[0].mxu0 %v608
    %v669 = vpop.f32.mrb[0].mxu0
    %v670 = vadd.f32 %v490, %v669
    %v671 = vpop.f32.mrb[0].mxu0
    %v672 = vadd.f32 %v494, %v671
    %v673 = vpop.f32.mrb[0].mxu0
    %v674 = vadd.f32 %v490, %v673
    %v675 = vpop.f32.mrb[0].mxu0
    %v676 = vadd.f32 %v494, %v675
    %677 = vmatprep.mubr.bf16.mxu0 0
    %678 = vmatmul.mubr.bf16.gmra.mrb[0].mxu0 %v611
    %v679 = vpop.f32.mrb[0].mxu0
    %v680 = vadd.f32 %v490, %v679
    %v681 = vpop.f32.mrb[0].mxu0
    %v682 = vadd.f32 %v494, %v681
    %v683 = vpop.f32.mrb[0].mxu0
    %v684 = vadd.f32 %v490, %v683
    %v685 = vpop.f32.mrb[0].mxu0
    %v686 = vadd.f32 %v494, %v685
    %687 = vmatprep.mubr.bf16.mxu0 0
    %688 = vmatmul.mubr.bf16.gmra.mrb[0].mxu0 %v614
    %v689 = vpop.f32.mrb[0].mxu0
    %v690 = vadd.f32 %v490, %v689
    %v691 = vpop.f32.mrb[0].mxu0
    %v692 = vadd.f32 %v494, %v691
    %v693 = vpop.f32.mrb[0].mxu0
    %v694 = vadd.f32 %v490, %v693
    %v695 = vpop.f32.mrb[0].mxu0
    %v696 = vadd.f32 %v494, %v695
    %697 = vdwg.mxu0
    %698 = vmatprep.subr.bf16.mxu0 0
    %699 = vmatpush1.bf16.msra.mxu0 %v566
    %700 = vmatprep.subr.bf16.mxu0 0
    %701 = vmatpush1.bf16.msra.mxu0 %v569
    %702 = vmatprep.subr.bf16.mxu0 0
    %703 = vmatpush1.bf16.msra.mxu0 %v572
    %704 = vmatprep.subr.bf16.mxu0 0
    %705 = vmatpush1.bf16.msra.mxu0 %v575
    %706 = vmatprep.subr.bf16.mxu0 0
    %707 = vmatpush1.bf16.msra.mxu0 %v578
    %708 = vmatprep.subr.bf16.mxu0 0
    %709 = vmatpush1.bf16.msra.mxu0 %v581
    %710 = vmatprep.subr.bf16.mxu0 0
    %711 = vmatpush1.bf16.msra.mxu0 %v623
    %712 = vmatprep.subr.bf16.mxu0 0
    %713 = vmatpush1.bf16.msra.mxu0 0
    %714 = vmatprep.subr.bf16.mxu0 0
    %715 = vmatpush1.bf16.msra.mxu0 0
    %716 = vmatprep.subr.bf16.mxu0 0
    %717 = vmatpush1.bf16.msra.mxu0 0
    %718 = vmatprep.subr.bf16.mxu0 0
    %719 = vmatpush1.bf16.msra.mxu0 0
    %720 = vmatprep.subr.bf16.mxu0 0
    %721 = vmatpush1.bf16.msra.mxu0 0
    %722 = vmatprep.subr.bf16.mxu0 0
    %723 = vmatpush1.bf16.msra.mxu0 0
    %724 = vmatprep.subr.bf16.mxu0 0
    %725 = vmatpush1.bf16.msra.mxu0 0
    %726 = vmatprep.subr.bf16.mxu0 0
    %727 = vmatpush1.bf16.msra.mxu0 0
    %728 = vmatprep.subr.bf16.mxu0 0
    %729 = vmatpush1.bf16.msra.mxu0 0
    %730 = vmatprep.mubr.bf16.mxu0 0
    %731 = vmatmul.mubr.bf16.gmra.mrb[0].mxu0 %v605
    %v732 = vpop.f32.mrb[0].mxu0
    %v733 = vadd.f32 %v498, %v732
    %v734 = vpop.f32.mrb[0].mxu0
    %v735 = vpop.f32.mrb[0].mxu0
    %v736 = vadd.f32 %v498, %v735
    %v737 = vpop.f32.mrb[0].mxu0
    %738 = vmatprep.mubr.bf16.mxu0 0
    %739 = vmatmul.mubr.bf16.gmra.mrb[0].mxu0 %v608
    %v740 = vpop.f32.mrb[0].mxu0
    %v741 = vadd.f32 %v498, %v740
    %v742 = vpop.f32.mrb[0].mxu0
    %v743 = vpop.f32.mrb[0].mxu0
    %v744 = vadd.f32 %v498, %v743
    %v745 = vpop.f32.mrb[0].mxu0
    %746 = vmatprep.mubr.bf16.mxu0 0
    %747 = vmatmul.mubr.bf16.gmra.mrb[0].mxu0 %v611
    %v748 = vpop.f32.mrb[0].mxu0
    %v749 = vadd.f32 %v498, %v748
    %v750 = vpop.f32.mrb[0].mxu0
    %v751 = vpop.f32.mrb[0].mxu0
    %v752 = vadd.f32 %v498, %v751
    %v753 = vpop.f32.mrb[0].mxu0
    %754 = vmatprep.mubr.bf16.mxu0 0
    %755 = vmatmul.mubr.bf16.gmra.mrb[0].mxu0 %v614
    %v756 = vpop.f32.mrb[0].mxu0
    %v757 = vadd.f32 %v498, %v756
    %v758 = vpop.f32.mrb[0].mxu0
    %v759 = vpop.f32.mrb[0].mxu0
    %v760 = vadd.f32 %v498, %v759
    %v761 = vpop.f32.mrb[0].mxu0
    %762 = vdwg.mxu0
    %763 = vst [vmem:[#allocation2] sm:$0xff] %v660
    %764 = vst [vmem:[#allocation2 + $0x8] sm:$0xff] %v662
    %765 = vst [vmem:[#allocation2 + $0x10] sm:$0xff] %v733
    %766 = vst [vmem:[#allocation2 + $0x18] sm:$0xff] %v664
    %767 = vst [vmem:[#allocation2 + $0x20] sm:$0xff] %v666
    %768 = vst [vmem:[#allocation2 + $0x28] sm:$0xff] %v736
    %769 = vst [vmem:[#allocation2 + $0x30] sm:$0xff] %v670
    %770 = vst [vmem:[#allocation2 + $0x38] sm:$0xff] %v672
    %771 = vst [vmem:[#allocation2 + $0x40] sm:$0xff] %v741
    %772 = vst [vmem:[#allocation2 + $0x48] sm:$0xff] %v674
    %773 = vst [vmem:[#allocation2 + $0x50] sm:$0xff] %v676
    %774 = vst [vmem:[#allocation2 + $0x58] sm:$0xff] %v744
    %775 = vst [vmem:[#allocation2 + $0x60] sm:$0xff] %v680
    %776 = vst [vmem:[#allocation2 + $0x68] sm:$0xff] %v682
    %777 = vst [vmem:[#allocation2 + $0x70] sm:$0xff] %v749
    %778 = vst [vmem:[#allocation2 + $0x78] sm:$0xff] %v684
    %779 = vst [vmem:[#allocation2 + $0x80] sm:$0xff] %v686
    %780 = vst [vmem:[#allocation2 + $0x88] sm:$0xff] %v752
    %781 = vst [vmem:[#allocation2 + $0x90] sm:$0xff] %v690
    %782 = vst [vmem:[#allocation2 + $0x98] sm:$0xff] %v692
    %783 = vst [vmem:[#allocation2 + $0xa0] sm:$0xff] %v757
    %784 = vst [vmem:[#allocation2 + $0xa8] sm:$0xff] %v694
    %785 = vst [vmem:[#allocation2 + $0xb0] sm:$0xff] %v696
    %786 = vst [vmem:[#allocation2 + $0xb8] sm:$0xff] %v760
    %v787 = vld [vmem:[%s4] sm:$0xff]
    %v788 = vld [vmem:[%s4 + $0x8] sm:$0xf]
    %v789 = vld [vmem:[%s4 + $0xc] sm:$0xff]
    %v790 = vld [vmem:[%s4 + $0x14] sm:$0xf]
    %v791 = vld [vmem:[%s4 + $0x18] sm:$0xff]
    %v792 = vld [vmem:[%s4 + $0x20] sm:$0xf]
    %v793 = vld [vmem:[%s4 + $0x24] sm:$0xff]
    %v794 = vld [vmem:[%s4 + $0x2c] sm:$0xf]
    %v795 = vld [vmem:[%s4 + $0x30] sm:$0xff]
    %v796 = vld [vmem:[%s4 + $0x38] sm:$0xf]
    %v797 = vld [vmem:[%s4 + $0x3c] sm:$0xff]
    %v798 = vld [vmem:[%s4 + $0x44] sm:$0xf]
    %v799 = vld [vmem:[%s4 + $0x48] sm:$0x11]
    %v800 = vld [vmem:[%s4 + $0x50] sm:$0x1]
    %v801 = vld [vmem:[#allocation2] sm:$0xff]
    %v802 = vld [vmem:[#allocation2 + $0x8] sm:$0xff]
    %v803 = vld [vmem:[#allocation2 + $0x10] sm:$0xff]
    %v818 = vunpack.c.l.b16 %v787
    %v819 = vunpack.c.h.b16 %v787
    %v820 = vunpack.c.l.b16 %v788
    %v821 = vunpack.c.l.b16 %v789
    %v822 = vunpack.c.h.b16 %v789
    %v823 = vunpack.c.l.b16 %v790
    %v824 = vunpack.c.l.b16 %v791
    %v825 = vunpack.c.h.b16 %v791
    %v826 = vunpack.c.l.b16 %v792
    %v827 = vunpack.c.l.b16 %v793
    %v828 = vunpack.c.h.b16 %v793
    %v829 = vunpack.c.l.b16 %v794
    %v830 = vunpack.c.l.b16 %v795
    %v831 = vunpack.c.h.b16 %v795
    %v832 = vunpack.c.l.b16 %v796
    %v833 = vunpack.c.l.b16 %v797
    %v834 = vunpack.c.h.b16 %v797
    %v835 = vunpack.c.l.b16 %v798
    %v836 = vunpack.c.l.b16 %v799
    %v837 = vunpack.c.h.b16 %v799
    %v838 = vunpack.c.l.b16 %v800
    %v839 = vpack.c.b16 %v821, %v818
    %v840 = vpack.c.b16 %v822, %v819
    %v841 = vpack.c.b16 %v823, %v820
    %v842 = vpack.c.b16 %v827, %v824
    %v843 = vpack.c.b16 %v828, %v825
    %v844 = vpack.c.b16 %v829, %v826
    %v845 = vpack.c.b16 %v833, %v830
    %v846 = vpack.c.b16 %v834, %v831
    %v847 = vpack.c.b16 %v835, %v832
    %v848 = vpack.c.b16 %v836, %v836
    %v849 = vpack.c.b16 %v837, %v837
    %v850 = vpack.c.b16 %v838, %v838
    %vm860 = vcmask 408576
    %v862 = vsel %vm860, 0, 0
    %vm864 = vcmask 1040384
    %v866 = vsel %vm864, %v848, 0
    %v869 = vsel %vm864, %v849, 0
    %v872 = vsel %vm864, %v850, 0
    %874 = vmatprep.subr.bf16.mxu0 %v840
    %875 = vmatpush1.bf16.msra.mxu0 %v839
    %876 = vmatprep.subr.bf16.mxu0 %v843
    %877 = vmatpush1.bf16.msra.mxu0 %v842
    %878 = vmatprep.subr.bf16.mxu0 %v846
    %879 = vmatpush1.bf16.msra.mxu0 %v845
    %880 = vmatprep.subr.bf16.mxu0 %v869
    %881 = vmatpush1.bf16.msra.mxu0 %v866
    %882 = vmatprep.subr.bf16.mxu0 0
    %883 = vmatpush1.bf16.msra.mxu0 0
    %884 = vmatprep.subr.bf16.mxu0 0
    %885 = vmatpush1.bf16.msra.mxu0 0
    %886 = vmatprep.subr.bf16.mxu0 0
    %887 = vmatpush1.bf16.msra.mxu0 0
    %888 = vmatprep.subr.bf16.mxu0 0
    %889 = vmatpush1.bf16.msra.mxu0 0
    %890 = vmatprep.subr.bf16.mxu0 0
    %891 = vmatpush1.bf16.msra.mxu0 0
    %892 = vmatprep.subr.bf16.mxu0 0
    %893 = vmatpush1.bf16.msra.mxu0 0
    %894 = vmatprep.subr.bf16.mxu0 0
    %895 = vmatpush1.bf16.msra.mxu0 0
    %896 = vmatprep.subr.bf16.mxu0 0
    %897 = vmatpush1.bf16.msra.mxu0 0
    %898 = vmatprep.subr.bf16.mxu0 0
    %899 = vmatpush1.bf16.msra.mxu0 0
    %900 = vmatprep.subr.bf16.mxu0 0
    %901 = vmatpush1.bf16.msra.mxu0 0
    %902 = vmatprep.subr.bf16.mxu0 0
    %903 = vmatpush1.bf16.msra.mxu0 0
    %904 = vmatprep.subr.bf16.mxu0 0
    %905 = vmatpush1.bf16.msra.mxu0 0
    %906 = vmatprep.mubr.bf16.mxu0 0
    %907 = vmatmul.mubr.bf16.gmra.mrb[0].mxu0 %v862
    %v908 = vpop.f32.mrb[0].mxu0
    %v909 = vadd.f32 0.0, %v908
    %v910 = vpop.f32.mrb[0].mxu0
    %v911 = vadd.f32 0.0, %v910
    %v912 = vpop.f32.mrb[0].mxu0
    %v913 = vpop.f32.mrb[0].mxu0
    %914 = vdwg.mxu0
    %915 = vmatprep.subr.bf16.mxu0 0
    %916 = vmatpush1.bf16.msra.mxu0 %v841
    %917 = vmatprep.subr.bf16.mxu0 0
    %918 = vmatpush1.bf16.msra.mxu0 %v844
    %919 = vmatprep.subr.bf16.mxu0 0
    %920 = vmatpush1.bf16.msra.mxu0 %v847
    %921 = vmatprep.subr.bf16.mxu0 0
    %922 = vmatpush1.bf16.msra.mxu0 %v872
    %923 = vmatprep.subr.bf16.mxu0 0
    %924 = vmatpush1.bf16.msra.mxu0 0
    %925 = vmatprep.subr.bf16.mxu0 0
    %926 = vmatpush1.bf16.msra.mxu0 0
    %927 = vmatprep.subr.bf16.mxu0 0
    %928 = vmatpush1.bf16.msra.mxu0 0
    %929 = vmatprep.subr.bf16.mxu0 0
    %930 = vmatpush1.bf16.msra.mxu0 0
    %931 = vmatprep.subr.bf16.mxu0 0
    %932 = vmatpush1.bf16.msra.mxu0 0
    %933 = vmatprep.subr.bf16.mxu0 0
    %934 = vmatpush1.bf16.msra.mxu0 0
    %935 = vmatprep.subr.bf16.mxu0 0
    %936 = vmatpush1.bf16.msra.mxu0 0
    %937 = vmatprep.subr.bf16.mxu0 0
    %938 = vmatpush1.bf16.msra.mxu0 0
    %939 = vmatprep.subr.bf16.mxu0 0
    %940 = vmatpush1.bf16.msra.mxu0 0
    %941 = vmatprep.subr.bf16.mxu0 0
    %942 = vmatpush1.bf16.msra.mxu0 0
    %943 = vmatprep.subr.bf16.mxu0 0
    %944 = vmatpush1.bf16.msra.mxu0 0
    %945 = vmatprep.subr.bf16.mxu0 0
    %946 = vmatpush1.bf16.msra.mxu0 0
    %947 = vmatprep.mubr.bf16.mxu0 0
    %948 = vmatmul.mubr.bf16.gmra.mrb[0].mxu0 %v862
    %v949 = vpop.f32.mrb[0].mxu0
    %v950 = vadd.f32 0.0, %v949
    %v951 = vpop.f32.mrb[0].mxu0
    %v952 = vpop.f32.mrb[0].mxu0
    %v953 = vpop.f32.mrb[0].mxu0
    %954 = vdwg.mxu0
    %v955 = vadd.f32 %v801, %v909
    %v956 = vxor.u32 %v955, 2147483648
    %v957 = vmul.f32 %v956, 1.442695
    %v958 = vpow.pop %v957
    %v959 = vadd.f32 %v958, 1.0
    %v960 = vrcp.pop %v959
    %v961 = vmul.f32 1.0, %v960
    %v962 = vadd.f32 %v802, %v911
    %v963 = vxor.u32 %v962, 2147483648
    %v964 = vmul.f32 %v963, 1.442695
    %v965 = vpow.pop %v964
    %v966 = vadd.f32 %v965, 1.0
    %v967 = vrcp.pop %v966
    %v968 = vmul.f32 1.0, %v967
    %v969 = vlaneseq
    %v970 = vshrl.u32 %v969, 7
    %v971 = vsub.s32 1, %v970
    %v972 = vrot.slane %v444, %v971
    %v973 = vadd.f32 %v950, %v972
    %v974 = vmul.f32 %v961, %v973
    %v975 = vadd.f32 %v803, %v974
    %v976 = vtanh.pop %v975
    %v977 = vsub.f32 1.0, %v968
    %v978 = vmul.f32 %v977, %v976
    %v979 = vmul.f32 %v968, 0.0
    %v980 = vadd.f32 %v978, %v979
    %v981 = vxor.u32 %v980, 2147483648
    %v982 = vmul.f32 %v981, 1.442695
    %v983 = vpow.pop %v982
    %v984 = vadd.f32 %v983, 1.0
    %v985 = vrcp.pop %v984
    %v986 = vmul.f32 1.0, %v985
    %987 = vst.msk [vmem:[#allocation3] sm:$0xff] %vm860, %v986
    %v988 = vld [vmem:[#allocation2 + $0x18] sm:$0xff]
    %v989 = vld [vmem:[#allocation2 + $0x20] sm:$0xff]
    %v990 = vld [vmem:[#allocation2 + $0x28] sm:$0xff]
    %v991 = vpack.c.bf16 %v980, %v980
    %v993 = vsel %vm860, %v991, 0
    %995 = vmatprep.subr.bf16.mxu0 %v840
    %996 = vmatpush1.bf16.msra.mxu0 %v839
    %997 = vmatprep.subr.bf16.mxu0 %v843
    %998 = vmatpush1.bf16.msra.mxu0 %v842
    %999 = vmatprep.subr.bf16.mxu0 %v846
    %1000 = vmatpush1.bf16.msra.mxu0 %v845
    %1001 = vmatprep.subr.bf16.mxu0 %v869
    %1002 = vmatpush1.bf16.msra.mxu0 %v866
    %1003 = vmatprep.subr.bf16.mxu0 0
    %1004 = vmatpush1.bf16.msra.mxu0 0
    %1005 = vmatprep.subr.bf16.mxu0 0
    %1006 = vmatpush1.bf16.msra.mxu0 0
    %1007 = vmatprep.subr.bf16.mxu0 0
    %1008 = vmatpush1.bf16.msra.mxu0 0
    %1009 = vmatprep.subr.bf16.mxu0 0
    %1010 = vmatpush1.bf16.msra.mxu0 0
    %1011 = vmatprep.subr.bf16.mxu0 0
    %1012 = vmatpush1.bf16.msra.mxu0 0
    %1013 = vmatprep.subr.bf16.mxu0 0
    %1014 = vmatpush1.bf16.msra.mxu0 0
    %1015 = vmatprep.subr.bf16.mxu0 0
    %1016 = vmatpush1.bf16.msra.mxu0 0
    %1017 = vmatprep.subr.bf16.mxu0 0
    %1018 = vmatpush1.bf16.msra.mxu0 0
    %1019 = vmatprep.subr.bf16.mxu0 0
    %1020 = vmatpush1.bf16.msra.mxu0 0
    %1021 = vmatprep.subr.bf16.mxu0 0
    %1022 = vmatpush1.bf16.msra.mxu0 0
    %1023 = vmatprep.subr.bf16.mxu0 0
    %1024 = vmatpush1.bf16.msra.mxu0 0
    %1025 = vmatprep.subr.bf16.mxu0 0
    %1026 = vmatpush1.bf16.msra.mxu0 0
    %1027 = vmatprep.mubr.bf16.mxu0 0
    %1028 = vmatmul.mubr.bf16.gmra.mrb[0].mxu0 %v993
    %v1029 = vpop.f32.mrb[0].mxu0
    %v1030 = vadd.f32 0.0, %v1029
    %v1031 = vpop.f32.mrb[0].mxu0
    %v1032 = vadd.f32 0.0, %v1031
    %v1033 = vpop.f32.mrb[0].mxu0
    %v1034 = vpop.f32.mrb[0].mxu0
    %1035 = vdwg.mxu0
    %1036 = vmatprep.subr.bf16.mxu0 0
    %1037 = vmatpush1.bf16.msra.mxu0 %v841
    %1038 = vmatprep.subr.bf16.mxu0 0
    %1039 = vmatpush1.bf16.msra.mxu0 %v844
    %1040 = vmatprep.subr.bf16.mxu0 0
    %1041 = vmatpush1.bf16.msra.mxu0 %v847
    %1042 = vmatprep.subr.bf16.mxu0 0
    %1043 = vmatpush1.bf16.msra.mxu0 %v872
    %1044 = vmatprep.subr.bf16.mxu0 0
    %1045 = vmatpush1.bf16.msra.mxu0 0
    %1046 = vmatprep.subr.bf16.mxu0 0
    %1047 = vmatpush1.bf16.msra.mxu0 0
    %1048 = vmatprep.subr.bf16.mxu0 0
    %1049 = vmatpush1.bf16.msra.mxu0 0
    %1050 = vmatprep.subr.bf16.mxu0 0
    %1051 = vmatpush1.bf16.msra.mxu0 0
    %1052 = vmatprep.subr.bf16.mxu0 0
    %1053 = vmatpush1.bf16.msra.mxu0 0
    %1054 = vmatprep.subr.bf16.mxu0 0
    %1055 = vmatpush1.bf16.msra.mxu0 0
    %1056 = vmatprep.subr.bf16.mxu0 0
    %1057 = vmatpush1.bf16.msra.mxu0 0
    %1058 = vmatprep.subr.bf16.mxu0 0
    %1059 = vmatpush1.bf16.msra.mxu0 0
    %1060 = vmatprep.subr.bf16.mxu0 0
    %1061 = vmatpush1.bf16.msra.mxu0 0
    %1062 = vmatprep.subr.bf16.mxu0 0
    %1063 = vmatpush1.bf16.msra.mxu0 0
    %1064 = vmatprep.subr.bf16.mxu0 0
    %1065 = vmatpush1.bf16.msra.mxu0 0
    %1066 = vmatprep.subr.bf16.mxu0 0
    %1067 = vmatpush1.bf16.msra.mxu0 0
    %1068 = vmatprep.mubr.bf16.mxu0 0
    %1069 = vmatmul.mubr.bf16.gmra.mrb[0].mxu0 %v993
    %v1070 = vpop.f32.mrb[0].mxu0
    %v1071 = vadd.f32 0.0, %v1070
    %v1072 = vpop.f32.mrb[0].mxu0
    %v1073 = vpop.f32.mrb[0].mxu0
    %v1074 = vpop.f32.mrb[0].mxu0
    %1075 = vdwg.mxu0
    %v1076 = vadd.f32 %v988, %v1030
    %v1077 = vxor.u32 %v1076, 2147483648
    %v1078 = vmul.f32 %v1077, 1.442695
    %v1079 = vpow.pop %v1078
    %v1080 = vadd.f32 %v1079, 1.0
    %v1081 = vrcp.pop %v1080
    %v1082 = vmul.f32 1.0, %v1081
    %v1083 = vadd.f32 %v989, %v1032
    %v1084 = vxor.u32 %v1083, 2147483648
    %v1085 = vmul.f32 %v1084, 1.442695
    %v1086 = vpow.pop %v1085
    %v1087 = vadd.f32 %v1086, 1.0
    %v1088 = vrcp.pop %v1087
    %v1089 = vmul.f32 1.0, %v1088
    %v1090 = vadd.f32 %v1071, %v972
    %v1091 = vmul.f32 %v1082, %v1090
    %v1092 = vadd.f32 %v990, %v1091
    %v1093 = vtanh.pop %v1092
    %v1094 = vsub.f32 1.0, %v1089
    %v1095 = vmul.f32 %v1094, %v1093
    %v1096 = vmul.f32 %v1089, %v980
    %v1097 = vadd.f32 %v1095, %v1096
    %v1098 = vxor.u32 %v1097, 2147483648
    %v1099 = vmul.f32 %v1098, 1.442695
    %v1100 = vpow.pop %v1099
    %v1101 = vadd.f32 %v1100, 1.0
    %v1102 = vrcp.pop %v1101
    %v1103 = vmul.f32 1.0, %v1102
    %1104 = vst.msk [vmem:[#allocation3 + $0x8] sm:$0xff] %vm860, %v1103
    %v1105 = vld [vmem:[#allocation2 + $0x30] sm:$0xff]
    %v1106 = vld [vmem:[#allocation2 + $0x38] sm:$0xff]
    %v1107 = vld [vmem:[#allocation2 + $0x40] sm:$0xff]
    %v1108 = vpack.c.bf16 %v1097, %v1097
    %v1110 = vsel %vm860, %v1108, 0
    %1112 = vmatprep.subr.bf16.mxu0 %v840
    %1113 = vmatpush1.bf16.msra.mxu0 %v839
    %1114 = vmatprep.subr.bf16.mxu0 %v843
    %1115 = vmatpush1.bf16.msra.mxu0 %v842
    %1116 = vmatprep.subr.bf16.mxu0 %v846
    %1117 = vmatpush1.bf16.msra.mxu0 %v845
    %1118 = vmatprep.subr.bf16.mxu0 %v869
    %1119 = vmatpush1.bf16.msra.mxu0 %v866
    %1120 = vmatprep.subr.bf16.mxu0 0
    %1121 = vmatpush1.bf16.msra.mxu0 0
    %1122 = vmatprep.subr.bf16.mxu0 0
    %1123 = vmatpush1.bf16.msra.mxu0 0
    %1124 = vmatprep.subr.bf16.mxu0 0
    %1125 = vmatpush1.bf16.msra.mxu0 0
    %1126 = vmatprep.subr.bf16.mxu0 0
    %1127 = vmatpush1.bf16.msra.mxu0 0
    %1128 = vmatprep.subr.bf16.mxu0 0
    %1129 = vmatpush1.bf16.msra.mxu0 0
    %1130 = vmatprep.subr.bf16.mxu0 0
    %1131 = vmatpush1.bf16.msra.mxu0 0
    %1132 = vmatprep.subr.bf16.mxu0 0
    %1133 = vmatpush1.bf16.msra.mxu0 0
    %1134 = vmatprep.subr.bf16.mxu0 0
    %1135 = vmatpush1.bf16.msra.mxu0 0
    %1136 = vmatprep.subr.bf16.mxu0 0
    %1137 = vmatpush1.bf16.msra.mxu0 0
    %1138 = vmatprep.subr.bf16.mxu0 0
    %1139 = vmatpush1.bf16.msra.mxu0 0
    %1140 = vmatprep.subr.bf16.mxu0 0
    %1141 = vmatpush1.bf16.msra.mxu0 0
    %1142 = vmatprep.subr.bf16.mxu0 0
    %1143 = vmatpush1.bf16.msra.mxu0 0
    %1144 = vmatprep.mubr.bf16.mxu0 0
    %1145 = vmatmul.mubr.bf16.gmra.mrb[0].mxu0 %v1110
    %v1146 = vpop.f32.mrb[0].mxu0
    %v1147 = vadd.f32 0.0, %v1146
    %v1148 = vpop.f32.mrb[0].mxu0
    %v1149 = vadd.f32 0.0, %v1148
    %v1150 = vpop.f32.mrb[0].mxu0
    %v1151 = vpop.f32.mrb[0].mxu0
    %1152 = vdwg.mxu0
    %1153 = vmatprep.subr.bf16.mxu0 0
    %1154 = vmatpush1.bf16.msra.mxu0 %v841
    %1155 = vmatprep.subr.bf16.mxu0 0
    %1156 = vmatpush1.bf16.msra.mxu0 %v844
    %1157 = vmatprep.subr.bf16.mxu0 0
    %1158 = vmatpush1.bf16.msra.mxu0 %v847
    %1159 = vmatprep.subr.bf16.mxu0 0
    %1160 = vmatpush1.bf16.msra.mxu0 %v872
    %1161 = vmatprep.subr.bf16.mxu0 0
    %1162 = vmatpush1.bf16.msra.mxu0 0
    %1163 = vmatprep.subr.bf16.mxu0 0
    %1164 = vmatpush1.bf16.msra.mxu0 0
    %1165 = vmatprep.subr.bf16.mxu0 0
    %1166 = vmatpush1.bf16.msra.mxu0 0
    %1167 = vmatprep.subr.bf16.mxu0 0
    %1168 = vmatpush1.bf16.msra.mxu0 0
    %1169 = vmatprep.subr.bf16.mxu0 0
    %1170 = vmatpush1.bf16.msra.mxu0 0
    %1171 = vmatprep.subr.bf16.mxu0 0
    %1172 = vmatpush1.bf16.msra.mxu0 0
    %1173 = vmatprep.subr.bf16.mxu0 0
    %1174 = vmatpush1.bf16.msra.mxu0 0
    %1175 = vmatprep.subr.bf16.mxu0 0
    %1176 = vmatpush1.bf16.msra.mxu0 0
    %1177 = vmatprep.subr.bf16.mxu0 0
    %1178 = vmatpush1.bf16.msra.mxu0 0
    %1179 = vmatprep.subr.bf16.mxu0 0
    %1180 = vmatpush1.bf16.msra.mxu0 0
    %1181 = vmatprep.subr.bf16.mxu0 0
    %1182 = vmatpush1.bf16.msra.mxu0 0
    %1183 = vmatprep.subr.bf16.mxu0 0
    %1184 = vmatpush1.bf16.msra.mxu0 0
    %1185 = vmatprep.mubr.bf16.mxu0 0
    %1186 = vmatmul.mubr.bf16.gmra.mrb[0].mxu0 %v1110
    %v1187 = vpop.f32.mrb[0].mxu0
    %v1188 = vadd.f32 0.0, %v1187
    %v1189 = vpop.f32.mrb[0].mxu0
    %v1190 = vpop.f32.mrb[0].mxu0
    %v1191 = vpop.f32.mrb[0].mxu0
    %1192 = vdwg.mxu0
    %v1193 = vadd.f32 %v1105, %v1147
    %v1194 = vxor.u32 %v1193, 2147483648
    %v1195 = vmul.f32 %v1194, 1.442695
    %v1196 = vpow.pop %v1195
    %v1197 = vadd.f32 %v1196, 1.0
    %v1198 = vrcp.pop %v1197
    %v1199 = vmul.f32 1.0, %v1198
    %v1200 = vadd.f32 %v1106, %v1149
    %v1201 = vxor.u32 %v1200, 2147483648
    %v1202 = vmul.f32 %v1201, 1.442695
    %v1203 = vpow.pop %v1202
    %v1204 = vadd.f32 %v1203, 1.0
    %v1205 = vrcp.pop %v1204
    %v1206 = vmul.f32 1.0, %v1205
    %v1207 = vadd.f32 %v1188, %v972
    %v1208 = vmul.f32 %v1199, %v1207
    %v1209 = vadd.f32 %v1107, %v1208
    %v1210 = vtanh.pop %v1209
    %v1211 = vsub.f32 1.0, %v1206
    %v1212 = vmul.f32 %v1211, %v1210
    %v1213 = vmul.f32 %v1206, %v1097
    %v1214 = vadd.f32 %v1212, %v1213
    %v1215 = vxor.u32 %v1214, 2147483648
    %v1216 = vmul.f32 %v1215, 1.442695
    %v1217 = vpow.pop %v1216
    %v1218 = vadd.f32 %v1217, 1.0
    %v1219 = vrcp.pop %v1218
    %v1220 = vmul.f32 1.0, %v1219
    %1221 = vst.msk [vmem:[#allocation3 + $0x10] sm:$0xff] %vm860, %v1220
    %v1222 = vld [vmem:[#allocation2 + $0x48] sm:$0xff]
    %v1223 = vld [vmem:[#allocation2 + $0x50] sm:$0xff]
    %v1224 = vld [vmem:[#allocation2 + $0x58] sm:$0xff]
    %v1225 = vpack.c.bf16 %v1214, %v1214
    %v1227 = vsel %vm860, %v1225, 0
    %1229 = vmatprep.subr.bf16.mxu0 %v840
    %1230 = vmatpush1.bf16.msra.mxu0 %v839
    %1231 = vmatprep.subr.bf16.mxu0 %v843
    %1232 = vmatpush1.bf16.msra.mxu0 %v842
    %1233 = vmatprep.subr.bf16.mxu0 %v846
    %1234 = vmatpush1.bf16.msra.mxu0 %v845
    %1235 = vmatprep.subr.bf16.mxu0 %v869
    %1236 = vmatpush1.bf16.msra.mxu0 %v866
    %1237 = vmatprep.subr.bf16.mxu0 0
    %1238 = vmatpush1.bf16.msra.mxu0 0
    %1239 = vmatprep.subr.bf16.mxu0 0
    %1240 = vmatpush1.bf16.msra.mxu0 0
    %1241 = vmatprep.subr.bf16.mxu0 0
    %1242 = vmatpush1.bf16.msra.mxu0 0
    %1243 = vmatprep.subr.bf16.mxu0 0
    %1244 = vmatpush1.bf16.msra.mxu0 0
    %1245 = vmatprep.subr.bf16.mxu0 0
    %1246 = vmatpush1.bf16.msra.mxu0 0
    %1247 = vmatprep.subr.bf16.mxu0 0
    %1248 = vmatpush1.bf16.msra.mxu0 0
    %1249 = vmatprep.subr.bf16.mxu0 0
    %1250 = vmatpush1.bf16.msra.mxu0 0
    %1251 = vmatprep.subr.bf16.mxu0 0
    %1252 = vmatpush1.bf16.msra.mxu0 0
    %1253 = vmatprep.subr.bf16.mxu0 0
    %1254 = vmatpush1.bf16.msra.mxu0 0
    %1255 = vmatprep.subr.bf16.mxu0 0
    %1256 = vmatpush1.bf16.msra.mxu0 0
    %1257 = vmatprep.subr.bf16.mxu0 0
    %1258 = vmatpush1.bf16.msra.mxu0 0
    %1259 = vmatprep.subr.bf16.mxu0 0
    %1260 = vmatpush1.bf16.msra.mxu0 0
    %1261 = vmatprep.mubr.bf16.mxu0 0
    %1262 = vmatmul.mubr.bf16.gmra.mrb[0].mxu0 %v1227
    %v1263 = vpop.f32.mrb[0].mxu0
    %v1264 = vadd.f32 0.0, %v1263
    %v1265 = vpop.f32.mrb[0].mxu0
    %v1266 = vadd.f32 0.0, %v1265
    %v1267 = vpop.f32.mrb[0].mxu0
    %v1268 = vpop.f32.mrb[0].mxu0
    %1269 = vdwg.mxu0
    %1270 = vmatprep.subr.bf16.mxu0 0
    %1271 = vmatpush1.bf16.msra.mxu0 %v841
    %1272 = vmatprep.subr.bf16.mxu0 0
    %1273 = vmatpush1.bf16.msra.mxu0 %v844
    %1274 = vmatprep.subr.bf16.mxu0 0
    %1275 = vmatpush1.bf16.msra.mxu0 %v847
    %1276 = vmatprep.subr.bf16.mxu0 0
    %1277 = vmatpush1.bf16.msra.mxu0 %v872
    %1278 = vmatprep.subr.bf16.mxu0 0
    %1279 = vmatpush1.bf16.msra.mxu0 0
    %1280 = vmatprep.subr.bf16.mxu0 0
    %1281 = vmatpush1.bf16.msra.mxu0 0
    %1282 = vmatprep.subr.bf16.mxu0 0
    %1283 = vmatpush1.bf16.msra.mxu0 0
    %1284 = vmatprep.subr.bf16.mxu0 0
    %1285 = vmatpush1.bf16.msra.mxu0 0
    %1286 = vmatprep.subr.bf16.mxu0 0
    %1287 = vmatpush1.bf16.msra.mxu0 0
    %1288 = vmatprep.subr.bf16.mxu0 0
    %1289 = vmatpush1.bf16.msra.mxu0 0
    %1290 = vmatprep.subr.bf16.mxu0 0
    %1291 = vmatpush1.bf16.msra.mxu0 0
    %1292 = vmatprep.subr.bf16.mxu0 0
    %1293 = vmatpush1.bf16.msra.mxu0 0
    %1294 = vmatprep.subr.bf16.mxu0 0
    %1295 = vmatpush1.bf16.msra.mxu0 0
    %1296 = vmatprep.subr.bf16.mxu0 0
    %1297 = vmatpush1.bf16.msra.mxu0 0
    %1298 = vmatprep.subr.bf16.mxu0 0
    %1299 = vmatpush1.bf16.msra.mxu0 0
    %1300 = vmatprep.subr.bf16.mxu0 0
    %1301 = vmatpush1.bf16.msra.mxu0 0
    %1302 = vmatprep.mubr.bf16.mxu0 0
    %1303 = vmatmul.mubr.bf16.gmra.mrb[0].mxu0 %v1227
    %v1304 = vpop.f32.mrb[0].mxu0
    %v1305 = vadd.f32 0.0, %v1304
    %v1306 = vpop.f32.mrb[0].mxu0
    %v1307 = vpop.f32.mrb[0].mxu0
    %v1308 = vpop.f32.mrb[0].mxu0
    %1309 = vdwg.mxu0
    %v1310 = vadd.f32 %v1222, %v1264
    %v1311 = vxor.u32 %v1310, 2147483648
    %v1312 = vmul.f32 %v1311, 1.442695
    %v1313 = vpow.pop %v1312
    %v1314 = vadd.f32 %v1313, 1.0
    %v1315 = vrcp.pop %v1314
    %v1316 = vmul.f32 1.0, %v1315
    %v1317 = vadd.f32 %v1223, %v1266
    %v1318 = vxor.u32 %v1317, 2147483648
    %v1319 = vmul.f32 %v1318, 1.442695
    %v1320 = vpow.pop %v1319
    %v1321 = vadd.f32 %v1320, 1.0
    %v1322 = vrcp.pop %v1321
    %v1323 = vmul.f32 1.0, %v1322
    %v1324 = vadd.f32 %v1305, %v972
    %v1325 = vmul.f32 %v1316, %v1324
    %v1326 = vadd.f32 %v1224, %v1325
    %v1327 = vtanh.pop %v1326
    %v1328 = vsub.f32 1.0, %v1323
    %v1329 = vmul.f32 %v1328, %v1327
    %v1330 = vmul.f32 %v1323, %v1214
    %v1331 = vadd.f32 %v1329, %v1330
    %v1332 = vxor.u32 %v1331, 2147483648
    %v1333 = vmul.f32 %v1332, 1.442695
    %v1334 = vpow.pop %v1333
    %v1335 = vadd.f32 %v1334, 1.0
    %v1336 = vrcp.pop %v1335
    %v1337 = vmul.f32 1.0, %v1336
    %1338 = vst.msk [vmem:[#allocation3 + $0x18] sm:$0xff] %vm860, %v1337
    %v1339 = vld [vmem:[#allocation2 + $0x60] sm:$0xff]
    %v1340 = vld [vmem:[#allocation2 + $0x68] sm:$0xff]
    %v1341 = vld [vmem:[#allocation2 + $0x70] sm:$0xff]
    %v1342 = vpack.c.bf16 %v1331, %v1331
    %v1344 = vsel %vm860, %v1342, 0
    %1346 = vmatprep.subr.bf16.mxu0 %v840
    %1347 = vmatpush1.bf16.msra.mxu0 %v839
    %1348 = vmatprep.subr.bf16.mxu0 %v843
    %1349 = vmatpush1.bf16.msra.mxu0 %v842
    %1350 = vmatprep.subr.bf16.mxu0 %v846
    %1351 = vmatpush1.bf16.msra.mxu0 %v845
    %1352 = vmatprep.subr.bf16.mxu0 %v869
    %1353 = vmatpush1.bf16.msra.mxu0 %v866
    %1354 = vmatprep.subr.bf16.mxu0 0
    %1355 = vmatpush1.bf16.msra.mxu0 0
    %1356 = vmatprep.subr.bf16.mxu0 0
    %1357 = vmatpush1.bf16.msra.mxu0 0
    %1358 = vmatprep.subr.bf16.mxu0 0
    %1359 = vmatpush1.bf16.msra.mxu0 0
    %1360 = vmatprep.subr.bf16.mxu0 0
    %1361 = vmatpush1.bf16.msra.mxu0 0
    %1362 = vmatprep.subr.bf16.mxu0 0
    %1363 = vmatpush1.bf16.msra.mxu0 0
    %1364 = vmatprep.subr.bf16.mxu0 0
    %1365 = vmatpush1.bf16.msra.mxu0 0
    %1366 = vmatprep.subr.bf16.mxu0 0
    %1367 = vmatpush1.bf16.msra.mxu0 0
    %1368 = vmatprep.subr.bf16.mxu0 0
    %1369 = vmatpush1.bf16.msra.mxu0 0
    %1370 = vmatprep.subr.bf16.mxu0 0
    %1371 = vmatpush1.bf16.msra.mxu0 0
    %1372 = vmatprep.subr.bf16.mxu0 0
    %1373 = vmatpush1.bf16.msra.mxu0 0
    %1374 = vmatprep.subr.bf16.mxu0 0
    %1375 = vmatpush1.bf16.msra.mxu0 0
    %1376 = vmatprep.subr.bf16.mxu0 0
    %1377 = vmatpush1.bf16.msra.mxu0 0
    %1378 = vmatprep.mubr.bf16.mxu0 0
    %1379 = vmatmul.mubr.bf16.gmra.mrb[0].mxu0 %v1344
    %v1380 = vpop.f32.mrb[0].mxu0
    %v1381 = vadd.f32 0.0, %v1380
    %v1382 = vpop.f32.mrb[0].mxu0
    %v1383 = vadd.f32 0.0, %v1382
    %v1384 = vpop.f32.mrb[0].mxu0
    %v1385 = vpop.f32.mrb[0].mxu0
    %1386 = vdwg.mxu0
    %1387 = vmatprep.subr.bf16.mxu0 0
    %1388 = vmatpush1.bf16.msra.mxu0 %v841
    %1389 = vmatprep.subr.bf16.mxu0 0
    %1390 = vmatpush1.bf16.msra.mxu0 %v844
    %1391 = vmatprep.subr.bf16.mxu0 0
    %1392 = vmatpush1.bf16.msra.mxu0 %v847
    %1393 = vmatprep.subr.bf16.mxu0 0
    %1394 = vmatpush1.bf16.msra.mxu0 %v872
    %1395 = vmatprep.subr.bf16.mxu0 0
    %1396 = vmatpush1.bf16.msra.mxu0 0
    %1397 = vmatprep.subr.bf16.mxu0 0
    %1398 = vmatpush1.bf16.msra.mxu0 0
    %1399 = vmatprep.subr.bf16.mxu0 0
    %1400 = vmatpush1.bf16.msra.mxu0 0
    %1401 = vmatprep.subr.bf16.mxu0 0
    %1402 = vmatpush1.bf16.msra.mxu0 0
    %1403 = vmatprep.subr.bf16.mxu0 0
    %1404 = vmatpush1.bf16.msra.mxu0 0
    %1405 = vmatprep.subr.bf16.mxu0 0
    %1406 = vmatpush1.bf16.msra.mxu0 0
    %1407 = vmatprep.subr.bf16.mxu0 0
    %1408 = vmatpush1.bf16.msra.mxu0 0
    %1409 = vmatprep.subr.bf16.mxu0 0
    %1410 = vmatpush1.bf16.msra.mxu0 0
    %1411 = vmatprep.subr.bf16.mxu0 0
    %1412 = vmatpush1.bf16.msra.mxu0 0
    %1413 = vmatprep.subr.bf16.mxu0 0
    %1414 = vmatpush1.bf16.msra.mxu0 0
    %1415 = vmatprep.subr.bf16.mxu0 0
    %1416 = vmatpush1.bf16.msra.mxu0 0
    %1417 = vmatprep.subr.bf16.mxu0 0
    %1418 = vmatpush1.bf16.msra.mxu0 0
    %1419 = vmatprep.mubr.bf16.mxu0 0
    %1420 = vmatmul.mubr.bf16.gmra.mrb[0].mxu0 %v1344
    %v1421 = vpop.f32.mrb[0].mxu0
    %v1422 = vadd.f32 0.0, %v1421
    %v1423 = vpop.f32.mrb[0].mxu0
    %v1424 = vpop.f32.mrb[0].mxu0
    %v1425 = vpop.f32.mrb[0].mxu0
    %1426 = vdwg.mxu0
    %v1427 = vadd.f32 %v1339, %v1381
    %v1428 = vxor.u32 %v1427, 2147483648
    %v1429 = vmul.f32 %v1428, 1.442695
    %v1430 = vpow.pop %v1429
    %v1431 = vadd.f32 %v1430, 1.0
    %v1432 = vrcp.pop %v1431
    %v1433 = vmul.f32 1.0, %v1432
    %v1434 = vadd.f32 %v1340, %v1383
    %v1435 = vxor.u32 %v1434, 2147483648
    %v1436 = vmul.f32 %v1435, 1.442695
    %v1437 = vpow.pop %v1436
    %v1438 = vadd.f32 %v1437, 1.0
    %v1439 = vrcp.pop %v1438
    %v1440 = vmul.f32 1.0, %v1439
    %v1441 = vadd.f32 %v1422, %v972
    %v1442 = vmul.f32 %v1433, %v1441
    %v1443 = vadd.f32 %v1341, %v1442
    %v1444 = vtanh.pop %v1443
    %v1445 = vsub.f32 1.0, %v1440
    %v1446 = vmul.f32 %v1445, %v1444
    %v1447 = vmul.f32 %v1440, %v1331
    %v1448 = vadd.f32 %v1446, %v1447
    %v1449 = vxor.u32 %v1448, 2147483648
    %v1450 = vmul.f32 %v1449, 1.442695
    %v1451 = vpow.pop %v1450
    %v1452 = vadd.f32 %v1451, 1.0
    %v1453 = vrcp.pop %v1452
    %v1454 = vmul.f32 1.0, %v1453
    %1455 = vst.msk [vmem:[#allocation3 + $0x20] sm:$0xff] %vm860, %v1454
    %v1456 = vld [vmem:[#allocation2 + $0x78] sm:$0xff]
    %v1457 = vld [vmem:[#allocation2 + $0x80] sm:$0xff]
    %v1458 = vld [vmem:[#allocation2 + $0x88] sm:$0xff]
    %v1459 = vpack.c.bf16 %v1448, %v1448
    %v1461 = vsel %vm860, %v1459, 0
    %1463 = vmatprep.subr.bf16.mxu0 %v840
    %1464 = vmatpush1.bf16.msra.mxu0 %v839
    %1465 = vmatprep.subr.bf16.mxu0 %v843
    %1466 = vmatpush1.bf16.msra.mxu0 %v842
    %1467 = vmatprep.subr.bf16.mxu0 %v846
    %1468 = vmatpush1.bf16.msra.mxu0 %v845
    %1469 = vmatprep.subr.bf16.mxu0 %v869
    %1470 = vmatpush1.bf16.msra.mxu0 %v866
    %1471 = vmatprep.subr.bf16.mxu0 0
    %1472 = vmatpush1.bf16.msra.mxu0 0
    %1473 = vmatprep.subr.bf16.mxu0 0
    %1474 = vmatpush1.bf16.msra.mxu0 0
    %1475 = vmatprep.subr.bf16.mxu0 0
    %1476 = vmatpush1.bf16.msra.mxu0 0
    %1477 = vmatprep.subr.bf16.mxu0 0
    %1478 = vmatpush1.bf16.msra.mxu0 0
    %1479 = vmatprep.subr.bf16.mxu0 0
    %1480 = vmatpush1.bf16.msra.mxu0 0
    %1481 = vmatprep.subr.bf16.mxu0 0
    %1482 = vmatpush1.bf16.msra.mxu0 0
    %1483 = vmatprep.subr.bf16.mxu0 0
    %1484 = vmatpush1.bf16.msra.mxu0 0
    %1485 = vmatprep.subr.bf16.mxu0 0
    %1486 = vmatpush1.bf16.msra.mxu0 0
    %1487 = vmatprep.subr.bf16.mxu0 0
    %1488 = vmatpush1.bf16.msra.mxu0 0
    %1489 = vmatprep.subr.bf16.mxu0 0
    %1490 = vmatpush1.bf16.msra.mxu0 0
    %1491 = vmatprep.subr.bf16.mxu0 0
    %1492 = vmatpush1.bf16.msra.mxu0 0
    %1493 = vmatprep.subr.bf16.mxu0 0
    %1494 = vmatpush1.bf16.msra.mxu0 0
    %1495 = vmatprep.mubr.bf16.mxu0 0
    %1496 = vmatmul.mubr.bf16.gmra.mrb[0].mxu0 %v1461
    %v1497 = vpop.f32.mrb[0].mxu0
    %v1498 = vadd.f32 0.0, %v1497
    %v1499 = vpop.f32.mrb[0].mxu0
    %v1500 = vadd.f32 0.0, %v1499
    %v1501 = vpop.f32.mrb[0].mxu0
    %v1502 = vpop.f32.mrb[0].mxu0
    %1503 = vdwg.mxu0
    %1504 = vmatprep.subr.bf16.mxu0 0
    %1505 = vmatpush1.bf16.msra.mxu0 %v841
    %1506 = vmatprep.subr.bf16.mxu0 0
    %1507 = vmatpush1.bf16.msra.mxu0 %v844
    %1508 = vmatprep.subr.bf16.mxu0 0
    %1509 = vmatpush1.bf16.msra.mxu0 %v847
    %1510 = vmatprep.subr.bf16.mxu0 0
    %1511 = vmatpush1.bf16.msra.mxu0 %v872
    %1512 = vmatprep.subr.bf16.mxu0 0
    %1513 = vmatpush1.bf16.msra.mxu0 0
    %1514 = vmatprep.subr.bf16.mxu0 0
    %1515 = vmatpush1.bf16.msra.mxu0 0
    %1516 = vmatprep.subr.bf16.mxu0 0
    %1517 = vmatpush1.bf16.msra.mxu0 0
    %1518 = vmatprep.subr.bf16.mxu0 0
    %1519 = vmatpush1.bf16.msra.mxu0 0
    %1520 = vmatprep.subr.bf16.mxu0 0
    %1521 = vmatpush1.bf16.msra.mxu0 0
    %1522 = vmatprep.subr.bf16.mxu0 0
    %1523 = vmatpush1.bf16.msra.mxu0 0
    %1524 = vmatprep.subr.bf16.mxu0 0
    %1525 = vmatpush1.bf16.msra.mxu0 0
    %1526 = vmatprep.subr.bf16.mxu0 0
    %1527 = vmatpush1.bf16.msra.mxu0 0
    %1528 = vmatprep.subr.bf16.mxu0 0
    %1529 = vmatpush1.bf16.msra.mxu0 0
    %1530 = vmatprep.subr.bf16.mxu0 0
    %1531 = vmatpush1.bf16.msra.mxu0 0
    %1532 = vmatprep.subr.bf16.mxu0 0
    %1533 = vmatpush1.bf16.msra.mxu0 0
    %1534 = vmatprep.subr.bf16.mxu0 0
    %1535 = vmatpush1.bf16.msra.mxu0 0
    %1536 = vmatprep.mubr.bf16.mxu0 0
    %1537 = vmatmul.mubr.bf16.gmra.mrb[0].mxu0 %v1461
    %v1538 = vpop.f32.mrb[0].mxu0
    %v1539 = vadd.f32 0.0, %v1538
    %v1540 = vpop.f32.mrb[0].mxu0
    %v1541 = vpop.f32.mrb[0].mxu0
    %v1542 = vpop.f32.mrb[0].mxu0
    %1543 = vdwg.mxu0
    %v1544 = vadd.f32 %v1456, %v1498
    %v1545 = vxor.u32 %v1544, 2147483648
    %v1546 = vmul.f32 %v1545, 1.442695
    %v1547 = vpow.pop %v1546
    %v1548 = vadd.f32 %v1547, 1.0
    %v1549 = vrcp.pop %v1548
    %v1550 = vmul.f32 1.0, %v1549
    %v1551 = vadd.f32 %v1457, %v1500
    %v1552 = vxor.u32 %v1551, 2147483648
    %v1553 = vmul.f32 %v1552, 1.442695
    %v1554 = vpow.pop %v1553
    %v1555 = vadd.f32 %v1554, 1.0
    %v1556 = vrcp.pop %v1555
    %v1557 = vmul.f32 1.0, %v1556
    %v1558 = vadd.f32 %v1539, %v972
    %v1559 = vmul.f32 %v1550, %v1558
    %v1560 = vadd.f32 %v1458, %v1559
    %v1561 = vtanh.pop %v1560
    %v1562 = vsub.f32 1.0, %v1557
    %v1563 = vmul.f32 %v1562, %v1561
    %v1564 = vmul.f32 %v1557, %v1448
    %v1565 = vadd.f32 %v1563, %v1564
    %v1566 = vxor.u32 %v1565, 2147483648
    %v1567 = vmul.f32 %v1566, 1.442695
    %v1568 = vpow.pop %v1567
    %v1569 = vadd.f32 %v1568, 1.0
    %v1570 = vrcp.pop %v1569
    %v1571 = vmul.f32 1.0, %v1570
    %1572 = vst.msk [vmem:[#allocation3 + $0x28] sm:$0xff] %vm860, %v1571
    %v1573 = vld [vmem:[#allocation2 + $0x90] sm:$0xff]
    %v1574 = vld [vmem:[#allocation2 + $0x98] sm:$0xff]
    %v1575 = vld [vmem:[#allocation2 + $0xa0] sm:$0xff]
    %v1576 = vpack.c.bf16 %v1565, %v1565
    %v1578 = vsel %vm860, %v1576, 0
    %1580 = vmatprep.subr.bf16.mxu0 %v840
    %1581 = vmatpush1.bf16.msra.mxu0 %v839
    %1582 = vmatprep.subr.bf16.mxu0 %v843
    %1583 = vmatpush1.bf16.msra.mxu0 %v842
    %1584 = vmatprep.subr.bf16.mxu0 %v846
    %1585 = vmatpush1.bf16.msra.mxu0 %v845
    %1586 = vmatprep.subr.bf16.mxu0 %v869
    %1587 = vmatpush1.bf16.msra.mxu0 %v866
    %1588 = vmatprep.subr.bf16.mxu0 0
    %1589 = vmatpush1.bf16.msra.mxu0 0
    %1590 = vmatprep.subr.bf16.mxu0 0
    %1591 = vmatpush1.bf16.msra.mxu0 0
    %1592 = vmatprep.subr.bf16.mxu0 0
    %1593 = vmatpush1.bf16.msra.mxu0 0
    %1594 = vmatprep.subr.bf16.mxu0 0
    %1595 = vmatpush1.bf16.msra.mxu0 0
    %1596 = vmatprep.subr.bf16.mxu0 0
    %1597 = vmatpush1.bf16.msra.mxu0 0
    %1598 = vmatprep.subr.bf16.mxu0 0
    %1599 = vmatpush1.bf16.msra.mxu0 0
    %1600 = vmatprep.subr.bf16.mxu0 0
    %1601 = vmatpush1.bf16.msra.mxu0 0
    %1602 = vmatprep.subr.bf16.mxu0 0
    %1603 = vmatpush1.bf16.msra.mxu0 0
    %1604 = vmatprep.subr.bf16.mxu0 0
    %1605 = vmatpush1.bf16.msra.mxu0 0
    %1606 = vmatprep.subr.bf16.mxu0 0
    %1607 = vmatpush1.bf16.msra.mxu0 0
    %1608 = vmatprep.subr.bf16.mxu0 0
    %1609 = vmatpush1.bf16.msra.mxu0 0
    %1610 = vmatprep.subr.bf16.mxu0 0
    %1611 = vmatpush1.bf16.msra.mxu0 0
    %1612 = vmatprep.mubr.bf16.mxu0 0
    %1613 = vmatmul.mubr.bf16.gmra.mrb[0].mxu0 %v1578
    %v1614 = vpop.f32.mrb[0].mxu0
    %v1615 = vadd.f32 0.0, %v1614
    %v1616 = vpop.f32.mrb[0].mxu0
    %v1617 = vadd.f32 0.0, %v1616
    %v1618 = vpop.f32.mrb[0].mxu0
    %v1619 = vpop.f32.mrb[0].mxu0
    %1620 = vdwg.mxu0
    %1621 = vmatprep.subr.bf16.mxu0 0
    %1622 = vmatpush1.bf16.msra.mxu0 %v841
    %1623 = vmatprep.subr.bf16.mxu0 0
    %1624 = vmatpush1.bf16.msra.mxu0 %v844
    %1625 = vmatprep.subr.bf16.mxu0 0
    %1626 = vmatpush1.bf16.msra.mxu0 %v847
    %1627 = vmatprep.subr.bf16.mxu0 0
    %1628 = vmatpush1.bf16.msra.mxu0 %v872
    %1629 = vmatprep.subr.bf16.mxu0 0
    %1630 = vmatpush1.bf16.msra.mxu0 0
    %1631 = vmatprep.subr.bf16.mxu0 0
    %1632 = vmatpush1.bf16.msra.mxu0 0
    %1633 = vmatprep.subr.bf16.mxu0 0
    %1634 = vmatpush1.bf16.msra.mxu0 0
    %1635 = vmatprep.subr.bf16.mxu0 0
    %1636 = vmatpush1.bf16.msra.mxu0 0
    %1637 = vmatprep.subr.bf16.mxu0 0
    %1638 = vmatpush1.bf16.msra.mxu0 0
    %1639 = vmatprep.subr.bf16.mxu0 0
    %1640 = vmatpush1.bf16.msra.mxu0 0
    %1641 = vmatprep.subr.bf16.mxu0 0
    %1642 = vmatpush1.bf16.msra.mxu0 0
    %1643 = vmatprep.subr.bf16.mxu0 0
    %1644 = vmatpush1.bf16.msra.mxu0 0
    %1645 = vmatprep.subr.bf16.mxu0 0
    %1646 = vmatpush1.bf16.msra.mxu0 0
    %1647 = vmatprep.subr.bf16.mxu0 0
    %1648 = vmatpush1.bf16.msra.mxu0 0
    %1649 = vmatprep.subr.bf16.mxu0 0
    %1650 = vmatpush1.bf16.msra.mxu0 0
    %1651 = vmatprep.subr.bf16.mxu0 0
    %1652 = vmatpush1.bf16.msra.mxu0 0
    %1653 = vmatprep.mubr.bf16.mxu0 0
    %1654 = vmatmul.mubr.bf16.gmra.mrb[0].mxu0 %v1578
    %v1655 = vpop.f32.mrb[0].mxu0
    %v1656 = vadd.f32 0.0, %v1655
    %v1657 = vpop.f32.mrb[0].mxu0
    %v1658 = vpop.f32.mrb[0].mxu0
    %v1659 = vpop.f32.mrb[0].mxu0
    %1660 = vdwg.mxu0
    %v1661 = vadd.f32 %v1573, %v1615
    %v1662 = vxor.u32 %v1661, 2147483648
    %v1663 = vmul.f32 %v1662, 1.442695
    %v1664 = vpow.pop %v1663
    %v1665 = vadd.f32 %v1664, 1.0
    %v1666 = vrcp.pop %v1665
    %v1667 = vmul.f32 1.0, %v1666
    %v1668 = vadd.f32 %v1574, %v1617
    %v1669 = vxor.u32 %v1668, 2147483648
    %v1670 = vmul.f32 %v1669, 1.442695
    %v1671 = vpow.pop %v1670
    %v1672 = vadd.f32 %v1671, 1.0
    %v1673 = vrcp.pop %v1672
    %v1674 = vmul.f32 1.0, %v1673
    %v1675 = vadd.f32 %v1656, %v972
    %v1676 = vmul.f32 %v1667, %v1675
    %v1677 = vadd.f32 %v1575, %v1676
    %v1678 = vtanh.pop %v1677
    %v1679 = vsub.f32 1.0, %v1674
    %v1680 = vmul.f32 %v1679, %v1678
    %v1681 = vmul.f32 %v1674, %v1565
    %v1682 = vadd.f32 %v1680, %v1681
    %v1683 = vxor.u32 %v1682, 2147483648
    %v1684 = vmul.f32 %v1683, 1.442695
    %v1685 = vpow.pop %v1684
    %v1686 = vadd.f32 %v1685, 1.0
    %v1687 = vrcp.pop %v1686
    %v1688 = vmul.f32 1.0, %v1687
    %1689 = vst.msk [vmem:[#allocation3 + $0x30] sm:$0xff] %vm860, %v1688
    %v1690 = vld [vmem:[#allocation2 + $0xa8] sm:$0xff]
    %v1691 = vld [vmem:[#allocation2 + $0xb0] sm:$0xff]
    %v1692 = vld [vmem:[#allocation2 + $0xb8] sm:$0xff]
    %v1693 = vpack.c.bf16 %v1682, %v1682
    %v1695 = vsel %vm860, %v1693, 0
    %1697 = vmatprep.subr.bf16.mxu0 %v840
    %1698 = vmatpush1.bf16.msra.mxu0 %v839
    %1699 = vmatprep.subr.bf16.mxu0 %v843
    %1700 = vmatpush1.bf16.msra.mxu0 %v842
    %1701 = vmatprep.subr.bf16.mxu0 %v846
    %1702 = vmatpush1.bf16.msra.mxu0 %v845
    %1703 = vmatprep.subr.bf16.mxu0 %v869
    %1704 = vmatpush1.bf16.msra.mxu0 %v866
    %1705 = vmatprep.subr.bf16.mxu0 0
    %1706 = vmatpush1.bf16.msra.mxu0 0
    %1707 = vmatprep.subr.bf16.mxu0 0
    %1708 = vmatpush1.bf16.msra.mxu0 0
    %1709 = vmatprep.subr.bf16.mxu0 0
    %1710 = vmatpush1.bf16.msra.mxu0 0
    %1711 = vmatprep.subr.bf16.mxu0 0
    %1712 = vmatpush1.bf16.msra.mxu0 0
    %1713 = vmatprep.subr.bf16.mxu0 0
    %1714 = vmatpush1.bf16.msra.mxu0 0
    %1715 = vmatprep.subr.bf16.mxu0 0
    %1716 = vmatpush1.bf16.msra.mxu0 0
    %1717 = vmatprep.subr.bf16.mxu0 0
    %1718 = vmatpush1.bf16.msra.mxu0 0
    %1719 = vmatprep.subr.bf16.mxu0 0
    %1720 = vmatpush1.bf16.msra.mxu0 0
    %1721 = vmatprep.subr.bf16.mxu0 0
    %1722 = vmatpush1.bf16.msra.mxu0 0
    %1723 = vmatprep.subr.bf16.mxu0 0
    %1724 = vmatpush1.bf16.msra.mxu0 0
    %1725 = vmatprep.subr.bf16.mxu0 0
    %1726 = vmatpush1.bf16.msra.mxu0 0
    %1727 = vmatprep.subr.bf16.mxu0 0
    %1728 = vmatpush1.bf16.msra.mxu0 0
    %1729 = vmatprep.mubr.bf16.mxu0 0
    %1730 = vmatmul.mubr.bf16.gmra.mrb[0].mxu0 %v1695
    %v1731 = vpop.f32.mrb[0].mxu0
    %v1732 = vadd.f32 0.0, %v1731
    %v1733 = vpop.f32.mrb[0].mxu0
    %v1734 = vadd.f32 0.0, %v1733
    %v1735 = vpop.f32.mrb[0].mxu0
    %v1736 = vpop.f32.mrb[0].mxu0
    %1737 = vdwg.mxu0
    %1738 = vmatprep.subr.bf16.mxu0 0
    %1739 = vmatpush1.bf16.msra.mxu0 %v841
    %1740 = vmatprep.subr.bf16.mxu0 0
    %1741 = vmatpush1.bf16.msra.mxu0 %v844
    %1742 = vmatprep.subr.bf16.mxu0 0
    %1743 = vmatpush1.bf16.msra.mxu0 %v847
    %1744 = vmatprep.subr.bf16.mxu0 0
    %1745 = vmatpush1.bf16.msra.mxu0 %v872
    %1746 = vmatprep.subr.bf16.mxu0 0
    %1747 = vmatpush1.bf16.msra.mxu0 0
    %1748 = vmatprep.subr.bf16.mxu0 0
    %1749 = vmatpush1.bf16.msra.mxu0 0
    %1750 = vmatprep.subr.bf16.mxu0 0
    %1751 = vmatpush1.bf16.msra.mxu0 0
    %1752 = vmatprep.subr.bf16.mxu0 0
    %1753 = vmatpush1.bf16.msra.mxu0 0
    %1754 = vmatprep.subr.bf16.mxu0 0
    %1755 = vmatpush1.bf16.msra.mxu0 0
    %1756 = vmatprep.subr.bf16.mxu0 0
    %1757 = vmatpush1.bf16.msra.mxu0 0
    %1758 = vmatprep.subr.bf16.mxu0 0
    %1759 = vmatpush1.bf16.msra.mxu0 0
    %1760 = vmatprep.subr.bf16.mxu0 0
    %1761 = vmatpush1.bf16.msra.mxu0 0
    %1762 = vmatprep.subr.bf16.mxu0 0
    %1763 = vmatpush1.bf16.msra.mxu0 0
    %1764 = vmatprep.subr.bf16.mxu0 0
    %1765 = vmatpush1.bf16.msra.mxu0 0
    %1766 = vmatprep.subr.bf16.mxu0 0
    %1767 = vmatpush1.bf16.msra.mxu0 0
    %1768 = vmatprep.subr.bf16.mxu0 0
    %1769 = vmatpush1.bf16.msra.mxu0 0
    %1770 = vmatprep.mubr.bf16.mxu0 0
    %1771 = vmatmul.mubr.bf16.gmra.mrb[0].mxu0 %v1695
    %v1772 = vpop.f32.mrb[0].mxu0
    %v1773 = vadd.f32 0.0, %v1772
    %v1774 = vpop.f32.mrb[0].mxu0
    %v1775 = vpop.f32.mrb[0].mxu0
    %v1776 = vpop.f32.mrb[0].mxu0
    %1777 = vdwg.mxu0
    %v1778 = vadd.f32 %v1690, %v1732
    %v1779 = vxor.u32 %v1778, 2147483648
    %v1780 = vmul.f32 %v1779, 1.442695
    %v1781 = vpow.pop %v1780
    %v1782 = vadd.f32 %v1781, 1.0
    %v1783 = vrcp.pop %v1782
    %v1784 = vmul.f32 1.0, %v1783
    %v1785 = vadd.f32 %v1691, %v1734
    %v1786 = vxor.u32 %v1785, 2147483648
    %v1787 = vmul.f32 %v1786, 1.442695
    %v1788 = vpow.pop %v1787
    %v1789 = vadd.f32 %v1788, 1.0
    %v1790 = vrcp.pop %v1789
    %v1791 = vmul.f32 1.0, %v1790
    %v1792 = vadd.f32 %v1773, %v972
    %v1793 = vmul.f32 %v1784, %v1792
    %v1794 = vadd.f32 %v1692, %v1793
    %v1795 = vtanh.pop %v1794
    %v1796 = vsub.f32 1.0, %v1791
    %v1797 = vmul.f32 %v1796, %v1795
    %v1798 = vmul.f32 %v1791, %v1682
    %v1799 = vadd.f32 %v1797, %v1798
    %v1800 = vxor.u32 %v1799, 2147483648
    %v1801 = vmul.f32 %v1800, 1.442695
    %v1802 = vpow.pop %v1801
    %v1803 = vadd.f32 %v1802, 1.0
    %v1804 = vrcp.pop %v1803
    %v1805 = vmul.f32 1.0, %v1804
    %1806 = vst.msk [vmem:[#allocation3 + $0x38] sm:$0xff] %vm860, %v1805
    %v1807 = vld [vmem:[#allocation3] sm:$0xff]
    %v1808 = vld [vmem:[#allocation3 + $0x8] sm:$0xff]
    %v1809 = vld [vmem:[#allocation3 + $0x10] sm:$0xff]
    %v1810 = vld [vmem:[#allocation3 + $0x18] sm:$0xff]
    %v1811 = vld [vmem:[#allocation3 + $0x20] sm:$0xff]
    %v1812 = vld [vmem:[#allocation3 + $0x28] sm:$0xff]
    %v1813 = vld [vmem:[#allocation3 + $0x30] sm:$0xff]
    %v1814 = vld [vmem:[#allocation3 + $0x38] sm:$0xff]
    %v1815 = vpack.c.bf16 %v1808, %v1807
    %v1816 = vpack.c.bf16 %v1810, %v1809
    %v1817 = vpack.c.bf16 %v1812, %v1811
    %v1818 = vpack.c.bf16 %v1814, %v1813
    %v1819 = vld [vmem:[#allocation16] sm:$0x3f]
    %v1820 = vld [vmem:[#allocation15] sm:$0xff]
    %v1821 = vld [vmem:[#allocation15 + $0x8] sm:$0xf]
    %v1822 = vld [vmem:[#allocation15 + $0xc] sm:$0xff]
    %v1823 = vld [vmem:[#allocation15 + $0x14] sm:$0xf]
    %v1824 = vld [vmem:[#allocation15 + $0x18] sm:$0xff]
    %v1825 = vld [vmem:[#allocation15 + $0x20] sm:$0xf]
    %v1826 = vld [vmem:[#allocation15 + $0x24] sm:$0xff]
    %v1827 = vld [vmem:[#allocation15 + $0x2c] sm:$0xf]
    %v1828 = vld [vmem:[#allocation15 + $0x30] sm:$0xff]
    %v1829 = vld [vmem:[#allocation15 + $0x38] sm:$0xf]
    %v1830 = vld [vmem:[#allocation15 + $0x3c] sm:$0xff]
    %v1831 = vld [vmem:[#allocation15 + $0x44] sm:$0xf]
    %v1832 = vld [vmem:[#allocation15 + $0x48] sm:$0x11]
    %v1833 = vld [vmem:[#allocation15 + $0x50] sm:$0x1]
    %v1835 = vlaneseq
    %v1836 = vshrl.u32 %v1835, 7
    %v1837 = vsub.s32 0, %v1836
    %v1838 = vrot.slane %v1819, %v1837
    %v1839 = vlaneseq
    %v1840 = vshrl.u32 %v1839, 7
    %v1841 = vsub.s32 2, %v1840
    %v1842 = vrot.slane %v1819, %v1841
    %v1843 = vlaneseq
    %v1844 = vshrl.u32 %v1843, 7
    %v1845 = vsub.s32 4, %v1844
    %v1846 = vrot.slane %v1819, %v1845
    %v1850 = vlaneseq
    %v1851 = vshrl.u32 %v1850, 7
    %v1852 = vsub.s32 0, %v1851
    %v1853 = vrot.slane %v1838, %v1852
    %v1854 = vlaneseq
    %v1855 = vshrl.u32 %v1854, 7
    %v1856 = vsub.s32 0, %v1855
    %v1857 = vrot.slane %v1842, %v1856
    %v1858 = vlaneseq
    %v1859 = vshrl.u32 %v1858, 7
    %v1860 = vsub.s32 0, %v1859
    %v1861 = vrot.slane %v1846, %v1860
    %v1876 = vunpack.c.l.b16 %v1820
    %v1877 = vunpack.c.h.b16 %v1820
    %v1878 = vunpack.c.l.b16 %v1821
    %v1879 = vunpack.c.l.b16 %v1822
    %v1880 = vunpack.c.h.b16 %v1822
    %v1881 = vunpack.c.l.b16 %v1823
    %v1882 = vunpack.c.l.b16 %v1824
    %v1883 = vunpack.c.h.b16 %v1824
    %v1884 = vunpack.c.l.b16 %v1825
    %v1885 = vunpack.c.l.b16 %v1826
    %v1886 = vunpack.c.h.b16 %v1826
    %v1887 = vunpack.c.l.b16 %v1827
    %v1888 = vunpack.c.l.b16 %v1828
    %v1889 = vunpack.c.h.b16 %v1828
    %v1890 = vunpack.c.l.b16 %v1829
    %v1891 = vunpack.c.l.b16 %v1830
    %v1892 = vunpack.c.h.b16 %v1830
    %v1893 = vunpack.c.l.b16 %v1831
    %v1894 = vunpack.c.l.b16 %v1832
    %v1895 = vunpack.c.h.b16 %v1832
    %v1896 = vunpack.c.l.b16 %v1833
    %v1897 = vpack.c.b16 %v1879, %v1876
    %v1898 = vpack.c.b16 %v1880, %v1877
    %v1899 = vpack.c.b16 %v1881, %v1878
    %v1900 = vpack.c.b16 %v1885, %v1882
    %v1901 = vpack.c.b16 %v1886, %v1883
    %v1902 = vpack.c.b16 %v1887, %v1884
    %v1903 = vpack.c.b16 %v1891, %v1888
    %v1904 = vpack.c.b16 %v1892, %v1889
    %v1905 = vpack.c.b16 %v1893, %v1890
    %v1906 = vpack.c.b16 %v1894, %v1894
    %v1907 = vpack.c.b16 %v1895, %v1895
    %v1908 = vpack.c.b16 %v1896, %v1896
    %v1919 = vsel %vm860, %v1815, 0
    %v1922 = vsel %vm860, %v1816, 0
    %v1925 = vsel %vm860, %v1817, 0
    %v1928 = vsel %vm860, %v1818, 0
    %v1931 = vsel %vm864, %v1906, 0
    %v1934 = vsel %vm864, %v1907, 0
    %v1937 = vsel %vm864, %v1908, 0
    %1939 = vmatprep.subr.bf16.mxu0 %v1898
    %1940 = vmatpush1.bf16.msra.mxu0 %v1897
    %1941 = vmatprep.subr.bf16.mxu0 %v1901
    %1942 = vmatpush1.bf16.msra.mxu0 %v1900
    %1943 = vmatprep.subr.bf16.mxu0 %v1904
    %1944 = vmatpush1.bf16.msra.mxu0 %v1903
    %1945 = vmatprep.subr.bf16.mxu0 %v1934
    %1946 = vmatpush1.bf16.msra.mxu0 %v1931
    %1947 = vmatprep.subr.bf16.mxu0 0
    %1948 = vmatpush1.bf16.msra.mxu0 0
    %1949 = vmatprep.subr.bf16.mxu0 0
    %1950 = vmatpush1.bf16.msra.mxu0 0
    %1951 = vmatprep.subr.bf16.mxu0 0
    %1952 = vmatpush1.bf16.msra.mxu0 0
    %1953 = vmatprep.subr.bf16.mxu0 0
    %1954 = vmatpush1.bf16.msra.mxu0 0
    %1955 = vmatprep.subr.bf16.mxu0 0
    %1956 = vmatpush1.bf16.msra.mxu0 0
    %1957 = vmatprep.subr.bf16.mxu0 0
    %1958 = vmatpush1.bf16.msra.mxu0 0
    %1959 = vmatprep.subr.bf16.mxu0 0
    %1960 = vmatpush1.bf16.msra.mxu0 0
    %1961 = vmatprep.subr.bf16.mxu0 0
    %1962 = vmatpush1.bf16.msra.mxu0 0
    %1963 = vmatprep.subr.bf16.mxu0 0
    %1964 = vmatpush1.bf16.msra.mxu0 0
    %1965 = vmatprep.subr.bf16.mxu0 0
    %1966 = vmatpush1.bf16.msra.mxu0 0
    %1967 = vmatprep.subr.bf16.mxu0 0
    %1968 = vmatpush1.bf16.msra.mxu0 0
    %1969 = vmatprep.subr.bf16.mxu0 0
    %1970 = vmatpush1.bf16.msra.mxu0 0
    %1971 = vmatprep.mubr.bf16.mxu0 0
    %1972 = vmatmul.mubr.bf16.gmra.mrb[0].mxu0 %v1919
    %v1973 = vpop.f32.mrb[0].mxu0
    %v1974 = vadd.f32 %v1853, %v1973
    %v1975 = vpop.f32.mrb[0].mxu0
    %v1976 = vadd.f32 %v1857, %v1975
    %v1977 = vpop.f32.mrb[0].mxu0
    %v1978 = vadd.f32 %v1853, %v1977
    %v1979 = vpop.f32.mrb[0].mxu0
    %v1980 = vadd.f32 %v1857, %v1979
    %1981 = vmatprep.mubr.bf16.mxu0 0
    %1982 = vmatmul.mubr.bf16.gmra.mrb[0].mxu0 %v1922
    %v1983 = vpop.f32.mrb[0].mxu0
    %v1984 = vadd.f32 %v1853, %v1983
    %v1985 = vpop.f32.mrb[0].mxu0
    %v1986 = vadd.f32 %v1857, %v1985
    %v1987 = vpop.f32.mrb[0].mxu0
    %v1988 = vadd.f32 %v1853, %v1987
    %v1989 = vpop.f32.mrb[0].mxu0
    %v1990 = vadd.f32 %v1857, %v1989
    %1991 = vmatprep.mubr.bf16.mxu0 0
    %1992 = vmatmul.mubr.bf16.gmra.mrb[0].mxu0 %v1925
    %v1993 = vpop.f32.mrb[0].mxu0
    %v1994 = vadd.f32 %v1853, %v1993
    %v1995 = vpop.f32.mrb[0].mxu0
    %v1996 = vadd.f32 %v1857, %v1995
    %v1997 = vpop.f32.mrb[0].mxu0
    %v1998 = vadd.f32 %v1853, %v1997
    %v1999 = vpop.f32.mrb[0].mxu0
    %v2000 = vadd.f32 %v1857, %v1999
    %2001 = vmatprep.mubr.bf16.mxu0 0
    %2002 = vmatmul.mubr.bf16.gmra.mrb[0].mxu0 %v1928
    %v2003 = vpop.f32.mrb[0].mxu0
    %v2004 = vadd.f32 %v1853, %v2003
    %v2005 = vpop.f32.mrb[0].mxu0
    %v2006 = vadd.f32 %v1857, %v2005
    %v2007 = vpop.f32.mrb[0].mxu0
    %v2008 = vadd.f32 %v1853, %v2007
    %v2009 = vpop.f32.mrb[0].mxu0
    %v2010 = vadd.f32 %v1857, %v2009
    %2011 = vdwg.mxu0
    %2012 = vmatprep.subr.bf16.mxu0 0
    %2013 = vmatpush1.bf16.msra.mxu0 %v1899
    %2014 = vmatprep.subr.bf16.mxu0 0
    %2015 = vmatpush1.bf16.msra.mxu0 %v1902
    %2016 = vmatprep.subr.bf16.mxu0 0
    %2017 = vmatpush1.bf16.msra.mxu0 %v1905
    %2018 = vmatprep.subr.bf16.mxu0 0
    %2019 = vmatpush1.bf16.msra.mxu0 %v1937
    %2020 = vmatprep.subr.bf16.mxu0 0
    %2021 = vmatpush1.bf16.msra.mxu0 0
    %2022 = vmatprep.subr.bf16.mxu0 0
    %2023 = vmatpush1.bf16.msra.mxu0 0
    %2024 = vmatprep.subr.bf16.mxu0 0
    %2025 = vmatpush1.bf16.msra.mxu0 0
    %2026 = vmatprep.subr.bf16.mxu0 0
    %2027 = vmatpush1.bf16.msra.mxu0 0
    %2028 = vmatprep.subr.bf16.mxu0 0
    %2029 = vmatpush1.bf16.msra.mxu0 0
    %2030 = vmatprep.subr.bf16.mxu0 0
    %2031 = vmatpush1.bf16.msra.mxu0 0
    %2032 = vmatprep.subr.bf16.mxu0 0
    %2033 = vmatpush1.bf16.msra.mxu0 0
    %2034 = vmatprep.subr.bf16.mxu0 0
    %2035 = vmatpush1.bf16.msra.mxu0 0
    %2036 = vmatprep.subr.bf16.mxu0 0
    %2037 = vmatpush1.bf16.msra.mxu0 0
    %2038 = vmatprep.subr.bf16.mxu0 0
    %2039 = vmatpush1.bf16.msra.mxu0 0
    %2040 = vmatprep.subr.bf16.mxu0 0
    %2041 = vmatpush1.bf16.msra.mxu0 0
    %2042 = vmatprep.subr.bf16.mxu0 0
    %2043 = vmatpush1.bf16.msra.mxu0 0
    %2044 = vmatprep.mubr.bf16.mxu0 0
    %2045 = vmatmul.mubr.bf16.gmra.mrb[0].mxu0 %v1919
    %v2046 = vpop.f32.mrb[0].mxu0
    %v2047 = vadd.f32 %v1861, %v2046
    %v2048 = vpop.f32.mrb[0].mxu0
    %v2049 = vpop.f32.mrb[0].mxu0
    %v2050 = vadd.f32 %v1861, %v2049
    %v2051 = vpop.f32.mrb[0].mxu0
    %2052 = vmatprep.mubr.bf16.mxu0 0
    %2053 = vmatmul.mubr.bf16.gmra.mrb[0].mxu0 %v1922
    %v2054 = vpop.f32.mrb[0].mxu0
    %v2055 = vadd.f32 %v1861, %v2054
    %v2056 = vpop.f32.mrb[0].mxu0
    %v2057 = vpop.f32.mrb[0].mxu0
    %v2058 = vadd.f32 %v1861, %v2057
    %v2059 = vpop.f32.mrb[0].mxu0
    %2060 = vmatprep.mubr.bf16.mxu0 0
    %2061 = vmatmul.mubr.bf16.gmra.mrb[0].mxu0 %v1925
    %v2062 = vpop.f32.mrb[0].mxu0
    %v2063 = vadd.f32 %v1861, %v2062
    %v2064 = vpop.f32.mrb[0].mxu0
    %v2065 = vpop.f32.mrb[0].mxu0
    %v2066 = vadd.f32 %v1861, %v2065
    %v2067 = vpop.f32.mrb[0].mxu0
    %2068 = vmatprep.mubr.bf16.mxu0 0
    %2069 = vmatmul.mubr.bf16.gmra.mrb[0].mxu0 %v1928
    %v2070 = vpop.f32.mrb[0].mxu0
    %v2071 = vadd.f32 %v1861, %v2070
    %v2072 = vpop.f32.mrb[0].mxu0
    %v2073 = vpop.f32.mrb[0].mxu0
    %v2074 = vadd.f32 %v1861, %v2073
    %v2075 = vpop.f32.mrb[0].mxu0
    %2076 = vdwg.mxu0
    %2077 = vst [vmem:[#allocation2] sm:$0xff] %v1974
    %2078 = vst [vmem:[#allocation2 + $0x8] sm:$0xff] %v1976
    %2079 = vst [vmem:[#allocation2 + $0x10] sm:$0xff] %v2047
    %2080 = vst [vmem:[#allocation2 + $0x18] sm:$0xff] %v1978
    %2081 = vst [vmem:[#allocation2 + $0x20] sm:$0xff] %v1980
    %2082 = vst [vmem:[#allocation2 + $0x28] sm:$0xff] %v2050
    %2083 = vst [vmem:[#allocation2 + $0x30] sm:$0xff] %v1984
    %2084 = vst [vmem:[#allocation2 + $0x38] sm:$0xff] %v1986
    %2085 = vst [vmem:[#allocation2 + $0x40] sm:$0xff] %v2055
    %2086 = vst [vmem:[#allocation2 + $0x48] sm:$0xff] %v1988
    %2087 = vst [vmem:[#allocation2 + $0x50] sm:$0xff] %v1990
    %2088 = vst [vmem:[#allocation2 + $0x58] sm:$0xff] %v2058
    %2089 = vst [vmem:[#allocation2 + $0x60] sm:$0xff] %v1994
    %2090 = vst [vmem:[#allocation2 + $0x68] sm:$0xff] %v1996
    %2091 = vst [vmem:[#allocation2 + $0x70] sm:$0xff] %v2063
    %2092 = vst [vmem:[#allocation2 + $0x78] sm:$0xff] %v1998
    %2093 = vst [vmem:[#allocation2 + $0x80] sm:$0xff] %v2000
    %2094 = vst [vmem:[#allocation2 + $0x88] sm:$0xff] %v2066
    %2095 = vst [vmem:[#allocation2 + $0x90] sm:$0xff] %v2004
    %2096 = vst [vmem:[#allocation2 + $0x98] sm:$0xff] %v2006
    %2097 = vst [vmem:[#allocation2 + $0xa0] sm:$0xff] %v2071
    %2098 = vst [vmem:[#allocation2 + $0xa8] sm:$0xff] %v2008
    %2099 = vst [vmem:[#allocation2 + $0xb0] sm:$0xff] %v2010
    %2100 = vst [vmem:[#allocation2 + $0xb8] sm:$0xff] %v2074
    %v2101 = vld [vmem:[%s7] sm:$0xff]
    %v2102 = vld [vmem:[%s7 + $0x8] sm:$0xf]
    %v2103 = vld [vmem:[%s7 + $0xc] sm:$0xff]
    %v2104 = vld [vmem:[%s7 + $0x14] sm:$0xf]
    %v2105 = vld [vmem:[%s7 + $0x18] sm:$0xff]
    %v2106 = vld [vmem:[%s7 + $0x20] sm:$0xf]
    %v2107 = vld [vmem:[%s7 + $0x24] sm:$0xff]
    %v2108 = vld [vmem:[%s7 + $0x2c] sm:$0xf]
    %v2109 = vld [vmem:[#allocation2] sm:$0xff]
    %v2110 = vld [vmem:[#allocation2 + $0x8] sm:$0xff]
    %v2111 = vld [vmem:[#allocation2 + $0x10] sm:$0xff]
    %v2120 = vunpack.c.l.b16 %v2101
    %v2121 = vunpack.c.h.b16 %v2101
    %v2122 = vunpack.c.l.b16 %v2102
    %v2123 = vunpack.c.l.b16 %v2103
    %v2124 = vunpack.c.h.b16 %v2103
    %v2125 = vunpack.c.l.b16 %v2104
    %v2126 = vunpack.c.l.b16 %v2105
    %v2127 = vunpack.c.h.b16 %v2105
    %v2128 = vunpack.c.l.b16 %v2106
    %v2129 = vunpack.c.l.b16 %v2107
    %v2130 = vunpack.c.h.b16 %v2107
    %v2131 = vunpack.c.l.b16 %v2108
    %v2132 = vpack.c.b16 %v2123, %v2120
    %v2133 = vpack.c.b16 %v2124, %v2121
    %v2134 = vpack.c.b16 %v2125, %v2122
    %v2135 = vpack.c.b16 %v2129, %v2126
    %v2136 = vpack.c.b16 %v2130, %v2127
    %v2137 = vpack.c.b16 %v2131, %v2128
    %vm2144 = vcmask 261120
    %v2145 = vsel %vm2144, 0, 0
    %2147 = vmatprep.subr.bf16.mxu0 %v2133
    %2148 = vmatpush1.bf16.msra.mxu0 %v2132
    %2149 = vmatprep.subr.bf16.mxu0 %v2136
    %2150 = vmatpush1.bf16.msra.mxu0 %v2135
    %2151 = vmatprep.subr.bf16.mxu0 0
    %2152 = vmatpush1.bf16.msra.mxu0 0
    %2153 = vmatprep.subr.bf16.mxu0 0
    %2154 = vmatpush1.bf16.msra.mxu0 0
    %2155 = vmatprep.subr.bf16.mxu0 0
    %2156 = vmatpush1.bf16.msra.mxu0 0
    %2157 = vmatprep.subr.bf16.mxu0 0
    %2158 = vmatpush1.bf16.msra.mxu0 0
    %2159 = vmatprep.subr.bf16.mxu0 0
    %2160 = vmatpush1.bf16.msra.mxu0 0
    %2161 = vmatprep.subr.bf16.mxu0 0
    %2162 = vmatpush1.bf16.msra.mxu0 0
    %2163 = vmatprep.subr.bf16.mxu0 0
    %2164 = vmatpush1.bf16.msra.mxu0 0
    %2165 = vmatprep.subr.bf16.mxu0 0
    %2166 = vmatpush1.bf16.msra.mxu0 0
    %2167 = vmatprep.subr.bf16.mxu0 0
    %2168 = vmatpush1.bf16.msra.mxu0 0
    %2169 = vmatprep.subr.bf16.mxu0 0
    %2170 = vmatpush1.bf16.msra.mxu0 0
    %2171 = vmatprep.subr.bf16.mxu0 0
    %2172 = vmatpush1.bf16.msra.mxu0 0
    %2173 = vmatprep.subr.bf16.mxu0 0
    %2174 = vmatpush1.bf16.msra.mxu0 0
    %2175 = vmatprep.subr.bf16.mxu0 0
    %2176 = vmatpush1.bf16.msra.mxu0 0
    %2177 = vmatprep.subr.bf16.mxu0 0
    %2178 = vmatpush1.bf16.msra.mxu0 0
    %2179 = vmatprep.mubr.bf16.mxu0 0
    %2180 = vmatmul.mubr.bf16.gmra.mrb[0].mxu0 %v2145
    %v2181 = vpop.f32.mrb[0].mxu0
    %v2182 = vadd.f32 0.0, %v2181
    %v2183 = vpop.f32.mrb[0].mxu0
    %v2184 = vadd.f32 0.0, %v2183
    %v2185 = vpop.f32.mrb[0].mxu0
    %v2186 = vpop.f32.mrb[0].mxu0
    %2187 = vdwg.mxu0
    %2188 = vmatprep.subr.bf16.mxu0 0
    %2189 = vmatpush1.bf16.msra.mxu0 %v2134
    %2190 = vmatprep.subr.bf16.mxu0 0
    %2191 = vmatpush1.bf16.msra.mxu0 %v2137
    %2192 = vmatprep.subr.bf16.mxu0 0
    %2193 = vmatpush1.bf16.msra.mxu0 0
    %2194 = vmatprep.subr.bf16.mxu0 0
    %2195 = vmatpush1.bf16.msra.mxu0 0
    %2196 = vmatprep.subr.bf16.mxu0 0
    %2197 = vmatpush1.bf16.msra.mxu0 0
    %2198 = vmatprep.subr.bf16.mxu0 0
    %2199 = vmatpush1.bf16.msra.mxu0 0
    %2200 = vmatprep.subr.bf16.mxu0 0
    %2201 = vmatpush1.bf16.msra.mxu0 0
    %2202 = vmatprep.subr.bf16.mxu0 0
    %2203 = vmatpush1.bf16.msra.mxu0 0
    %2204 = vmatprep.subr.bf16.mxu0 0
    %2205 = vmatpush1.bf16.msra.mxu0 0
    %2206 = vmatprep.subr.bf16.mxu0 0
    %2207 = vmatpush1.bf16.msra.mxu0 0
    %2208 = vmatprep.subr.bf16.mxu0 0
    %2209 = vmatpush1.bf16.msra.mxu0 0
    %2210 = vmatprep.subr.bf16.mxu0 0
    %2211 = vmatpush1.bf16.msra.mxu0 0
    %2212 = vmatprep.subr.bf16.mxu0 0
    %2213 = vmatpush1.bf16.msra.mxu0 0
    %2214 = vmatprep.subr.bf16.mxu0 0
    %2215 = vmatpush1.bf16.msra.mxu0 0
    %2216 = vmatprep.subr.bf16.mxu0 0
    %2217 = vmatpush1.bf16.msra.mxu0 0
    %2218 = vmatprep.subr.bf16.mxu0 0
    %2219 = vmatpush1.bf16.msra.mxu0 0
    %2220 = vmatprep.mubr.bf16.mxu0 0
    %2221 = vmatmul.mubr.bf16.gmra.mrb[0].mxu0 %v2145
    %v2222 = vpop.f32.mrb[0].mxu0
    %v2223 = vadd.f32 0.0, %v2222
    %v2224 = vpop.f32.mrb[0].mxu0
    %v2225 = vpop.f32.mrb[0].mxu0
    %v2226 = vpop.f32.mrb[0].mxu0
    %2227 = vdwg.mxu0
    %v2228 = vadd.f32 %v2109, %v2182
    %v2229 = vxor.u32 %v2228, 2147483648
    %v2230 = vmul.f32 %v2229, 1.442695
    %v2231 = vpow.pop %v2230
    %v2232 = vadd.f32 %v2231, 1.0
    %v2233 = vrcp.pop %v2232
    %v2234 = vmul.f32 1.0, %v2233
    %v2235 = vadd.f32 %v2110, %v2184
    %v2236 = vxor.u32 %v2235, 2147483648
    %v2237 = vmul.f32 %v2236, 1.442695
    %v2238 = vpow.pop %v2237
    %v2239 = vadd.f32 %v2238, 1.0
    %v2240 = vrcp.pop %v2239
    %v2241 = vmul.f32 1.0, %v2240
    %v2242 = vlaneseq
    %v2243 = vshrl.u32 %v2242, 7
    %v2244 = vsub.s32 1, %v2243
    %v2245 = vrot.slane %v1819, %v2244
    %v2246 = vadd.f32 %v2223, %v2245
    %v2247 = vmul.f32 %v2234, %v2246
    %v2248 = vadd.f32 %v2111, %v2247
    %v2249 = vtanh.pop %v2248
    %v2250 = vsub.f32 1.0, %v2241
    %v2251 = vmul.f32 %v2250, %v2249
    %v2252 = vmul.f32 %v2241, 0.0
    %v2253 = vadd.f32 %v2251, %v2252
    %2254 = vst.msk [vmem:[#allocation4] sm:$0xff] %vm2144, %v2253
    %v2255 = vld [vmem:[#allocation2 + $0x18] sm:$0xff]
    %v2256 = vld [vmem:[#allocation2 + $0x20] sm:$0xff]
    %v2257 = vld [vmem:[#allocation2 + $0x28] sm:$0xff]
    %v2258 = vpack.c.bf16 %v2253, %v2253
    %v2260 = vsel %vm2144, %v2258, 0
    %2262 = vmatprep.subr.bf16.mxu0 %v2133
    %2263 = vmatpush1.bf16.msra.mxu0 %v2132
    %2264 = vmatprep.subr.bf16.mxu0 %v2136
    %2265 = vmatpush1.bf16.msra.mxu0 %v2135
    %2266 = vmatprep.subr.bf16.mxu0 0
    %2267 = vmatpush1.bf16.msra.mxu0 0
    %2268 = vmatprep.subr.bf16.mxu0 0
    %2269 = vmatpush1.bf16.msra.mxu0 0
    %2270 = vmatprep.subr.bf16.mxu0 0
    %2271 = vmatpush1.bf16.msra.mxu0 0
    %2272 = vmatprep.subr.bf16.mxu0 0
    %2273 = vmatpush1.bf16.msra.mxu0 0
    %2274 = vmatprep.subr.bf16.mxu0 0
    %2275 = vmatpush1.bf16.msra.mxu0 0
    %2276 = vmatprep.subr.bf16.mxu0 0
    %2277 = vmatpush1.bf16.msra.mxu0 0
    %2278 = vmatprep.subr.bf16.mxu0 0
    %2279 = vmatpush1.bf16.msra.mxu0 0
    %2280 = vmatprep.subr.bf16.mxu0 0
    %2281 = vmatpush1.bf16.msra.mxu0 0
    %2282 = vmatprep.subr.bf16.mxu0 0
    %2283 = vmatpush1.bf16.msra.mxu0 0
    %2284 = vmatprep.subr.bf16.mxu0 0
    %2285 = vmatpush1.bf16.msra.mxu0 0
    %2286 = vmatprep.subr.bf16.mxu0 0
    %2287 = vmatpush1.bf16.msra.mxu0 0
    %2288 = vmatprep.subr.bf16.mxu0 0
    %2289 = vmatpush1.bf16.msra.mxu0 0
    %2290 = vmatprep.subr.bf16.mxu0 0
    %2291 = vmatpush1.bf16.msra.mxu0 0
    %2292 = vmatprep.subr.bf16.mxu0 0
    %2293 = vmatpush1.bf16.msra.mxu0 0
    %2294 = vmatprep.mubr.bf16.mxu0 0
    %2295 = vmatmul.mubr.bf16.gmra.mrb[0].mxu0 %v2260
    %v2296 = vpop.f32.mrb[0].mxu0
    %v2297 = vadd.f32 0.0, %v2296
    %v2298 = vpop.f32.mrb[0].mxu0
    %v2299 = vadd.f32 0.0, %v2298
    %v2300 = vpop.f32.mrb[0].mxu0
    %v2301 = vpop.f32.mrb[0].mxu0
    %2302 = vdwg.mxu0
    %2303 = vmatprep.subr.bf16.mxu0 0
    %2304 = vmatpush1.bf16.msra.mxu0 %v2134
    %2305 = vmatprep.subr.bf16.mxu0 0
    %2306 = vmatpush1.bf16.msra.mxu0 %v2137
    %2307 = vmatprep.subr.bf16.mxu0 0
    %2308 = vmatpush1.bf16.msra.mxu0 0
    %2309 = vmatprep.subr.bf16.mxu0 0
    %2310 = vmatpush1.bf16.msra.mxu0 0
    %2311 = vmatprep.subr.bf16.mxu0 0
    %2312 = vmatpush1.bf16.msra.mxu0 0
    %2313 = vmatprep.subr.bf16.mxu0 0
    %2314 = vmatpush1.bf16.msra.mxu0 0
    %2315 = vmatprep.subr.bf16.mxu0 0
    %2316 = vmatpush1.bf16.msra.mxu0 0
    %2317 = vmatprep.subr.bf16.mxu0 0
    %2318 = vmatpush1.bf16.msra.mxu0 0
    %2319 = vmatprep.subr.bf16.mxu0 0
    %2320 = vmatpush1.bf16.msra.mxu0 0
    %2321 = vmatprep.subr.bf16.mxu0 0
    %2322 = vmatpush1.bf16.msra.mxu0 0
    %2323 = vmatprep.subr.bf16.mxu0 0
    %2324 = vmatpush1.bf16.msra.mxu0 0
    %2325 = vmatprep.subr.bf16.mxu0 0
    %2326 = vmatpush1.bf16.msra.mxu0 0
    %2327 = vmatprep.subr.bf16.mxu0 0
    %2328 = vmatpush1.bf16.msra.mxu0 0
    %2329 = vmatprep.subr.bf16.mxu0 0
    %2330 = vmatpush1.bf16.msra.mxu0 0
    %2331 = vmatprep.subr.bf16.mxu0 0
    %2332 = vmatpush1.bf16.msra.mxu0 0
    %2333 = vmatprep.subr.bf16.mxu0 0
    %2334 = vmatpush1.bf16.msra.mxu0 0
    %2335 = vmatprep.mubr.bf16.mxu0 0
    %2336 = vmatmul.mubr.bf16.gmra.mrb[0].mxu0 %v2260
    %v2337 = vpop.f32.mrb[0].mxu0
    %v2338 = vadd.f32 0.0, %v2337
    %v2339 = vpop.f32.mrb[0].mxu0
    %v2340 = vpop.f32.mrb[0].mxu0
    %v2341 = vpop.f32.mrb[0].mxu0
    %2342 = vdwg.mxu0
    %v2343 = vadd.f32 %v2255, %v2297
    %v2344 = vxor.u32 %v2343, 2147483648
    %v2345 = vmul.f32 %v2344, 1.442695
    %v2346 = vpow.pop %v2345
    %v2347 = vadd.f32 %v2346, 1.0
    %v2348 = vrcp.pop %v2347
    %v2349 = vmul.f32 1.0, %v2348
    %v2350 = vadd.f32 %v2256, %v2299
    %v2351 = vxor.u32 %v2350, 2147483648
    %v2352 = vmul.f32 %v2351, 1.442695
    %v2353 = vpow.pop %v2352
    %v2354 = vadd.f32 %v2353, 1.0
    %v2355 = vrcp.pop %v2354
    %v2356 = vmul.f32 1.0, %v2355
    %v2357 = vadd.f32 %v2338, %v2245
    %v2358 = vmul.f32 %v2349, %v2357
    %v2359 = vadd.f32 %v2257, %v2358
    %v2360 = vtanh.pop %v2359
    %v2361 = vsub.f32 1.0, %v2356
    %v2362 = vmul.f32 %v2361, %v2360
    %v2363 = vmul.f32 %v2356, %v2253
    %v2364 = vadd.f32 %v2362, %v2363
    %2365 = vst.msk [vmem:[#allocation4 + $0x8] sm:$0xff] %vm2144, %v2364
    %v2366 = vld [vmem:[#allocation2 + $0x30] sm:$0xff]
    %v2367 = vld [vmem:[#allocation2 + $0x38] sm:$0xff]
    %v2368 = vld [vmem:[#allocation2 + $0x40] sm:$0xff]
    %v2369 = vpack.c.bf16 %v2364, %v2364
    %v2371 = vsel %vm2144, %v2369, 0
    %2373 = vmatprep.subr.bf16.mxu0 %v2133
    %2374 = vmatpush1.bf16.msra.mxu0 %v2132
    %2375 = vmatprep.subr.bf16.mxu0 %v2136
    %2376 = vmatpush1.bf16.msra.mxu0 %v2135
    %2377 = vmatprep.subr.bf16.mxu0 0
    %2378 = vmatpush1.bf16.msra.mxu0 0
    %2379 = vmatprep.subr.bf16.mxu0 0
    %2380 = vmatpush1.bf16.msra.mxu0 0
    %2381 = vmatprep.subr.bf16.mxu0 0
    %2382 = vmatpush1.bf16.msra.mxu0 0
    %2383 = vmatprep.subr.bf16.mxu0 0
    %2384 = vmatpush1.bf16.msra.mxu0 0
    %2385 = vmatprep.subr.bf16.mxu0 0
    %2386 = vmatpush1.bf16.msra.mxu0 0
    %2387 = vmatprep.subr.bf16.mxu0 0
    %2388 = vmatpush1.bf16.msra.mxu0 0
    %2389 = vmatprep.subr.bf16.mxu0 0
    %2390 = vmatpush1.bf16.msra.mxu0 0
    %2391 = vmatprep.subr.bf16.mxu0 0
    %2392 = vmatpush1.bf16.msra.mxu0 0
    %2393 = vmatprep.subr.bf16.mxu0 0
    %2394 = vmatpush1.bf16.msra.mxu0 0
    %2395 = vmatprep.subr.bf16.mxu0 0
    %2396 = vmatpush1.bf16.msra.mxu0 0
    %2397 = vmatprep.subr.bf16.mxu0 0
    %2398 = vmatpush1.bf16.msra.mxu0 0
    %2399 = vmatprep.subr.bf16.mxu0 0
    %2400 = vmatpush1.bf16.msra.mxu0 0
    %2401 = vmatprep.subr.bf16.mxu0 0
    %2402 = vmatpush1.bf16.msra.mxu0 0
    %2403 = vmatprep.subr.bf16.mxu0 0
    %2404 = vmatpush1.bf16.msra.mxu0 0
    %2405 = vmatprep.mubr.bf16.mxu0 0
    %2406 = vmatmul.mubr.bf16.gmra.mrb[0].mxu0 %v2371
    %v2407 = vpop.f32.mrb[0].mxu0
    %v2408 = vadd.f32 0.0, %v2407
    %v2409 = vpop.f32.mrb[0].mxu0
    %v2410 = vadd.f32 0.0, %v2409
    %v2411 = vpop.f32.mrb[0].mxu0
    %v2412 = vpop.f32.mrb[0].mxu0
    %2413 = vdwg.mxu0
    %2414 = vmatprep.subr.bf16.mxu0 0
    %2415 = vmatpush1.bf16.msra.mxu0 %v2134
    %2416 = vmatprep.subr.bf16.mxu0 0
    %2417 = vmatpush1.bf16.msra.mxu0 %v2137
    %2418 = vmatprep.subr.bf16.mxu0 0
    %2419 = vmatpush1.bf16.msra.mxu0 0
    %2420 = vmatprep.subr.bf16.mxu0 0
    %2421 = vmatpush1.bf16.msra.mxu0 0
    %2422 = vmatprep.subr.bf16.mxu0 0
    %2423 = vmatpush1.bf16.msra.mxu0 0
    %2424 = vmatprep.subr.bf16.mxu0 0
    %2425 = vmatpush1.bf16.msra.mxu0 0
    %2426 = vmatprep.subr.bf16.mxu0 0
    %2427 = vmatpush1.bf16.msra.mxu0 0
    %2428 = vmatprep.subr.bf16.mxu0 0
    %2429 = vmatpush1.bf16.msra.mxu0 0
    %2430 = vmatprep.subr.bf16.mxu0 0
    %2431 = vmatpush1.bf16.msra.mxu0 0
    %2432 = vmatprep.subr.bf16.mxu0 0
    %2433 = vmatpush1.bf16.msra.mxu0 0
    %2434 = vmatprep.subr.bf16.mxu0 0
    %2435 = vmatpush1.bf16.msra.mxu0 0
    %2436 = vmatprep.subr.bf16.mxu0 0
    %2437 = vmatpush1.bf16.msra.mxu0 0
    %2438 = vmatprep.subr.bf16.mxu0 0
    %2439 = vmatpush1.bf16.msra.mxu0 0
    %2440 = vmatprep.subr.bf16.mxu0 0
    %2441 = vmatpush1.bf16.msra.mxu0 0
    %2442 = vmatprep.subr.bf16.mxu0 0
    %2443 = vmatpush1.bf16.msra.mxu0 0
    %2444 = vmatprep.subr.bf16.mxu0 0
    %2445 = vmatpush1.bf16.msra.mxu0 0
    %2446 = vmatprep.mubr.bf16.mxu0 0
    %2447 = vmatmul.mubr.bf16.gmra.mrb[0].mxu0 %v2371
    %v2448 = vpop.f32.mrb[0].mxu0
    %v2449 = vadd.f32 0.0, %v2448
    %v2450 = vpop.f32.mrb[0].mxu0
    %v2451 = vpop.f32.mrb[0].mxu0
    %v2452 = vpop.f32.mrb[0].mxu0
    %2453 = vdwg.mxu0
    %v2454 = vadd.f32 %v2366, %v2408
    %v2455 = vxor.u32 %v2454, 2147483648
    %v2456 = vmul.f32 %v2455, 1.442695
    %v2457 = vpow.pop %v2456
    %v2458 = vadd.f32 %v2457, 1.0
    %v2459 = vrcp.pop %v2458
    %v2460 = vmul.f32 1.0, %v2459
    %v2461 = vadd.f32 %v2367, %v2410
    %v2462 = vxor.u32 %v2461, 2147483648
    %v2463 = vmul.f32 %v2462, 1.442695
    %v2464 = vpow.pop %v2463
    %v2465 = vadd.f32 %v2464, 1.0
    %v2466 = vrcp.pop %v2465
    %v2467 = vmul.f32 1.0, %v2466
    %v2468 = vadd.f32 %v2449, %v2245
    %v2469 = vmul.f32 %v2460, %v2468
    %v2470 = vadd.f32 %v2368, %v2469
    %v2471 = vtanh.pop %v2470
    %v2472 = vsub.f32 1.0, %v2467
    %v2473 = vmul.f32 %v2472, %v2471
    %v2474 = vmul.f32 %v2467, %v2364
    %v2475 = vadd.f32 %v2473, %v2474
    %2476 = vst.msk [vmem:[#allocation4 + $0x10] sm:$0xff] %vm2144, %v2475
    %v2477 = vld [vmem:[#allocation2 + $0x48] sm:$0xff]
    %v2478 = vld [vmem:[#allocation2 + $0x50] sm:$0xff]
    %v2479 = vld [vmem:[#allocation2 + $0x58] sm:$0xff]
    %v2480 = vpack.c.bf16 %v2475, %v2475
    %v2482 = vsel %vm2144, %v2480, 0
    %2484 = vmatprep.subr.bf16.mxu0 %v2133
    %2485 = vmatpush1.bf16.msra.mxu0 %v2132
    %2486 = vmatprep.subr.bf16.mxu0 %v2136
    %2487 = vmatpush1.bf16.msra.mxu0 %v2135
    %2488 = vmatprep.subr.bf16.mxu0 0
    %2489 = vmatpush1.bf16.msra.mxu0 0
    %2490 = vmatprep.subr.bf16.mxu0 0
    %2491 = vmatpush1.bf16.msra.mxu0 0
    %2492 = vmatprep.subr.bf16.mxu0 0
    %2493 = vmatpush1.bf16.msra.mxu0 0
    %2494 = vmatprep.subr.bf16.mxu0 0
    %2495 = vmatpush1.bf16.msra.mxu0 0
    %2496 = vmatprep.subr.bf16.mxu0 0
    %2497 = vmatpush1.bf16.msra.mxu0 0
    %2498 = vmatprep.subr.bf16.mxu0 0
    %2499 = vmatpush1.bf16.msra.mxu0 0
    %2500 = vmatprep.subr.bf16.mxu0 0
    %2501 = vmatpush1.bf16.msra.mxu0 0
    %2502 = vmatprep.subr.bf16.mxu0 0
    %2503 = vmatpush1.bf16.msra.mxu0 0
    %2504 = vmatprep.subr.bf16.mxu0 0
    %2505 = vmatpush1.bf16.msra.mxu0 0
    %2506 = vmatprep.subr.bf16.mxu0 0
    %2507 = vmatpush1.bf16.msra.mxu0 0
    %2508 = vmatprep.subr.bf16.mxu0 0
    %2509 = vmatpush1.bf16.msra.mxu0 0
    %2510 = vmatprep.subr.bf16.mxu0 0
    %2511 = vmatpush1.bf16.msra.mxu0 0
    %2512 = vmatprep.subr.bf16.mxu0 0
    %2513 = vmatpush1.bf16.msra.mxu0 0
    %2514 = vmatprep.subr.bf16.mxu0 0
    %2515 = vmatpush1.bf16.msra.mxu0 0
    %2516 = vmatprep.mubr.bf16.mxu0 0
    %2517 = vmatmul.mubr.bf16.gmra.mrb[0].mxu0 %v2482
    %v2518 = vpop.f32.mrb[0].mxu0
    %v2519 = vadd.f32 0.0, %v2518
    %v2520 = vpop.f32.mrb[0].mxu0
    %v2521 = vadd.f32 0.0, %v2520
    %v2522 = vpop.f32.mrb[0].mxu0
    %v2523 = vpop.f32.mrb[0].mxu0
    %2524 = vdwg.mxu0
    %2525 = vmatprep.subr.bf16.mxu0 0
    %2526 = vmatpush1.bf16.msra.mxu0 %v2134
    %2527 = vmatprep.subr.bf16.mxu0 0
    %2528 = vmatpush1.bf16.msra.mxu0 %v2137
    %2529 = vmatprep.subr.bf16.mxu0 0
    %2530 = vmatpush1.bf16.msra.mxu0 0
    %2531 = vmatprep.subr.bf16.mxu0 0
    %2532 = vmatpush1.bf16.msra.mxu0 0
    %2533 = vmatprep.subr.bf16.mxu0 0
    %2534 = vmatpush1.bf16.msra.mxu0 0
    %2535 = vmatprep.subr.bf16.mxu0 0
    %2536 = vmatpush1.bf16.msra.mxu0 0
    %2537 = vmatprep.subr.bf16.mxu0 0
    %2538 = vmatpush1.bf16.msra.mxu0 0
    %2539 = vmatprep.subr.bf16.mxu0 0
    %2540 = vmatpush1.bf16.msra.mxu0 0
    %2541 = vmatprep.subr.bf16.mxu0 0
    %2542 = vmatpush1.bf16.msra.mxu0 0
    %2543 = vmatprep.subr.bf16.mxu0 0
    %2544 = vmatpush1.bf16.msra.mxu0 0
    %2545 = vmatprep.subr.bf16.mxu0 0
    %2546 = vmatpush1.bf16.msra.mxu0 0
    %2547 = vmatprep.subr.bf16.mxu0 0
    %2548 = vmatpush1.bf16.msra.mxu0 0
    %2549 = vmatprep.subr.bf16.mxu0 0
    %2550 = vmatpush1.bf16.msra.mxu0 0
    %2551 = vmatprep.subr.bf16.mxu0 0
    %2552 = vmatpush1.bf16.msra.mxu0 0
    %2553 = vmatprep.subr.bf16.mxu0 0
    %2554 = vmatpush1.bf16.msra.mxu0 0
    %2555 = vmatprep.subr.bf16.mxu0 0
    %2556 = vmatpush1.bf16.msra.mxu0 0
    %2557 = vmatprep.mubr.bf16.mxu0 0
    %2558 = vmatmul.mubr.bf16.gmra.mrb[0].mxu0 %v2482
    %v2559 = vpop.f32.mrb[0].mxu0
    %v2560 = vadd.f32 0.0, %v2559
    %v2561 = vpop.f32.mrb[0].mxu0
    %v2562 = vpop.f32.mrb[0].mxu0
    %v2563 = vpop.f32.mrb[0].mxu0
    %2564 = vdwg.mxu0
    %v2565 = vadd.f32 %v2477, %v2519
    %v2566 = vxor.u32 %v2565, 2147483648
    %v2567 = vmul.f32 %v2566, 1.442695
    %v2568 = vpow.pop %v2567
    %v2569 = vadd.f32 %v2568, 1.0
    %v2570 = vrcp.pop %v2569
    %v2571 = vmul.f32 1.0, %v2570
    %v2572 = vadd.f32 %v2478, %v2521
    %v2573 = vxor.u32 %v2572, 2147483648
    %v2574 = vmul.f32 %v2573, 1.442695
    %v2575 = vpow.pop %v2574
    %v2576 = vadd.f32 %v2575, 1.0
    %v2577 = vrcp.pop %v2576
    %v2578 = vmul.f32 1.0, %v2577
    %v2579 = vadd.f32 %v2560, %v2245
    %v2580 = vmul.f32 %v2571, %v2579
    %v2581 = vadd.f32 %v2479, %v2580
    %v2582 = vtanh.pop %v2581
    %v2583 = vsub.f32 1.0, %v2578
    %v2584 = vmul.f32 %v2583, %v2582
    %v2585 = vmul.f32 %v2578, %v2475
    %v2586 = vadd.f32 %v2584, %v2585
    %2587 = vst.msk [vmem:[#allocation4 + $0x18] sm:$0xff] %vm2144, %v2586
    %v2588 = vld [vmem:[#allocation2 + $0x60] sm:$0xff]
    %v2589 = vld [vmem:[#allocation2 + $0x68] sm:$0xff]
    %v2590 = vld [vmem:[#allocation2 + $0x70] sm:$0xff]
    %v2591 = vpack.c.bf16 %v2586, %v2586
    %v2593 = vsel %vm2144, %v2591, 0
    %2595 = vmatprep.subr.bf16.mxu0 %v2133
    %2596 = vmatpush1.bf16.msra.mxu0 %v2132
    %2597 = vmatprep.subr.bf16.mxu0 %v2136
    %2598 = vmatpush1.bf16.msra.mxu0 %v2135
    %2599 = vmatprep.subr.bf16.mxu0 0
    %2600 = vmatpush1.bf16.msra.mxu0 0
    %2601 = vmatprep.subr.bf16.mxu0 0
    %2602 = vmatpush1.bf16.msra.mxu0 0
    %2603 = vmatprep.subr.bf16.mxu0 0
    %2604 = vmatpush1.bf16.msra.mxu0 0
    %2605 = vmatprep.subr.bf16.mxu0 0
    %2606 = vmatpush1.bf16.msra.mxu0 0
    %2607 = vmatprep.subr.bf16.mxu0 0
    %2608 = vmatpush1.bf16.msra.mxu0 0
    %2609 = vmatprep.subr.bf16.mxu0 0
    %2610 = vmatpush1.bf16.msra.mxu0 0
    %2611 = vmatprep.subr.bf16.mxu0 0
    %2612 = vmatpush1.bf16.msra.mxu0 0
    %2613 = vmatprep.subr.bf16.mxu0 0
    %2614 = vmatpush1.bf16.msra.mxu0 0
    %2615 = vmatprep.subr.bf16.mxu0 0
    %2616 = vmatpush1.bf16.msra.mxu0 0
    %2617 = vmatprep.subr.bf16.mxu0 0
    %2618 = vmatpush1.bf16.msra.mxu0 0
    %2619 = vmatprep.subr.bf16.mxu0 0
    %2620 = vmatpush1.bf16.msra.mxu0 0
    %2621 = vmatprep.subr.bf16.mxu0 0
    %2622 = vmatpush1.bf16.msra.mxu0 0
    %2623 = vmatprep.subr.bf16.mxu0 0
    %2624 = vmatpush1.bf16.msra.mxu0 0
    %2625 = vmatprep.subr.bf16.mxu0 0
    %2626 = vmatpush1.bf16.msra.mxu0 0
    %2627 = vmatprep.mubr.bf16.mxu0 0
    %2628 = vmatmul.mubr.bf16.gmra.mrb[0].mxu0 %v2593
    %v2629 = vpop.f32.mrb[0].mxu0
    %v2630 = vadd.f32 0.0, %v2629
    %v2631 = vpop.f32.mrb[0].mxu0
    %v2632 = vadd.f32 0.0, %v2631
    %v2633 = vpop.f32.mrb[0].mxu0
    %v2634 = vpop.f32.mrb[0].mxu0
    %2635 = vdwg.mxu0
    %2636 = vmatprep.subr.bf16.mxu0 0
    %2637 = vmatpush1.bf16.msra.mxu0 %v2134
    %2638 = vmatprep.subr.bf16.mxu0 0
    %2639 = vmatpush1.bf16.msra.mxu0 %v2137
    %2640 = vmatprep.subr.bf16.mxu0 0
    %2641 = vmatpush1.bf16.msra.mxu0 0
    %2642 = vmatprep.subr.bf16.mxu0 0
    %2643 = vmatpush1.bf16.msra.mxu0 0
    %2644 = vmatprep.subr.bf16.mxu0 0
    %2645 = vmatpush1.bf16.msra.mxu0 0
    %2646 = vmatprep.subr.bf16.mxu0 0
    %2647 = vmatpush1.bf16.msra.mxu0 0
    %2648 = vmatprep.subr.bf16.mxu0 0
    %2649 = vmatpush1.bf16.msra.mxu0 0
    %2650 = vmatprep.subr.bf16.mxu0 0
    %2651 = vmatpush1.bf16.msra.mxu0 0
    %2652 = vmatprep.subr.bf16.mxu0 0
    %2653 = vmatpush1.bf16.msra.mxu0 0
    %2654 = vmatprep.subr.bf16.mxu0 0
    %2655 = vmatpush1.bf16.msra.mxu0 0
    %2656 = vmatprep.subr.bf16.mxu0 0
    %2657 = vmatpush1.bf16.msra.mxu0 0
    %2658 = vmatprep.subr.bf16.mxu0 0
    %2659 = vmatpush1.bf16.msra.mxu0 0
    %2660 = vmatprep.subr.bf16.mxu0 0
    %2661 = vmatpush1.bf16.msra.mxu0 0
    %2662 = vmatprep.subr.bf16.mxu0 0
    %2663 = vmatpush1.bf16.msra.mxu0 0
    %2664 = vmatprep.subr.bf16.mxu0 0
    %2665 = vmatpush1.bf16.msra.mxu0 0
    %2666 = vmatprep.subr.bf16.mxu0 0
    %2667 = vmatpush1.bf16.msra.mxu0 0
    %2668 = vmatprep.mubr.bf16.mxu0 0
    %2669 = vmatmul.mubr.bf16.gmra.mrb[0].mxu0 %v2593
    %v2670 = vpop.f32.mrb[0].mxu0
    %v2671 = vadd.f32 0.0, %v2670
    %v2672 = vpop.f32.mrb[0].mxu0
    %v2673 = vpop.f32.mrb[0].mxu0
    %v2674 = vpop.f32.mrb[0].mxu0
    %2675 = vdwg.mxu0
    %v2676 = vadd.f32 %v2588, %v2630
    %v2677 = vxor.u32 %v2676, 2147483648
    %v2678 = vmul.f32 %v2677, 1.442695
    %v2679 = vpow.pop %v2678
    %v2680 = vadd.f32 %v2679, 1.0
    %v2681 = vrcp.pop %v2680
    %v2682 = vmul.f32 1.0, %v2681
    %v2683 = vadd.f32 %v2589, %v2632
    %v2684 = vxor.u32 %v2683, 2147483648
    %v2685 = vmul.f32 %v2684, 1.442695
    %v2686 = vpow.pop %v2685
    %v2687 = vadd.f32 %v2686, 1.0
    %v2688 = vrcp.pop %v2687
    %v2689 = vmul.f32 1.0, %v2688
    %v2690 = vadd.f32 %v2671, %v2245
    %v2691 = vmul.f32 %v2682, %v2690
    %v2692 = vadd.f32 %v2590, %v2691
    %v2693 = vtanh.pop %v2692
    %v2694 = vsub.f32 1.0, %v2689
    %v2695 = vmul.f32 %v2694, %v2693
    %v2696 = vmul.f32 %v2689, %v2586
    %v2697 = vadd.f32 %v2695, %v2696
    %2698 = vst.msk [vmem:[#allocation4 + $0x20] sm:$0xff] %vm2144, %v2697
    %v2699 = vld [vmem:[#allocation2 + $0x78] sm:$0xff]
    %v2700 = vld [vmem:[#allocation2 + $0x80] sm:$0xff]
    %v2701 = vld [vmem:[#allocation2 + $0x88] sm:$0xff]
    %v2702 = vpack.c.bf16 %v2697, %v2697
    %v2704 = vsel %vm2144, %v2702, 0
    %2706 = vmatprep.subr.bf16.mxu0 %v2133
    %2707 = vmatpush1.bf16.msra.mxu0 %v2132
    %2708 = vmatprep.subr.bf16.mxu0 %v2136
    %2709 = vmatpush1.bf16.msra.mxu0 %v2135
    %2710 = vmatprep.subr.bf16.mxu0 0
    %2711 = vmatpush1.bf16.msra.mxu0 0
    %2712 = vmatprep.subr.bf16.mxu0 0
    %2713 = vmatpush1.bf16.msra.mxu0 0
    %2714 = vmatprep.subr.bf16.mxu0 0
    %2715 = vmatpush1.bf16.msra.mxu0 0
    %2716 = vmatprep.subr.bf16.mxu0 0
    %2717 = vmatpush1.bf16.msra.mxu0 0
    %2718 = vmatprep.subr.bf16.mxu0 0
    %2719 = vmatpush1.bf16.msra.mxu0 0
    %2720 = vmatprep.subr.bf16.mxu0 0
    %2721 = vmatpush1.bf16.msra.mxu0 0
    %2722 = vmatprep.subr.bf16.mxu0 0
    %2723 = vmatpush1.bf16.msra.mxu0 0
    %2724 = vmatprep.subr.bf16.mxu0 0
    %2725 = vmatpush1.bf16.msra.mxu0 0
    %2726 = vmatprep.subr.bf16.mxu0 0
    %2727 = vmatpush1.bf16.msra.mxu0 0
    %2728 = vmatprep.subr.bf16.mxu0 0
    %2729 = vmatpush1.bf16.msra.mxu0 0
    %2730 = vmatprep.subr.bf16.mxu0 0
    %2731 = vmatpush1.bf16.msra.mxu0 0
    %2732 = vmatprep.subr.bf16.mxu0 0
    %2733 = vmatpush1.bf16.msra.mxu0 0
    %2734 = vmatprep.subr.bf16.mxu0 0
    %2735 = vmatpush1.bf16.msra.mxu0 0
    %2736 = vmatprep.subr.bf16.mxu0 0
    %2737 = vmatpush1.bf16.msra.mxu0 0
    %2738 = vmatprep.mubr.bf16.mxu0 0
    %2739 = vmatmul.mubr.bf16.gmra.mrb[0].mxu0 %v2704
    %v2740 = vpop.f32.mrb[0].mxu0
    %v2741 = vadd.f32 0.0, %v2740
    %v2742 = vpop.f32.mrb[0].mxu0
    %v2743 = vadd.f32 0.0, %v2742
    %v2744 = vpop.f32.mrb[0].mxu0
    %v2745 = vpop.f32.mrb[0].mxu0
    %2746 = vdwg.mxu0
    %2747 = vmatprep.subr.bf16.mxu0 0
    %2748 = vmatpush1.bf16.msra.mxu0 %v2134
    %2749 = vmatprep.subr.bf16.mxu0 0
    %2750 = vmatpush1.bf16.msra.mxu0 %v2137
    %2751 = vmatprep.subr.bf16.mxu0 0
    %2752 = vmatpush1.bf16.msra.mxu0 0
    %2753 = vmatprep.subr.bf16.mxu0 0
    %2754 = vmatpush1.bf16.msra.mxu0 0
    %2755 = vmatprep.subr.bf16.mxu0 0
    %2756 = vmatpush1.bf16.msra.mxu0 0
    %2757 = vmatprep.subr.bf16.mxu0 0
    %2758 = vmatpush1.bf16.msra.mxu0 0
    %2759 = vmatprep.subr.bf16.mxu0 0
    %2760 = vmatpush1.bf16.msra.mxu0 0
    %2761 = vmatprep.subr.bf16.mxu0 0
    %2762 = vmatpush1.bf16.msra.mxu0 0
    %2763 = vmatprep.subr.bf16.mxu0 0
    %2764 = vmatpush1.bf16.msra.mxu0 0
    %2765 = vmatprep.subr.bf16.mxu0 0
    %2766 = vmatpush1.bf16.msra.mxu0 0
    %2767 = vmatprep.subr.bf16.mxu0 0
    %2768 = vmatpush1.bf16.msra.mxu0 0
    %2769 = vmatprep.subr.bf16.mxu0 0
    %2770 = vmatpush1.bf16.msra.mxu0 0
    %2771 = vmatprep.subr.bf16.mxu0 0
    %2772 = vmatpush1.bf16.msra.mxu0 0
    %2773 = vmatprep.subr.bf16.mxu0 0
    %2774 = vmatpush1.bf16.msra.mxu0 0
    %2775 = vmatprep.subr.bf16.mxu0 0
    %2776 = vmatpush1.bf16.msra.mxu0 0
    %2777 = vmatprep.subr.bf16.mxu0 0
    %2778 = vmatpush1.bf16.msra.mxu0 0
    %2779 = vmatprep.mubr.bf16.mxu0 0
    %2780 = vmatmul.mubr.bf16.gmra.mrb[0].mxu0 %v2704
    %v2781 = vpop.f32.mrb[0].mxu0
    %v2782 = vadd.f32 0.0, %v2781
    %v2783 = vpop.f32.mrb[0].mxu0
    %v2784 = vpop.f32.mrb[0].mxu0
    %v2785 = vpop.f32.mrb[0].mxu0
    %2786 = vdwg.mxu0
    %v2787 = vadd.f32 %v2699, %v2741
    %v2788 = vxor.u32 %v2787, 2147483648
    %v2789 = vmul.f32 %v2788, 1.442695
    %v2790 = vpow.pop %v2789
    %v2791 = vadd.f32 %v2790, 1.0
    %v2792 = vrcp.pop %v2791
    %v2793 = vmul.f32 1.0, %v2792
    %v2794 = vadd.f32 %v2700, %v2743
    %v2795 = vxor.u32 %v2794, 2147483648
    %v2796 = vmul.f32 %v2795, 1.442695
    %v2797 = vpow.pop %v2796
    %v2798 = vadd.f32 %v2797, 1.0
    %v2799 = vrcp.pop %v2798
    %v2800 = vmul.f32 1.0, %v2799
    %v2801 = vadd.f32 %v2782, %v2245
    %v2802 = vmul.f32 %v2793, %v2801
    %v2803 = vadd.f32 %v2701, %v2802
    %v2804 = vtanh.pop %v2803
    %v2805 = vsub.f32 1.0, %v2800
    %v2806 = vmul.f32 %v2805, %v2804
    %v2807 = vmul.f32 %v2800, %v2697
    %v2808 = vadd.f32 %v2806, %v2807
    %2809 = vst.msk [vmem:[#allocation4 + $0x28] sm:$0xff] %vm2144, %v2808
    %v2810 = vld [vmem:[#allocation2 + $0x90] sm:$0xff]
    %v2811 = vld [vmem:[#allocation2 + $0x98] sm:$0xff]
    %v2812 = vld [vmem:[#allocation2 + $0xa0] sm:$0xff]
    %v2813 = vpack.c.bf16 %v2808, %v2808
    %v2815 = vsel %vm2144, %v2813, 0
    %2817 = vmatprep.subr.bf16.mxu0 %v2133
    %2818 = vmatpush1.bf16.msra.mxu0 %v2132
    %2819 = vmatprep.subr.bf16.mxu0 %v2136
    %2820 = vmatpush1.bf16.msra.mxu0 %v2135
    %2821 = vmatprep.subr.bf16.mxu0 0
    %2822 = vmatpush1.bf16.msra.mxu0 0
    %2823 = vmatprep.subr.bf16.mxu0 0
    %2824 = vmatpush1.bf16.msra.mxu0 0
    %2825 = vmatprep.subr.bf16.mxu0 0
    %2826 = vmatpush1.bf16.msra.mxu0 0
    %2827 = vmatprep.subr.bf16.mxu0 0
    %2828 = vmatpush1.bf16.msra.mxu0 0
    %2829 = vmatprep.subr.bf16.mxu0 0
    %2830 = vmatpush1.bf16.msra.mxu0 0
    %2831 = vmatprep.subr.bf16.mxu0 0
    %2832 = vmatpush1.bf16.msra.mxu0 0
    %2833 = vmatprep.subr.bf16.mxu0 0
    %2834 = vmatpush1.bf16.msra.mxu0 0
    %2835 = vmatprep.subr.bf16.mxu0 0
    %2836 = vmatpush1.bf16.msra.mxu0 0
    %2837 = vmatprep.subr.bf16.mxu0 0
    %2838 = vmatpush1.bf16.msra.mxu0 0
    %2839 = vmatprep.subr.bf16.mxu0 0
    %2840 = vmatpush1.bf16.msra.mxu0 0
    %2841 = vmatprep.subr.bf16.mxu0 0
    %2842 = vmatpush1.bf16.msra.mxu0 0
    %2843 = vmatprep.subr.bf16.mxu0 0
    %2844 = vmatpush1.bf16.msra.mxu0 0
    %2845 = vmatprep.subr.bf16.mxu0 0
    %2846 = vmatpush1.bf16.msra.mxu0 0
    %2847 = vmatprep.subr.bf16.mxu0 0
    %2848 = vmatpush1.bf16.msra.mxu0 0
    %2849 = vmatprep.mubr.bf16.mxu0 0
    %2850 = vmatmul.mubr.bf16.gmra.mrb[0].mxu0 %v2815
    %v2851 = vpop.f32.mrb[0].mxu0
    %v2852 = vadd.f32 0.0, %v2851
    %v2853 = vpop.f32.mrb[0].mxu0
    %v2854 = vadd.f32 0.0, %v2853
    %v2855 = vpop.f32.mrb[0].mxu0
    %v2856 = vpop.f32.mrb[0].mxu0
    %2857 = vdwg.mxu0
    %2858 = vmatprep.subr.bf16.mxu0 0
    %2859 = vmatpush1.bf16.msra.mxu0 %v2134
    %2860 = vmatprep.subr.bf16.mxu0 0
    %2861 = vmatpush1.bf16.msra.mxu0 %v2137
    %2862 = vmatprep.subr.bf16.mxu0 0
    %2863 = vmatpush1.bf16.msra.mxu0 0
    %2864 = vmatprep.subr.bf16.mxu0 0
    %2865 = vmatpush1.bf16.msra.mxu0 0
    %2866 = vmatprep.subr.bf16.mxu0 0
    %2867 = vmatpush1.bf16.msra.mxu0 0
    %2868 = vmatprep.subr.bf16.mxu0 0
    %2869 = vmatpush1.bf16.msra.mxu0 0
    %2870 = vmatprep.subr.bf16.mxu0 0
    %2871 = vmatpush1.bf16.msra.mxu0 0
    %2872 = vmatprep.subr.bf16.mxu0 0
    %2873 = vmatpush1.bf16.msra.mxu0 0
    %2874 = vmatprep.subr.bf16.mxu0 0
    %2875 = vmatpush1.bf16.msra.mxu0 0
    %2876 = vmatprep.subr.bf16.mxu0 0
    %2877 = vmatpush1.bf16.msra.mxu0 0
    %2878 = vmatprep.subr.bf16.mxu0 0
    %2879 = vmatpush1.bf16.msra.mxu0 0
    %2880 = vmatprep.subr.bf16.mxu0 0
    %2881 = vmatpush1.bf16.msra.mxu0 0
    %2882 = vmatprep.subr.bf16.mxu0 0
    %2883 = vmatpush1.bf16.msra.mxu0 0
    %2884 = vmatprep.subr.bf16.mxu0 0
    %2885 = vmatpush1.bf16.msra.mxu0 0
    %2886 = vmatprep.subr.bf16.mxu0 0
    %2887 = vmatpush1.bf16.msra.mxu0 0
    %2888 = vmatprep.subr.bf16.mxu0 0
    %2889 = vmatpush1.bf16.msra.mxu0 0
    %2890 = vmatprep.mubr.bf16.mxu0 0
    %2891 = vmatmul.mubr.bf16.gmra.mrb[0].mxu0 %v2815
    %v2892 = vpop.f32.mrb[0].mxu0
    %v2893 = vadd.f32 0.0, %v2892
    %v2894 = vpop.f32.mrb[0].mxu0
    %v2895 = vpop.f32.mrb[0].mxu0
    %v2896 = vpop.f32.mrb[0].mxu0
    %2897 = vdwg.mxu0
    %v2898 = vadd.f32 %v2810, %v2852
    %v2899 = vxor.u32 %v2898, 2147483648
    %v2900 = vmul.f32 %v2899, 1.442695
    %v2901 = vpow.pop %v2900
    %v2902 = vadd.f32 %v2901, 1.0
    %v2903 = vrcp.pop %v2902
    %v2904 = vmul.f32 1.0, %v2903
    %v2905 = vadd.f32 %v2811, %v2854
    %v2906 = vxor.u32 %v2905, 2147483648
    %v2907 = vmul.f32 %v2906, 1.442695
    %v2908 = vpow.pop %v2907
    %v2909 = vadd.f32 %v2908, 1.0
    %v2910 = vrcp.pop %v2909
    %v2911 = vmul.f32 1.0, %v2910
    %v2912 = vadd.f32 %v2893, %v2245
    %v2913 = vmul.f32 %v2904, %v2912
    %v2914 = vadd.f32 %v2812, %v2913
    %v2915 = vtanh.pop %v2914
    %v2916 = vsub.f32 1.0, %v2911
    %v2917 = vmul.f32 %v2916, %v2915
    %v2918 = vmul.f32 %v2911, %v2808
    %v2919 = vadd.f32 %v2917, %v2918
    %2920 = vst.msk [vmem:[#allocation4 + $0x30] sm:$0xff] %vm2144, %v2919
    %v2921 = vld [vmem:[#allocation2 + $0xa8] sm:$0xff]
    %v2922 = vld [vmem:[#allocation2 + $0xb0] sm:$0xff]
    %v2923 = vld [vmem:[#allocation2 + $0xb8] sm:$0xff]
    %v2924 = vpack.c.bf16 %v2919, %v2919
    %v2926 = vsel %vm2144, %v2924, 0
    %2928 = vmatprep.subr.bf16.mxu0 %v2133
    %2929 = vmatpush1.bf16.msra.mxu0 %v2132
    %2930 = vmatprep.subr.bf16.mxu0 %v2136
    %2931 = vmatpush1.bf16.msra.mxu0 %v2135
    %2932 = vmatprep.subr.bf16.mxu0 0
    %2933 = vmatpush1.bf16.msra.mxu0 0
    %2934 = vmatprep.subr.bf16.mxu0 0
    %2935 = vmatpush1.bf16.msra.mxu0 0
    %2936 = vmatprep.subr.bf16.mxu0 0
    %2937 = vmatpush1.bf16.msra.mxu0 0
    %2938 = vmatprep.subr.bf16.mxu0 0
    %2939 = vmatpush1.bf16.msra.mxu0 0
    %2940 = vmatprep.subr.bf16.mxu0 0
    %2941 = vmatpush1.bf16.msra.mxu0 0
    %2942 = vmatprep.subr.bf16.mxu0 0
    %2943 = vmatpush1.bf16.msra.mxu0 0
    %2944 = vmatprep.subr.bf16.mxu0 0
    %2945 = vmatpush1.bf16.msra.mxu0 0
    %2946 = vmatprep.subr.bf16.mxu0 0
    %2947 = vmatpush1.bf16.msra.mxu0 0
    %2948 = vmatprep.subr.bf16.mxu0 0
    %2949 = vmatpush1.bf16.msra.mxu0 0
    %2950 = vmatprep.subr.bf16.mxu0 0
    %2951 = vmatpush1.bf16.msra.mxu0 0
    %2952 = vmatprep.subr.bf16.mxu0 0
    %2953 = vmatpush1.bf16.msra.mxu0 0
    %2954 = vmatprep.subr.bf16.mxu0 0
    %2955 = vmatpush1.bf16.msra.mxu0 0
    %2956 = vmatprep.subr.bf16.mxu0 0
    %2957 = vmatpush1.bf16.msra.mxu0 0
    %2958 = vmatprep.subr.bf16.mxu0 0
    %2959 = vmatpush1.bf16.msra.mxu0 0
    %2960 = vmatprep.mubr.bf16.mxu0 0
    %2961 = vmatmul.mubr.bf16.gmra.mrb[0].mxu0 %v2926
    %v2962 = vpop.f32.mrb[0].mxu0
    %v2963 = vadd.f32 0.0, %v2962
    %v2964 = vpop.f32.mrb[0].mxu0
    %v2965 = vadd.f32 0.0, %v2964
    %v2966 = vpop.f32.mrb[0].mxu0
    %v2967 = vpop.f32.mrb[0].mxu0
    %2968 = vdwg.mxu0
    %2969 = vmatprep.subr.bf16.mxu0 0
    %2970 = vmatpush1.bf16.msra.mxu0 %v2134
    %2971 = vmatprep.subr.bf16.mxu0 0
    %2972 = vmatpush1.bf16.msra.mxu0 %v2137
    %2973 = vmatprep.subr.bf16.mxu0 0
    %2974 = vmatpush1.bf16.msra.mxu0 0
    %2975 = vmatprep.subr.bf16.mxu0 0
    %2976 = vmatpush1.bf16.msra.mxu0 0
    %2977 = vmatprep.subr.bf16.mxu0 0
    %2978 = vmatpush1.bf16.msra.mxu0 0
    %2979 = vmatprep.subr.bf16.mxu0 0
    %2980 = vmatpush1.bf16.msra.mxu0 0
    %2981 = vmatprep.subr.bf16.mxu0 0
    %2982 = vmatpush1.bf16.msra.mxu0 0
    %2983 = vmatprep.subr.bf16.mxu0 0
    %2984 = vmatpush1.bf16.msra.mxu0 0
    %2985 = vmatprep.subr.bf16.mxu0 0
    %2986 = vmatpush1.bf16.msra.mxu0 0
    %2987 = vmatprep.subr.bf16.mxu0 0
    %2988 = vmatpush1.bf16.msra.mxu0 0
    %2989 = vmatprep.subr.bf16.mxu0 0
    %2990 = vmatpush1.bf16.msra.mxu0 0
    %2991 = vmatprep.subr.bf16.mxu0 0
    %2992 = vmatpush1.bf16.msra.mxu0 0
    %2993 = vmatprep.subr.bf16.mxu0 0
    %2994 = vmatpush1.bf16.msra.mxu0 0
    %2995 = vmatprep.subr.bf16.mxu0 0
    %2996 = vmatpush1.bf16.msra.mxu0 0
    %2997 = vmatprep.subr.bf16.mxu0 0
    %2998 = vmatpush1.bf16.msra.mxu0 0
    %2999 = vmatprep.subr.bf16.mxu0 0
    %3000 = vmatpush1.bf16.msra.mxu0 0
    %3001 = vmatprep.mubr.bf16.mxu0 0
    %3002 = vmatmul.mubr.bf16.gmra.mrb[0].mxu0 %v2926
    %v3003 = vpop.f32.mrb[0].mxu0
    %v3004 = vadd.f32 0.0, %v3003
    %v3005 = vpop.f32.mrb[0].mxu0
    %v3006 = vpop.f32.mrb[0].mxu0
    %v3007 = vpop.f32.mrb[0].mxu0
    %3008 = vdwg.mxu0
    %v3009 = vadd.f32 %v2921, %v2963
    %v3010 = vxor.u32 %v3009, 2147483648
    %v3011 = vmul.f32 %v3010, 1.442695
    %v3012 = vpow.pop %v3011
    %v3013 = vadd.f32 %v3012, 1.0
    %v3014 = vrcp.pop %v3013
    %v3015 = vmul.f32 1.0, %v3014
    %v3016 = vadd.f32 %v2922, %v2965
    %v3017 = vxor.u32 %v3016, 2147483648
    %v3018 = vmul.f32 %v3017, 1.442695
    %v3019 = vpow.pop %v3018
    %v3020 = vadd.f32 %v3019, 1.0
    %v3021 = vrcp.pop %v3020
    %v3022 = vmul.f32 1.0, %v3021
    %v3023 = vadd.f32 %v3004, %v2245
    %v3024 = vmul.f32 %v3015, %v3023
    %v3025 = vadd.f32 %v2923, %v3024
    %v3026 = vtanh.pop %v3025
    %v3027 = vsub.f32 1.0, %v3022
    %v3028 = vmul.f32 %v3027, %v3026
    %v3029 = vmul.f32 %v3022, %v2919
    %v3030 = vadd.f32 %v3028, %v3029
    %3031 = vst.msk [vmem:[#allocation4 + $0x38] sm:$0xff] %vm2144, %v3030
    %v3032 = vld [vmem:[#allocation4] sm:$0xff]
    %v3033 = vld [vmem:[#allocation4 + $0x8] sm:$0xff]
    %v3034 = vld [vmem:[#allocation4 + $0x10] sm:$0xff]
    %v3035 = vld [vmem:[#allocation4 + $0x18] sm:$0xff]
    %v3036 = vld [vmem:[#allocation4 + $0x20] sm:$0xff]
    %v3037 = vld [vmem:[#allocation4 + $0x28] sm:$0xff]
    %v3038 = vld [vmem:[#allocation4 + $0x30] sm:$0xff]
    %v3039 = vld [vmem:[#allocation4 + $0x38] sm:$0xff]
    %v3040 = vpack.c.bf16 %v3033, %v3032
    %v3041 = vpack.c.bf16 %v3035, %v3034
    %v3042 = vpack.c.bf16 %v3037, %v3036
    %v3043 = vpack.c.bf16 %v3039, %v3038
    %v3044 = vld [vmem:[#allocation21] sm:$0x3f]
    %v3045 = vld [vmem:[#allocation18] sm:$0xff]
    %v3046 = vld [vmem:[#allocation18 + $0x8] sm:$0xf]
    %v3047 = vld [vmem:[#allocation18 + $0xc] sm:$0xff]
    %v3048 = vld [vmem:[#allocation18 + $0x14] sm:$0xf]
    %v3049 = vld [vmem:[#allocation18 + $0x18] sm:$0xff]
    %v3050 = vld [vmem:[#allocation18 + $0x20] sm:$0xf]
    %v3051 = vld [vmem:[#allocation18 + $0x24] sm:$0xff]
    %v3052 = vld [vmem:[#allocation18 + $0x2c] sm:$0xf]
    %v3054 = vlaneseq
    %v3055 = vshrl.u32 %v3054, 7
    %v3056 = vsub.s32 0, %v3055
    %v3057 = vrot.slane %v3044, %v3056
    %v3058 = vlaneseq
    %v3059 = vshrl.u32 %v3058, 7
    %v3060 = vsub.s32 2, %v3059
    %v3061 = vrot.slane %v3044, %v3060
    %v3062 = vlaneseq
    %v3063 = vshrl.u32 %v3062, 7
    %v3064 = vsub.s32 4, %v3063
    %v3065 = vrot.slane %v3044, %v3064
    %v3069 = vlaneseq
    %v3070 = vshrl.u32 %v3069, 7
    %v3071 = vsub.s32 0, %v3070
    %v3072 = vrot.slane %v3057, %v3071
    %v3073 = vlaneseq
    %v3074 = vshrl.u32 %v3073, 7
    %v3075 = vsub.s32 0, %v3074
    %v3076 = vrot.slane %v3061, %v3075
    %v3077 = vlaneseq
    %v3078 = vshrl.u32 %v3077, 7
    %v3079 = vsub.s32 0, %v3078
    %v3080 = vrot.slane %v3065, %v3079
    %v3089 = vunpack.c.l.b16 %v3045
    %v3090 = vunpack.c.h.b16 %v3045
    %v3091 = vunpack.c.l.b16 %v3046
    %v3092 = vunpack.c.l.b16 %v3047
    %v3093 = vunpack.c.h.b16 %v3047
    %v3094 = vunpack.c.l.b16 %v3048
    %v3095 = vunpack.c.l.b16 %v3049
    %v3096 = vunpack.c.h.b16 %v3049
    %v3097 = vunpack.c.l.b16 %v3050
    %v3098 = vunpack.c.l.b16 %v3051
    %v3099 = vunpack.c.h.b16 %v3051
    %v3100 = vunpack.c.l.b16 %v3052
    %v3101 = vpack.c.b16 %v3092, %v3089
    %v3102 = vpack.c.b16 %v3093, %v3090
    %v3103 = vpack.c.b16 %v3094, %v3091
    %v3104 = vpack.c.b16 %v3098, %v3095
    %v3105 = vpack.c.b16 %v3099, %v3096
    %v3106 = vpack.c.b16 %v3100, %v3097
    %v3114 = vsel %vm2144, %v3040, 0
    %v3117 = vsel %vm2144, %v3041, 0
    %v3120 = vsel %vm2144, %v3042, 0
    %v3123 = vsel %vm2144, %v3043, 0
    %3125 = vmatprep.subr.bf16.mxu0 %v3102
    %3126 = vmatpush1.bf16.msra.mxu0 %v3101
    %3127 = vmatprep.subr.bf16.mxu0 %v3105
    %3128 = vmatpush1.bf16.msra.mxu0 %v3104
    %3129 = vmatprep.subr.bf16.mxu0 0
    %3130 = vmatpush1.bf16.msra.mxu0 0
    %3131 = vmatprep.subr.bf16.mxu0 0
    %3132 = vmatpush1.bf16.msra.mxu0 0
    %3133 = vmatprep.subr.bf16.mxu0 0
    %3134 = vmatpush1.bf16.msra.mxu0 0
    %3135 = vmatprep.subr.bf16.mxu0 0
    %3136 = vmatpush1.bf16.msra.mxu0 0
    %3137 = vmatprep.subr.bf16.mxu0 0
    %3138 = vmatpush1.bf16.msra.mxu0 0
    %3139 = vmatprep.subr.bf16.mxu0 0
    %3140 = vmatpush1.bf16.msra.mxu0 0
    %3141 = vmatprep.subr.bf16.mxu0 0
    %3142 = vmatpush1.bf16.msra.mxu0 0
    %3143 = vmatprep.subr.bf16.mxu0 0
    %3144 = vmatpush1.bf16.msra.mxu0 0
    %3145 = vmatprep.subr.bf16.mxu0 0
    %3146 = vmatpush1.bf16.msra.mxu0 0
    %3147 = vmatprep.subr.bf16.mxu0 0
    %3148 = vmatpush1.bf16.msra.mxu0 0
    %3149 = vmatprep.subr.bf16.mxu0 0
    %3150 = vmatpush1.bf16.msra.mxu0 0
    %3151 = vmatprep.subr.bf16.mxu0 0
    %3152 = vmatpush1.bf16.msra.mxu0 0
    %3153 = vmatprep.subr.bf16.mxu0 0
    %3154 = vmatpush1.bf16.msra.mxu0 0
    %3155 = vmatprep.subr.bf16.mxu0 0
    %3156 = vmatpush1.bf16.msra.mxu0 0
    %3157 = vmatprep.mubr.bf16.mxu0 0
    %3158 = vmatmul.mubr.bf16.gmra.mrb[0].mxu0 %v3114
    %v3159 = vpop.f32.mrb[0].mxu0
    %v3160 = vadd.f32 %v3072, %v3159
    %v3161 = vpop.f32.mrb[0].mxu0
    %v3162 = vadd.f32 %v3076, %v3161
    %v3163 = vpop.f32.mrb[0].mxu0
    %v3164 = vadd.f32 %v3072, %v3163
    %v3165 = vpop.f32.mrb[0].mxu0
    %v3166 = vadd.f32 %v3076, %v3165
    %3167 = vmatprep.mubr.bf16.mxu0 0
    %3168 = vmatmul.mubr.bf16.gmra.mrb[0].mxu0 %v3117
    %v3169 = vpop.f32.mrb[0].mxu0
    %v3170 = vadd.f32 %v3072, %v3169
    %v3171 = vpop.f32.mrb[0].mxu0
    %v3172 = vadd.f32 %v3076, %v3171
    %v3173 = vpop.f32.mrb[0].mxu0
    %v3174 = vadd.f32 %v3072, %v3173
    %v3175 = vpop.f32.mrb[0].mxu0
    %v3176 = vadd.f32 %v3076, %v3175
    %3177 = vmatprep.mubr.bf16.mxu0 0
    %3178 = vmatmul.mubr.bf16.gmra.mrb[0].mxu0 %v3120
    %v3179 = vpop.f32.mrb[0].mxu0
    %v3180 = vadd.f32 %v3072, %v3179
    %v3181 = vpop.f32.mrb[0].mxu0
    %v3182 = vadd.f32 %v3076, %v3181
    %v3183 = vpop.f32.mrb[0].mxu0
    %v3184 = vadd.f32 %v3072, %v3183
    %v3185 = vpop.f32.mrb[0].mxu0
    %v3186 = vadd.f32 %v3076, %v3185
    %3187 = vmatprep.mubr.bf16.mxu0 0
    %3188 = vmatmul.mubr.bf16.gmra.mrb[0].mxu0 %v3123
    %v3189 = vpop.f32.mrb[0].mxu0
    %v3190 = vadd.f32 %v3072, %v3189
    %v3191 = vpop.f32.mrb[0].mxu0
    %v3192 = vadd.f32 %v3076, %v3191
    %v3193 = vpop.f32.mrb[0].mxu0
    %v3194 = vadd.f32 %v3072, %v3193
    %v3195 = vpop.f32.mrb[0].mxu0
    %v3196 = vadd.f32 %v3076, %v3195
    %3197 = vdwg.mxu0
    %3198 = vmatprep.subr.bf16.mxu0 0
    %3199 = vmatpush1.bf16.msra.mxu0 %v3103
    %3200 = vmatprep.subr.bf16.mxu0 0
    %3201 = vmatpush1.bf16.msra.mxu0 %v3106
    %3202 = vmatprep.subr.bf16.mxu0 0
    %3203 = vmatpush1.bf16.msra.mxu0 0
    %3204 = vmatprep.subr.bf16.mxu0 0
    %3205 = vmatpush1.bf16.msra.mxu0 0
    %3206 = vmatprep.subr.bf16.mxu0 0
    %3207 = vmatpush1.bf16.msra.mxu0 0
    %3208 = vmatprep.subr.bf16.mxu0 0
    %3209 = vmatpush1.bf16.msra.mxu0 0
    %3210 = vmatprep.subr.bf16.mxu0 0
    %3211 = vmatpush1.bf16.msra.mxu0 0
    %3212 = vmatprep.subr.bf16.mxu0 0
    %3213 = vmatpush1.bf16.msra.mxu0 0
    %3214 = vmatprep.subr.bf16.mxu0 0
    %3215 = vmatpush1.bf16.msra.mxu0 0
    %3216 = vmatprep.subr.bf16.mxu0 0
    %3217 = vmatpush1.bf16.msra.mxu0 0
    %3218 = vmatprep.subr.bf16.mxu0 0
    %3219 = vmatpush1.bf16.msra.mxu0 0
    %3220 = vmatprep.subr.bf16.mxu0 0
    %3221 = vmatpush1.bf16.msra.mxu0 0
    %3222 = vmatprep.subr.bf16.mxu0 0
    %3223 = vmatpush1.bf16.msra.mxu0 0
    %3224 = vmatprep.subr.bf16.mxu0 0
    %3225 = vmatpush1.bf16.msra.mxu0 0
    %3226 = vmatprep.subr.bf16.mxu0 0
    %3227 = vmatpush1.bf16.msra.mxu0 0
    %3228 = vmatprep.subr.bf16.mxu0 0
    %3229 = vmatpush1.bf16.msra.mxu0 0
    %3230 = vmatprep.mubr.bf16.mxu0 0
    %3231 = vmatmul.mubr.bf16.gmra.mrb[0].mxu0 %v3114
    %v3232 = vpop.f32.mrb[0].mxu0
    %v3233 = vadd.f32 %v3080, %v3232
    %v3234 = vpop.f32.mrb[0].mxu0
    %v3235 = vpop.f32.mrb[0].mxu0
    %v3236 = vadd.f32 %v3080, %v3235
    %v3237 = vpop.f32.mrb[0].mxu0
    %3238 = vmatprep.mubr.bf16.mxu0 0
    %3239 = vmatmul.mubr.bf16.gmra.mrb[0].mxu0 %v3117
    %v3240 = vpop.f32.mrb[0].mxu0
    %v3241 = vadd.f32 %v3080, %v3240
    %v3242 = vpop.f32.mrb[0].mxu0
    %v3243 = vpop.f32.mrb[0].mxu0
    %v3244 = vadd.f32 %v3080, %v3243
    %v3245 = vpop.f32.mrb[0].mxu0
    %3246 = vmatprep.mubr.bf16.mxu0 0
    %3247 = vmatmul.mubr.bf16.gmra.mrb[0].mxu0 %v3120
    %v3248 = vpop.f32.mrb[0].mxu0
    %v3249 = vadd.f32 %v3080, %v3248
    %v3250 = vpop.f32.mrb[0].mxu0
    %v3251 = vpop.f32.mrb[0].mxu0
    %v3252 = vadd.f32 %v3080, %v3251
    %v3253 = vpop.f32.mrb[0].mxu0
    %3254 = vmatprep.mubr.bf16.mxu0 0
    %3255 = vmatmul.mubr.bf16.gmra.mrb[0].mxu0 %v3123
    %v3256 = vpop.f32.mrb[0].mxu0
    %v3257 = vadd.f32 %v3080, %v3256
    %v3258 = vpop.f32.mrb[0].mxu0
    %v3259 = vpop.f32.mrb[0].mxu0
    %v3260 = vadd.f32 %v3080, %v3259
    %v3261 = vpop.f32.mrb[0].mxu0
    %3262 = vdwg.mxu0
    %3263 = vst [vmem:[#allocation2] sm:$0xff] %v3160
    %3264 = vst [vmem:[#allocation2 + $0x8] sm:$0xff] %v3162
    %3265 = vst [vmem:[#allocation2 + $0x10] sm:$0xff] %v3233
    %3266 = vst [vmem:[#allocation2 + $0x18] sm:$0xff] %v3164
    %3267 = vst [vmem:[#allocation2 + $0x20] sm:$0xff] %v3166
    %3268 = vst [vmem:[#allocation2 + $0x28] sm:$0xff] %v3236
    %3269 = vst [vmem:[#allocation2 + $0x30] sm:$0xff] %v3170
    %3270 = vst [vmem:[#allocation2 + $0x38] sm:$0xff] %v3172
    %3271 = vst [vmem:[#allocation2 + $0x40] sm:$0xff] %v3241
    %3272 = vst [vmem:[#allocation2 + $0x48] sm:$0xff] %v3174
    %3273 = vst [vmem:[#allocation2 + $0x50] sm:$0xff] %v3176
    %3274 = vst [vmem:[#allocation2 + $0x58] sm:$0xff] %v3244
    %3275 = vst [vmem:[#allocation2 + $0x60] sm:$0xff] %v3180
    %3276 = vst [vmem:[#allocation2 + $0x68] sm:$0xff] %v3182
    %3277 = vst [vmem:[#allocation2 + $0x70] sm:$0xff] %v3249
    %3278 = vst [vmem:[#allocation2 + $0x78] sm:$0xff] %v3184
    %3279 = vst [vmem:[#allocation2 + $0x80] sm:$0xff] %v3186
    %3280 = vst [vmem:[#allocation2 + $0x88] sm:$0xff] %v3252
    %3281 = vst [vmem:[#allocation2 + $0x90] sm:$0xff] %v3190
    %3282 = vst [vmem:[#allocation2 + $0x98] sm:$0xff] %v3192
    %3283 = vst [vmem:[#allocation2 + $0xa0] sm:$0xff] %v3257
    %3284 = vst [vmem:[#allocation2 + $0xa8] sm:$0xff] %v3194
    %3285 = vst [vmem:[#allocation2 + $0xb0] sm:$0xff] %v3196
    %3286 = vst [vmem:[#allocation2 + $0xb8] sm:$0xff] %v3260
    %v3287 = vld [vmem:[#allocation19] sm:$0xff]
    %v3288 = vld [vmem:[#allocation19 + $0x8] sm:$0xf]
    %v3289 = vld [vmem:[#allocation19 + $0xc] sm:$0xff]
    %v3290 = vld [vmem:[#allocation19 + $0x14] sm:$0xf]
    %v3291 = vld [vmem:[#allocation19 + $0x18] sm:$0xff]
    %v3292 = vld [vmem:[#allocation19 + $0x20] sm:$0xf]
    %v3293 = vld [vmem:[#allocation19 + $0x24] sm:$0xff]
    %v3294 = vld [vmem:[#allocation19 + $0x2c] sm:$0xf]
    %v3295 = vld [vmem:[#allocation2] sm:$0xff]
    %v3296 = vld [vmem:[#allocation2 + $0x8] sm:$0xff]
    %v3297 = vld [vmem:[#allocation2 + $0x10] sm:$0xff]
    %v3306 = vunpack.c.l.b16 %v3287
    %v3307 = vunpack.c.h.b16 %v3287
    %v3308 = vunpack.c.l.b16 %v3288
    %v3309 = vunpack.c.l.b16 %v3289
    %v3310 = vunpack.c.h.b16 %v3289
    %v3311 = vunpack.c.l.b16 %v3290
    %v3312 = vunpack.c.l.b16 %v3291
    %v3313 = vunpack.c.h.b16 %v3291
    %v3314 = vunpack.c.l.b16 %v3292
    %v3315 = vunpack.c.l.b16 %v3293
    %v3316 = vunpack.c.h.b16 %v3293
    %v3317 = vunpack.c.l.b16 %v3294
    %v3318 = vpack.c.b16 %v3309, %v3306
    %v3319 = vpack.c.b16 %v3310, %v3307
    %v3320 = vpack.c.b16 %v3311, %v3308
    %v3321 = vpack.c.b16 %v3315, %v3312
    %v3322 = vpack.c.b16 %v3316, %v3313
    %v3323 = vpack.c.b16 %v3317, %v3314
    %3330 = vmatprep.subr.bf16.mxu0 %v3319
    %3331 = vmatpush1.bf16.msra.mxu0 %v3318
    %3332 = vmatprep.subr.bf16.mxu0 %v3322
    %3333 = vmatpush1.bf16.msra.mxu0 %v3321
    %3334 = vmatprep.subr.bf16.mxu0 0
    %3335 = vmatpush1.bf16.msra.mxu0 0
    %3336 = vmatprep.subr.bf16.mxu0 0
    %3337 = vmatpush1.bf16.msra.mxu0 0
    %3338 = vmatprep.subr.bf16.mxu0 0
    %3339 = vmatpush1.bf16.msra.mxu0 0
    %3340 = vmatprep.subr.bf16.mxu0 0
    %3341 = vmatpush1.bf16.msra.mxu0 0
    %3342 = vmatprep.subr.bf16.mxu0 0
    %3343 = vmatpush1.bf16.msra.mxu0 0
    %3344 = vmatprep.subr.bf16.mxu0 0
    %3345 = vmatpush1.bf16.msra.mxu0 0
    %3346 = vmatprep.subr.bf16.mxu0 0
    %3347 = vmatpush1.bf16.msra.mxu0 0
    %3348 = vmatprep.subr.bf16.mxu0 0
    %3349 = vmatpush1.bf16.msra.mxu0 0
    %3350 = vmatprep.subr.bf16.mxu0 0
    %3351 = vmatpush1.bf16.msra.mxu0 0
    %3352 = vmatprep.subr.bf16.mxu0 0
    %3353 = vmatpush1.bf16.msra.mxu0 0
    %3354 = vmatprep.subr.bf16.mxu0 0
    %3355 = vmatpush1.bf16.msra.mxu0 0
    %3356 = vmatprep.subr.bf16.mxu0 0
    %3357 = vmatpush1.bf16.msra.mxu0 0
    %3358 = vmatprep.subr.bf16.mxu0 0
    %3359 = vmatpush1.bf16.msra.mxu0 0
    %3360 = vmatprep.subr.bf16.mxu0 0
    %3361 = vmatpush1.bf16.msra.mxu0 0
    %3362 = vmatprep.mubr.bf16.mxu0 0
    %3363 = vmatmul.mubr.bf16.gmra.mrb[0].mxu0 %v2145
    %v3364 = vpop.f32.mrb[0].mxu0
    %v3365 = vadd.f32 0.0, %v3364
    %v3366 = vpop.f32.mrb[0].mxu0
    %v3367 = vadd.f32 0.0, %v3366
    %v3368 = vpop.f32.mrb[0].mxu0
    %v3369 = vpop.f32.mrb[0].mxu0
    %3370 = vdwg.mxu0
    %3371 = vmatprep.subr.bf16.mxu0 0
    %3372 = vmatpush1.bf16.msra.mxu0 %v3320
    %3373 = vmatprep.subr.bf16.mxu0 0
    %3374 = vmatpush1.bf16.msra.mxu0 %v3323
    %3375 = vmatprep.subr.bf16.mxu0 0
    %3376 = vmatpush1.bf16.msra.mxu0 0
    %3377 = vmatprep.subr.bf16.mxu0 0
    %3378 = vmatpush1.bf16.msra.mxu0 0
    %3379 = vmatprep.subr.bf16.mxu0 0
    %3380 = vmatpush1.bf16.msra.mxu0 0
    %3381 = vmatprep.subr.bf16.mxu0 0
    %3382 = vmatpush1.bf16.msra.mxu0 0
    %3383 = vmatprep.subr.bf16.mxu0 0
    %3384 = vmatpush1.bf16.msra.mxu0 0
    %3385 = vmatprep.subr.bf16.mxu0 0
    %3386 = vmatpush1.bf16.msra.mxu0 0
    %3387 = vmatprep.subr.bf16.mxu0 0
    %3388 = vmatpush1.bf16.msra.mxu0 0
    %3389 = vmatprep.subr.bf16.mxu0 0
    %3390 = vmatpush1.bf16.msra.mxu0 0
    %3391 = vmatprep.subr.bf16.mxu0 0
    %3392 = vmatpush1.bf16.msra.mxu0 0
    %3393 = vmatprep.subr.bf16.mxu0 0
    %3394 = vmatpush1.bf16.msra.mxu0 0
    %3395 = vmatprep.subr.bf16.mxu0 0
    %3396 = vmatpush1.bf16.msra.mxu0 0
    %3397 = vmatprep.subr.bf16.mxu0 0
    %3398 = vmatpush1.bf16.msra.mxu0 0
    %3399 = vmatprep.subr.bf16.mxu0 0
    %3400 = vmatpush1.bf16.msra.mxu0 0
    %3401 = vmatprep.subr.bf16.mxu0 0
    %3402 = vmatpush1.bf16.msra.mxu0 0
    %3403 = vmatprep.mubr.bf16.mxu0 0
    %3404 = vmatmul.mubr.bf16.gmra.mrb[0].mxu0 %v2145
    %v3405 = vpop.f32.mrb[0].mxu0
    %v3406 = vadd.f32 0.0, %v3405
    %v3407 = vpop.f32.mrb[0].mxu0
    %v3408 = vpop.f32.mrb[0].mxu0
    %v3409 = vpop.f32.mrb[0].mxu0
    %3410 = vdwg.mxu0
    %v3411 = vadd.f32 %v3295, %v3365
    %v3412 = vxor.u32 %v3411, 2147483648
    %v3413 = vmul.f32 %v3412, 1.442695
    %v3414 = vpow.pop %v3413
    %v3415 = vadd.f32 %v3414, 1.0
    %v3416 = vrcp.pop %v3415
    %v3417 = vmul.f32 1.0, %v3416
    %v3418 = vadd.f32 %v3296, %v3367
    %v3419 = vxor.u32 %v3418, 2147483648
    %v3420 = vmul.f32 %v3419, 1.442695
    %v3421 = vpow.pop %v3420
    %v3422 = vadd.f32 %v3421, 1.0
    %v3423 = vrcp.pop %v3422
    %v3424 = vmul.f32 1.0, %v3423
    %v3425 = vlaneseq
    %v3426 = vshrl.u32 %v3425, 7
    %v3427 = vsub.s32 1, %v3426
    %v3428 = vrot.slane %v3044, %v3427
    %v3429 = vadd.f32 %v3406, %v3428
    %v3430 = vmul.f32 %v3417, %v3429
    %v3431 = vadd.f32 %v3297, %v3430
    %v3432 = vtanh.pop %v3431
    %v3433 = vsub.f32 1.0, %v3424
    %v3434 = vmul.f32 %v3433, %v3432
    %v3435 = vmul.f32 %v3424, 0.0
    %v3436 = vadd.f32 %v3434, %v3435
    %v3437 = vxor.u32 %v3436, 2147483648
    %v3438 = vmul.f32 %v3437, 1.442695
    %v3439 = vpow.pop %v3438
    %v3440 = vadd.f32 %v3439, 1.0
    %v3441 = vrcp.pop %v3440
    %v3442 = vmul.f32 1.0, %v3441
    %3443 = vst.msk [vmem:[#allocation5] sm:$0xff] %vm2144, %v3442
    %v3444 = vld [vmem:[#allocation2 + $0x18] sm:$0xff]
    %v3445 = vld [vmem:[#allocation2 + $0x20] sm:$0xff]
    %v3446 = vld [vmem:[#allocation2 + $0x28] sm:$0xff]
    %v3447 = vpack.c.bf16 %v3436, %v3436
    %v3449 = vsel %vm2144, %v3447, 0
    %3451 = vmatprep.subr.bf16.mxu0 %v3319
    %3452 = vmatpush1.bf16.msra.mxu0 %v3318
    %3453 = vmatprep.subr.bf16.mxu0 %v3322
    %3454 = vmatpush1.bf16.msra.mxu0 %v3321
    %3455 = vmatprep.subr.bf16.mxu0 0
    %3456 = vmatpush1.bf16.msra.mxu0 0
    %3457 = vmatprep.subr.bf16.mxu0 0
    %3458 = vmatpush1.bf16.msra.mxu0 0
    %3459 = vmatprep.subr.bf16.mxu0 0
    %3460 = vmatpush1.bf16.msra.mxu0 0
    %3461 = vmatprep.subr.bf16.mxu0 0
    %3462 = vmatpush1.bf16.msra.mxu0 0
    %3463 = vmatprep.subr.bf16.mxu0 0
    %3464 = vmatpush1.bf16.msra.mxu0 0
    %3465 = vmatprep.subr.bf16.mxu0 0
    %3466 = vmatpush1.bf16.msra.mxu0 0
    %3467 = vmatprep.subr.bf16.mxu0 0
    %3468 = vmatpush1.bf16.msra.mxu0 0
    %3469 = vmatprep.subr.bf16.mxu0 0
    %3470 = vmatpush1.bf16.msra.mxu0 0
    %3471 = vmatprep.subr.bf16.mxu0 0
    %3472 = vmatpush1.bf16.msra.mxu0 0
    %3473 = vmatprep.subr.bf16.mxu0 0
    %3474 = vmatpush1.bf16.msra.mxu0 0
    %3475 = vmatprep.subr.bf16.mxu0 0
    %3476 = vmatpush1.bf16.msra.mxu0 0
    %3477 = vmatprep.subr.bf16.mxu0 0
    %3478 = vmatpush1.bf16.msra.mxu0 0
    %3479 = vmatprep.subr.bf16.mxu0 0
    %3480 = vmatpush1.bf16.msra.mxu0 0
    %3481 = vmatprep.subr.bf16.mxu0 0
    %3482 = vmatpush1.bf16.msra.mxu0 0
    %3483 = vmatprep.mubr.bf16.mxu0 0
    %3484 = vmatmul.mubr.bf16.gmra.mrb[0].mxu0 %v3449
    %v3485 = vpop.f32.mrb[0].mxu0
    %v3486 = vadd.f32 0.0, %v3485
    %v3487 = vpop.f32.mrb[0].mxu0
    %v3488 = vadd.f32 0.0, %v3487
    %v3489 = vpop.f32.mrb[0].mxu0
    %v3490 = vpop.f32.mrb[0].mxu0
    %3491 = vdwg.mxu0
    %3492 = vmatprep.subr.bf16.mxu0 0
    %3493 = vmatpush1.bf16.msra.mxu0 %v3320
    %3494 = vmatprep.subr.bf16.mxu0 0
    %3495 = vmatpush1.bf16.msra.mxu0 %v3323
    %3496 = vmatprep.subr.bf16.mxu0 0
    %3497 = vmatpush1.bf16.msra.mxu0 0
    %3498 = vmatprep.subr.bf16.mxu0 0
    %3499 = vmatpush1.bf16.msra.mxu0 0
    %3500 = vmatprep.subr.bf16.mxu0 0
    %3501 = vmatpush1.bf16.msra.mxu0 0
    %3502 = vmatprep.subr.bf16.mxu0 0
    %3503 = vmatpush1.bf16.msra.mxu0 0
    %3504 = vmatprep.subr.bf16.mxu0 0
    %3505 = vmatpush1.bf16.msra.mxu0 0
    %3506 = vmatprep.subr.bf16.mxu0 0
    %3507 = vmatpush1.bf16.msra.mxu0 0
    %3508 = vmatprep.subr.bf16.mxu0 0
    %3509 = vmatpush1.bf16.msra.mxu0 0
    %3510 = vmatprep.subr.bf16.mxu0 0
    %3511 = vmatpush1.bf16.msra.mxu0 0
    %3512 = vmatprep.subr.bf16.mxu0 0
    %3513 = vmatpush1.bf16.msra.mxu0 0
    %3514 = vmatprep.subr.bf16.mxu0 0
    %3515 = vmatpush1.bf16.msra.mxu0 0
    %3516 = vmatprep.subr.bf16.mxu0 0
    %3517 = vmatpush1.bf16.msra.mxu0 0
    %3518 = vmatprep.subr.bf16.mxu0 0
    %3519 = vmatpush1.bf16.msra.mxu0 0
    %3520 = vmatprep.subr.bf16.mxu0 0
    %3521 = vmatpush1.bf16.msra.mxu0 0
    %3522 = vmatprep.subr.bf16.mxu0 0
    %3523 = vmatpush1.bf16.msra.mxu0 0
    %3524 = vmatprep.mubr.bf16.mxu0 0
    %3525 = vmatmul.mubr.bf16.gmra.mrb[0].mxu0 %v3449
    %v3526 = vpop.f32.mrb[0].mxu0
    %v3527 = vadd.f32 0.0, %v3526
    %v3528 = vpop.f32.mrb[0].mxu0
    %v3529 = vpop.f32.mrb[0].mxu0
    %v3530 = vpop.f32.mrb[0].mxu0
    %3531 = vdwg.mxu0
    %v3532 = vadd.f32 %v3444, %v3486
    %v3533 = vxor.u32 %v3532, 2147483648
    %v3534 = vmul.f32 %v3533, 1.442695
    %v3535 = vpow.pop %v3534
    %v3536 = vadd.f32 %v3535, 1.0
    %v3537 = vrcp.pop %v3536
    %v3538 = vmul.f32 1.0, %v3537
    %v3539 = vadd.f32 %v3445, %v3488
    %v3540 = vxor.u32 %v3539, 2147483648
    %v3541 = vmul.f32 %v3540, 1.442695
    %v3542 = vpow.pop %v3541
    %v3543 = vadd.f32 %v3542, 1.0
    %v3544 = vrcp.pop %v3543
    %v3545 = vmul.f32 1.0, %v3544
    %v3546 = vadd.f32 %v3527, %v3428
    %v3547 = vmul.f32 %v3538, %v3546
    %v3548 = vadd.f32 %v3446, %v3547
    %v3549 = vtanh.pop %v3548
    %v3550 = vsub.f32 1.0, %v3545
    %v3551 = vmul.f32 %v3550, %v3549
    %v3552 = vmul.f32 %v3545, %v3436
    %v3553 = vadd.f32 %v3551, %v3552
    %v3554 = vxor.u32 %v3553, 2147483648
    %v3555 = vmul.f32 %v3554, 1.442695
    %v3556 = vpow.pop %v3555
    %v3557 = vadd.f32 %v3556, 1.0
    %v3558 = vrcp.pop %v3557
    %v3559 = vmul.f32 1.0, %v3558
    %3560 = vst.msk [vmem:[#allocation5 + $0x8] sm:$0xff] %vm2144, %v3559
    %v3561 = vld [vmem:[#allocation2 + $0x30] sm:$0xff]
    %v3562 = vld [vmem:[#allocation2 + $0x38] sm:$0xff]
    %v3563 = vld [vmem:[#allocation2 + $0x40] sm:$0xff]
    %v3564 = vpack.c.bf16 %v3553, %v3553
    %v3566 = vsel %vm2144, %v3564, 0
    %3568 = vmatprep.subr.bf16.mxu0 %v3319
    %3569 = vmatpush1.bf16.msra.mxu0 %v3318
    %3570 = vmatprep.subr.bf16.mxu0 %v3322
    %3571 = vmatpush1.bf16.msra.mxu0 %v3321
    %3572 = vmatprep.subr.bf16.mxu0 0
    %3573 = vmatpush1.bf16.msra.mxu0 0
    %3574 = vmatprep.subr.bf16.mxu0 0
    %3575 = vmatpush1.bf16.msra.mxu0 0
    %3576 = vmatprep.subr.bf16.mxu0 0
    %3577 = vmatpush1.bf16.msra.mxu0 0
    %3578 = vmatprep.subr.bf16.mxu0 0
    %3579 = vmatpush1.bf16.msra.mxu0 0
    %3580 = vmatprep.subr.bf16.mxu0 0
    %3581 = vmatpush1.bf16.msra.mxu0 0
    %3582 = vmatprep.subr.bf16.mxu0 0
    %3583 = vmatpush1.bf16.msra.mxu0 0
    %3584 = vmatprep.subr.bf16.mxu0 0
    %3585 = vmatpush1.bf16.msra.mxu0 0
    %3586 = vmatprep.subr.bf16.mxu0 0
    %3587 = vmatpush1.bf16.msra.mxu0 0
    %3588 = vmatprep.subr.bf16.mxu0 0
    %3589 = vmatpush1.bf16.msra.mxu0 0
    %3590 = vmatprep.subr.bf16.mxu0 0
    %3591 = vmatpush1.bf16.msra.mxu0 0
    %3592 = vmatprep.subr.bf16.mxu0 0
    %3593 = vmatpush1.bf16.msra.mxu0 0
    %3594 = vmatprep.subr.bf16.mxu0 0
    %3595 = vmatpush1.bf16.msra.mxu0 0
    %3596 = vmatprep.subr.bf16.mxu0 0
    %3597 = vmatpush1.bf16.msra.mxu0 0
    %3598 = vmatprep.subr.bf16.mxu0 0
    %3599 = vmatpush1.bf16.msra.mxu0 0
    %3600 = vmatprep.mubr.bf16.mxu0 0
    %3601 = vmatmul.mubr.bf16.gmra.mrb[0].mxu0 %v3566
    %v3602 = vpop.f32.mrb[0].mxu0
    %v3603 = vadd.f32 0.0, %v3602
    %v3604 = vpop.f32.mrb[0].mxu0
    %v3605 = vadd.f32 0.0, %v3604
    %v3606 = vpop.f32.mrb[0].mxu0
    %v3607 = vpop.f32.mrb[0].mxu0
    %3608 = vdwg.mxu0
    %3609 = vmatprep.subr.bf16.mxu0 0
    %3610 = vmatpush1.bf16.msra.mxu0 %v3320
    %3611 = vmatprep.subr.bf16.mxu0 0
    %3612 = vmatpush1.bf16.msra.mxu0 %v3323
    %3613 = vmatprep.subr.bf16.mxu0 0
    %3614 = vmatpush1.bf16.msra.mxu0 0
    %3615 = vmatprep.subr.bf16.mxu0 0
    %3616 = vmatpush1.bf16.msra.mxu0 0
    %3617 = vmatprep.subr.bf16.mxu0 0
    %3618 = vmatpush1.bf16.msra.mxu0 0
    %3619 = vmatprep.subr.bf16.mxu0 0
    %3620 = vmatpush1.bf16.msra.mxu0 0
    %3621 = vmatprep.subr.bf16.mxu0 0
    %3622 = vmatpush1.bf16.msra.mxu0 0
    %3623 = vmatprep.subr.bf16.mxu0 0
    %3624 = vmatpush1.bf16.msra.mxu0 0
    %3625 = vmatprep.subr.bf16.mxu0 0
    %3626 = vmatpush1.bf16.msra.mxu0 0
    %3627 = vmatprep.subr.bf16.mxu0 0
    %3628 = vmatpush1.bf16.msra.mxu0 0
    %3629 = vmatprep.subr.bf16.mxu0 0
    %3630 = vmatpush1.bf16.msra.mxu0 0
    %3631 = vmatprep.subr.bf16.mxu0 0
    %3632 = vmatpush1.bf16.msra.mxu0 0
    %3633 = vmatprep.subr.bf16.mxu0 0
    %3634 = vmatpush1.bf16.msra.mxu0 0
    %3635 = vmatprep.subr.bf16.mxu0 0
    %3636 = vmatpush1.bf16.msra.mxu0 0
    %3637 = vmatprep.subr.bf16.mxu0 0
    %3638 = vmatpush1.bf16.msra.mxu0 0
    %3639 = vmatprep.subr.bf16.mxu0 0
    %3640 = vmatpush1.bf16.msra.mxu0 0
    %3641 = vmatprep.mubr.bf16.mxu0 0
    %3642 = vmatmul.mubr.bf16.gmra.mrb[0].mxu0 %v3566
    %v3643 = vpop.f32.mrb[0].mxu0
    %v3644 = vadd.f32 0.0, %v3643
    %v3645 = vpop.f32.mrb[0].mxu0
    %v3646 = vpop.f32.mrb[0].mxu0
    %v3647 = vpop.f32.mrb[0].mxu0
    %3648 = vdwg.mxu0
    %v3649 = vadd.f32 %v3561, %v3603
    %v3650 = vxor.u32 %v3649, 2147483648
    %v3651 = vmul.f32 %v3650, 1.442695
    %v3652 = vpow.pop %v3651
    %v3653 = vadd.f32 %v3652, 1.0
    %v3654 = vrcp.pop %v3653
    %v3655 = vmul.f32 1.0, %v3654
    %v3656 = vadd.f32 %v3562, %v3605
    %v3657 = vxor.u32 %v3656, 2147483648
    %v3658 = vmul.f32 %v3657, 1.442695
    %v3659 = vpow.pop %v3658
    %v3660 = vadd.f32 %v3659, 1.0
    %v3661 = vrcp.pop %v3660
    %v3662 = vmul.f32 1.0, %v3661
    %v3663 = vadd.f32 %v3644, %v3428
    %v3664 = vmul.f32 %v3655, %v3663
    %v3665 = vadd.f32 %v3563, %v3664
    %v3666 = vtanh.pop %v3665
    %v3667 = vsub.f32 1.0, %v3662
    %v3668 = vmul.f32 %v3667, %v3666
    %v3669 = vmul.f32 %v3662, %v3553
    %v3670 = vadd.f32 %v3668, %v3669
    %v3671 = vxor.u32 %v3670, 2147483648
    %v3672 = vmul.f32 %v3671, 1.442695
    %v3673 = vpow.pop %v3672
    %v3674 = vadd.f32 %v3673, 1.0
    %v3675 = vrcp.pop %v3674
    %v3676 = vmul.f32 1.0, %v3675
    %3677 = vst.msk [vmem:[#allocation5 + $0x10] sm:$0xff] %vm2144, %v3676
    %v3678 = vld [vmem:[#allocation2 + $0x48] sm:$0xff]
    %v3679 = vld [vmem:[#allocation2 + $0x50] sm:$0xff]
    %v3680 = vld [vmem:[#allocation2 + $0x58] sm:$0xff]
    %v3681 = vpack.c.bf16 %v3670, %v3670
    %v3683 = vsel %vm2144, %v3681, 0
    %3685 = vmatprep.subr.bf16.mxu0 %v3319
    %3686 = vmatpush1.bf16.msra.mxu0 %v3318
    %3687 = vmatprep.subr.bf16.mxu0 %v3322
    %3688 = vmatpush1.bf16.msra.mxu0 %v3321
    %3689 = vmatprep.subr.bf16.mxu0 0
    %3690 = vmatpush1.bf16.msra.mxu0 0
    %3691 = vmatprep.subr.bf16.mxu0 0
    %3692 = vmatpush1.bf16.msra.mxu0 0
    %3693 = vmatprep.subr.bf16.mxu0 0
    %3694 = vmatpush1.bf16.msra.mxu0 0
    %3695 = vmatprep.subr.bf16.mxu0 0
    %3696 = vmatpush1.bf16.msra.mxu0 0
    %3697 = vmatprep.subr.bf16.mxu0 0
    %3698 = vmatpush1.bf16.msra.mxu0 0
    %3699 = vmatprep.subr.bf16.mxu0 0
    %3700 = vmatpush1.bf16.msra.mxu0 0
    %3701 = vmatprep.subr.bf16.mxu0 0
    %3702 = vmatpush1.bf16.msra.mxu0 0
    %3703 = vmatprep.subr.bf16.mxu0 0
    %3704 = vmatpush1.bf16.msra.mxu0 0
    %3705 = vmatprep.subr.bf16.mxu0 0
    %3706 = vmatpush1.bf16.msra.mxu0 0
    %3707 = vmatprep.subr.bf16.mxu0 0
    %3708 = vmatpush1.bf16.msra.mxu0 0
    %3709 = vmatprep.subr.bf16.mxu0 0
    %3710 = vmatpush1.bf16.msra.mxu0 0
    %3711 = vmatprep.subr.bf16.mxu0 0
    %3712 = vmatpush1.bf16.msra.mxu0 0
    %3713 = vmatprep.subr.bf16.mxu0 0
    %3714 = vmatpush1.bf16.msra.mxu0 0
    %3715 = vmatprep.subr.bf16.mxu0 0
    %3716 = vmatpush1.bf16.msra.mxu0 0
    %3717 = vmatprep.mubr.bf16.mxu0 0
    %3718 = vmatmul.mubr.bf16.gmra.mrb[0].mxu0 %v3683
    %v3719 = vpop.f32.mrb[0].mxu0
    %v3720 = vadd.f32 0.0, %v3719
    %v3721 = vpop.f32.mrb[0].mxu0
    %v3722 = vadd.f32 0.0, %v3721
    %v3723 = vpop.f32.mrb[0].mxu0
    %v3724 = vpop.f32.mrb[0].mxu0
    %3725 = vdwg.mxu0
    %3726 = vmatprep.subr.bf16.mxu0 0
    %3727 = vmatpush1.bf16.msra.mxu0 %v3320
    %3728 = vmatprep.subr.bf16.mxu0 0
    %3729 = vmatpush1.bf16.msra.mxu0 %v3323
    %3730 = vmatprep.subr.bf16.mxu0 0
    %3731 = vmatpush1.bf16.msra.mxu0 0
    %3732 = vmatprep.subr.bf16.mxu0 0
    %3733 = vmatpush1.bf16.msra.mxu0 0
    %3734 = vmatprep.subr.bf16.mxu0 0
    %3735 = vmatpush1.bf16.msra.mxu0 0
    %3736 = vmatprep.subr.bf16.mxu0 0
    %3737 = vmatpush1.bf16.msra.mxu0 0
    %3738 = vmatprep.subr.bf16.mxu0 0
    %3739 = vmatpush1.bf16.msra.mxu0 0
    %3740 = vmatprep.subr.bf16.mxu0 0
    %3741 = vmatpush1.bf16.msra.mxu0 0
    %3742 = vmatprep.subr.bf16.mxu0 0
    %3743 = vmatpush1.bf16.msra.mxu0 0
    %3744 = vmatprep.subr.bf16.mxu0 0
    %3745 = vmatpush1.bf16.msra.mxu0 0
    %3746 = vmatprep.subr.bf16.mxu0 0
    %3747 = vmatpush1.bf16.msra.mxu0 0
    %3748 = vmatprep.subr.bf16.mxu0 0
    %3749 = vmatpush1.bf16.msra.mxu0 0
    %3750 = vmatprep.subr.bf16.mxu0 0
    %3751 = vmatpush1.bf16.msra.mxu0 0
    %3752 = vmatprep.subr.bf16.mxu0 0
    %3753 = vmatpush1.bf16.msra.mxu0 0
    %3754 = vmatprep.subr.bf16.mxu0 0
    %3755 = vmatpush1.bf16.msra.mxu0 0
    %3756 = vmatprep.subr.bf16.mxu0 0
    %3757 = vmatpush1.bf16.msra.mxu0 0
    %3758 = vmatprep.mubr.bf16.mxu0 0
    %3759 = vmatmul.mubr.bf16.gmra.mrb[0].mxu0 %v3683
    %v3760 = vpop.f32.mrb[0].mxu0
    %v3761 = vadd.f32 0.0, %v3760
    %v3762 = vpop.f32.mrb[0].mxu0
    %v3763 = vpop.f32.mrb[0].mxu0
    %v3764 = vpop.f32.mrb[0].mxu0
    %3765 = vdwg.mxu0
    %v3766 = vadd.f32 %v3678, %v3720
    %v3767 = vxor.u32 %v3766, 2147483648
    %v3768 = vmul.f32 %v3767, 1.442695
    %v3769 = vpow.pop %v3768
    %v3770 = vadd.f32 %v3769, 1.0
    %v3771 = vrcp.pop %v3770
    %v3772 = vmul.f32 1.0, %v3771
    %v3773 = vadd.f32 %v3679, %v3722
    %v3774 = vxor.u32 %v3773, 2147483648
    %v3775 = vmul.f32 %v3774, 1.442695
    %v3776 = vpow.pop %v3775
    %v3777 = vadd.f32 %v3776, 1.0
    %v3778 = vrcp.pop %v3777
    %v3779 = vmul.f32 1.0, %v3778
    %v3780 = vadd.f32 %v3761, %v3428
    %v3781 = vmul.f32 %v3772, %v3780
    %v3782 = vadd.f32 %v3680, %v3781
    %v3783 = vtanh.pop %v3782
    %v3784 = vsub.f32 1.0, %v3779
    %v3785 = vmul.f32 %v3784, %v3783
    %v3786 = vmul.f32 %v3779, %v3670
    %v3787 = vadd.f32 %v3785, %v3786
    %v3788 = vxor.u32 %v3787, 2147483648
    %v3789 = vmul.f32 %v3788, 1.442695
    %v3790 = vpow.pop %v3789
    %v3791 = vadd.f32 %v3790, 1.0
    %v3792 = vrcp.pop %v3791
    %v3793 = vmul.f32 1.0, %v3792
    %3794 = vst.msk [vmem:[#allocation5 + $0x18] sm:$0xff] %vm2144, %v3793
    %v3795 = vld [vmem:[#allocation2 + $0x60] sm:$0xff]
    %v3796 = vld [vmem:[#allocation2 + $0x68] sm:$0xff]
    %v3797 = vld [vmem:[#allocation2 + $0x70] sm:$0xff]
    %v3798 = vpack.c.bf16 %v3787, %v3787
    %v3800 = vsel %vm2144, %v3798, 0
    %3802 = vmatprep.subr.bf16.mxu0 %v3319
    %3803 = vmatpush1.bf16.msra.mxu0 %v3318
    %3804 = vmatprep.subr.bf16.mxu0 %v3322
    %3805 = vmatpush1.bf16.msra.mxu0 %v3321
    %3806 = vmatprep.subr.bf16.mxu0 0
    %3807 = vmatpush1.bf16.msra.mxu0 0
    %3808 = vmatprep.subr.bf16.mxu0 0
    %3809 = vmatpush1.bf16.msra.mxu0 0
    %3810 = vmatprep.subr.bf16.mxu0 0
    %3811 = vmatpush1.bf16.msra.mxu0 0
    %3812 = vmatprep.subr.bf16.mxu0 0
    %3813 = vmatpush1.bf16.msra.mxu0 0
    %3814 = vmatprep.subr.bf16.mxu0 0
    %3815 = vmatpush1.bf16.msra.mxu0 0
    %3816 = vmatprep.subr.bf16.mxu0 0
    %3817 = vmatpush1.bf16.msra.mxu0 0
    %3818 = vmatprep.subr.bf16.mxu0 0
    %3819 = vmatpush1.bf16.msra.mxu0 0
    %3820 = vmatprep.subr.bf16.mxu0 0
    %3821 = vmatpush1.bf16.msra.mxu0 0
    %3822 = vmatprep.subr.bf16.mxu0 0
    %3823 = vmatpush1.bf16.msra.mxu0 0
    %3824 = vmatprep.subr.bf16.mxu0 0
    %3825 = vmatpush1.bf16.msra.mxu0 0
    %3826 = vmatprep.subr.bf16.mxu0 0
    %3827 = vmatpush1.bf16.msra.mxu0 0
    %3828 = vmatprep.subr.bf16.mxu0 0
    %3829 = vmatpush1.bf16.msra.mxu0 0
    %3830 = vmatprep.subr.bf16.mxu0 0
    %3831 = vmatpush1.bf16.msra.mxu0 0
    %3832 = vmatprep.subr.bf16.mxu0 0
    %3833 = vmatpush1.bf16.msra.mxu0 0
    %3834 = vmatprep.mubr.bf16.mxu0 0
    %3835 = vmatmul.mubr.bf16.gmra.mrb[0].mxu0 %v3800
    %v3836 = vpop.f32.mrb[0].mxu0
    %v3837 = vadd.f32 0.0, %v3836
    %v3838 = vpop.f32.mrb[0].mxu0
    %v3839 = vadd.f32 0.0, %v3838
    %v3840 = vpop.f32.mrb[0].mxu0
    %v3841 = vpop.f32.mrb[0].mxu0
    %3842 = vdwg.mxu0
    %3843 = vmatprep.subr.bf16.mxu0 0
    %3844 = vmatpush1.bf16.msra.mxu0 %v3320
    %3845 = vmatprep.subr.bf16.mxu0 0
    %3846 = vmatpush1.bf16.msra.mxu0 %v3323
    %3847 = vmatprep.subr.bf16.mxu0 0
    %3848 = vmatpush1.bf16.msra.mxu0 0
    %3849 = vmatprep.subr.bf16.mxu0 0
    %3850 = vmatpush1.bf16.msra.mxu0 0
    %3851 = vmatprep.subr.bf16.mxu0 0
    %3852 = vmatpush1.bf16.msra.mxu0 0
    %3853 = vmatprep.subr.bf16.mxu0 0
    %3854 = vmatpush1.bf16.msra.mxu0 0
    %3855 = vmatprep.subr.bf16.mxu0 0
    %3856 = vmatpush1.bf16.msra.mxu0 0
    %3857 = vmatprep.subr.bf16.mxu0 0
    %3858 = vmatpush1.bf16.msra.mxu0 0
    %3859 = vmatprep.subr.bf16.mxu0 0
    %3860 = vmatpush1.bf16.msra.mxu0 0
    %3861 = vmatprep.subr.bf16.mxu0 0
    %3862 = vmatpush1.bf16.msra.mxu0 0
    %3863 = vmatprep.subr.bf16.mxu0 0
    %3864 = vmatpush1.bf16.msra.mxu0 0
    %3865 = vmatprep.subr.bf16.mxu0 0
    %3866 = vmatpush1.bf16.msra.mxu0 0
    %3867 = vmatprep.subr.bf16.mxu0 0
    %3868 = vmatpush1.bf16.msra.mxu0 0
    %3869 = vmatprep.subr.bf16.mxu0 0
    %3870 = vmatpush1.bf16.msra.mxu0 0
    %3871 = vmatprep.subr.bf16.mxu0 0
    %3872 = vmatpush1.bf16.msra.mxu0 0
    %3873 = vmatprep.subr.bf16.mxu0 0
    %3874 = vmatpush1.bf16.msra.mxu0 0
    %3875 = vmatprep.mubr.bf16.mxu0 0
    %3876 = vmatmul.mubr.bf16.gmra.mrb[0].mxu0 %v3800
    %v3877 = vpop.f32.mrb[0].mxu0
    %v3878 = vadd.f32 0.0, %v3877
    %v3879 = vpop.f32.mrb[0].mxu0
    %v3880 = vpop.f32.mrb[0].mxu0
    %v3881 = vpop.f32.mrb[0].mxu0
    %3882 = vdwg.mxu0
    %v3883 = vadd.f32 %v3795, %v3837
    %v3884 = vxor.u32 %v3883, 2147483648
    %v3885 = vmul.f32 %v3884, 1.442695
    %v3886 = vpow.pop %v3885
    %v3887 = vadd.f32 %v3886, 1.0
    %v3888 = vrcp.pop %v3887
    %v3889 = vmul.f32 1.0, %v3888
    %v3890 = vadd.f32 %v3796, %v3839
    %v3891 = vxor.u32 %v3890, 2147483648
    %v3892 = vmul.f32 %v3891, 1.442695
    %v3893 = vpow.pop %v3892
    %v3894 = vadd.f32 %v3893, 1.0
    %v3895 = vrcp.pop %v3894
    %v3896 = vmul.f32 1.0, %v3895
    %v3897 = vadd.f32 %v3878, %v3428
    %v3898 = vmul.f32 %v3889, %v3897
    %v3899 = vadd.f32 %v3797, %v3898
    %v3900 = vtanh.pop %v3899
    %v3901 = vsub.f32 1.0, %v3896
    %v3902 = vmul.f32 %v3901, %v3900
    %v3903 = vmul.f32 %v3896, %v3787
    %v3904 = vadd.f32 %v3902, %v3903
    %v3905 = vxor.u32 %v3904, 2147483648
    %v3906 = vmul.f32 %v3905, 1.442695
    %v3907 = vpow.pop %v3906
    %v3908 = vadd.f32 %v3907, 1.0
    %v3909 = vrcp.pop %v3908
    %v3910 = vmul.f32 1.0, %v3909
    %3911 = vst.msk [vmem:[#allocation5 + $0x20] sm:$0xff] %vm2144, %v3910
    %v3912 = vld [vmem:[#allocation2 + $0x78] sm:$0xff]
    %v3913 = vld [vmem:[#allocation2 + $0x80] sm:$0xff]
    %v3914 = vld [vmem:[#allocation2 + $0x88] sm:$0xff]
    %v3915 = vpack.c.bf16 %v3904, %v3904
    %v3917 = vsel %vm2144, %v3915, 0
    %3919 = vmatprep.subr.bf16.mxu0 %v3319
    %3920 = vmatpush1.bf16.msra.mxu0 %v3318
    %3921 = vmatprep.subr.bf16.mxu0 %v3322
    %3922 = vmatpush1.bf16.msra.mxu0 %v3321
    %3923 = vmatprep.subr.bf16.mxu0 0
    %3924 = vmatpush1.bf16.msra.mxu0 0
    %3925 = vmatprep.subr.bf16.mxu0 0
    %3926 = vmatpush1.bf16.msra.mxu0 0
    %3927 = vmatprep.subr.bf16.mxu0 0
    %3928 = vmatpush1.bf16.msra.mxu0 0
    %3929 = vmatprep.subr.bf16.mxu0 0
    %3930 = vmatpush1.bf16.msra.mxu0 0
    %3931 = vmatprep.subr.bf16.mxu0 0
    %3932 = vmatpush1.bf16.msra.mxu0 0
    %3933 = vmatprep.subr.bf16.mxu0 0
    %3934 = vmatpush1.bf16.msra.mxu0 0
    %3935 = vmatprep.subr.bf16.mxu0 0
    %3936 = vmatpush1.bf16.msra.mxu0 0
    %3937 = vmatprep.subr.bf16.mxu0 0
    %3938 = vmatpush1.bf16.msra.mxu0 0
    %3939 = vmatprep.subr.bf16.mxu0 0
    %3940 = vmatpush1.bf16.msra.mxu0 0
    %3941 = vmatprep.subr.bf16.mxu0 0
    %3942 = vmatpush1.bf16.msra.mxu0 0
    %3943 = vmatprep.subr.bf16.mxu0 0
    %3944 = vmatpush1.bf16.msra.mxu0 0
    %3945 = vmatprep.subr.bf16.mxu0 0
    %3946 = vmatpush1.bf16.msra.mxu0 0
    %3947 = vmatprep.subr.bf16.mxu0 0
    %3948 = vmatpush1.bf16.msra.mxu0 0
    %3949 = vmatprep.subr.bf16.mxu0 0
    %3950 = vmatpush1.bf16.msra.mxu0 0
    %3951 = vmatprep.mubr.bf16.mxu0 0
    %3952 = vmatmul.mubr.bf16.gmra.mrb[0].mxu0 %v3917
    %v3953 = vpop.f32.mrb[0].mxu0
    %v3954 = vadd.f32 0.0, %v3953
    %v3955 = vpop.f32.mrb[0].mxu0
    %v3956 = vadd.f32 0.0, %v3955
    %v3957 = vpop.f32.mrb[0].mxu0
    %v3958 = vpop.f32.mrb[0].mxu0
    %3959 = vdwg.mxu0
    %3960 = vmatprep.subr.bf16.mxu0 0
    %3961 = vmatpush1.bf16.msra.mxu0 %v3320
    %3962 = vmatprep.subr.bf16.mxu0 0
    %3963 = vmatpush1.bf16.msra.mxu0 %v3323
    %3964 = vmatprep.subr.bf16.mxu0 0
    %3965 = vmatpush1.bf16.msra.mxu0 0
    %3966 = vmatprep.subr.bf16.mxu0 0
    %3967 = vmatpush1.bf16.msra.mxu0 0
    %3968 = vmatprep.subr.bf16.mxu0 0
    %3969 = vmatpush1.bf16.msra.mxu0 0
    %3970 = vmatprep.subr.bf16.mxu0 0
    %3971 = vmatpush1.bf16.msra.mxu0 0
    %3972 = vmatprep.subr.bf16.mxu0 0
    %3973 = vmatpush1.bf16.msra.mxu0 0
    %3974 = vmatprep.subr.bf16.mxu0 0
    %3975 = vmatpush1.bf16.msra.mxu0 0
    %3976 = vmatprep.subr.bf16.mxu0 0
    %3977 = vmatpush1.bf16.msra.mxu0 0
    %3978 = vmatprep.subr.bf16.mxu0 0
    %3979 = vmatpush1.bf16.msra.mxu0 0
    %3980 = vmatprep.subr.bf16.mxu0 0
    %3981 = vmatpush1.bf16.msra.mxu0 0
    %3982 = vmatprep.subr.bf16.mxu0 0
    %3983 = vmatpush1.bf16.msra.mxu0 0
    %3984 = vmatprep.subr.bf16.mxu0 0
    %3985 = vmatpush1.bf16.msra.mxu0 0
    %3986 = vmatprep.subr.bf16.mxu0 0
    %3987 = vmatpush1.bf16.msra.mxu0 0
    %3988 = vmatprep.subr.bf16.mxu0 0
    %3989 = vmatpush1.bf16.msra.mxu0 0
    %3990 = vmatprep.subr.bf16.mxu0 0
    %3991 = vmatpush1.bf16.msra.mxu0 0
    %3992 = vmatprep.mubr.bf16.mxu0 0
    %3993 = vmatmul.mubr.bf16.gmra.mrb[0].mxu0 %v3917
    %v3994 = vpop.f32.mrb[0].mxu0
    %v3995 = vadd.f32 0.0, %v3994
    %v3996 = vpop.f32.mrb[0].mxu0
    %v3997 = vpop.f32.mrb[0].mxu0
    %v3998 = vpop.f32.mrb[0].mxu0
    %3999 = vdwg.mxu0
    %v4000 = vadd.f32 %v3912, %v3954
    %v4001 = vxor.u32 %v4000, 2147483648
    %v4002 = vmul.f32 %v4001, 1.442695
    %v4003 = vpow.pop %v4002
    %v4004 = vadd.f32 %v4003, 1.0
    %v4005 = vrcp.pop %v4004
    %v4006 = vmul.f32 1.0, %v4005
    %v4007 = vadd.f32 %v3913, %v3956
    %v4008 = vxor.u32 %v4007, 2147483648
    %v4009 = vmul.f32 %v4008, 1.442695
    %v4010 = vpow.pop %v4009
    %v4011 = vadd.f32 %v4010, 1.0
    %v4012 = vrcp.pop %v4011
    %v4013 = vmul.f32 1.0, %v4012
    %v4014 = vadd.f32 %v3995, %v3428
    %v4015 = vmul.f32 %v4006, %v4014
    %v4016 = vadd.f32 %v3914, %v4015
    %v4017 = vtanh.pop %v4016
    %v4018 = vsub.f32 1.0, %v4013
    %v4019 = vmul.f32 %v4018, %v4017
    %v4020 = vmul.f32 %v4013, %v3904
    %v4021 = vadd.f32 %v4019, %v4020
    %v4022 = vxor.u32 %v4021, 2147483648
    %v4023 = vmul.f32 %v4022, 1.442695
    %v4024 = vpow.pop %v4023
    %v4025 = vadd.f32 %v4024, 1.0
    %v4026 = vrcp.pop %v4025
    %v4027 = vmul.f32 1.0, %v4026
    %4028 = vst.msk [vmem:[#allocation5 + $0x28] sm:$0xff] %vm2144, %v4027
    %v4029 = vld [vmem:[#allocation2 + $0x90] sm:$0xff]
    %v4030 = vld [vmem:[#allocation2 + $0x98] sm:$0xff]
    %v4031 = vld [vmem:[#allocation2 + $0xa0] sm:$0xff]
    %v4032 = vpack.c.bf16 %v4021, %v4021
    %v4034 = vsel %vm2144, %v4032, 0
    %4036 = vmatprep.subr.bf16.mxu0 %v3319
    %4037 = vmatpush1.bf16.msra.mxu0 %v3318
    %4038 = vmatprep.subr.bf16.mxu0 %v3322
    %4039 = vmatpush1.bf16.msra.mxu0 %v3321
    %4040 = vmatprep.subr.bf16.mxu0 0
    %4041 = vmatpush1.bf16.msra.mxu0 0
    %4042 = vmatprep.subr.bf16.mxu0 0
    %4043 = vmatpush1.bf16.msra.mxu0 0
    %4044 = vmatprep.subr.bf16.mxu0 0
    %4045 = vmatpush1.bf16.msra.mxu0 0
    %4046 = vmatprep.subr.bf16.mxu0 0
    %4047 = vmatpush1.bf16.msra.mxu0 0
    %4048 = vmatprep.subr.bf16.mxu0 0
    %4049 = vmatpush1.bf16.msra.mxu0 0
    %4050 = vmatprep.subr.bf16.mxu0 0
    %4051 = vmatpush1.bf16.msra.mxu0 0
    %4052 = vmatprep.subr.bf16.mxu0 0
    %4053 = vmatpush1.bf16.msra.mxu0 0
    %4054 = vmatprep.subr.bf16.mxu0 0
    %4055 = vmatpush1.bf16.msra.mxu0 0
    %4056 = vmatprep.subr.bf16.mxu0 0
    %4057 = vmatpush1.bf16.msra.mxu0 0
    %4058 = vmatprep.subr.bf16.mxu0 0
    %4059 = vmatpush1.bf16.msra.mxu0 0
    %4060 = vmatprep.subr.bf16.mxu0 0
    %4061 = vmatpush1.bf16.msra.mxu0 0
    %4062 = vmatprep.subr.bf16.mxu0 0
    %4063 = vmatpush1.bf16.msra.mxu0 0
    %4064 = vmatprep.subr.bf16.mxu0 0
    %4065 = vmatpush1.bf16.msra.mxu0 0
    %4066 = vmatprep.subr.bf16.mxu0 0
    %4067 = vmatpush1.bf16.msra.mxu0 0
    %4068 = vmatprep.mubr.bf16.mxu0 0
    %4069 = vmatmul.mubr.bf16.gmra.mrb[0].mxu0 %v4034
    %v4070 = vpop.f32.mrb[0].mxu0
    %v4071 = vadd.f32 0.0, %v4070
    %v4072 = vpop.f32.mrb[0].mxu0
    %v4073 = vadd.f32 0.0, %v4072
    %v4074 = vpop.f32.mrb[0].mxu0
    %v4075 = vpop.f32.mrb[0].mxu0
    %4076 = vdwg.mxu0
    %4077 = vmatprep.subr.bf16.mxu0 0
    %4078 = vmatpush1.bf16.msra.mxu0 %v3320
    %4079 = vmatprep.subr.bf16.mxu0 0
    %4080 = vmatpush1.bf16.msra.mxu0 %v3323
    %4081 = vmatprep.subr.bf16.mxu0 0
    %4082 = vmatpush1.bf16.msra.mxu0 0
    %4083 = vmatprep.subr.bf16.mxu0 0
    %4084 = vmatpush1.bf16.msra.mxu0 0
    %4085 = vmatprep.subr.bf16.mxu0 0
    %4086 = vmatpush1.bf16.msra.mxu0 0
    %4087 = vmatprep.subr.bf16.mxu0 0
    %4088 = vmatpush1.bf16.msra.mxu0 0
    %4089 = vmatprep.subr.bf16.mxu0 0
    %4090 = vmatpush1.bf16.msra.mxu0 0
    %4091 = vmatprep.subr.bf16.mxu0 0
    %4092 = vmatpush1.bf16.msra.mxu0 0
    %4093 = vmatprep.subr.bf16.mxu0 0
    %4094 = vmatpush1.bf16.msra.mxu0 0
    %4095 = vmatprep.subr.bf16.mxu0 0
    %4096 = vmatpush1.bf16.msra.mxu0 0
    %4097 = vmatprep.subr.bf16.mxu0 0
    %4098 = vmatpush1.bf16.msra.mxu0 0
    %4099 = vmatprep.subr.bf16.mxu0 0
    %4100 = vmatpush1.bf16.msra.mxu0 0
    %4101 = vmatprep.subr.bf16.mxu0 0
    %4102 = vmatpush1.bf16.msra.mxu0 0
    %4103 = vmatprep.subr.bf16.mxu0 0
    %4104 = vmatpush1.bf16.msra.mxu0 0
    %4105 = vmatprep.subr.bf16.mxu0 0
    %4106 = vmatpush1.bf16.msra.mxu0 0
    %4107 = vmatprep.subr.bf16.mxu0 0
    %4108 = vmatpush1.bf16.msra.mxu0 0
    %4109 = vmatprep.mubr.bf16.mxu0 0
    %4110 = vmatmul.mubr.bf16.gmra.mrb[0].mxu0 %v4034
    %v4111 = vpop.f32.mrb[0].mxu0
    %v4112 = vadd.f32 0.0, %v4111
    %v4113 = vpop.f32.mrb[0].mxu0
    %v4114 = vpop.f32.mrb[0].mxu0
    %v4115 = vpop.f32.mrb[0].mxu0
    %4116 = vdwg.mxu0
    %v4117 = vadd.f32 %v4029, %v4071
    %v4118 = vxor.u32 %v4117, 2147483648
    %v4119 = vmul.f32 %v4118, 1.442695
    %v4120 = vpow.pop %v4119
    %v4121 = vadd.f32 %v4120, 1.0
    %v4122 = vrcp.pop %v4121
    %v4123 = vmul.f32 1.0, %v4122
    %v4124 = vadd.f32 %v4030, %v4073
    %v4125 = vxor.u32 %v4124, 2147483648
    %v4126 = vmul.f32 %v4125, 1.442695
    %v4127 = vpow.pop %v4126
    %v4128 = vadd.f32 %v4127, 1.0
    %v4129 = vrcp.pop %v4128
    %v4130 = vmul.f32 1.0, %v4129
    %v4131 = vadd.f32 %v4112, %v3428
    %v4132 = vmul.f32 %v4123, %v4131
    %v4133 = vadd.f32 %v4031, %v4132
    %v4134 = vtanh.pop %v4133
    %v4135 = vsub.f32 1.0, %v4130
    %v4136 = vmul.f32 %v4135, %v4134
    %v4137 = vmul.f32 %v4130, %v4021
    %v4138 = vadd.f32 %v4136, %v4137
    %v4139 = vxor.u32 %v4138, 2147483648
    %v4140 = vmul.f32 %v4139, 1.442695
    %v4141 = vpow.pop %v4140
    %v4142 = vadd.f32 %v4141, 1.0
    %v4143 = vrcp.pop %v4142
    %v4144 = vmul.f32 1.0, %v4143
    %4145 = vst.msk [vmem:[#allocation5 + $0x30] sm:$0xff] %vm2144, %v4144
    %v4146 = vld [vmem:[#allocation2 + $0xa8] sm:$0xff]
    %v4147 = vld [vmem:[#allocation2 + $0xb0] sm:$0xff]
    %v4148 = vld [vmem:[#allocation2 + $0xb8] sm:$0xff]
    %v4149 = vpack.c.bf16 %v4138, %v4138
    %v4151 = vsel %vm2144, %v4149, 0
    %4153 = vmatprep.subr.bf16.mxu0 %v3319
    %4154 = vmatpush1.bf16.msra.mxu0 %v3318
    %4155 = vmatprep.subr.bf16.mxu0 %v3322
    %4156 = vmatpush1.bf16.msra.mxu0 %v3321
    %4157 = vmatprep.subr.bf16.mxu0 0
    %4158 = vmatpush1.bf16.msra.mxu0 0
    %4159 = vmatprep.subr.bf16.mxu0 0
    %4160 = vmatpush1.bf16.msra.mxu0 0
    %4161 = vmatprep.subr.bf16.mxu0 0
    %4162 = vmatpush1.bf16.msra.mxu0 0
    %4163 = vmatprep.subr.bf16.mxu0 0
    %4164 = vmatpush1.bf16.msra.mxu0 0
    %4165 = vmatprep.subr.bf16.mxu0 0
    %4166 = vmatpush1.bf16.msra.mxu0 0
    %4167 = vmatprep.subr.bf16.mxu0 0
    %4168 = vmatpush1.bf16.msra.mxu0 0
    %4169 = vmatprep.subr.bf16.mxu0 0
    %4170 = vmatpush1.bf16.msra.mxu0 0
    %4171 = vmatprep.subr.bf16.mxu0 0
    %4172 = vmatpush1.bf16.msra.mxu0 0
    %4173 = vmatprep.subr.bf16.mxu0 0
    %4174 = vmatpush1.bf16.msra.mxu0 0
    %4175 = vmatprep.subr.bf16.mxu0 0
    %4176 = vmatpush1.bf16.msra.mxu0 0
    %4177 = vmatprep.subr.bf16.mxu0 0
    %4178 = vmatpush1.bf16.msra.mxu0 0
    %4179 = vmatprep.subr.bf16.mxu0 0
    %4180 = vmatpush1.bf16.msra.mxu0 0
    %4181 = vmatprep.subr.bf16.mxu0 0
    %4182 = vmatpush1.bf16.msra.mxu0 0
    %4183 = vmatprep.subr.bf16.mxu0 0
    %4184 = vmatpush1.bf16.msra.mxu0 0
    %4185 = vmatprep.mubr.bf16.mxu0 0
    %4186 = vmatmul.mubr.bf16.gmra.mrb[0].mxu0 %v4151
    %v4187 = vpop.f32.mrb[0].mxu0
    %v4188 = vadd.f32 0.0, %v4187
    %v4189 = vpop.f32.mrb[0].mxu0
    %v4190 = vadd.f32 0.0, %v4189
    %v4191 = vpop.f32.mrb[0].mxu0
    %v4192 = vpop.f32.mrb[0].mxu0
    %4193 = vdwg.mxu0
    %4194 = vmatprep.subr.bf16.mxu0 0
    %4195 = vmatpush1.bf16.msra.mxu0 %v3320
    %4196 = vmatprep.subr.bf16.mxu0 0
    %4197 = vmatpush1.bf16.msra.mxu0 %v3323
    %4198 = vmatprep.subr.bf16.mxu0 0
    %4199 = vmatpush1.bf16.msra.mxu0 0
    %4200 = vmatprep.subr.bf16.mxu0 0
    %4201 = vmatpush1.bf16.msra.mxu0 0
    %4202 = vmatprep.subr.bf16.mxu0 0
    %4203 = vmatpush1.bf16.msra.mxu0 0
    %4204 = vmatprep.subr.bf16.mxu0 0
    %4205 = vmatpush1.bf16.msra.mxu0 0
    %4206 = vmatprep.subr.bf16.mxu0 0
    %4207 = vmatpush1.bf16.msra.mxu0 0
    %4208 = vmatprep.subr.bf16.mxu0 0
    %4209 = vmatpush1.bf16.msra.mxu0 0
    %4210 = vmatprep.subr.bf16.mxu0 0
    %4211 = vmatpush1.bf16.msra.mxu0 0
    %4212 = vmatprep.subr.bf16.mxu0 0
    %4213 = vmatpush1.bf16.msra.mxu0 0
    %4214 = vmatprep.subr.bf16.mxu0 0
    %4215 = vmatpush1.bf16.msra.mxu0 0
    %4216 = vmatprep.subr.bf16.mxu0 0
    %4217 = vmatpush1.bf16.msra.mxu0 0
    %4218 = vmatprep.subr.bf16.mxu0 0
    %4219 = vmatpush1.bf16.msra.mxu0 0
    %4220 = vmatprep.subr.bf16.mxu0 0
    %4221 = vmatpush1.bf16.msra.mxu0 0
    %4222 = vmatprep.subr.bf16.mxu0 0
    %4223 = vmatpush1.bf16.msra.mxu0 0
    %4224 = vmatprep.subr.bf16.mxu0 0
    %4225 = vmatpush1.bf16.msra.mxu0 0
    %4226 = vmatprep.mubr.bf16.mxu0 0
    %4227 = vmatmul.mubr.bf16.gmra.mrb[0].mxu0 %v4151
    %v4228 = vpop.f32.mrb[0].mxu0
    %v4229 = vadd.f32 0.0, %v4228
    %v4230 = vpop.f32.mrb[0].mxu0
    %v4231 = vpop.f32.mrb[0].mxu0
    %v4232 = vpop.f32.mrb[0].mxu0
    %4233 = vdwg.mxu0
    %v4234 = vadd.f32 %v4146, %v4188
    %v4235 = vxor.u32 %v4234, 2147483648
    %v4236 = vmul.f32 %v4235, 1.442695
    %v4237 = vpow.pop %v4236
    %v4238 = vadd.f32 %v4237, 1.0
    %v4239 = vrcp.pop %v4238
    %v4240 = vmul.f32 1.0, %v4239
    %v4241 = vadd.f32 %v4147, %v4190
    %v4242 = vxor.u32 %v4241, 2147483648
    %v4243 = vmul.f32 %v4242, 1.442695
    %v4244 = vpow.pop %v4243
    %v4245 = vadd.f32 %v4244, 1.0
    %v4246 = vrcp.pop %v4245
    %v4247 = vmul.f32 1.0, %v4246
    %v4248 = vadd.f32 %v4229, %v3428
    %v4249 = vmul.f32 %v4240, %v4248
    %v4250 = vadd.f32 %v4148, %v4249
    %v4251 = vtanh.pop %v4250
    %v4252 = vsub.f32 1.0, %v4247
    %v4253 = vmul.f32 %v4252, %v4251
    %v4254 = vmul.f32 %v4247, %v4138
    %v4255 = vadd.f32 %v4253, %v4254
    %v4256 = vxor.u32 %v4255, 2147483648
    %v4257 = vmul.f32 %v4256, 1.442695
    %v4258 = vpow.pop %v4257
    %v4259 = vadd.f32 %v4258, 1.0
    %v4260 = vrcp.pop %v4259
    %v4261 = vmul.f32 1.0, %v4260
    %4262 = vst.msk [vmem:[#allocation5 + $0x38] sm:$0xff] %vm2144, %v4261
    %v4263 = vld [vmem:[#allocation5] sm:$0xff]
    %v4264 = vld [vmem:[#allocation5 + $0x8] sm:$0xff]
    %v4265 = vld [vmem:[#allocation5 + $0x10] sm:$0xff]
    %v4266 = vld [vmem:[#allocation5 + $0x18] sm:$0xff]
    %v4267 = vld [vmem:[#allocation5 + $0x20] sm:$0xff]
    %v4268 = vld [vmem:[#allocation5 + $0x28] sm:$0xff]
    %v4269 = vld [vmem:[#allocation5 + $0x30] sm:$0xff]
    %v4270 = vld [vmem:[#allocation5 + $0x38] sm:$0xff]
    %v4271 = vpack.c.bf16 %v4264, %v4263
    %v4272 = vpack.c.bf16 %v4266, %v4265
    %v4273 = vpack.c.bf16 %v4268, %v4267
    %v4274 = vpack.c.bf16 %v4270, %v4269
    %v4275 = vld [vmem:[#allocation24] sm:$0x3f]
    %v4276 = vld [vmem:[%s12] sm:$0xff]
    %v4277 = vld [vmem:[%s12 + $0x8] sm:$0xf]
    %v4278 = vld [vmem:[%s12 + $0xc] sm:$0xff]
    %v4279 = vld [vmem:[%s12 + $0x14] sm:$0xf]
    %v4280 = vld [vmem:[%s12 + $0x18] sm:$0xff]
    %v4281 = vld [vmem:[%s12 + $0x20] sm:$0xf]
    %v4282 = vld [vmem:[%s12 + $0x24] sm:$0xff]
    %v4283 = vld [vmem:[%s12 + $0x2c] sm:$0xf]
    %v4285 = vlaneseq
    %v4286 = vshrl.u32 %v4285, 7
    %v4287 = vsub.s32 0, %v4286
    %v4288 = vrot.slane %v4275, %v4287
    %v4289 = vlaneseq
    %v4290 = vshrl.u32 %v4289, 7
    %v4291 = vsub.s32 2, %v4290
    %v4292 = vrot.slane %v4275, %v4291
    %v4293 = vlaneseq
    %v4294 = vshrl.u32 %v4293, 7
    %v4295 = vsub.s32 4, %v4294
    %v4296 = vrot.slane %v4275, %v4295
    %v4300 = vlaneseq
    %v4301 = vshrl.u32 %v4300, 7
    %v4302 = vsub.s32 0, %v4301
    %v4303 = vrot.slane %v4288, %v4302
    %v4304 = vlaneseq
    %v4305 = vshrl.u32 %v4304, 7
    %v4306 = vsub.s32 0, %v4305
    %v4307 = vrot.slane %v4292, %v4306
    %v4308 = vlaneseq
    %v4309 = vshrl.u32 %v4308, 7
    %v4310 = vsub.s32 0, %v4309
    %v4311 = vrot.slane %v4296, %v4310
    %v4320 = vunpack.c.l.b16 %v4276
    %v4321 = vunpack.c.h.b16 %v4276
    %v4322 = vunpack.c.l.b16 %v4277
    %v4323 = vunpack.c.l.b16 %v4278
    %v4324 = vunpack.c.h.b16 %v4278
    %v4325 = vunpack.c.l.b16 %v4279
    %v4326 = vunpack.c.l.b16 %v4280
    %v4327 = vunpack.c.h.b16 %v4280
    %v4328 = vunpack.c.l.b16 %v4281
    %v4329 = vunpack.c.l.b16 %v4282
    %v4330 = vunpack.c.h.b16 %v4282
    %v4331 = vunpack.c.l.b16 %v4283
    %v4332 = vpack.c.b16 %v4323, %v4320
    %v4333 = vpack.c.b16 %v4324, %v4321
    %v4334 = vpack.c.b16 %v4325, %v4322
    %v4335 = vpack.c.b16 %v4329, %v4326
    %v4336 = vpack.c.b16 %v4330, %v4327
    %v4337 = vpack.c.b16 %v4331, %v4328
    %v4345 = vsel %vm2144, %v4271, 0
    %v4348 = vsel %vm2144, %v4272, 0
    %v4351 = vsel %vm2144, %v4273, 0
    %v4354 = vsel %vm2144, %v4274, 0
    %4356 = vmatprep.subr.bf16.mxu0 %v4333
    %4357 = vmatpush1.bf16.msra.mxu0 %v4332
    %4358 = vmatprep.subr.bf16.mxu0 %v4336
    %4359 = vmatpush1.bf16.msra.mxu0 %v4335
    %4360 = vmatprep.subr.bf16.mxu0 0
    %4361 = vmatpush1.bf16.msra.mxu0 0
    %4362 = vmatprep.subr.bf16.mxu0 0
    %4363 = vmatpush1.bf16.msra.mxu0 0
    %4364 = vmatprep.subr.bf16.mxu0 0
    %4365 = vmatpush1.bf16.msra.mxu0 0
    %4366 = vmatprep.subr.bf16.mxu0 0
    %4367 = vmatpush1.bf16.msra.mxu0 0
    %4368 = vmatprep.subr.bf16.mxu0 0
    %4369 = vmatpush1.bf16.msra.mxu0 0
    %4370 = vmatprep.subr.bf16.mxu0 0
    %4371 = vmatpush1.bf16.msra.mxu0 0
    %4372 = vmatprep.subr.bf16.mxu0 0
    %4373 = vmatpush1.bf16.msra.mxu0 0
    %4374 = vmatprep.subr.bf16.mxu0 0
    %4375 = vmatpush1.bf16.msra.mxu0 0
    %4376 = vmatprep.subr.bf16.mxu0 0
    %4377 = vmatpush1.bf16.msra.mxu0 0
    %4378 = vmatprep.subr.bf16.mxu0 0
    %4379 = vmatpush1.bf16.msra.mxu0 0
    %4380 = vmatprep.subr.bf16.mxu0 0
    %4381 = vmatpush1.bf16.msra.mxu0 0
    %4382 = vmatprep.subr.bf16.mxu0 0
    %4383 = vmatpush1.bf16.msra.mxu0 0
    %4384 = vmatprep.subr.bf16.mxu0 0
    %4385 = vmatpush1.bf16.msra.mxu0 0
    %4386 = vmatprep.subr.bf16.mxu0 0
    %4387 = vmatpush1.bf16.msra.mxu0 0
    %4388 = vmatprep.mubr.bf16.mxu0 0
    %4389 = vmatmul.mubr.bf16.gmra.mrb[0].mxu0 %v4345
    %v4390 = vpop.f32.mrb[0].mxu0
    %v4391 = vadd.f32 %v4303, %v4390
    %v4392 = vpop.f32.mrb[0].mxu0
    %v4393 = vadd.f32 %v4307, %v4392
    %v4394 = vpop.f32.mrb[0].mxu0
    %v4395 = vadd.f32 %v4303, %v4394
    %v4396 = vpop.f32.mrb[0].mxu0
    %v4397 = vadd.f32 %v4307, %v4396
    %4398 = vmatprep.mubr.bf16.mxu0 0
    %4399 = vmatmul.mubr.bf16.gmra.mrb[0].mxu0 %v4348
    %v4400 = vpop.f32.mrb[0].mxu0
    %v4401 = vadd.f32 %v4303, %v4400
    %v4402 = vpop.f32.mrb[0].mxu0
    %v4403 = vadd.f32 %v4307, %v4402
    %v4404 = vpop.f32.mrb[0].mxu0
    %v4405 = vadd.f32 %v4303, %v4404
    %v4406 = vpop.f32.mrb[0].mxu0
    %v4407 = vadd.f32 %v4307, %v4406
    %4408 = vmatprep.mubr.bf16.mxu0 0
    %4409 = vmatmul.mubr.bf16.gmra.mrb[0].mxu0 %v4351
    %v4410 = vpop.f32.mrb[0].mxu0
    %v4411 = vadd.f32 %v4303, %v4410
    %v4412 = vpop.f32.mrb[0].mxu0
    %v4413 = vadd.f32 %v4307, %v4412
    %v4414 = vpop.f32.mrb[0].mxu0
    %v4415 = vadd.f32 %v4303, %v4414
    %v4416 = vpop.f32.mrb[0].mxu0
    %v4417 = vadd.f32 %v4307, %v4416
    %4418 = vmatprep.mubr.bf16.mxu0 0
    %4419 = vmatmul.mubr.bf16.gmra.mrb[0].mxu0 %v4354
    %v4420 = vpop.f32.mrb[0].mxu0
    %v4421 = vadd.f32 %v4303, %v4420
    %v4422 = vpop.f32.mrb[0].mxu0
    %v4423 = vadd.f32 %v4307, %v4422
    %v4424 = vpop.f32.mrb[0].mxu0
    %v4425 = vadd.f32 %v4303, %v4424
    %v4426 = vpop.f32.mrb[0].mxu0
    %v4427 = vadd.f32 %v4307, %v4426
    %4428 = vdwg.mxu0
    %4429 = vmatprep.subr.bf16.mxu0 0
    %4430 = vmatpush1.bf16.msra.mxu0 %v4334
    %4431 = vmatprep.subr.bf16.mxu0 0
    %4432 = vmatpush1.bf16.msra.mxu0 %v4337
    %4433 = vmatprep.subr.bf16.mxu0 0
    %4434 = vmatpush1.bf16.msra.mxu0 0
    %4435 = vmatprep.subr.bf16.mxu0 0
    %4436 = vmatpush1.bf16.msra.mxu0 0
    %4437 = vmatprep.subr.bf16.mxu0 0
    %4438 = vmatpush1.bf16.msra.mxu0 0
    %4439 = vmatprep.subr.bf16.mxu0 0
    %4440 = vmatpush1.bf16.msra.mxu0 0
    %4441 = vmatprep.subr.bf16.mxu0 0
    %4442 = vmatpush1.bf16.msra.mxu0 0
    %4443 = vmatprep.subr.bf16.mxu0 0
    %4444 = vmatpush1.bf16.msra.mxu0 0
    %4445 = vmatprep.subr.bf16.mxu0 0
    %4446 = vmatpush1.bf16.msra.mxu0 0
    %4447 = vmatprep.subr.bf16.mxu0 0
    %4448 = vmatpush1.bf16.msra.mxu0 0
    %4449 = vmatprep.subr.bf16.mxu0 0
    %4450 = vmatpush1.bf16.msra.mxu0 0
    %4451 = vmatprep.subr.bf16.mxu0 0
    %4452 = vmatpush1.bf16.msra.mxu0 0
    %4453 = vmatprep.subr.bf16.mxu0 0
    %4454 = vmatpush1.bf16.msra.mxu0 0
    %4455 = vmatprep.subr.bf16.mxu0 0
    %4456 = vmatpush1.bf16.msra.mxu0 0
    %4457 = vmatprep.subr.bf16.mxu0 0
    %4458 = vmatpush1.bf16.msra.mxu0 0
    %4459 = vmatprep.subr.bf16.mxu0 0
    %4460 = vmatpush1.bf16.msra.mxu0 0
    %4461 = vmatprep.mubr.bf16.mxu0 0
    %4462 = vmatmul.mubr.bf16.gmra.mrb[0].mxu0 %v4345
    %v4463 = vpop.f32.mrb[0].mxu0
    %v4464 = vadd.f32 %v4311, %v4463
    %v4465 = vpop.f32.mrb[0].mxu0
    %v4466 = vpop.f32.mrb[0].mxu0
    %v4467 = vadd.f32 %v4311, %v4466
    %v4468 = vpop.f32.mrb[0].mxu0
    %4469 = vmatprep.mubr.bf16.mxu0 0
    %4470 = vmatmul.mubr.bf16.gmra.mrb[0].mxu0 %v4348
    %v4471 = vpop.f32.mrb[0].mxu0
    %v4472 = vadd.f32 %v4311, %v4471
    %v4473 = vpop.f32.mrb[0].mxu0
    %v4474 = vpop.f32.mrb[0].mxu0
    %v4475 = vadd.f32 %v4311, %v4474
    %v4476 = vpop.f32.mrb[0].mxu0
    %4477 = vmatprep.mubr.bf16.mxu0 0
    %4478 = vmatmul.mubr.bf16.gmra.mrb[0].mxu0 %v4351
    %v4479 = vpop.f32.mrb[0].mxu0
    %v4480 = vadd.f32 %v4311, %v4479
    %v4481 = vpop.f32.mrb[0].mxu0
    %v4482 = vpop.f32.mrb[0].mxu0
    %v4483 = vadd.f32 %v4311, %v4482
    %v4484 = vpop.f32.mrb[0].mxu0
    %4485 = vmatprep.mubr.bf16.mxu0 0
    %4486 = vmatmul.mubr.bf16.gmra.mrb[0].mxu0 %v4354
    %v4487 = vpop.f32.mrb[0].mxu0
    %v4488 = vadd.f32 %v4311, %v4487
    %v4489 = vpop.f32.mrb[0].mxu0
    %v4490 = vpop.f32.mrb[0].mxu0
    %v4491 = vadd.f32 %v4311, %v4490
    %v4492 = vpop.f32.mrb[0].mxu0
    %4493 = vdwg.mxu0
    %4494 = vst [vmem:[#allocation2] sm:$0xff] %v4391
    %4495 = vst [vmem:[#allocation2 + $0x8] sm:$0xff] %v4393
    %4496 = vst [vmem:[#allocation2 + $0x10] sm:$0xff] %v4464
    %4497 = vst [vmem:[#allocation2 + $0x18] sm:$0xff] %v4395
    %4498 = vst [vmem:[#allocation2 + $0x20] sm:$0xff] %v4397
    %4499 = vst [vmem:[#allocation2 + $0x28] sm:$0xff] %v4467
    %4500 = vst [vmem:[#allocation2 + $0x30] sm:$0xff] %v4401
    %4501 = vst [vmem:[#allocation2 + $0x38] sm:$0xff] %v4403
    %4502 = vst [vmem:[#allocation2 + $0x40] sm:$0xff] %v4472
    %4503 = vst [vmem:[#allocation2 + $0x48] sm:$0xff] %v4405
    %4504 = vst [vmem:[#allocation2 + $0x50] sm:$0xff] %v4407
    %4505 = vst [vmem:[#allocation2 + $0x58] sm:$0xff] %v4475
    %4506 = vst [vmem:[#allocation2 + $0x60] sm:$0xff] %v4411
    %4507 = vst [vmem:[#allocation2 + $0x68] sm:$0xff] %v4413
    %4508 = vst [vmem:[#allocation2 + $0x70] sm:$0xff] %v4480
    %4509 = vst [vmem:[#allocation2 + $0x78] sm:$0xff] %v4415
    %4510 = vst [vmem:[#allocation2 + $0x80] sm:$0xff] %v4417
    %4511 = vst [vmem:[#allocation2 + $0x88] sm:$0xff] %v4483
    %4512 = vst [vmem:[#allocation2 + $0x90] sm:$0xff] %v4421
    %4513 = vst [vmem:[#allocation2 + $0x98] sm:$0xff] %v4423
    %4514 = vst [vmem:[#allocation2 + $0xa0] sm:$0xff] %v4488
    %4515 = vst [vmem:[#allocation2 + $0xa8] sm:$0xff] %v4425
    %4516 = vst [vmem:[#allocation2 + $0xb0] sm:$0xff] %v4427
    %4517 = vst [vmem:[#allocation2 + $0xb8] sm:$0xff] %v4491
    %v4518 = vld [vmem:[#allocation22] sm:$0xff]
    %v4519 = vld [vmem:[#allocation22 + $0x8] sm:$0xf]
    %v4520 = vld [vmem:[#allocation22 + $0xc] sm:$0xff]
    %v4521 = vld [vmem:[#allocation22 + $0x14] sm:$0xf]
    %v4522 = vld [vmem:[#allocation2] sm:$0xff]
    %v4523 = vld [vmem:[#allocation2 + $0x8] sm:$0xff]
    %v4524 = vld [vmem:[#allocation2 + $0x10] sm:$0xff]
    %v4529 = vunpack.c.l.b16 %v4518
    %v4530 = vunpack.c.h.b16 %v4518
    %v4531 = vunpack.c.l.b16 %v4519
    %v4532 = vunpack.c.l.b16 %v4520
    %v4533 = vunpack.c.h.b16 %v4520
    %v4534 = vunpack.c.l.b16 %v4521
    %v4535 = vpack.c.b16 %v4532, %v4529
    %v4536 = vpack.c.b16 %v4533, %v4530
    %v4537 = vpack.c.b16 %v4534, %v4531
    %vm4541 = vcmask 130048
    %v4542 = vsel %vm4541, 0, 0
    %4544 = vmatprep.subr.bf16.mxu0 %v4536
    %4545 = vmatpush1.bf16.msra.mxu0 %v4535
    %4546 = vmatprep.subr.bf16.mxu0 0
    %4547 = vmatpush1.bf16.msra.mxu0 0
    %4548 = vmatprep.subr.bf16.mxu0 0
    %4549 = vmatpush1.bf16.msra.mxu0 0
    %4550 = vmatprep.subr.bf16.mxu0 0
    %4551 = vmatpush1.bf16.msra.mxu0 0
    %4552 = vmatprep.subr.bf16.mxu0 0
    %4553 = vmatpush1.bf16.msra.mxu0 0
    %4554 = vmatprep.subr.bf16.mxu0 0
    %4555 = vmatpush1.bf16.msra.mxu0 0
    %4556 = vmatprep.subr.bf16.mxu0 0
    %4557 = vmatpush1.bf16.msra.mxu0 0
    %4558 = vmatprep.subr.bf16.mxu0 0
    %4559 = vmatpush1.bf16.msra.mxu0 0
    %4560 = vmatprep.subr.bf16.mxu0 0
    %4561 = vmatpush1.bf16.msra.mxu0 0
    %4562 = vmatprep.subr.bf16.mxu0 0
    %4563 = vmatpush1.bf16.msra.mxu0 0
    %4564 = vmatprep.subr.bf16.mxu0 0
    %4565 = vmatpush1.bf16.msra.mxu0 0
    %4566 = vmatprep.subr.bf16.mxu0 0
    %4567 = vmatpush1.bf16.msra.mxu0 0
    %4568 = vmatprep.subr.bf16.mxu0 0
    %4569 = vmatpush1.bf16.msra.mxu0 0
    %4570 = vmatprep.subr.bf16.mxu0 0
    %4571 = vmatpush1.bf16.msra.mxu0 0
    %4572 = vmatprep.subr.bf16.mxu0 0
    %4573 = vmatpush1.bf16.msra.mxu0 0
    %4574 = vmatprep.subr.bf16.mxu0 0
    %4575 = vmatpush1.bf16.msra.mxu0 0
    %4576 = vmatprep.mubr.bf16.mxu0 0
    %4577 = vmatmul.mubr.bf16.gmra.mrb[0].mxu0 %v4542
    %v4578 = vpop.f32.mrb[0].mxu0
    %v4579 = vadd.f32 0.0, %v4578
    %v4580 = vpop.f32.mrb[0].mxu0
    %v4581 = vadd.f32 0.0, %v4580
    %v4582 = vpop.f32.mrb[0].mxu0
    %v4583 = vpop.f32.mrb[0].mxu0
    %4584 = vdwg.mxu0
    %4585 = vmatprep.subr.bf16.mxu0 0
    %4586 = vmatpush1.bf16.msra.mxu0 %v4537
    %4587 = vmatprep.subr.bf16.mxu0 0
    %4588 = vmatpush1.bf16.msra.mxu0 0
    %4589 = vmatprep.subr.bf16.mxu0 0
    %4590 = vmatpush1.bf16.msra.mxu0 0
    %4591 = vmatprep.subr.bf16.mxu0 0
    %4592 = vmatpush1.bf16.msra.mxu0 0
    %4593 = vmatprep.subr.bf16.mxu0 0
    %4594 = vmatpush1.bf16.msra.mxu0 0
    %4595 = vmatprep.subr.bf16.mxu0 0
    %4596 = vmatpush1.bf16.msra.mxu0 0
    %4597 = vmatprep.subr.bf16.mxu0 0
    %4598 = vmatpush1.bf16.msra.mxu0 0
    %4599 = vmatprep.subr.bf16.mxu0 0
    %4600 = vmatpush1.bf16.msra.mxu0 0
    %4601 = vmatprep.subr.bf16.mxu0 0
    %4602 = vmatpush1.bf16.msra.mxu0 0
    %4603 = vmatprep.subr.bf16.mxu0 0
    %4604 = vmatpush1.bf16.msra.mxu0 0
    %4605 = vmatprep.subr.bf16.mxu0 0
    %4606 = vmatpush1.bf16.msra.mxu0 0
    %4607 = vmatprep.subr.bf16.mxu0 0
    %4608 = vmatpush1.bf16.msra.mxu0 0
    %4609 = vmatprep.subr.bf16.mxu0 0
    %4610 = vmatpush1.bf16.msra.mxu0 0
    %4611 = vmatprep.subr.bf16.mxu0 0
    %4612 = vmatpush1.bf16.msra.mxu0 0
    %4613 = vmatprep.subr.bf16.mxu0 0
    %4614 = vmatpush1.bf16.msra.mxu0 0
    %4615 = vmatprep.subr.bf16.mxu0 0
    %4616 = vmatpush1.bf16.msra.mxu0 0
    %4617 = vmatprep.mubr.bf16.mxu0 0
    %4618 = vmatmul.mubr.bf16.gmra.mrb[0].mxu0 %v4542
    %v4619 = vpop.f32.mrb[0].mxu0
    %v4620 = vadd.f32 0.0, %v4619
    %v4621 = vpop.f32.mrb[0].mxu0
    %v4622 = vpop.f32.mrb[0].mxu0
    %v4623 = vpop.f32.mrb[0].mxu0
    %4624 = vdwg.mxu0
    %v4625 = vadd.f32 %v4522, %v4579
    %v4626 = vxor.u32 %v4625, 2147483648
    %v4627 = vmul.f32 %v4626, 1.442695
    %v4628 = vpow.pop %v4627
    %v4629 = vadd.f32 %v4628, 1.0
    %v4630 = vrcp.pop %v4629
    %v4631 = vmul.f32 1.0, %v4630
    %v4632 = vadd.f32 %v4523, %v4581
    %v4633 = vxor.u32 %v4632, 2147483648
    %v4634 = vmul.f32 %v4633, 1.442695
    %v4635 = vpow.pop %v4634
    %v4636 = vadd.f32 %v4635, 1.0
    %v4637 = vrcp.pop %v4636
    %v4638 = vmul.f32 1.0, %v4637
    %v4639 = vlaneseq
    %v4640 = vshrl.u32 %v4639, 7
    %v4641 = vsub.s32 1, %v4640
    %v4642 = vrot.slane %v4275, %v4641
    %v4643 = vadd.f32 %v4620, %v4642
    %v4644 = vmul.f32 %v4631, %v4643
    %v4645 = vadd.f32 %v4524, %v4644
    %v4646 = vtanh.pop %v4645
    %v4647 = vsub.f32 1.0, %v4638
    %v4648 = vmul.f32 %v4647, %v4646
    %v4649 = vmul.f32 %v4638, 0.0
    %v4650 = vadd.f32 %v4648, %v4649
    %4651 = vst.msk [vmem:[#allocation6] sm:$0xff] %vm4541, %v4650
    %v4652 = vld [vmem:[#allocation2 + $0x18] sm:$0xff]
    %v4653 = vld [vmem:[#allocation2 + $0x20] sm:$0xff]
    %v4654 = vld [vmem:[#allocation2 + $0x28] sm:$0xff]
    %v4655 = vpack.c.bf16 %v4650, %v4650
    %v4657 = vsel %vm4541, %v4655, 0
    %4659 = vmatprep.subr.bf16.mxu0 %v4536
    %4660 = vmatpush1.bf16.msra.mxu0 %v4535
    %4661 = vmatprep.subr.bf16.mxu0 0
    %4662 = vmatpush1.bf16.msra.mxu0 0
    %4663 = vmatprep.subr.bf16.mxu0 0
    %4664 = vmatpush1.bf16.msra.mxu0 0
    %4665 = vmatprep.subr.bf16.mxu0 0
    %4666 = vmatpush1.bf16.msra.mxu0 0
    %4667 = vmatprep.subr.bf16.mxu0 0
    %4668 = vmatpush1.bf16.msra.mxu0 0
    %4669 = vmatprep.subr.bf16.mxu0 0
    %4670 = vmatpush1.bf16.msra.mxu0 0
    %4671 = vmatprep.subr.bf16.mxu0 0
    %4672 = vmatpush1.bf16.msra.mxu0 0
    %4673 = vmatprep.subr.bf16.mxu0 0
    %4674 = vmatpush1.bf16.msra.mxu0 0
    %4675 = vmatprep.subr.bf16.mxu0 0
    %4676 = vmatpush1.bf16.msra.mxu0 0
    %4677 = vmatprep.subr.bf16.mxu0 0
    %4678 = vmatpush1.bf16.msra.mxu0 0
    %4679 = vmatprep.subr.bf16.mxu0 0
    %4680 = vmatpush1.bf16.msra.mxu0 0
    %4681 = vmatprep.subr.bf16.mxu0 0
    %4682 = vmatpush1.bf16.msra.mxu0 0
    %4683 = vmatprep.subr.bf16.mxu0 0
    %4684 = vmatpush1.bf16.msra.mxu0 0
    %4685 = vmatprep.subr.bf16.mxu0 0
    %4686 = vmatpush1.bf16.msra.mxu0 0
    %4687 = vmatprep.subr.bf16.mxu0 0
    %4688 = vmatpush1.bf16.msra.mxu0 0
    %4689 = vmatprep.subr.bf16.mxu0 0
    %4690 = vmatpush1.bf16.msra.mxu0 0
    %4691 = vmatprep.mubr.bf16.mxu0 0
    %4692 = vmatmul.mubr.bf16.gmra.mrb[0].mxu0 %v4657
    %v4693 = vpop.f32.mrb[0].mxu0
    %v4694 = vadd.f32 0.0, %v4693
    %v4695 = vpop.f32.mrb[0].mxu0
    %v4696 = vadd.f32 0.0, %v4695
    %v4697 = vpop.f32.mrb[0].mxu0
    %v4698 = vpop.f32.mrb[0].mxu0
    %4699 = vdwg.mxu0
    %4700 = vmatprep.subr.bf16.mxu0 0
    %4701 = vmatpush1.bf16.msra.mxu0 %v4537
    %4702 = vmatprep.subr.bf16.mxu0 0
    %4703 = vmatpush1.bf16.msra.mxu0 0
    %4704 = vmatprep.subr.bf16.mxu0 0
    %4705 = vmatpush1.bf16.msra.mxu0 0
    %4706 = vmatprep.subr.bf16.mxu0 0
    %4707 = vmatpush1.bf16.msra.mxu0 0
    %4708 = vmatprep.subr.bf16.mxu0 0
    %4709 = vmatpush1.bf16.msra.mxu0 0
    %4710 = vmatprep.subr.bf16.mxu0 0
    %4711 = vmatpush1.bf16.msra.mxu0 0
    %4712 = vmatprep.subr.bf16.mxu0 0
    %4713 = vmatpush1.bf16.msra.mxu0 0
    %4714 = vmatprep.subr.bf16.mxu0 0
    %4715 = vmatpush1.bf16.msra.mxu0 0
    %4716 = vmatprep.subr.bf16.mxu0 0
    %4717 = vmatpush1.bf16.msra.mxu0 0
    %4718 = vmatprep.subr.bf16.mxu0 0
    %4719 = vmatpush1.bf16.msra.mxu0 0
    %4720 = vmatprep.subr.bf16.mxu0 0
    %4721 = vmatpush1.bf16.msra.mxu0 0
    %4722 = vmatprep.subr.bf16.mxu0 0
    %4723 = vmatpush1.bf16.msra.mxu0 0
    %4724 = vmatprep.subr.bf16.mxu0 0
    %4725 = vmatpush1.bf16.msra.mxu0 0
    %4726 = vmatprep.subr.bf16.mxu0 0
    %4727 = vmatpush1.bf16.msra.mxu0 0
    %4728 = vmatprep.subr.bf16.mxu0 0
    %4729 = vmatpush1.bf16.msra.mxu0 0
    %4730 = vmatprep.subr.bf16.mxu0 0
    %4731 = vmatpush1.bf16.msra.mxu0 0
    %4732 = vmatprep.mubr.bf16.mxu0 0
    %4733 = vmatmul.mubr.bf16.gmra.mrb[0].mxu0 %v4657
    %v4734 = vpop.f32.mrb[0].mxu0
    %v4735 = vadd.f32 0.0, %v4734
    %v4736 = vpop.f32.mrb[0].mxu0
    %v4737 = vpop.f32.mrb[0].mxu0
    %v4738 = vpop.f32.mrb[0].mxu0
    %4739 = vdwg.mxu0
    %v4740 = vadd.f32 %v4652, %v4694
    %v4741 = vxor.u32 %v4740, 2147483648
    %v4742 = vmul.f32 %v4741, 1.442695
    %v4743 = vpow.pop %v4742
    %v4744 = vadd.f32 %v4743, 1.0
    %v4745 = vrcp.pop %v4744
    %v4746 = vmul.f32 1.0, %v4745
    %v4747 = vadd.f32 %v4653, %v4696
    %v4748 = vxor.u32 %v4747, 2147483648
    %v4749 = vmul.f32 %v4748, 1.442695
    %v4750 = vpow.pop %v4749
    %v4751 = vadd.f32 %v4750, 1.0
    %v4752 = vrcp.pop %v4751
    %v4753 = vmul.f32 1.0, %v4752
    %v4754 = vadd.f32 %v4735, %v4642
    %v4755 = vmul.f32 %v4746, %v4754
    %v4756 = vadd.f32 %v4654, %v4755
    %v4757 = vtanh.pop %v4756
    %v4758 = vsub.f32 1.0, %v4753
    %v4759 = vmul.f32 %v4758, %v4757
    %v4760 = vmul.f32 %v4753, %v4650
    %v4761 = vadd.f32 %v4759, %v4760
    %4762 = vst.msk [vmem:[#allocation6 + $0x8] sm:$0xff] %vm4541, %v4761
    %v4763 = vld [vmem:[#allocation2 + $0x30] sm:$0xff]
    %v4764 = vld [vmem:[#allocation2 + $0x38] sm:$0xff]
    %v4765 = vld [vmem:[#allocation2 + $0x40] sm:$0xff]
    %v4766 = vpack.c.bf16 %v4761, %v4761
    %v4768 = vsel %vm4541, %v4766, 0
    %4770 = vmatprep.subr.bf16.mxu0 %v4536
    %4771 = vmatpush1.bf16.msra.mxu0 %v4535
    %4772 = vmatprep.subr.bf16.mxu0 0
    %4773 = vmatpush1.bf16.msra.mxu0 0
    %4774 = vmatprep.subr.bf16.mxu0 0
    %4775 = vmatpush1.bf16.msra.mxu0 0
    %4776 = vmatprep.subr.bf16.mxu0 0
    %4777 = vmatpush1.bf16.msra.mxu0 0
    %4778 = vmatprep.subr.bf16.mxu0 0
    %4779 = vmatpush1.bf16.msra.mxu0 0
    %4780 = vmatprep.subr.bf16.mxu0 0
    %4781 = vmatpush1.bf16.msra.mxu0 0
    %4782 = vmatprep.subr.bf16.mxu0 0
    %4783 = vmatpush1.bf16.msra.mxu0 0
    %4784 = vmatprep.subr.bf16.mxu0 0
    %4785 = vmatpush1.bf16.msra.mxu0 0
    %4786 = vmatprep.subr.bf16.mxu0 0
    %4787 = vmatpush1.bf16.msra.mxu0 0
    %4788 = vmatprep.subr.bf16.mxu0 0
    %4789 = vmatpush1.bf16.msra.mxu0 0
    %4790 = vmatprep.subr.bf16.mxu0 0
    %4791 = vmatpush1.bf16.msra.mxu0 0
    %4792 = vmatprep.subr.bf16.mxu0 0
    %4793 = vmatpush1.bf16.msra.mxu0 0
    %4794 = vmatprep.subr.bf16.mxu0 0
    %4795 = vmatpush1.bf16.msra.mxu0 0
    %4796 = vmatprep.subr.bf16.mxu0 0
    %4797 = vmatpush1.bf16.msra.mxu0 0
    %4798 = vmatprep.subr.bf16.mxu0 0
    %4799 = vmatpush1.bf16.msra.mxu0 0
    %4800 = vmatprep.subr.bf16.mxu0 0
    %4801 = vmatpush1.bf16.msra.mxu0 0
    %4802 = vmatprep.mubr.bf16.mxu0 0
    %4803 = vmatmul.mubr.bf16.gmra.mrb[0].mxu0 %v4768
    %v4804 = vpop.f32.mrb[0].mxu0
    %v4805 = vadd.f32 0.0, %v4804
    %v4806 = vpop.f32.mrb[0].mxu0
    %v4807 = vadd.f32 0.0, %v4806
    %v4808 = vpop.f32.mrb[0].mxu0
    %v4809 = vpop.f32.mrb[0].mxu0
    %4810 = vdwg.mxu0
    %4811 = vmatprep.subr.bf16.mxu0 0
    %4812 = vmatpush1.bf16.msra.mxu0 %v4537
    %4813 = vmatprep.subr.bf16.mxu0 0
    %4814 = vmatpush1.bf16.msra.mxu0 0
    %4815 = vmatprep.subr.bf16.mxu0 0
    %4816 = vmatpush1.bf16.msra.mxu0 0
    %4817 = vmatprep.subr.bf16.mxu0 0
    %4818 = vmatpush1.bf16.msra.mxu0 0
    %4819 = vmatprep.subr.bf16.mxu0 0
    %4820 = vmatpush1.bf16.msra.mxu0 0
    %4821 = vmatprep.subr.bf16.mxu0 0
    %4822 = vmatpush1.bf16.msra.mxu0 0
    %4823 = vmatprep.subr.bf16.mxu0 0
    %4824 = vmatpush1.bf16.msra.mxu0 0
    %4825 = vmatprep.subr.bf16.mxu0 0
    %4826 = vmatpush1.bf16.msra.mxu0 0
    %4827 = vmatprep.subr.bf16.mxu0 0
    %4828 = vmatpush1.bf16.msra.mxu0 0
    %4829 = vmatprep.subr.bf16.mxu0 0
    %4830 = vmatpush1.bf16.msra.mxu0 0
    %4831 = vmatprep.subr.bf16.mxu0 0
    %4832 = vmatpush1.bf16.msra.mxu0 0
    %4833 = vmatprep.subr.bf16.mxu0 0
    %4834 = vmatpush1.bf16.msra.mxu0 0
    %4835 = vmatprep.subr.bf16.mxu0 0
    %4836 = vmatpush1.bf16.msra.mxu0 0
    %4837 = vmatprep.subr.bf16.mxu0 0
    %4838 = vmatpush1.bf16.msra.mxu0 0
    %4839 = vmatprep.subr.bf16.mxu0 0
    %4840 = vmatpush1.bf16.msra.mxu0 0
    %4841 = vmatprep.subr.bf16.mxu0 0
    %4842 = vmatpush1.bf16.msra.mxu0 0
    %4843 = vmatprep.mubr.bf16.mxu0 0
    %4844 = vmatmul.mubr.bf16.gmra.mrb[0].mxu0 %v4768
    %v4845 = vpop.f32.mrb[0].mxu0
    %v4846 = vadd.f32 0.0, %v4845
    %v4847 = vpop.f32.mrb[0].mxu0
    %v4848 = vpop.f32.mrb[0].mxu0
    %v4849 = vpop.f32.mrb[0].mxu0
    %4850 = vdwg.mxu0
    %v4851 = vadd.f32 %v4763, %v4805
    %v4852 = vxor.u32 %v4851, 2147483648
    %v4853 = vmul.f32 %v4852, 1.442695
    %v4854 = vpow.pop %v4853
    %v4855 = vadd.f32 %v4854, 1.0
    %v4856 = vrcp.pop %v4855
    %v4857 = vmul.f32 1.0, %v4856
    %v4858 = vadd.f32 %v4764, %v4807
    %v4859 = vxor.u32 %v4858, 2147483648
    %v4860 = vmul.f32 %v4859, 1.442695
    %v4861 = vpow.pop %v4860
    %v4862 = vadd.f32 %v4861, 1.0
    %v4863 = vrcp.pop %v4862
    %v4864 = vmul.f32 1.0, %v4863
    %v4865 = vadd.f32 %v4846, %v4642
    %v4866 = vmul.f32 %v4857, %v4865
    %v4867 = vadd.f32 %v4765, %v4866
    %v4868 = vtanh.pop %v4867
    %v4869 = vsub.f32 1.0, %v4864
    %v4870 = vmul.f32 %v4869, %v4868
    %v4871 = vmul.f32 %v4864, %v4761
    %v4872 = vadd.f32 %v4870, %v4871
    %4873 = vst.msk [vmem:[#allocation6 + $0x10] sm:$0xff] %vm4541, %v4872
    %v4874 = vld [vmem:[#allocation2 + $0x48] sm:$0xff]
    %v4875 = vld [vmem:[#allocation2 + $0x50] sm:$0xff]
    %v4876 = vld [vmem:[#allocation2 + $0x58] sm:$0xff]
    %v4877 = vpack.c.bf16 %v4872, %v4872
    %v4879 = vsel %vm4541, %v4877, 0
    %4881 = vmatprep.subr.bf16.mxu0 %v4536
    %4882 = vmatpush1.bf16.msra.mxu0 %v4535
    %4883 = vmatprep.subr.bf16.mxu0 0
    %4884 = vmatpush1.bf16.msra.mxu0 0
    %4885 = vmatprep.subr.bf16.mxu0 0
    %4886 = vmatpush1.bf16.msra.mxu0 0
    %4887 = vmatprep.subr.bf16.mxu0 0
    %4888 = vmatpush1.bf16.msra.mxu0 0
    %4889 = vmatprep.subr.bf16.mxu0 0
    %4890 = vmatpush1.bf16.msra.mxu0 0
    %4891 = vmatprep.subr.bf16.mxu0 0
    %4892 = vmatpush1.bf16.msra.mxu0 0
    %4893 = vmatprep.subr.bf16.mxu0 0
    %4894 = vmatpush1.bf16.msra.mxu0 0
    %4895 = vmatprep.subr.bf16.mxu0 0
    %4896 = vmatpush1.bf16.msra.mxu0 0
    %4897 = vmatprep.subr.bf16.mxu0 0
    %4898 = vmatpush1.bf16.msra.mxu0 0
    %4899 = vmatprep.subr.bf16.mxu0 0
    %4900 = vmatpush1.bf16.msra.mxu0 0
    %4901 = vmatprep.subr.bf16.mxu0 0
    %4902 = vmatpush1.bf16.msra.mxu0 0
    %4903 = vmatprep.subr.bf16.mxu0 0
    %4904 = vmatpush1.bf16.msra.mxu0 0
    %4905 = vmatprep.subr.bf16.mxu0 0
    %4906 = vmatpush1.bf16.msra.mxu0 0
    %4907 = vmatprep.subr.bf16.mxu0 0
    %4908 = vmatpush1.bf16.msra.mxu0 0
    %4909 = vmatprep.subr.bf16.mxu0 0
    %4910 = vmatpush1.bf16.msra.mxu0 0
    %4911 = vmatprep.subr.bf16.mxu0 0
    %4912 = vmatpush1.bf16.msra.mxu0 0
    %4913 = vmatprep.mubr.bf16.mxu0 0
    %4914 = vmatmul.mubr.bf16.gmra.mrb[0].mxu0 %v4879
    %v4915 = vpop.f32.mrb[0].mxu0
    %v4916 = vadd.f32 0.0, %v4915
    %v4917 = vpop.f32.mrb[0].mxu0
    %v4918 = vadd.f32 0.0, %v4917
    %v4919 = vpop.f32.mrb[0].mxu0
    %v4920 = vpop.f32.mrb[0].mxu0
    %4921 = vdwg.mxu0
    %4922 = vmatprep.subr.bf16.mxu0 0
    %4923 = vmatpush1.bf16.msra.mxu0 %v4537
    %4924 = vmatprep.subr.bf16.mxu0 0
    %4925 = vmatpush1.bf16.msra.mxu0 0
    %4926 = vmatprep.subr.bf16.mxu0 0
    %4927 = vmatpush1.bf16.msra.mxu0 0
    %4928 = vmatprep.subr.bf16.mxu0 0
    %4929 = vmatpush1.bf16.msra.mxu0 0
    %4930 = vmatprep.subr.bf16.mxu0 0
    %4931 = vmatpush1.bf16.msra.mxu0 0
    %4932 = vmatprep.subr.bf16.mxu0 0
    %4933 = vmatpush1.bf16.msra.mxu0 0
    %4934 = vmatprep.subr.bf16.mxu0 0
    %4935 = vmatpush1.bf16.msra.mxu0 0
    %4936 = vmatprep.subr.bf16.mxu0 0
    %4937 = vmatpush1.bf16.msra.mxu0 0
    %4938 = vmatprep.subr.bf16.mxu0 0
    %4939 = vmatpush1.bf16.msra.mxu0 0
    %4940 = vmatprep.subr.bf16.mxu0 0
    %4941 = vmatpush1.bf16.msra.mxu0 0
    %4942 = vmatprep.subr.bf16.mxu0 0
    %4943 = vmatpush1.bf16.msra.mxu0 0
    %4944 = vmatprep.subr.bf16.mxu0 0
    %4945 = vmatpush1.bf16.msra.mxu0 0
    %4946 = vmatprep.subr.bf16.mxu0 0
    %4947 = vmatpush1.bf16.msra.mxu0 0
    %4948 = vmatprep.subr.bf16.mxu0 0
    %4949 = vmatpush1.bf16.msra.mxu0 0
    %4950 = vmatprep.subr.bf16.mxu0 0
    %4951 = vmatpush1.bf16.msra.mxu0 0
    %4952 = vmatprep.subr.bf16.mxu0 0
    %4953 = vmatpush1.bf16.msra.mxu0 0
    %4954 = vmatprep.mubr.bf16.mxu0 0
    %4955 = vmatmul.mubr.bf16.gmra.mrb[0].mxu0 %v4879
    %v4956 = vpop.f32.mrb[0].mxu0
    %v4957 = vadd.f32 0.0, %v4956
    %v4958 = vpop.f32.mrb[0].mxu0
    %v4959 = vpop.f32.mrb[0].mxu0
    %v4960 = vpop.f32.mrb[0].mxu0
    %4961 = vdwg.mxu0
    %v4962 = vadd.f32 %v4874, %v4916
    %v4963 = vxor.u32 %v4962, 2147483648
    %v4964 = vmul.f32 %v4963, 1.442695
    %v4965 = vpow.pop %v4964
    %v4966 = vadd.f32 %v4965, 1.0
    %v4967 = vrcp.pop %v4966
    %v4968 = vmul.f32 1.0, %v4967
    %v4969 = vadd.f32 %v4875, %v4918
    %v4970 = vxor.u32 %v4969, 2147483648
    %v4971 = vmul.f32 %v4970, 1.442695
    %v4972 = vpow.pop %v4971
    %v4973 = vadd.f32 %v4972, 1.0
    %v4974 = vrcp.pop %v4973
    %v4975 = vmul.f32 1.0, %v4974
    %v4976 = vadd.f32 %v4957, %v4642
    %v4977 = vmul.f32 %v4968, %v4976
    %v4978 = vadd.f32 %v4876, %v4977
    %v4979 = vtanh.pop %v4978
    %v4980 = vsub.f32 1.0, %v4975
    %v4981 = vmul.f32 %v4980, %v4979
    %v4982 = vmul.f32 %v4975, %v4872
    %v4983 = vadd.f32 %v4981, %v4982
    %4984 = vst.msk [vmem:[#allocation6 + $0x18] sm:$0xff] %vm4541, %v4983
    %v4985 = vld [vmem:[#allocation2 + $0x60] sm:$0xff]
    %v4986 = vld [vmem:[#allocation2 + $0x68] sm:$0xff]
    %v4987 = vld [vmem:[#allocation2 + $0x70] sm:$0xff]
    %v4988 = vpack.c.bf16 %v4983, %v4983
    %v4990 = vsel %vm4541, %v4988, 0
    %4992 = vmatprep.subr.bf16.mxu0 %v4536
    %4993 = vmatpush1.bf16.msra.mxu0 %v4535
    %4994 = vmatprep.subr.bf16.mxu0 0
    %4995 = vmatpush1.bf16.msra.mxu0 0
    %4996 = vmatprep.subr.bf16.mxu0 0
    %4997 = vmatpush1.bf16.msra.mxu0 0
    %4998 = vmatprep.subr.bf16.mxu0 0
    %4999 = vmatpush1.bf16.msra.mxu0 0
    %5000 = vmatprep.subr.bf16.mxu0 0
    %5001 = vmatpush1.bf16.msra.mxu0 0
    %5002 = vmatprep.subr.bf16.mxu0 0
    %5003 = vmatpush1.bf16.msra.mxu0 0
    %5004 = vmatprep.subr.bf16.mxu0 0
    %5005 = vmatpush1.bf16.msra.mxu0 0
    %5006 = vmatprep.subr.bf16.mxu0 0
    %5007 = vmatpush1.bf16.msra.mxu0 0
    %5008 = vmatprep.subr.bf16.mxu0 0
    %5009 = vmatpush1.bf16.msra.mxu0 0
    %5010 = vmatprep.subr.bf16.mxu0 0
    %5011 = vmatpush1.bf16.msra.mxu0 0
    %5012 = vmatprep.subr.bf16.mxu0 0
    %5013 = vmatpush1.bf16.msra.mxu0 0
    %5014 = vmatprep.subr.bf16.mxu0 0
    %5015 = vmatpush1.bf16.msra.mxu0 0
    %5016 = vmatprep.subr.bf16.mxu0 0
    %5017 = vmatpush1.bf16.msra.mxu0 0
    %5018 = vmatprep.subr.bf16.mxu0 0
    %5019 = vmatpush1.bf16.msra.mxu0 0
    %5020 = vmatprep.subr.bf16.mxu0 0
    %5021 = vmatpush1.bf16.msra.mxu0 0
    %5022 = vmatprep.subr.bf16.mxu0 0
    %5023 = vmatpush1.bf16.msra.mxu0 0
    %5024 = vmatprep.mubr.bf16.mxu0 0
    %5025 = vmatmul.mubr.bf16.gmra.mrb[0].mxu0 %v4990
    %v5026 = vpop.f32.mrb[0].mxu0
    %v5027 = vadd.f32 0.0, %v5026
    %v5028 = vpop.f32.mrb[0].mxu0
    %v5029 = vadd.f32 0.0, %v5028
    %v5030 = vpop.f32.mrb[0].mxu0
    %v5031 = vpop.f32.mrb[0].mxu0
    %5032 = vdwg.mxu0
    %5033 = vmatprep.subr.bf16.mxu0 0
    %5034 = vmatpush1.bf16.msra.mxu0 %v4537
    %5035 = vmatprep.subr.bf16.mxu0 0
    %5036 = vmatpush1.bf16.msra.mxu0 0
    %5037 = vmatprep.subr.bf16.mxu0 0
    %5038 = vmatpush1.bf16.msra.mxu0 0
    %5039 = vmatprep.subr.bf16.mxu0 0
    %5040 = vmatpush1.bf16.msra.mxu0 0
    %5041 = vmatprep.subr.bf16.mxu0 0
    %5042 = vmatpush1.bf16.msra.mxu0 0
    %5043 = vmatprep.subr.bf16.mxu0 0
    %5044 = vmatpush1.bf16.msra.mxu0 0
    %5045 = vmatprep.subr.bf16.mxu0 0
    %5046 = vmatpush1.bf16.msra.mxu0 0
    %5047 = vmatprep.subr.bf16.mxu0 0
    %5048 = vmatpush1.bf16.msra.mxu0 0
    %5049 = vmatprep.subr.bf16.mxu0 0
    %5050 = vmatpush1.bf16.msra.mxu0 0
    %5051 = vmatprep.subr.bf16.mxu0 0
    %5052 = vmatpush1.bf16.msra.mxu0 0
    %5053 = vmatprep.subr.bf16.mxu0 0
    %5054 = vmatpush1.bf16.msra.mxu0 0
    %5055 = vmatprep.subr.bf16.mxu0 0
    %5056 = vmatpush1.bf16.msra.mxu0 0
    %5057 = vmatprep.subr.bf16.mxu0 0
    %5058 = vmatpush1.bf16.msra.mxu0 0
    %5059 = vmatprep.subr.bf16.mxu0 0
    %5060 = vmatpush1.bf16.msra.mxu0 0
    %5061 = vmatprep.subr.bf16.mxu0 0
    %5062 = vmatpush1.bf16.msra.mxu0 0
    %5063 = vmatprep.subr.bf16.mxu0 0
    %5064 = vmatpush1.bf16.msra.mxu0 0
    %5065 = vmatprep.mubr.bf16.mxu0 0
    %5066 = vmatmul.mubr.bf16.gmra.mrb[0].mxu0 %v4990
    %v5067 = vpop.f32.mrb[0].mxu0
    %v5068 = vadd.f32 0.0, %v5067
    %v5069 = vpop.f32.mrb[0].mxu0
    %v5070 = vpop.f32.mrb[0].mxu0
    %v5071 = vpop.f32.mrb[0].mxu0
    %5072 = vdwg.mxu0
    %v5073 = vadd.f32 %v4985, %v5027
    %v5074 = vxor.u32 %v5073, 2147483648
    %v5075 = vmul.f32 %v5074, 1.442695
    %v5076 = vpow.pop %v5075
    %v5077 = vadd.f32 %v5076, 1.0
    %v5078 = vrcp.pop %v5077
    %v5079 = vmul.f32 1.0, %v5078
    %v5080 = vadd.f32 %v4986, %v5029
    %v5081 = vxor.u32 %v5080, 2147483648
    %v5082 = vmul.f32 %v5081, 1.442695
    %v5083 = vpow.pop %v5082
    %v5084 = vadd.f32 %v5083, 1.0
    %v5085 = vrcp.pop %v5084
    %v5086 = vmul.f32 1.0, %v5085
    %v5087 = vadd.f32 %v5068, %v4642
    %v5088 = vmul.f32 %v5079, %v5087
    %v5089 = vadd.f32 %v4987, %v5088
    %v5090 = vtanh.pop %v5089
    %v5091 = vsub.f32 1.0, %v5086
    %v5092 = vmul.f32 %v5091, %v5090
    %v5093 = vmul.f32 %v5086, %v4983
    %v5094 = vadd.f32 %v5092, %v5093
    %5095 = vst.msk [vmem:[#allocation6 + $0x20] sm:$0xff] %vm4541, %v5094
    %v5096 = vld [vmem:[#allocation2 + $0x78] sm:$0xff]
    %v5097 = vld [vmem:[#allocation2 + $0x80] sm:$0xff]
    %v5098 = vld [vmem:[#allocation2 + $0x88] sm:$0xff]
    %v5099 = vpack.c.bf16 %v5094, %v5094
    %v5101 = vsel %vm4541, %v5099, 0
    %5103 = vmatprep.subr.bf16.mxu0 %v4536
    %5104 = vmatpush1.bf16.msra.mxu0 %v4535
    %5105 = vmatprep.subr.bf16.mxu0 0
    %5106 = vmatpush1.bf16.msra.mxu0 0
    %5107 = vmatprep.subr.bf16.mxu0 0
    %5108 = vmatpush1.bf16.msra.mxu0 0
    %5109 = vmatprep.subr.bf16.mxu0 0
    %5110 = vmatpush1.bf16.msra.mxu0 0
    %5111 = vmatprep.subr.bf16.mxu0 0
    %5112 = vmatpush1.bf16.msra.mxu0 0
    %5113 = vmatprep.subr.bf16.mxu0 0
    %5114 = vmatpush1.bf16.msra.mxu0 0
    %5115 = vmatprep.subr.bf16.mxu0 0
    %5116 = vmatpush1.bf16.msra.mxu0 0
    %5117 = vmatprep.subr.bf16.mxu0 0
    %5118 = vmatpush1.bf16.msra.mxu0 0
    %5119 = vmatprep.subr.bf16.mxu0 0
    %5120 = vmatpush1.bf16.msra.mxu0 0
    %5121 = vmatprep.subr.bf16.mxu0 0
    %5122 = vmatpush1.bf16.msra.mxu0 0
    %5123 = vmatprep.subr.bf16.mxu0 0
    %5124 = vmatpush1.bf16.msra.mxu0 0
    %5125 = vmatprep.subr.bf16.mxu0 0
    %5126 = vmatpush1.bf16.msra.mxu0 0
    %5127 = vmatprep.subr.bf16.mxu0 0
    %5128 = vmatpush1.bf16.msra.mxu0 0
    %5129 = vmatprep.subr.bf16.mxu0 0
    %5130 = vmatpush1.bf16.msra.mxu0 0
    %5131 = vmatprep.subr.bf16.mxu0 0
    %5132 = vmatpush1.bf16.msra.mxu0 0
    %5133 = vmatprep.subr.bf16.mxu0 0
    %5134 = vmatpush1.bf16.msra.mxu0 0
    %5135 = vmatprep.mubr.bf16.mxu0 0
    %5136 = vmatmul.mubr.bf16.gmra.mrb[0].mxu0 %v5101
    %v5137 = vpop.f32.mrb[0].mxu0
    %v5138 = vadd.f32 0.0, %v5137
    %v5139 = vpop.f32.mrb[0].mxu0
    %v5140 = vadd.f32 0.0, %v5139
    %v5141 = vpop.f32.mrb[0].mxu0
    %v5142 = vpop.f32.mrb[0].mxu0
    %5143 = vdwg.mxu0
    %5144 = vmatprep.subr.bf16.mxu0 0
    %5145 = vmatpush1.bf16.msra.mxu0 %v4537
    %5146 = vmatprep.subr.bf16.mxu0 0
    %5147 = vmatpush1.bf16.msra.mxu0 0
    %5148 = vmatprep.subr.bf16.mxu0 0
    %5149 = vmatpush1.bf16.msra.mxu0 0
    %5150 = vmatprep.subr.bf16.mxu0 0
    %5151 = vmatpush1.bf16.msra.mxu0 0
    %5152 = vmatprep.subr.bf16.mxu0 0
    %5153 = vmatpush1.bf16.msra.mxu0 0
    %5154 = vmatprep.subr.bf16.mxu0 0
    %5155 = vmatpush1.bf16.msra.mxu0 0
    %5156 = vmatprep.subr.bf16.mxu0 0
    %5157 = vmatpush1.bf16.msra.mxu0 0
    %5158 = vmatprep.subr.bf16.mxu0 0
    %5159 = vmatpush1.bf16.msra.mxu0 0
    %5160 = vmatprep.subr.bf16.mxu0 0
    %5161 = vmatpush1.bf16.msra.mxu0 0
    %5162 = vmatprep.subr.bf16.mxu0 0
    %5163 = vmatpush1.bf16.msra.mxu0 0
    %5164 = vmatprep.subr.bf16.mxu0 0
    %5165 = vmatpush1.bf16.msra.mxu0 0
    %5166 = vmatprep.subr.bf16.mxu0 0
    %5167 = vmatpush1.bf16.msra.mxu0 0
    %5168 = vmatprep.subr.bf16.mxu0 0
    %5169 = vmatpush1.bf16.msra.mxu0 0
    %5170 = vmatprep.subr.bf16.mxu0 0
    %5171 = vmatpush1.bf16.msra.mxu0 0
    %5172 = vmatprep.subr.bf16.mxu0 0
    %5173 = vmatpush1.bf16.msra.mxu0 0
    %5174 = vmatprep.subr.bf16.mxu0 0
    %5175 = vmatpush1.bf16.msra.mxu0 0
    %5176 = vmatprep.mubr.bf16.mxu0 0
    %5177 = vmatmul.mubr.bf16.gmra.mrb[0].mxu0 %v5101
    %v5178 = vpop.f32.mrb[0].mxu0
    %v5179 = vadd.f32 0.0, %v5178
    %v5180 = vpop.f32.mrb[0].mxu0
    %v5181 = vpop.f32.mrb[0].mxu0
    %v5182 = vpop.f32.mrb[0].mxu0
    %5183 = vdwg.mxu0
    %v5184 = vadd.f32 %v5096, %v5138
    %v5185 = vxor.u32 %v5184, 2147483648
    %v5186 = vmul.f32 %v5185, 1.442695
    %v5187 = vpow.pop %v5186
    %v5188 = vadd.f32 %v5187, 1.0
    %v5189 = vrcp.pop %v5188
    %v5190 = vmul.f32 1.0, %v5189
    %v5191 = vadd.f32 %v5097, %v5140
    %v5192 = vxor.u32 %v5191, 2147483648
    %v5193 = vmul.f32 %v5192, 1.442695
    %v5194 = vpow.pop %v5193
    %v5195 = vadd.f32 %v5194, 1.0
    %v5196 = vrcp.pop %v5195
    %v5197 = vmul.f32 1.0, %v5196
    %v5198 = vadd.f32 %v5179, %v4642
    %v5199 = vmul.f32 %v5190, %v5198
    %v5200 = vadd.f32 %v5098, %v5199
    %v5201 = vtanh.pop %v5200
    %v5202 = vsub.f32 1.0, %v5197
    %v5203 = vmul.f32 %v5202, %v5201
    %v5204 = vmul.f32 %v5197, %v5094
    %v5205 = vadd.f32 %v5203, %v5204
    %5206 = vst.msk [vmem:[#allocation6 + $0x28] sm:$0xff] %vm4541, %v5205
    %v5207 = vld [vmem:[#allocation2 + $0x90] sm:$0xff]
    %v5208 = vld [vmem:[#allocation2 + $0x98] sm:$0xff]
    %v5209 = vld [vmem:[#allocation2 + $0xa0] sm:$0xff]
    %v5210 = vpack.c.bf16 %v5205, %v5205
    %v5212 = vsel %vm4541, %v5210, 0
    %5214 = vmatprep.subr.bf16.mxu0 %v4536
    %5215 = vmatpush1.bf16.msra.mxu0 %v4535
    %5216 = vmatprep.subr.bf16.mxu0 0
    %5217 = vmatpush1.bf16.msra.mxu0 0
    %5218 = vmatprep.subr.bf16.mxu0 0
    %5219 = vmatpush1.bf16.msra.mxu0 0
    %5220 = vmatprep.subr.bf16.mxu0 0
    %5221 = vmatpush1.bf16.msra.mxu0 0
    %5222 = vmatprep.subr.bf16.mxu0 0
    %5223 = vmatpush1.bf16.msra.mxu0 0
    %5224 = vmatprep.subr.bf16.mxu0 0
    %5225 = vmatpush1.bf16.msra.mxu0 0
    %5226 = vmatprep.subr.bf16.mxu0 0
    %5227 = vmatpush1.bf16.msra.mxu0 0
    %5228 = vmatprep.subr.bf16.mxu0 0
    %5229 = vmatpush1.bf16.msra.mxu0 0
    %5230 = vmatprep.subr.bf16.mxu0 0
    %5231 = vmatpush1.bf16.msra.mxu0 0
    %5232 = vmatprep.subr.bf16.mxu0 0
    %5233 = vmatpush1.bf16.msra.mxu0 0
    %5234 = vmatprep.subr.bf16.mxu0 0
    %5235 = vmatpush1.bf16.msra.mxu0 0
    %5236 = vmatprep.subr.bf16.mxu0 0
    %5237 = vmatpush1.bf16.msra.mxu0 0
    %5238 = vmatprep.subr.bf16.mxu0 0
    %5239 = vmatpush1.bf16.msra.mxu0 0
    %5240 = vmatprep.subr.bf16.mxu0 0
    %5241 = vmatpush1.bf16.msra.mxu0 0
    %5242 = vmatprep.subr.bf16.mxu0 0
    %5243 = vmatpush1.bf16.msra.mxu0 0
    %5244 = vmatprep.subr.bf16.mxu0 0
    %5245 = vmatpush1.bf16.msra.mxu0 0
    %5246 = vmatprep.mubr.bf16.mxu0 0
    %5247 = vmatmul.mubr.bf16.gmra.mrb[0].mxu0 %v5212
    %v5248 = vpop.f32.mrb[0].mxu0
    %v5249 = vadd.f32 0.0, %v5248
    %v5250 = vpop.f32.mrb[0].mxu0
    %v5251 = vadd.f32 0.0, %v5250
    %v5252 = vpop.f32.mrb[0].mxu0
    %v5253 = vpop.f32.mrb[0].mxu0
    %5254 = vdwg.mxu0
    %5255 = vmatprep.subr.bf16.mxu0 0
    %5256 = vmatpush1.bf16.msra.mxu0 %v4537
    %5257 = vmatprep.subr.bf16.mxu0 0
    %5258 = vmatpush1.bf16.msra.mxu0 0
    %5259 = vmatprep.subr.bf16.mxu0 0
    %5260 = vmatpush1.bf16.msra.mxu0 0
    %5261 = vmatprep.subr.bf16.mxu0 0
    %5262 = vmatpush1.bf16.msra.mxu0 0
    %5263 = vmatprep.subr.bf16.mxu0 0
    %5264 = vmatpush1.bf16.msra.mxu0 0
    %5265 = vmatprep.subr.bf16.mxu0 0
    %5266 = vmatpush1.bf16.msra.mxu0 0
    %5267 = vmatprep.subr.bf16.mxu0 0
    %5268 = vmatpush1.bf16.msra.mxu0 0
    %5269 = vmatprep.subr.bf16.mxu0 0
    %5270 = vmatpush1.bf16.msra.mxu0 0
    %5271 = vmatprep.subr.bf16.mxu0 0
    %5272 = vmatpush1.bf16.msra.mxu0 0
    %5273 = vmatprep.subr.bf16.mxu0 0
    %5274 = vmatpush1.bf16.msra.mxu0 0
    %5275 = vmatprep.subr.bf16.mxu0 0
    %5276 = vmatpush1.bf16.msra.mxu0 0
    %5277 = vmatprep.subr.bf16.mxu0 0
    %5278 = vmatpush1.bf16.msra.mxu0 0
    %5279 = vmatprep.subr.bf16.mxu0 0
    %5280 = vmatpush1.bf16.msra.mxu0 0
    %5281 = vmatprep.subr.bf16.mxu0 0
    %5282 = vmatpush1.bf16.msra.mxu0 0
    %5283 = vmatprep.subr.bf16.mxu0 0
    %5284 = vmatpush1.bf16.msra.mxu0 0
    %5285 = vmatprep.subr.bf16.mxu0 0
    %5286 = vmatpush1.bf16.msra.mxu0 0
    %5287 = vmatprep.mubr.bf16.mxu0 0
    %5288 = vmatmul.mubr.bf16.gmra.mrb[0].mxu0 %v5212
    %v5289 = vpop.f32.mrb[0].mxu0
    %v5290 = vadd.f32 0.0, %v5289
    %v5291 = vpop.f32.mrb[0].mxu0
    %v5292 = vpop.f32.mrb[0].mxu0
    %v5293 = vpop.f32.mrb[0].mxu0
    %5294 = vdwg.mxu0
    %v5295 = vadd.f32 %v5207, %v5249
    %v5296 = vxor.u32 %v5295, 2147483648
    %v5297 = vmul.f32 %v5296, 1.442695
    %v5298 = vpow.pop %v5297
    %v5299 = vadd.f32 %v5298, 1.0
    %v5300 = vrcp.pop %v5299
    %v5301 = vmul.f32 1.0, %v5300
    %v5302 = vadd.f32 %v5208, %v5251
    %v5303 = vxor.u32 %v5302, 2147483648
    %v5304 = vmul.f32 %v5303, 1.442695
    %v5305 = vpow.pop %v5304
    %v5306 = vadd.f32 %v5305, 1.0
    %v5307 = vrcp.pop %v5306
    %v5308 = vmul.f32 1.0, %v5307
    %v5309 = vadd.f32 %v5290, %v4642
    %v5310 = vmul.f32 %v5301, %v5309
    %v5311 = vadd.f32 %v5209, %v5310
    %v5312 = vtanh.pop %v5311
    %v5313 = vsub.f32 1.0, %v5308
    %v5314 = vmul.f32 %v5313, %v5312
    %v5315 = vmul.f32 %v5308, %v5205
    %v5316 = vadd.f32 %v5314, %v5315
    %5317 = vst.msk [vmem:[#allocation6 + $0x30] sm:$0xff] %vm4541, %v5316
    %v5318 = vld [vmem:[#allocation2 + $0xa8] sm:$0xff]
    %v5319 = vld [vmem:[#allocation2 + $0xb0] sm:$0xff]
    %v5320 = vld [vmem:[#allocation2 + $0xb8] sm:$0xff]
    %v5321 = vpack.c.bf16 %v5316, %v5316
    %v5323 = vsel %vm4541, %v5321, 0
    %5325 = vmatprep.subr.bf16.mxu0 %v4536
    %5326 = vmatpush1.bf16.msra.mxu0 %v4535
    %5327 = vmatprep.subr.bf16.mxu0 0
    %5328 = vmatpush1.bf16.msra.mxu0 0
    %5329 = vmatprep.subr.bf16.mxu0 0
    %5330 = vmatpush1.bf16.msra.mxu0 0
    %5331 = vmatprep.subr.bf16.mxu0 0
    %5332 = vmatpush1.bf16.msra.mxu0 0
    %5333 = vmatprep.subr.bf16.mxu0 0
    %5334 = vmatpush1.bf16.msra.mxu0 0
    %5335 = vmatprep.subr.bf16.mxu0 0
    %5336 = vmatpush1.bf16.msra.mxu0 0
    %5337 = vmatprep.subr.bf16.mxu0 0
    %5338 = vmatpush1.bf16.msra.mxu0 0
    %5339 = vmatprep.subr.bf16.mxu0 0
    %5340 = vmatpush1.bf16.msra.mxu0 0
    %5341 = vmatprep.subr.bf16.mxu0 0
    %5342 = vmatpush1.bf16.msra.mxu0 0
    %5343 = vmatprep.subr.bf16.mxu0 0
    %5344 = vmatpush1.bf16.msra.mxu0 0
    %5345 = vmatprep.subr.bf16.mxu0 0
    %5346 = vmatpush1.bf16.msra.mxu0 0
    %5347 = vmatprep.subr.bf16.mxu0 0
    %5348 = vmatpush1.bf16.msra.mxu0 0
    %5349 = vmatprep.subr.bf16.mxu0 0
    %5350 = vmatpush1.bf16.msra.mxu0 0
    %5351 = vmatprep.subr.bf16.mxu0 0
    %5352 = vmatpush1.bf16.msra.mxu0 0
    %5353 = vmatprep.subr.bf16.mxu0 0
    %5354 = vmatpush1.bf16.msra.mxu0 0
    %5355 = vmatprep.subr.bf16.mxu0 0
    %5356 = vmatpush1.bf16.msra.mxu0 0
    %5357 = vmatprep.mubr.bf16.mxu0 0
    %5358 = vmatmul.mubr.bf16.gmra.mrb[0].mxu0 %v5323
    %v5359 = vpop.f32.mrb[0].mxu0
    %v5360 = vadd.f32 0.0, %v5359
    %v5361 = vpop.f32.mrb[0].mxu0
    %v5362 = vadd.f32 0.0, %v5361
    %v5363 = vpop.f32.mrb[0].mxu0
    %v5364 = vpop.f32.mrb[0].mxu0
    %5365 = vdwg.mxu0
    %5366 = vmatprep.subr.bf16.mxu0 0
    %5367 = vmatpush1.bf16.msra.mxu0 %v4537
    %5368 = vmatprep.subr.bf16.mxu0 0
    %5369 = vmatpush1.bf16.msra.mxu0 0
    %5370 = vmatprep.subr.bf16.mxu0 0
    %5371 = vmatpush1.bf16.msra.mxu0 0
    %5372 = vmatprep.subr.bf16.mxu0 0
    %5373 = vmatpush1.bf16.msra.mxu0 0
    %5374 = vmatprep.subr.bf16.mxu0 0
    %5375 = vmatpush1.bf16.msra.mxu0 0
    %5376 = vmatprep.subr.bf16.mxu0 0
    %5377 = vmatpush1.bf16.msra.mxu0 0
    %5378 = vmatprep.subr.bf16.mxu0 0
    %5379 = vmatpush1.bf16.msra.mxu0 0
    %5380 = vmatprep.subr.bf16.mxu0 0
    %5381 = vmatpush1.bf16.msra.mxu0 0
    %5382 = vmatprep.subr.bf16.mxu0 0
    %5383 = vmatpush1.bf16.msra.mxu0 0
    %5384 = vmatprep.subr.bf16.mxu0 0
    %5385 = vmatpush1.bf16.msra.mxu0 0
    %5386 = vmatprep.subr.bf16.mxu0 0
    %5387 = vmatpush1.bf16.msra.mxu0 0
    %5388 = vmatprep.subr.bf16.mxu0 0
    %5389 = vmatpush1.bf16.msra.mxu0 0
    %5390 = vmatprep.subr.bf16.mxu0 0
    %5391 = vmatpush1.bf16.msra.mxu0 0
    %5392 = vmatprep.subr.bf16.mxu0 0
    %5393 = vmatpush1.bf16.msra.mxu0 0
    %5394 = vmatprep.subr.bf16.mxu0 0
    %5395 = vmatpush1.bf16.msra.mxu0 0
    %5396 = vmatprep.subr.bf16.mxu0 0
    %5397 = vmatpush1.bf16.msra.mxu0 0
    %5398 = vmatprep.mubr.bf16.mxu0 0
    %5399 = vmatmul.mubr.bf16.gmra.mrb[0].mxu0 %v5323
    %v5400 = vpop.f32.mrb[0].mxu0
    %v5401 = vadd.f32 0.0, %v5400
    %v5402 = vpop.f32.mrb[0].mxu0
    %v5403 = vpop.f32.mrb[0].mxu0
    %v5404 = vpop.f32.mrb[0].mxu0
    %5405 = vdwg.mxu0
    %v5406 = vadd.f32 %v5318, %v5360
    %v5407 = vxor.u32 %v5406, 2147483648
    %v5408 = vmul.f32 %v5407, 1.442695
    %v5409 = vpow.pop %v5408
    %v5410 = vadd.f32 %v5409, 1.0
    %v5411 = vrcp.pop %v5410
    %v5412 = vmul.f32 1.0, %v5411
    %v5413 = vadd.f32 %v5319, %v5362
    %v5414 = vxor.u32 %v5413, 2147483648
    %v5415 = vmul.f32 %v5414, 1.442695
    %v5416 = vpow.pop %v5415
    %v5417 = vadd.f32 %v5416, 1.0
    %v5418 = vrcp.pop %v5417
    %v5419 = vmul.f32 1.0, %v5418
    %v5420 = vadd.f32 %v5401, %v4642
    %v5421 = vmul.f32 %v5412, %v5420
    %v5422 = vadd.f32 %v5320, %v5421
    %v5423 = vtanh.pop %v5422
    %v5424 = vsub.f32 1.0, %v5419
    %v5425 = vmul.f32 %v5424, %v5423
    %v5426 = vmul.f32 %v5419, %v5316
    %v5427 = vadd.f32 %v5425, %v5426
    %5428 = vst.msk [vmem:[#allocation6 + $0x38] sm:$0xff] %vm4541, %v5427
    %v5429 = vld [vmem:[#allocation6] sm:$0xff]
    %v5430 = vld [vmem:[#allocation6 + $0x8] sm:$0xff]
    %v5431 = vld [vmem:[#allocation6 + $0x10] sm:$0xff]
    %v5432 = vld [vmem:[#allocation6 + $0x18] sm:$0xff]
    %v5433 = vld [vmem:[#allocation6 + $0x20] sm:$0xff]
    %v5434 = vld [vmem:[#allocation6 + $0x28] sm:$0xff]
    %v5435 = vld [vmem:[#allocation6 + $0x30] sm:$0xff]
    %v5436 = vld [vmem:[#allocation6 + $0x38] sm:$0xff]
    %v5437 = vpack.c.bf16 %v5430, %v5429
    %v5438 = vpack.c.bf16 %v5432, %v5431
    %v5439 = vpack.c.bf16 %v5434, %v5433
    %v5440 = vpack.c.bf16 %v5436, %v5435
    %v5441 = vld [vmem:[#allocation28] sm:$0x3f]
    %v5442 = vld [vmem:[#allocation25] sm:$0xff]
    %v5443 = vld [vmem:[#allocation25 + $0x8] sm:$0xf]
    %v5444 = vld [vmem:[#allocation25 + $0xc] sm:$0xff]
    %v5445 = vld [vmem:[#allocation25 + $0x14] sm:$0xf]
    %v5447 = vlaneseq
    %v5448 = vshrl.u32 %v5447, 7
    %v5449 = vsub.s32 0, %v5448
    %v5450 = vrot.slane %v5441, %v5449
    %v5451 = vlaneseq
    %v5452 = vshrl.u32 %v5451, 7
    %v5453 = vsub.s32 2, %v5452
    %v5454 = vrot.slane %v5441, %v5453
    %v5455 = vlaneseq
    %v5456 = vshrl.u32 %v5455, 7
    %v5457 = vsub.s32 4, %v5456
    %v5458 = vrot.slane %v5441, %v5457
    %v5462 = vlaneseq
    %v5463 = vshrl.u32 %v5462, 7
    %v5464 = vsub.s32 0, %v5463
    %v5465 = vrot.slane %v5450, %v5464
    %v5466 = vlaneseq
    %v5467 = vshrl.u32 %v5466, 7
    %v5468 = vsub.s32 0, %v5467
    %v5469 = vrot.slane %v5454, %v5468
    %v5470 = vlaneseq
    %v5471 = vshrl.u32 %v5470, 7
    %v5472 = vsub.s32 0, %v5471
    %v5473 = vrot.slane %v5458, %v5472
    %v5478 = vunpack.c.l.b16 %v5442
    %v5479 = vunpack.c.h.b16 %v5442
    %v5480 = vunpack.c.l.b16 %v5443
    %v5481 = vunpack.c.l.b16 %v5444
    %v5482 = vunpack.c.h.b16 %v5444
    %v5483 = vunpack.c.l.b16 %v5445
    %v5484 = vpack.c.b16 %v5481, %v5478
    %v5485 = vpack.c.b16 %v5482, %v5479
    %v5486 = vpack.c.b16 %v5483, %v5480
    %v5491 = vsel %vm4541, %v5437, 0
    %v5494 = vsel %vm4541, %v5438, 0
    %v5497 = vsel %vm4541, %v5439, 0
    %v5500 = vsel %vm4541, %v5440, 0
    %5502 = vmatprep.subr.bf16.mxu0 %v5485
    %5503 = vmatpush1.bf16.msra.mxu0 %v5484
    %5504 = vmatprep.subr.bf16.mxu0 0
    %5505 = vmatpush1.bf16.msra.mxu0 0
    %5506 = vmatprep.subr.bf16.mxu0 0
    %5507 = vmatpush1.bf16.msra.mxu0 0
    %5508 = vmatprep.subr.bf16.mxu0 0
    %5509 = vmatpush1.bf16.msra.mxu0 0
    %5510 = vmatprep.subr.bf16.mxu0 0
    %5511 = vmatpush1.bf16.msra.mxu0 0
    %5512 = vmatprep.subr.bf16.mxu0 0
    %5513 = vmatpush1.bf16.msra.mxu0 0
    %5514 = vmatprep.subr.bf16.mxu0 0
    %5515 = vmatpush1.bf16.msra.mxu0 0
    %5516 = vmatprep.subr.bf16.mxu0 0
    %5517 = vmatpush1.bf16.msra.mxu0 0
    %5518 = vmatprep.subr.bf16.mxu0 0
    %5519 = vmatpush1.bf16.msra.mxu0 0
    %5520 = vmatprep.subr.bf16.mxu0 0
    %5521 = vmatpush1.bf16.msra.mxu0 0
    %5522 = vmatprep.subr.bf16.mxu0 0
    %5523 = vmatpush1.bf16.msra.mxu0 0
    %5524 = vmatprep.subr.bf16.mxu0 0
    %5525 = vmatpush1.bf16.msra.mxu0 0
    %5526 = vmatprep.subr.bf16.mxu0 0
    %5527 = vmatpush1.bf16.msra.mxu0 0
    %5528 = vmatprep.subr.bf16.mxu0 0
    %5529 = vmatpush1.bf16.msra.mxu0 0
    %5530 = vmatprep.subr.bf16.mxu0 0
    %5531 = vmatpush1.bf16.msra.mxu0 0
    %5532 = vmatprep.subr.bf16.mxu0 0
    %5533 = vmatpush1.bf16.msra.mxu0 0
    %5534 = vmatprep.mubr.bf16.mxu0 0
    %5535 = vmatmul.mubr.bf16.gmra.mrb[0].mxu0 %v5491
    %v5536 = vpop.f32.mrb[0].mxu0
    %v5537 = vadd.f32 %v5465, %v5536
    %v5538 = vpop.f32.mrb[0].mxu0
    %v5539 = vadd.f32 %v5469, %v5538
    %v5540 = vpop.f32.mrb[0].mxu0
    %v5541 = vadd.f32 %v5465, %v5540
    %v5542 = vpop.f32.mrb[0].mxu0
    %v5543 = vadd.f32 %v5469, %v5542
    %5544 = vmatprep.mubr.bf16.mxu0 0
    %5545 = vmatmul.mubr.bf16.gmra.mrb[0].mxu0 %v5494
    %v5546 = vpop.f32.mrb[0].mxu0
    %v5547 = vadd.f32 %v5465, %v5546
    %v5548 = vpop.f32.mrb[0].mxu0
    %v5549 = vadd.f32 %v5469, %v5548
    %v5550 = vpop.f32.mrb[0].mxu0
    %v5551 = vadd.f32 %v5465, %v5550
    %v5552 = vpop.f32.mrb[0].mxu0
    %v5553 = vadd.f32 %v5469, %v5552
    %5554 = vmatprep.mubr.bf16.mxu0 0
    %5555 = vmatmul.mubr.bf16.gmra.mrb[0].mxu0 %v5497
    %v5556 = vpop.f32.mrb[0].mxu0
    %v5557 = vadd.f32 %v5465, %v5556
    %v5558 = vpop.f32.mrb[0].mxu0
    %v5559 = vadd.f32 %v5469, %v5558
    %v5560 = vpop.f32.mrb[0].mxu0
    %v5561 = vadd.f32 %v5465, %v5560
    %v5562 = vpop.f32.mrb[0].mxu0
    %v5563 = vadd.f32 %v5469, %v5562
    %5564 = vmatprep.mubr.bf16.mxu0 0
    %5565 = vmatmul.mubr.bf16.gmra.mrb[0].mxu0 %v5500
    %v5566 = vpop.f32.mrb[0].mxu0
    %v5567 = vadd.f32 %v5465, %v5566
    %v5568 = vpop.f32.mrb[0].mxu0
    %v5569 = vadd.f32 %v5469, %v5568
    %v5570 = vpop.f32.mrb[0].mxu0
    %v5571 = vadd.f32 %v5465, %v5570
    %v5572 = vpop.f32.mrb[0].mxu0
    %v5573 = vadd.f32 %v5469, %v5572
    %5574 = vdwg.mxu0
    %5575 = vmatprep.subr.bf16.mxu0 0
    %5576 = vmatpush1.bf16.msra.mxu0 %v5486
    %5577 = vmatprep.subr.bf16.mxu0 0
    %5578 = vmatpush1.bf16.msra.mxu0 0
    %5579 = vmatprep.subr.bf16.mxu0 0
    %5580 = vmatpush1.bf16.msra.mxu0 0
    %5581 = vmatprep.subr.bf16.mxu0 0
    %5582 = vmatpush1.bf16.msra.mxu0 0
    %5583 = vmatprep.subr.bf16.mxu0 0
    %5584 = vmatpush1.bf16.msra.mxu0 0
    %5585 = vmatprep.subr.bf16.mxu0 0
    %5586 = vmatpush1.bf16.msra.mxu0 0
    %5587 = vmatprep.subr.bf16.mxu0 0
    %5588 = vmatpush1.bf16.msra.mxu0 0
    %5589 = vmatprep.subr.bf16.mxu0 0
    %5590 = vmatpush1.bf16.msra.mxu0 0
    %5591 = vmatprep.subr.bf16.mxu0 0
    %5592 = vmatpush1.bf16.msra.mxu0 0
    %5593 = vmatprep.subr.bf16.mxu0 0
    %5594 = vmatpush1.bf16.msra.mxu0 0
    %5595 = vmatprep.subr.bf16.mxu0 0
    %5596 = vmatpush1.bf16.msra.mxu0 0
    %5597 = vmatprep.subr.bf16.mxu0 0
    %5598 = vmatpush1.bf16.msra.mxu0 0
    %5599 = vmatprep.subr.bf16.mxu0 0
    %5600 = vmatpush1.bf16.msra.mxu0 0
    %5601 = vmatprep.subr.bf16.mxu0 0
    %5602 = vmatpush1.bf16.msra.mxu0 0
    %5603 = vmatprep.subr.bf16.mxu0 0
    %5604 = vmatpush1.bf16.msra.mxu0 0
    %5605 = vmatprep.subr.bf16.mxu0 0
    %5606 = vmatpush1.bf16.msra.mxu0 0
    %5607 = vmatprep.mubr.bf16.mxu0 0
    %5608 = vmatmul.mubr.bf16.gmra.mrb[0].mxu0 %v5491
    %v5609 = vpop.f32.mrb[0].mxu0
    %v5610 = vadd.f32 %v5473, %v5609
    %v5611 = vpop.f32.mrb[0].mxu0
    %v5612 = vpop.f32.mrb[0].mxu0
    %v5613 = vadd.f32 %v5473, %v5612
    %v5614 = vpop.f32.mrb[0].mxu0
    %5615 = vmatprep.mubr.bf16.mxu0 0
    %5616 = vmatmul.mubr.bf16.gmra.mrb[0].mxu0 %v5494
    %v5617 = vpop.f32.mrb[0].mxu0
    %v5618 = vadd.f32 %v5473, %v5617
    %v5619 = vpop.f32.mrb[0].mxu0
    %v5620 = vpop.f32.mrb[0].mxu0
    %v5621 = vadd.f32 %v5473, %v5620
    %v5622 = vpop.f32.mrb[0].mxu0
    %5623 = vmatprep.mubr.bf16.mxu0 0
    %5624 = vmatmul.mubr.bf16.gmra.mrb[0].mxu0 %v5497
    %v5625 = vpop.f32.mrb[0].mxu0
    %v5626 = vadd.f32 %v5473, %v5625
    %v5627 = vpop.f32.mrb[0].mxu0
    %v5628 = vpop.f32.mrb[0].mxu0
    %v5629 = vadd.f32 %v5473, %v5628
    %v5630 = vpop.f32.mrb[0].mxu0
    %5631 = vmatprep.mubr.bf16.mxu0 0
    %5632 = vmatmul.mubr.bf16.gmra.mrb[0].mxu0 %v5500
    %v5633 = vpop.f32.mrb[0].mxu0
    %v5634 = vadd.f32 %v5473, %v5633
    %v5635 = vpop.f32.mrb[0].mxu0
    %v5636 = vpop.f32.mrb[0].mxu0
    %v5637 = vadd.f32 %v5473, %v5636
    %v5638 = vpop.f32.mrb[0].mxu0
    %5639 = vdwg.mxu0
    %5640 = vst [vmem:[#allocation2] sm:$0xff] %v5537
    %5641 = vst [vmem:[#allocation2 + $0x8] sm:$0xff] %v5539
    %5642 = vst [vmem:[#allocation2 + $0x10] sm:$0xff] %v5610
    %5643 = vst [vmem:[#allocation2 + $0x18] sm:$0xff] %v5541
    %5644 = vst [vmem:[#allocation2 + $0x20] sm:$0xff] %v5543
    %5645 = vst [vmem:[#allocation2 + $0x28] sm:$0xff] %v5613
    %5646 = vst [vmem:[#allocation2 + $0x30] sm:$0xff] %v5547
    %5647 = vst [vmem:[#allocation2 + $0x38] sm:$0xff] %v5549
    %5648 = vst [vmem:[#allocation2 + $0x40] sm:$0xff] %v5618
    %5649 = vst [vmem:[#allocation2 + $0x48] sm:$0xff] %v5551
    %5650 = vst [vmem:[#allocation2 + $0x50] sm:$0xff] %v5553
    %5651 = vst [vmem:[#allocation2 + $0x58] sm:$0xff] %v5621
    %5652 = vst [vmem:[#allocation2 + $0x60] sm:$0xff] %v5557
    %5653 = vst [vmem:[#allocation2 + $0x68] sm:$0xff] %v5559
    %5654 = vst [vmem:[#allocation2 + $0x70] sm:$0xff] %v5626
    %5655 = vst [vmem:[#allocation2 + $0x78] sm:$0xff] %v5561
    %5656 = vst [vmem:[#allocation2 + $0x80] sm:$0xff] %v5563
    %5657 = vst [vmem:[#allocation2 + $0x88] sm:$0xff] %v5629
    %5658 = vst [vmem:[#allocation2 + $0x90] sm:$0xff] %v5567
    %5659 = vst [vmem:[#allocation2 + $0x98] sm:$0xff] %v5569
    %5660 = vst [vmem:[#allocation2 + $0xa0] sm:$0xff] %v5634
    %5661 = vst [vmem:[#allocation2 + $0xa8] sm:$0xff] %v5571
    %5662 = vst [vmem:[#allocation2 + $0xb0] sm:$0xff] %v5573
    %5663 = vst [vmem:[#allocation2 + $0xb8] sm:$0xff] %v5637
    %v5664 = vld [vmem:[#allocation27] sm:$0xff]
    %v5665 = vld [vmem:[#allocation27 + $0x8] sm:$0xf]
    %v5666 = vld [vmem:[#allocation27 + $0xc] sm:$0xff]
    %v5667 = vld [vmem:[#allocation27 + $0x14] sm:$0xf]
    %v5668 = vld [vmem:[#allocation2] sm:$0xff]
    %v5669 = vld [vmem:[#allocation2 + $0x8] sm:$0xff]
    %v5670 = vld [vmem:[#allocation2 + $0x10] sm:$0xff]
    %v5675 = vunpack.c.l.b16 %v5664
    %v5676 = vunpack.c.h.b16 %v5664
    %v5677 = vunpack.c.l.b16 %v5665
    %v5678 = vunpack.c.l.b16 %v5666
    %v5679 = vunpack.c.h.b16 %v5666
    %v5680 = vunpack.c.l.b16 %v5667
    %v5681 = vpack.c.b16 %v5678, %v5675
    %v5682 = vpack.c.b16 %v5679, %v5676
    %v5683 = vpack.c.b16 %v5680, %v5677
    %5687 = vmatprep.subr.bf16.mxu0 %v5682
    %5688 = vmatpush1.bf16.msra.mxu0 %v5681
    %5689 = vmatprep.subr.bf16.mxu0 0
    %5690 = vmatpush1.bf16.msra.mxu0 0
    %5691 = vmatprep.subr.bf16.mxu0 0
    %5692 = vmatpush1.bf16.msra.mxu0 0
    %5693 = vmatprep.subr.bf16.mxu0 0
    %5694 = vmatpush1.bf16.msra.mxu0 0
    %5695 = vmatprep.subr.bf16.mxu0 0
    %5696 = vmatpush1.bf16.msra.mxu0 0
    %5697 = vmatprep.subr.bf16.mxu0 0
    %5698 = vmatpush1.bf16.msra.mxu0 0
    %5699 = vmatprep.subr.bf16.mxu0 0
    %5700 = vmatpush1.bf16.msra.mxu0 0
    %5701 = vmatprep.subr.bf16.mxu0 0
    %5702 = vmatpush1.bf16.msra.mxu0 0
    %5703 = vmatprep.subr.bf16.mxu0 0
    %5704 = vmatpush1.bf16.msra.mxu0 0
    %5705 = vmatprep.subr.bf16.mxu0 0
    %5706 = vmatpush1.bf16.msra.mxu0 0
    %5707 = vmatprep.subr.bf16.mxu0 0
    %5708 = vmatpush1.bf16.msra.mxu0 0
    %5709 = vmatprep.subr.bf16.mxu0 0
    %5710 = vmatpush1.bf16.msra.mxu0 0
    %5711 = vmatprep.subr.bf16.mxu0 0
    %5712 = vmatpush1.bf16.msra.mxu0 0
    %5713 = vmatprep.subr.bf16.mxu0 0
    %5714 = vmatpush1.bf16.msra.mxu0 0
    %5715 = vmatprep.subr.bf16.mxu0 0
    %5716 = vmatpush1.bf16.msra.mxu0 0
    %5717 = vmatprep.subr.bf16.mxu0 0
    %5718 = vmatpush1.bf16.msra.mxu0 0
    %5719 = vmatprep.mubr.bf16.mxu0 0
    %5720 = vmatmul.mubr.bf16.gmra.mrb[0].mxu0 %v4542
    %v5721 = vpop.f32.mrb[0].mxu0
    %v5722 = vadd.f32 0.0, %v5721
    %v5723 = vpop.f32.mrb[0].mxu0
    %v5724 = vadd.f32 0.0, %v5723
    %v5725 = vpop.f32.mrb[0].mxu0
    %v5726 = vpop.f32.mrb[0].mxu0
    %5727 = vdwg.mxu0
    %5728 = vmatprep.subr.bf16.mxu0 0
    %5729 = vmatpush1.bf16.msra.mxu0 %v5683
    %5730 = vmatprep.subr.bf16.mxu0 0
    %5731 = vmatpush1.bf16.msra.mxu0 0
    %5732 = vmatprep.subr.bf16.mxu0 0
    %5733 = vmatpush1.bf16.msra.mxu0 0
    %5734 = vmatprep.subr.bf16.mxu0 0
    %5735 = vmatpush1.bf16.msra.mxu0 0
    %5736 = vmatprep.subr.bf16.mxu0 0
    %5737 = vmatpush1.bf16.msra.mxu0 0
    %5738 = vmatprep.subr.bf16.mxu0 0
    %5739 = vmatpush1.bf16.msra.mxu0 0
    %5740 = vmatprep.subr.bf16.mxu0 0
    %5741 = vmatpush1.bf16.msra.mxu0 0
    %5742 = vmatprep.subr.bf16.mxu0 0
    %5743 = vmatpush1.bf16.msra.mxu0 0
    %5744 = vmatprep.subr.bf16.mxu0 0
    %5745 = vmatpush1.bf16.msra.mxu0 0
    %5746 = vmatprep.subr.bf16.mxu0 0
    %5747 = vmatpush1.bf16.msra.mxu0 0
    %5748 = vmatprep.subr.bf16.mxu0 0
    %5749 = vmatpush1.bf16.msra.mxu0 0
    %5750 = vmatprep.subr.bf16.mxu0 0
    %5751 = vmatpush1.bf16.msra.mxu0 0
    %5752 = vmatprep.subr.bf16.mxu0 0
    %5753 = vmatpush1.bf16.msra.mxu0 0
    %5754 = vmatprep.subr.bf16.mxu0 0
    %5755 = vmatpush1.bf16.msra.mxu0 0
    %5756 = vmatprep.subr.bf16.mxu0 0
    %5757 = vmatpush1.bf16.msra.mxu0 0
    %5758 = vmatprep.subr.bf16.mxu0 0
    %5759 = vmatpush1.bf16.msra.mxu0 0
    %5760 = vmatprep.mubr.bf16.mxu0 0
    %5761 = vmatmul.mubr.bf16.gmra.mrb[0].mxu0 %v4542
    %v5762 = vpop.f32.mrb[0].mxu0
    %v5763 = vadd.f32 0.0, %v5762
    %v5764 = vpop.f32.mrb[0].mxu0
    %v5765 = vpop.f32.mrb[0].mxu0
    %v5766 = vpop.f32.mrb[0].mxu0
    %5767 = vdwg.mxu0
    %v5768 = vadd.f32 %v5668, %v5722
    %v5769 = vxor.u32 %v5768, 2147483648
    %v5770 = vmul.f32 %v5769, 1.442695
    %v5771 = vpow.pop %v5770
    %v5772 = vadd.f32 %v5771, 1.0
    %v5773 = vrcp.pop %v5772
    %v5774 = vmul.f32 1.0, %v5773
    %v5775 = vadd.f32 %v5669, %v5724
    %v5776 = vxor.u32 %v5775, 2147483648
    %v5777 = vmul.f32 %v5776, 1.442695
    %v5778 = vpow.pop %v5777
    %v5779 = vadd.f32 %v5778, 1.0
    %v5780 = vrcp.pop %v5779
    %v5781 = vmul.f32 1.0, %v5780
    %v5782 = vlaneseq
    %v5783 = vshrl.u32 %v5782, 7
    %v5784 = vsub.s32 1, %v5783
    %v5785 = vrot.slane %v5441, %v5784
    %v5786 = vadd.f32 %v5763, %v5785
    %v5787 = vmul.f32 %v5774, %v5786
    %v5788 = vadd.f32 %v5670, %v5787
    %v5789 = vtanh.pop %v5788
    %v5790 = vsub.f32 1.0, %v5781
    %v5791 = vmul.f32 %v5790, %v5789
    %v5792 = vmul.f32 %v5781, 0.0
    %v5793 = vadd.f32 %v5791, %v5792
    %5794 = vst.msk [vmem:[#allocation7] sm:$0xff] %vm4541, %v5793
    %v5795 = vld [vmem:[#allocation2 + $0x18] sm:$0xff]
    %v5796 = vld [vmem:[#allocation2 + $0x20] sm:$0xff]
    %v5797 = vld [vmem:[#allocation2 + $0x28] sm:$0xff]
    %v5798 = vpack.c.bf16 %v5793, %v5793
    %v5800 = vsel %vm4541, %v5798, 0
    %5802 = vmatprep.subr.bf16.mxu0 %v5682
    %5803 = vmatpush1.bf16.msra.mxu0 %v5681
    %5804 = vmatprep.subr.bf16.mxu0 0
    %5805 = vmatpush1.bf16.msra.mxu0 0
    %5806 = vmatprep.subr.bf16.mxu0 0
    %5807 = vmatpush1.bf16.msra.mxu0 0
    %5808 = vmatprep.subr.bf16.mxu0 0
    %5809 = vmatpush1.bf16.msra.mxu0 0
    %5810 = vmatprep.subr.bf16.mxu0 0
    %5811 = vmatpush1.bf16.msra.mxu0 0
    %5812 = vmatprep.subr.bf16.mxu0 0
    %5813 = vmatpush1.bf16.msra.mxu0 0
    %5814 = vmatprep.subr.bf16.mxu0 0
    %5815 = vmatpush1.bf16.msra.mxu0 0
    %5816 = vmatprep.subr.bf16.mxu0 0
    %5817 = vmatpush1.bf16.msra.mxu0 0
    %5818 = vmatprep.subr.bf16.mxu0 0
    %5819 = vmatpush1.bf16.msra.mxu0 0
    %5820 = vmatprep.subr.bf16.mxu0 0
    %5821 = vmatpush1.bf16.msra.mxu0 0
    %5822 = vmatprep.subr.bf16.mxu0 0
    %5823 = vmatpush1.bf16.msra.mxu0 0
    %5824 = vmatprep.subr.bf16.mxu0 0
    %5825 = vmatpush1.bf16.msra.mxu0 0
    %5826 = vmatprep.subr.bf16.mxu0 0
    %5827 = vmatpush1.bf16.msra.mxu0 0
    %5828 = vmatprep.subr.bf16.mxu0 0
    %5829 = vmatpush1.bf16.msra.mxu0 0
    %5830 = vmatprep.subr.bf16.mxu0 0
    %5831 = vmatpush1.bf16.msra.mxu0 0
    %5832 = vmatprep.subr.bf16.mxu0 0
    %5833 = vmatpush1.bf16.msra.mxu0 0
    %5834 = vmatprep.mubr.bf16.mxu0 0
    %5835 = vmatmul.mubr.bf16.gmra.mrb[0].mxu0 %v5800
    %v5836 = vpop.f32.mrb[0].mxu0
    %v5837 = vadd.f32 0.0, %v5836
    %v5838 = vpop.f32.mrb[0].mxu0
    %v5839 = vadd.f32 0.0, %v5838
    %v5840 = vpop.f32.mrb[0].mxu0
    %v5841 = vpop.f32.mrb[0].mxu0
    %5842 = vdwg.mxu0
    %5843 = vmatprep.subr.bf16.mxu0 0
    %5844 = vmatpush1.bf16.msra.mxu0 %v5683
    %5845 = vmatprep.subr.bf16.mxu0 0
    %5846 = vmatpush1.bf16.msra.mxu0 0
    %5847 = vmatprep.subr.bf16.mxu0 0
    %5848 = vmatpush1.bf16.msra.mxu0 0
    %5849 = vmatprep.subr.bf16.mxu0 0
    %5850 = vmatpush1.bf16.msra.mxu0 0
    %5851 = vmatprep.subr.bf16.mxu0 0
    %5852 = vmatpush1.bf16.msra.mxu0 0
    %5853 = vmatprep.subr.bf16.mxu0 0
    %5854 = vmatpush1.bf16.msra.mxu0 0
    %5855 = vmatprep.subr.bf16.mxu0 0
    %5856 = vmatpush1.bf16.msra.mxu0 0
    %5857 = vmatprep.subr.bf16.mxu0 0
    %5858 = vmatpush1.bf16.msra.mxu0 0
    %5859 = vmatprep.subr.bf16.mxu0 0
    %5860 = vmatpush1.bf16.msra.mxu0 0
    %5861 = vmatprep.subr.bf16.mxu0 0
    %5862 = vmatpush1.bf16.msra.mxu0 0
    %5863 = vmatprep.subr.bf16.mxu0 0
    %5864 = vmatpush1.bf16.msra.mxu0 0
    %5865 = vmatprep.subr.bf16.mxu0 0
    %5866 = vmatpush1.bf16.msra.mxu0 0
    %5867 = vmatprep.subr.bf16.mxu0 0
    %5868 = vmatpush1.bf16.msra.mxu0 0
    %5869 = vmatprep.subr.bf16.mxu0 0
    %5870 = vmatpush1.bf16.msra.mxu0 0
    %5871 = vmatprep.subr.bf16.mxu0 0
    %5872 = vmatpush1.bf16.msra.mxu0 0
    %5873 = vmatprep.subr.bf16.mxu0 0
    %5874 = vmatpush1.bf16.msra.mxu0 0
    %5875 = vmatprep.mubr.bf16.mxu0 0
    %5876 = vmatmul.mubr.bf16.gmra.mrb[0].mxu0 %v5800
    %v5877 = vpop.f32.mrb[0].mxu0
    %v5878 = vadd.f32 0.0, %v5877
    %v5879 = vpop.f32.mrb[0].mxu0
    %v5880 = vpop.f32.mrb[0].mxu0
    %v5881 = vpop.f32.mrb[0].mxu0
    %5882 = vdwg.mxu0
    %v5883 = vadd.f32 %v5795, %v5837
    %v5884 = vxor.u32 %v5883, 2147483648
    %v5885 = vmul.f32 %v5884, 1.442695
    %v5886 = vpow.pop %v5885
    %v5887 = vadd.f32 %v5886, 1.0
    %v5888 = vrcp.pop %v5887
    %v5889 = vmul.f32 1.0, %v5888
    %v5890 = vadd.f32 %v5796, %v5839
    %v5891 = vxor.u32 %v5890, 2147483648
    %v5892 = vmul.f32 %v5891, 1.442695
    %v5893 = vpow.pop %v5892
    %v5894 = vadd.f32 %v5893, 1.0
    %v5895 = vrcp.pop %v5894
    %v5896 = vmul.f32 1.0, %v5895
    %v5897 = vadd.f32 %v5878, %v5785
    %v5898 = vmul.f32 %v5889, %v5897
    %v5899 = vadd.f32 %v5797, %v5898
    %v5900 = vtanh.pop %v5899
    %v5901 = vsub.f32 1.0, %v5896
    %v5902 = vmul.f32 %v5901, %v5900
    %v5903 = vmul.f32 %v5896, %v5793
    %v5904 = vadd.f32 %v5902, %v5903
    %5905 = vst.msk [vmem:[#allocation7 + $0x8] sm:$0xff] %vm4541, %v5904
    %v5906 = vld [vmem:[#allocation2 + $0x30] sm:$0xff]
    %v5907 = vld [vmem:[#allocation2 + $0x38] sm:$0xff]
    %v5908 = vld [vmem:[#allocation2 + $0x40] sm:$0xff]
    %v5909 = vpack.c.bf16 %v5904, %v5904
    %v5911 = vsel %vm4541, %v5909, 0
    %5913 = vmatprep.subr.bf16.mxu0 %v5682
    %5914 = vmatpush1.bf16.msra.mxu0 %v5681
    %5915 = vmatprep.subr.bf16.mxu0 0
    %5916 = vmatpush1.bf16.msra.mxu0 0
    %5917 = vmatprep.subr.bf16.mxu0 0
    %5918 = vmatpush1.bf16.msra.mxu0 0
    %5919 = vmatprep.subr.bf16.mxu0 0
    %5920 = vmatpush1.bf16.msra.mxu0 0
    %5921 = vmatprep.subr.bf16.mxu0 0
    %5922 = vmatpush1.bf16.msra.mxu0 0
    %5923 = vmatprep.subr.bf16.mxu0 0
    %5924 = vmatpush1.bf16.msra.mxu0 0
    %5925 = vmatprep.subr.bf16.mxu0 0
    %5926 = vmatpush1.bf16.msra.mxu0 0
    %5927 = vmatprep.subr.bf16.mxu0 0
    %5928 = vmatpush1.bf16.msra.mxu0 0
    %5929 = vmatprep.subr.bf16.mxu0 0
    %5930 = vmatpush1.bf16.msra.mxu0 0
    %5931 = vmatprep.subr.bf16.mxu0 0
    %5932 = vmatpush1.bf16.msra.mxu0 0
    %5933 = vmatprep.subr.bf16.mxu0 0
    %5934 = vmatpush1.bf16.msra.mxu0 0
    %5935 = vmatprep.subr.bf16.mxu0 0
    %5936 = vmatpush1.bf16.msra.mxu0 0
    %5937 = vmatprep.subr.bf16.mxu0 0
    %5938 = vmatpush1.bf16.msra.mxu0 0
    %5939 = vmatprep.subr.bf16.mxu0 0
    %5940 = vmatpush1.bf16.msra.mxu0 0
    %5941 = vmatprep.subr.bf16.mxu0 0
    %5942 = vmatpush1.bf16.msra.mxu0 0
    %5943 = vmatprep.subr.bf16.mxu0 0
    %5944 = vmatpush1.bf16.msra.mxu0 0
    %5945 = vmatprep.mubr.bf16.mxu0 0
    %5946 = vmatmul.mubr.bf16.gmra.mrb[0].mxu0 %v5911
    %v5947 = vpop.f32.mrb[0].mxu0
    %v5948 = vadd.f32 0.0, %v5947
    %v5949 = vpop.f32.mrb[0].mxu0
    %v5950 = vadd.f32 0.0, %v5949
    %v5951 = vpop.f32.mrb[0].mxu0
    %v5952 = vpop.f32.mrb[0].mxu0
    %5953 = vdwg.mxu0
    %5954 = vmatprep.subr.bf16.mxu0 0
    %5955 = vmatpush1.bf16.msra.mxu0 %v5683
    %5956 = vmatprep.subr.bf16.mxu0 0
    %5957 = vmatpush1.bf16.msra.mxu0 0
    %5958 = vmatprep.subr.bf16.mxu0 0
    %5959 = vmatpush1.bf16.msra.mxu0 0
    %5960 = vmatprep.subr.bf16.mxu0 0
    %5961 = vmatpush1.bf16.msra.mxu0 0
    %5962 = vmatprep.subr.bf16.mxu0 0
    %5963 = vmatpush1.bf16.msra.mxu0 0
    %5964 = vmatprep.subr.bf16.mxu0 0
    %5965 = vmatpush1.bf16.msra.mxu0 0
    %5966 = vmatprep.subr.bf16.mxu0 0
    %5967 = vmatpush1.bf16.msra.mxu0 0
    %5968 = vmatprep.subr.bf16.mxu0 0
    %5969 = vmatpush1.bf16.msra.mxu0 0
    %5970 = vmatprep.subr.bf16.mxu0 0
    %5971 = vmatpush1.bf16.msra.mxu0 0
    %5972 = vmatprep.subr.bf16.mxu0 0
    %5973 = vmatpush1.bf16.msra.mxu0 0
    %5974 = vmatprep.subr.bf16.mxu0 0
    %5975 = vmatpush1.bf16.msra.mxu0 0
    %5976 = vmatprep.subr.bf16.mxu0 0
    %5977 = vmatpush1.bf16.msra.mxu0 0
    %5978 = vmatprep.subr.bf16.mxu0 0
    %5979 = vmatpush1.bf16.msra.mxu0 0
    %5980 = vmatprep.subr.bf16.mxu0 0
    %5981 = vmatpush1.bf16.msra.mxu0 0
    %5982 = vmatprep.subr.bf16.mxu0 0
    %5983 = vmatpush1.bf16.msra.mxu0 0
    %5984 = vmatprep.subr.bf16.mxu0 0
    %5985 = vmatpush1.bf16.msra.mxu0 0
    %5986 = vmatprep.mubr.bf16.mxu0 0
    %5987 = vmatmul.mubr.bf16.gmra.mrb[0].mxu0 %v5911
    %v5988 = vpop.f32.mrb[0].mxu0
    %v5989 = vadd.f32 0.0, %v5988
    %v5990 = vpop.f32.mrb[0].mxu0
    %v5991 = vpop.f32.mrb[0].mxu0
    %v5992 = vpop.f32.mrb[0].mxu0
    %5993 = vdwg.mxu0
    %v5994 = vadd.f32 %v5906, %v5948
    %v5995 = vxor.u32 %v5994, 2147483648
    %v5996 = vmul.f32 %v5995, 1.442695
    %v5997 = vpow.pop %v5996
    %v5998 = vadd.f32 %v5997, 1.0
    %v5999 = vrcp.pop %v5998
    %v6000 = vmul.f32 1.0, %v5999
    %v6001 = vadd.f32 %v5907, %v5950
    %v6002 = vxor.u32 %v6001, 2147483648
    %v6003 = vmul.f32 %v6002, 1.442695
    %v6004 = vpow.pop %v6003
    %v6005 = vadd.f32 %v6004, 1.0
    %v6006 = vrcp.pop %v6005
    %v6007 = vmul.f32 1.0, %v6006
    %v6008 = vadd.f32 %v5989, %v5785
    %v6009 = vmul.f32 %v6000, %v6008
    %v6010 = vadd.f32 %v5908, %v6009
    %v6011 = vtanh.pop %v6010
    %v6012 = vsub.f32 1.0, %v6007
    %v6013 = vmul.f32 %v6012, %v6011
    %v6014 = vmul.f32 %v6007, %v5904
    %v6015 = vadd.f32 %v6013, %v6014
    %6016 = vst.msk [vmem:[#allocation7 + $0x10] sm:$0xff] %vm4541, %v6015
    %v6017 = vld [vmem:[#allocation2 + $0x48] sm:$0xff]
    %v6018 = vld [vmem:[#allocation2 + $0x50] sm:$0xff]
    %v6019 = vld [vmem:[#allocation2 + $0x58] sm:$0xff]
    %v6020 = vpack.c.bf16 %v6015, %v6015
    %v6022 = vsel %vm4541, %v6020, 0
    %6024 = vmatprep.subr.bf16.mxu0 %v5682
    %6025 = vmatpush1.bf16.msra.mxu0 %v5681
    %6026 = vmatprep.subr.bf16.mxu0 0
    %6027 = vmatpush1.bf16.msra.mxu0 0
    %6028 = vmatprep.subr.bf16.mxu0 0
    %6029 = vmatpush1.bf16.msra.mxu0 0
    %6030 = vmatprep.subr.bf16.mxu0 0
    %6031 = vmatpush1.bf16.msra.mxu0 0
    %6032 = vmatprep.subr.bf16.mxu0 0
    %6033 = vmatpush1.bf16.msra.mxu0 0
    %6034 = vmatprep.subr.bf16.mxu0 0
    %6035 = vmatpush1.bf16.msra.mxu0 0
    %6036 = vmatprep.subr.bf16.mxu0 0
    %6037 = vmatpush1.bf16.msra.mxu0 0
    %6038 = vmatprep.subr.bf16.mxu0 0
    %6039 = vmatpush1.bf16.msra.mxu0 0
    %6040 = vmatprep.subr.bf16.mxu0 0
    %6041 = vmatpush1.bf16.msra.mxu0 0
    %6042 = vmatprep.subr.bf16.mxu0 0
    %6043 = vmatpush1.bf16.msra.mxu0 0
    %6044 = vmatprep.subr.bf16.mxu0 0
    %6045 = vmatpush1.bf16.msra.mxu0 0
    %6046 = vmatprep.subr.bf16.mxu0 0
    %6047 = vmatpush1.bf16.msra.mxu0 0
    %6048 = vmatprep.subr.bf16.mxu0 0
    %6049 = vmatpush1.bf16.msra.mxu0 0
    %6050 = vmatprep.subr.bf16.mxu0 0
    %6051 = vmatpush1.bf16.msra.mxu0 0
    %6052 = vmatprep.subr.bf16.mxu0 0
    %6053 = vmatpush1.bf16.msra.mxu0 0
    %6054 = vmatprep.subr.bf16.mxu0 0
    %6055 = vmatpush1.bf16.msra.mxu0 0
    %6056 = vmatprep.mubr.bf16.mxu0 0
    %6057 = vmatmul.mubr.bf16.gmra.mrb[0].mxu0 %v6022
    %v6058 = vpop.f32.mrb[0].mxu0
    %v6059 = vadd.f32 0.0, %v6058
    %v6060 = vpop.f32.mrb[0].mxu0
    %v6061 = vadd.f32 0.0, %v6060
    %v6062 = vpop.f32.mrb[0].mxu0
    %v6063 = vpop.f32.mrb[0].mxu0
    %6064 = vdwg.mxu0
    %6065 = vmatprep.subr.bf16.mxu0 0
    %6066 = vmatpush1.bf16.msra.mxu0 %v5683
    %6067 = vmatprep.subr.bf16.mxu0 0
    %6068 = vmatpush1.bf16.msra.mxu0 0
    %6069 = vmatprep.subr.bf16.mxu0 0
    %6070 = vmatpush1.bf16.msra.mxu0 0
    %6071 = vmatprep.subr.bf16.mxu0 0
    %6072 = vmatpush1.bf16.msra.mxu0 0
    %6073 = vmatprep.subr.bf16.mxu0 0
    %6074 = vmatpush1.bf16.msra.mxu0 0
    %6075 = vmatprep.subr.bf16.mxu0 0
    %6076 = vmatpush1.bf16.msra.mxu0 0
    %6077 = vmatprep.subr.bf16.mxu0 0
    %6078 = vmatpush1.bf16.msra.mxu0 0
    %6079 = vmatprep.subr.bf16.mxu0 0
    %6080 = vmatpush1.bf16.msra.mxu0 0
    %6081 = vmatprep.subr.bf16.mxu0 0
    %6082 = vmatpush1.bf16.msra.mxu0 0
    %6083 = vmatprep.subr.bf16.mxu0 0
    %6084 = vmatpush1.bf16.msra.mxu0 0
    %6085 = vmatprep.subr.bf16.mxu0 0
    %6086 = vmatpush1.bf16.msra.mxu0 0
    %6087 = vmatprep.subr.bf16.mxu0 0
    %6088 = vmatpush1.bf16.msra.mxu0 0
    %6089 = vmatprep.subr.bf16.mxu0 0
    %6090 = vmatpush1.bf16.msra.mxu0 0
    %6091 = vmatprep.subr.bf16.mxu0 0
    %6092 = vmatpush1.bf16.msra.mxu0 0
    %6093 = vmatprep.subr.bf16.mxu0 0
    %6094 = vmatpush1.bf16.msra.mxu0 0
    %6095 = vmatprep.subr.bf16.mxu0 0
    %6096 = vmatpush1.bf16.msra.mxu0 0
    %6097 = vmatprep.mubr.bf16.mxu0 0
    %6098 = vmatmul.mubr.bf16.gmra.mrb[0].mxu0 %v6022
    %v6099 = vpop.f32.mrb[0].mxu0
    %v6100 = vadd.f32 0.0, %v6099
    %v6101 = vpop.f32.mrb[0].mxu0
    %v6102 = vpop.f32.mrb[0].mxu0
    %v6103 = vpop.f32.mrb[0].mxu0
    %6104 = vdwg.mxu0
    %v6105 = vadd.f32 %v6017, %v6059
    %v6106 = vxor.u32 %v6105, 2147483648
    %v6107 = vmul.f32 %v6106, 1.442695
    %v6108 = vpow.pop %v6107
    %v6109 = vadd.f32 %v6108, 1.0
    %v6110 = vrcp.pop %v6109
    %v6111 = vmul.f32 1.0, %v6110
    %v6112 = vadd.f32 %v6018, %v6061
    %v6113 = vxor.u32 %v6112, 2147483648
    %v6114 = vmul.f32 %v6113, 1.442695
    %v6115 = vpow.pop %v6114
    %v6116 = vadd.f32 %v6115, 1.0
    %v6117 = vrcp.pop %v6116
    %v6118 = vmul.f32 1.0, %v6117
    %v6119 = vadd.f32 %v6100, %v5785
    %v6120 = vmul.f32 %v6111, %v6119
    %v6121 = vadd.f32 %v6019, %v6120
    %v6122 = vtanh.pop %v6121
    %v6123 = vsub.f32 1.0, %v6118
    %v6124 = vmul.f32 %v6123, %v6122
    %v6125 = vmul.f32 %v6118, %v6015
    %v6126 = vadd.f32 %v6124, %v6125
    %6127 = vst.msk [vmem:[#allocation7 + $0x18] sm:$0xff] %vm4541, %v6126
    %v6128 = vld [vmem:[#allocation2 + $0x60] sm:$0xff]
    %v6129 = vld [vmem:[#allocation2 + $0x68] sm:$0xff]
    %v6130 = vld [vmem:[#allocation2 + $0x70] sm:$0xff]
    %v6131 = vpack.c.bf16 %v6126, %v6126
    %v6133 = vsel %vm4541, %v6131, 0
    %6135 = vmatprep.subr.bf16.mxu0 %v5682
    %6136 = vmatpush1.bf16.msra.mxu0 %v5681
    %6137 = vmatprep.subr.bf16.mxu0 0
    %6138 = vmatpush1.bf16.msra.mxu0 0
    %6139 = vmatprep.subr.bf16.mxu0 0
    %6140 = vmatpush1.bf16.msra.mxu0 0
    %6141 = vmatprep.subr.bf16.mxu0 0
    %6142 = vmatpush1.bf16.msra.mxu0 0
    %6143 = vmatprep.subr.bf16.mxu0 0
    %6144 = vmatpush1.bf16.msra.mxu0 0
    %6145 = vmatprep.subr.bf16.mxu0 0
    %6146 = vmatpush1.bf16.msra.mxu0 0
    %6147 = vmatprep.subr.bf16.mxu0 0
    %6148 = vmatpush1.bf16.msra.mxu0 0
    %6149 = vmatprep.subr.bf16.mxu0 0
    %6150 = vmatpush1.bf16.msra.mxu0 0
    %6151 = vmatprep.subr.bf16.mxu0 0
    %6152 = vmatpush1.bf16.msra.mxu0 0
    %6153 = vmatprep.subr.bf16.mxu0 0
    %6154 = vmatpush1.bf16.msra.mxu0 0
    %6155 = vmatprep.subr.bf16.mxu0 0
    %6156 = vmatpush1.bf16.msra.mxu0 0
    %6157 = vmatprep.subr.bf16.mxu0 0
    %6158 = vmatpush1.bf16.msra.mxu0 0
    %6159 = vmatprep.subr.bf16.mxu0 0
    %6160 = vmatpush1.bf16.msra.mxu0 0
    %6161 = vmatprep.subr.bf16.mxu0 0
    %6162 = vmatpush1.bf16.msra.mxu0 0
    %6163 = vmatprep.subr.bf16.mxu0 0
    %6164 = vmatpush1.bf16.msra.mxu0 0
    %6165 = vmatprep.subr.bf16.mxu0 0
    %6166 = vmatpush1.bf16.msra.mxu0 0
    %6167 = vmatprep.mubr.bf16.mxu0 0
    %6168 = vmatmul.mubr.bf16.gmra.mrb[0].mxu0 %v6133
    %v6169 = vpop.f32.mrb[0].mxu0
    %v6170 = vadd.f32 0.0, %v6169
    %v6171 = vpop.f32.mrb[0].mxu0
    %v6172 = vadd.f32 0.0, %v6171
    %v6173 = vpop.f32.mrb[0].mxu0
    %v6174 = vpop.f32.mrb[0].mxu0
    %6175 = vdwg.mxu0
    %6176 = vmatprep.subr.bf16.mxu0 0
    %6177 = vmatpush1.bf16.msra.mxu0 %v5683
    %6178 = vmatprep.subr.bf16.mxu0 0
    %6179 = vmatpush1.bf16.msra.mxu0 0
    %6180 = vmatprep.subr.bf16.mxu0 0
    %6181 = vmatpush1.bf16.msra.mxu0 0
    %6182 = vmatprep.subr.bf16.mxu0 0
    %6183 = vmatpush1.bf16.msra.mxu0 0
    %6184 = vmatprep.subr.bf16.mxu0 0
    %6185 = vmatpush1.bf16.msra.mxu0 0
    %6186 = vmatprep.subr.bf16.mxu0 0
    %6187 = vmatpush1.bf16.msra.mxu0 0
    %6188 = vmatprep.subr.bf16.mxu0 0
    %6189 = vmatpush1.bf16.msra.mxu0 0
    %6190 = vmatprep.subr.bf16.mxu0 0
    %6191 = vmatpush1.bf16.msra.mxu0 0
    %6192 = vmatprep.subr.bf16.mxu0 0
    %6193 = vmatpush1.bf16.msra.mxu0 0
    %6194 = vmatprep.subr.bf16.mxu0 0
    %6195 = vmatpush1.bf16.msra.mxu0 0
    %6196 = vmatprep.subr.bf16.mxu0 0
    %6197 = vmatpush1.bf16.msra.mxu0 0
    %6198 = vmatprep.subr.bf16.mxu0 0
    %6199 = vmatpush1.bf16.msra.mxu0 0
    %6200 = vmatprep.subr.bf16.mxu0 0
    %6201 = vmatpush1.bf16.msra.mxu0 0
    %6202 = vmatprep.subr.bf16.mxu0 0
    %6203 = vmatpush1.bf16.msra.mxu0 0
    %6204 = vmatprep.subr.bf16.mxu0 0
    %6205 = vmatpush1.bf16.msra.mxu0 0
    %6206 = vmatprep.subr.bf16.mxu0 0
    %6207 = vmatpush1.bf16.msra.mxu0 0
    %6208 = vmatprep.mubr.bf16.mxu0 0
    %6209 = vmatmul.mubr.bf16.gmra.mrb[0].mxu0 %v6133
    %v6210 = vpop.f32.mrb[0].mxu0
    %v6211 = vadd.f32 0.0, %v6210
    %v6212 = vpop.f32.mrb[0].mxu0
    %v6213 = vpop.f32.mrb[0].mxu0
    %v6214 = vpop.f32.mrb[0].mxu0
    %6215 = vdwg.mxu0
    %v6216 = vadd.f32 %v6128, %v6170
    %v6217 = vxor.u32 %v6216, 2147483648
    %v6218 = vmul.f32 %v6217, 1.442695
    %v6219 = vpow.pop %v6218
    %v6220 = vadd.f32 %v6219, 1.0
    %v6221 = vrcp.pop %v6220
    %v6222 = vmul.f32 1.0, %v6221
    %v6223 = vadd.f32 %v6129, %v6172
    %v6224 = vxor.u32 %v6223, 2147483648
    %v6225 = vmul.f32 %v6224, 1.442695
    %v6226 = vpow.pop %v6225
    %v6227 = vadd.f32 %v6226, 1.0
    %v6228 = vrcp.pop %v6227
    %v6229 = vmul.f32 1.0, %v6228
    %v6230 = vadd.f32 %v6211, %v5785
    %v6231 = vmul.f32 %v6222, %v6230
    %v6232 = vadd.f32 %v6130, %v6231
    %v6233 = vtanh.pop %v6232
    %v6234 = vsub.f32 1.0, %v6229
    %v6235 = vmul.f32 %v6234, %v6233
    %v6236 = vmul.f32 %v6229, %v6126
    %v6237 = vadd.f32 %v6235, %v6236
    %6238 = vst.msk [vmem:[#allocation7 + $0x20] sm:$0xff] %vm4541, %v6237
    %v6239 = vld [vmem:[#allocation2 + $0x78] sm:$0xff]
    %v6240 = vld [vmem:[#allocation2 + $0x80] sm:$0xff]
    %v6241 = vld [vmem:[#allocation2 + $0x88] sm:$0xff]
    %v6242 = vpack.c.bf16 %v6237, %v6237
    %v6244 = vsel %vm4541, %v6242, 0
    %6246 = vmatprep.subr.bf16.mxu0 %v5682
    %6247 = vmatpush1.bf16.msra.mxu0 %v5681
    %6248 = vmatprep.subr.bf16.mxu0 0
    %6249 = vmatpush1.bf16.msra.mxu0 0
    %6250 = vmatprep.subr.bf16.mxu0 0
    %6251 = vmatpush1.bf16.msra.mxu0 0
    %6252 = vmatprep.subr.bf16.mxu0 0
    %6253 = vmatpush1.bf16.msra.mxu0 0
    %6254 = vmatprep.subr.bf16.mxu0 0
    %6255 = vmatpush1.bf16.msra.mxu0 0
    %6256 = vmatprep.subr.bf16.mxu0 0
    %6257 = vmatpush1.bf16.msra.mxu0 0
    %6258 = vmatprep.subr.bf16.mxu0 0
    %6259 = vmatpush1.bf16.msra.mxu0 0
    %6260 = vmatprep.subr.bf16.mxu0 0
    %6261 = vmatpush1.bf16.msra.mxu0 0
    %6262 = vmatprep.subr.bf16.mxu0 0
    %6263 = vmatpush1.bf16.msra.mxu0 0
    %6264 = vmatprep.subr.bf16.mxu0 0
    %6265 = vmatpush1.bf16.msra.mxu0 0
    %6266 = vmatprep.subr.bf16.mxu0 0
    %6267 = vmatpush1.bf16.msra.mxu0 0
    %6268 = vmatprep.subr.bf16.mxu0 0
    %6269 = vmatpush1.bf16.msra.mxu0 0
    %6270 = vmatprep.subr.bf16.mxu0 0
    %6271 = vmatpush1.bf16.msra.mxu0 0
    %6272 = vmatprep.subr.bf16.mxu0 0
    %6273 = vmatpush1.bf16.msra.mxu0 0
    %6274 = vmatprep.subr.bf16.mxu0 0
    %6275 = vmatpush1.bf16.msra.mxu0 0
    %6276 = vmatprep.subr.bf16.mxu0 0
    %6277 = vmatpush1.bf16.msra.mxu0 0
    %6278 = vmatprep.mubr.bf16.mxu0 0
    %6279 = vmatmul.mubr.bf16.gmra.mrb[0].mxu0 %v6244
    %v6280 = vpop.f32.mrb[0].mxu0
    %v6281 = vadd.f32 0.0, %v6280
    %v6282 = vpop.f32.mrb[0].mxu0
    %v6283 = vadd.f32 0.0, %v6282
    %v6284 = vpop.f32.mrb[0].mxu0
    %v6285 = vpop.f32.mrb[0].mxu0
    %6286 = vdwg.mxu0
    %6287 = vmatprep.subr.bf16.mxu0 0
    %6288 = vmatpush1.bf16.msra.mxu0 %v5683
    %6289 = vmatprep.subr.bf16.mxu0 0
    %6290 = vmatpush1.bf16.msra.mxu0 0
    %6291 = vmatprep.subr.bf16.mxu0 0
    %6292 = vmatpush1.bf16.msra.mxu0 0
    %6293 = vmatprep.subr.bf16.mxu0 0
    %6294 = vmatpush1.bf16.msra.mxu0 0
    %6295 = vmatprep.subr.bf16.mxu0 0
    %6296 = vmatpush1.bf16.msra.mxu0 0
    %6297 = vmatprep.subr.bf16.mxu0 0
    %6298 = vmatpush1.bf16.msra.mxu0 0
    %6299 = vmatprep.subr.bf16.mxu0 0
    %6300 = vmatpush1.bf16.msra.mxu0 0
    %6301 = vmatprep.subr.bf16.mxu0 0
    %6302 = vmatpush1.bf16.msra.mxu0 0
    %6303 = vmatprep.subr.bf16.mxu0 0
    %6304 = vmatpush1.bf16.msra.mxu0 0
    %6305 = vmatprep.subr.bf16.mxu0 0
    %6306 = vmatpush1.bf16.msra.mxu0 0
    %6307 = vmatprep.subr.bf16.mxu0 0
    %6308 = vmatpush1.bf16.msra.mxu0 0
    %6309 = vmatprep.subr.bf16.mxu0 0
    %6310 = vmatpush1.bf16.msra.mxu0 0
    %6311 = vmatprep.subr.bf16.mxu0 0
    %6312 = vmatpush1.bf16.msra.mxu0 0
    %6313 = vmatprep.subr.bf16.mxu0 0
    %6314 = vmatpush1.bf16.msra.mxu0 0
    %6315 = vmatprep.subr.bf16.mxu0 0
    %6316 = vmatpush1.bf16.msra.mxu0 0
    %6317 = vmatprep.subr.bf16.mxu0 0
    %6318 = vmatpush1.bf16.msra.mxu0 0
    %6319 = vmatprep.mubr.bf16.mxu0 0
    %6320 = vmatmul.mubr.bf16.gmra.mrb[0].mxu0 %v6244
    %v6321 = vpop.f32.mrb[0].mxu0
    %v6322 = vadd.f32 0.0, %v6321
    %v6323 = vpop.f32.mrb[0].mxu0
    %v6324 = vpop.f32.mrb[0].mxu0
    %v6325 = vpop.f32.mrb[0].mxu0
    %6326 = vdwg.mxu0
    %v6327 = vadd.f32 %v6239, %v6281
    %v6328 = vxor.u32 %v6327, 2147483648
    %v6329 = vmul.f32 %v6328, 1.442695
    %v6330 = vpow.pop %v6329
    %v6331 = vadd.f32 %v6330, 1.0
    %v6332 = vrcp.pop %v6331
    %v6333 = vmul.f32 1.0, %v6332
    %v6334 = vadd.f32 %v6240, %v6283
    %v6335 = vxor.u32 %v6334, 2147483648
    %v6336 = vmul.f32 %v6335, 1.442695
    %v6337 = vpow.pop %v6336
    %v6338 = vadd.f32 %v6337, 1.0
    %v6339 = vrcp.pop %v6338
    %v6340 = vmul.f32 1.0, %v6339
    %v6341 = vadd.f32 %v6322, %v5785
    %v6342 = vmul.f32 %v6333, %v6341
    %v6343 = vadd.f32 %v6241, %v6342
    %v6344 = vtanh.pop %v6343
    %v6345 = vsub.f32 1.0, %v6340
    %v6346 = vmul.f32 %v6345, %v6344
    %v6347 = vmul.f32 %v6340, %v6237
    %v6348 = vadd.f32 %v6346, %v6347
    %6349 = vst.msk [vmem:[#allocation7 + $0x28] sm:$0xff] %vm4541, %v6348
    %v6350 = vld [vmem:[#allocation2 + $0x90] sm:$0xff]
    %v6351 = vld [vmem:[#allocation2 + $0x98] sm:$0xff]
    %v6352 = vld [vmem:[#allocation2 + $0xa0] sm:$0xff]
    %v6353 = vpack.c.bf16 %v6348, %v6348
    %v6355 = vsel %vm4541, %v6353, 0
    %6357 = vmatprep.subr.bf16.mxu0 %v5682
    %6358 = vmatpush1.bf16.msra.mxu0 %v5681
    %6359 = vmatprep.subr.bf16.mxu0 0
    %6360 = vmatpush1.bf16.msra.mxu0 0
    %6361 = vmatprep.subr.bf16.mxu0 0
    %6362 = vmatpush1.bf16.msra.mxu0 0
    %6363 = vmatprep.subr.bf16.mxu0 0
    %6364 = vmatpush1.bf16.msra.mxu0 0
    %6365 = vmatprep.subr.bf16.mxu0 0
    %6366 = vmatpush1.bf16.msra.mxu0 0
    %6367 = vmatprep.subr.bf16.mxu0 0
    %6368 = vmatpush1.bf16.msra.mxu0 0
    %6369 = vmatprep.subr.bf16.mxu0 0
    %6370 = vmatpush1.bf16.msra.mxu0 0
    %6371 = vmatprep.subr.bf16.mxu0 0
    %6372 = vmatpush1.bf16.msra.mxu0 0
    %6373 = vmatprep.subr.bf16.mxu0 0
    %6374 = vmatpush1.bf16.msra.mxu0 0
    %6375 = vmatprep.subr.bf16.mxu0 0
    %6376 = vmatpush1.bf16.msra.mxu0 0
    %6377 = vmatprep.subr.bf16.mxu0 0
    %6378 = vmatpush1.bf16.msra.mxu0 0
    %6379 = vmatprep.subr.bf16.mxu0 0
    %6380 = vmatpush1.bf16.msra.mxu0 0
    %6381 = vmatprep.subr.bf16.mxu0 0
    %6382 = vmatpush1.bf16.msra.mxu0 0
    %6383 = vmatprep.subr.bf16.mxu0 0
    %6384 = vmatpush1.bf16.msra.mxu0 0
    %6385 = vmatprep.subr.bf16.mxu0 0
    %6386 = vmatpush1.bf16.msra.mxu0 0
    %6387 = vmatprep.subr.bf16.mxu0 0
    %6388 = vmatpush1.bf16.msra.mxu0 0
    %6389 = vmatprep.mubr.bf16.mxu0 0
    %6390 = vmatmul.mubr.bf16.gmra.mrb[0].mxu0 %v6355
    %v6391 = vpop.f32.mrb[0].mxu0
    %v6392 = vadd.f32 0.0, %v6391
    %v6393 = vpop.f32.mrb[0].mxu0
    %v6394 = vadd.f32 0.0, %v6393
    %v6395 = vpop.f32.mrb[0].mxu0
    %v6396 = vpop.f32.mrb[0].mxu0
    %6397 = vdwg.mxu0
    %6398 = vmatprep.subr.bf16.mxu0 0
    %6399 = vmatpush1.bf16.msra.mxu0 %v5683
    %6400 = vmatprep.subr.bf16.mxu0 0
    %6401 = vmatpush1.bf16.msra.mxu0 0
    %6402 = vmatprep.subr.bf16.mxu0 0
    %6403 = vmatpush1.bf16.msra.mxu0 0
    %6404 = vmatprep.subr.bf16.mxu0 0
    %6405 = vmatpush1.bf16.msra.mxu0 0
    %6406 = vmatprep.subr.bf16.mxu0 0
    %6407 = vmatpush1.bf16.msra.mxu0 0
    %6408 = vmatprep.subr.bf16.mxu0 0
    %6409 = vmatpush1.bf16.msra.mxu0 0
    %6410 = vmatprep.subr.bf16.mxu0 0
    %6411 = vmatpush1.bf16.msra.mxu0 0
    %6412 = vmatprep.subr.bf16.mxu0 0
    %6413 = vmatpush1.bf16.msra.mxu0 0
    %6414 = vmatprep.subr.bf16.mxu0 0
    %6415 = vmatpush1.bf16.msra.mxu0 0
    %6416 = vmatprep.subr.bf16.mxu0 0
    %6417 = vmatpush1.bf16.msra.mxu0 0
    %6418 = vmatprep.subr.bf16.mxu0 0
    %6419 = vmatpush1.bf16.msra.mxu0 0
    %6420 = vmatprep.subr.bf16.mxu0 0
    %6421 = vmatpush1.bf16.msra.mxu0 0
    %6422 = vmatprep.subr.bf16.mxu0 0
    %6423 = vmatpush1.bf16.msra.mxu0 0
    %6424 = vmatprep.subr.bf16.mxu0 0
    %6425 = vmatpush1.bf16.msra.mxu0 0
    %6426 = vmatprep.subr.bf16.mxu0 0
    %6427 = vmatpush1.bf16.msra.mxu0 0
    %6428 = vmatprep.subr.bf16.mxu0 0
    %6429 = vmatpush1.bf16.msra.mxu0 0
    %6430 = vmatprep.mubr.bf16.mxu0 0
    %6431 = vmatmul.mubr.bf16.gmra.mrb[0].mxu0 %v6355
    %v6432 = vpop.f32.mrb[0].mxu0
    %v6433 = vadd.f32 0.0, %v6432
    %v6434 = vpop.f32.mrb[0].mxu0
    %v6435 = vpop.f32.mrb[0].mxu0
    %v6436 = vpop.f32.mrb[0].mxu0
    %6437 = vdwg.mxu0
    %v6438 = vadd.f32 %v6350, %v6392
    %v6439 = vxor.u32 %v6438, 2147483648
    %v6440 = vmul.f32 %v6439, 1.442695
    %v6441 = vpow.pop %v6440
    %v6442 = vadd.f32 %v6441, 1.0
    %v6443 = vrcp.pop %v6442
    %v6444 = vmul.f32 1.0, %v6443
    %v6445 = vadd.f32 %v6351, %v6394
    %v6446 = vxor.u32 %v6445, 2147483648
    %v6447 = vmul.f32 %v6446, 1.442695
    %v6448 = vpow.pop %v6447
    %v6449 = vadd.f32 %v6448, 1.0
    %v6450 = vrcp.pop %v6449
    %v6451 = vmul.f32 1.0, %v6450
    %v6452 = vadd.f32 %v6433, %v5785
    %v6453 = vmul.f32 %v6444, %v6452
    %v6454 = vadd.f32 %v6352, %v6453
    %v6455 = vtanh.pop %v6454
    %v6456 = vsub.f32 1.0, %v6451
    %v6457 = vmul.f32 %v6456, %v6455
    %v6458 = vmul.f32 %v6451, %v6348
    %v6459 = vadd.f32 %v6457, %v6458
    %6460 = vst.msk [vmem:[#allocation7 + $0x30] sm:$0xff] %vm4541, %v6459
    %v6461 = vld [vmem:[#allocation2 + $0xa8] sm:$0xff]
    %v6462 = vld [vmem:[#allocation2 + $0xb0] sm:$0xff]
    %v6463 = vld [vmem:[#allocation2 + $0xb8] sm:$0xff]
    %v6464 = vpack.c.bf16 %v6459, %v6459
    %v6466 = vsel %vm4541, %v6464, 0
    %6468 = vmatprep.subr.bf16.mxu0 %v5682
    %6469 = vmatpush1.bf16.msra.mxu0 %v5681
    %6470 = vmatprep.subr.bf16.mxu0 0
    %6471 = vmatpush1.bf16.msra.mxu0 0
    %6472 = vmatprep.subr.bf16.mxu0 0
    %6473 = vmatpush1.bf16.msra.mxu0 0
    %6474 = vmatprep.subr.bf16.mxu0 0
    %6475 = vmatpush1.bf16.msra.mxu0 0
    %6476 = vmatprep.subr.bf16.mxu0 0
    %6477 = vmatpush1.bf16.msra.mxu0 0
    %6478 = vmatprep.subr.bf16.mxu0 0
    %6479 = vmatpush1.bf16.msra.mxu0 0
    %6480 = vmatprep.subr.bf16.mxu0 0
    %6481 = vmatpush1.bf16.msra.mxu0 0
    %6482 = vmatprep.subr.bf16.mxu0 0
    %6483 = vmatpush1.bf16.msra.mxu0 0
    %6484 = vmatprep.subr.bf16.mxu0 0
    %6485 = vmatpush1.bf16.msra.mxu0 0
    %6486 = vmatprep.subr.bf16.mxu0 0
    %6487 = vmatpush1.bf16.msra.mxu0 0
    %6488 = vmatprep.subr.bf16.mxu0 0
    %6489 = vmatpush1.bf16.msra.mxu0 0
    %6490 = vmatprep.subr.bf16.mxu0 0
    %6491 = vmatpush1.bf16.msra.mxu0 0
    %6492 = vmatprep.subr.bf16.mxu0 0
    %6493 = vmatpush1.bf16.msra.mxu0 0
    %6494 = vmatprep.subr.bf16.mxu0 0
    %6495 = vmatpush1.bf16.msra.mxu0 0
    %6496 = vmatprep.subr.bf16.mxu0 0
    %6497 = vmatpush1.bf16.msra.mxu0 0
    %6498 = vmatprep.subr.bf16.mxu0 0
    %6499 = vmatpush1.bf16.msra.mxu0 0
    %6500 = vmatprep.mubr.bf16.mxu0 0
    %6501 = vmatmul.mubr.bf16.gmra.mrb[0].mxu0 %v6466
    %v6502 = vpop.f32.mrb[0].mxu0
    %v6503 = vadd.f32 0.0, %v6502
    %v6504 = vpop.f32.mrb[0].mxu0
    %v6505 = vadd.f32 0.0, %v6504
    %v6506 = vpop.f32.mrb[0].mxu0
    %v6507 = vpop.f32.mrb[0].mxu0
    %6508 = vdwg.mxu0
    %6509 = vmatprep.subr.bf16.mxu0 0
    %6510 = vmatpush1.bf16.msra.mxu0 %v5683
    %6511 = vmatprep.subr.bf16.mxu0 0
    %6512 = vmatpush1.bf16.msra.mxu0 0
    %6513 = vmatprep.subr.bf16.mxu0 0
    %6514 = vmatpush1.bf16.msra.mxu0 0
    %6515 = vmatprep.subr.bf16.mxu0 0
    %6516 = vmatpush1.bf16.msra.mxu0 0
    %6517 = vmatprep.subr.bf16.mxu0 0
    %6518 = vmatpush1.bf16.msra.mxu0 0
    %6519 = vmatprep.subr.bf16.mxu0 0
    %6520 = vmatpush1.bf16.msra.mxu0 0
    %6521 = vmatprep.subr.bf16.mxu0 0
    %6522 = vmatpush1.bf16.msra.mxu0 0
    %6523 = vmatprep.subr.bf16.mxu0 0
    %6524 = vmatpush1.bf16.msra.mxu0 0
    %6525 = vmatprep.subr.bf16.mxu0 0
    %6526 = vmatpush1.bf16.msra.mxu0 0
    %6527 = vmatprep.subr.bf16.mxu0 0
    %6528 = vmatpush1.bf16.msra.mxu0 0
    %6529 = vmatprep.subr.bf16.mxu0 0
    %6530 = vmatpush1.bf16.msra.mxu0 0
    %6531 = vmatprep.subr.bf16.mxu0 0
    %6532 = vmatpush1.bf16.msra.mxu0 0
    %6533 = vmatprep.subr.bf16.mxu0 0
    %6534 = vmatpush1.bf16.msra.mxu0 0
    %6535 = vmatprep.subr.bf16.mxu0 0
    %6536 = vmatpush1.bf16.msra.mxu0 0
    %6537 = vmatprep.subr.bf16.mxu0 0
    %6538 = vmatpush1.bf16.msra.mxu0 0
    %6539 = vmatprep.subr.bf16.mxu0 0
    %6540 = vmatpush1.bf16.msra.mxu0 0
    %6541 = vmatprep.mubr.bf16.mxu0 0
    %6542 = vmatmul.mubr.bf16.gmra.mrb[0].mxu0 %v6466
    %v6543 = vpop.f32.mrb[0].mxu0
    %v6544 = vadd.f32 0.0, %v6543
    %v6545 = vpop.f32.mrb[0].mxu0
    %v6546 = vpop.f32.mrb[0].mxu0
    %v6547 = vpop.f32.mrb[0].mxu0
    %6548 = vdwg.mxu0
    %v6549 = vadd.f32 %v6461, %v6503
    %v6550 = vxor.u32 %v6549, 2147483648
    %v6551 = vmul.f32 %v6550, 1.442695
    %v6552 = vpow.pop %v6551
    %v6553 = vadd.f32 %v6552, 1.0
    %v6554 = vrcp.pop %v6553
    %v6555 = vmul.f32 1.0, %v6554
    %v6556 = vadd.f32 %v6462, %v6505
    %v6557 = vxor.u32 %v6556, 2147483648
    %v6558 = vmul.f32 %v6557, 1.442695
    %v6559 = vpow.pop %v6558
    %v6560 = vadd.f32 %v6559, 1.0
    %v6561 = vrcp.pop %v6560
    %v6562 = vmul.f32 1.0, %v6561
    %v6563 = vadd.f32 %v6544, %v5785
    %v6564 = vmul.f32 %v6555, %v6563
    %v6565 = vadd.f32 %v6463, %v6564
    %v6566 = vtanh.pop %v6565
    %v6567 = vsub.f32 1.0, %v6562
    %v6568 = vmul.f32 %v6567, %v6566
    %v6569 = vmul.f32 %v6562, %v6459
    %v6570 = vadd.f32 %v6568, %v6569
    %6571 = vst.msk [vmem:[#allocation7 + $0x38] sm:$0xff] %vm4541, %v6570
    %v6572 = vld [vmem:[#allocation7] sm:$0xff]
    %v6573 = vld [vmem:[#allocation7 + $0x8] sm:$0xff]
    %v6574 = vld [vmem:[#allocation7 + $0x10] sm:$0xff]
    %v6575 = vld [vmem:[#allocation7 + $0x18] sm:$0xff]
    %v6576 = vld [vmem:[#allocation7 + $0x20] sm:$0xff]
    %v6577 = vld [vmem:[#allocation7 + $0x28] sm:$0xff]
    %v6578 = vld [vmem:[#allocation7 + $0x30] sm:$0xff]
    %v6579 = vld [vmem:[#allocation7 + $0x38] sm:$0xff]
    %v6580 = vpack.c.bf16 %v6573, %v6572
    %v6581 = vpack.c.bf16 %v6575, %v6574
    %v6582 = vpack.c.bf16 %v6577, %v6576
    %v6583 = vpack.c.bf16 %v6579, %v6578
    %v6584 = vld [vmem:[#allocation33] sm:$0x3f]
    %v6585 = vld [vmem:[#allocation30] sm:$0xff]
    %v6586 = vld [vmem:[#allocation30 + $0x8] sm:$0xf]
    %v6587 = vld [vmem:[#allocation30 + $0xc] sm:$0xff]
    %v6588 = vld [vmem:[#allocation30 + $0x14] sm:$0xf]
    %v6590 = vlaneseq
    %v6591 = vshrl.u32 %v6590, 7
    %v6592 = vsub.s32 0, %v6591
    %v6593 = vrot.slane %v6584, %v6592
    %v6594 = vlaneseq
    %v6595 = vshrl.u32 %v6594, 7
    %v6596 = vsub.s32 2, %v6595
    %v6597 = vrot.slane %v6584, %v6596
    %v6598 = vlaneseq
    %v6599 = vshrl.u32 %v6598, 7
    %v6600 = vsub.s32 4, %v6599
    %v6601 = vrot.slane %v6584, %v6600
    %v6605 = vlaneseq
    %v6606 = vshrl.u32 %v6605, 7
    %v6607 = vsub.s32 0, %v6606
    %v6608 = vrot.slane %v6593, %v6607
    %v6609 = vlaneseq
    %v6610 = vshrl.u32 %v6609, 7
    %v6611 = vsub.s32 0, %v6610
    %v6612 = vrot.slane %v6597, %v6611
    %v6613 = vlaneseq
    %v6614 = vshrl.u32 %v6613, 7
    %v6615 = vsub.s32 0, %v6614
    %v6616 = vrot.slane %v6601, %v6615
    %v6621 = vunpack.c.l.b16 %v6585
    %v6622 = vunpack.c.h.b16 %v6585
    %v6623 = vunpack.c.l.b16 %v6586
    %v6624 = vunpack.c.l.b16 %v6587
    %v6625 = vunpack.c.h.b16 %v6587
    %v6626 = vunpack.c.l.b16 %v6588
    %v6627 = vpack.c.b16 %v6624, %v6621
    %v6628 = vpack.c.b16 %v6625, %v6622
    %v6629 = vpack.c.b16 %v6626, %v6623
    %v6634 = vsel %vm4541, %v6580, 0
    %v6637 = vsel %vm4541, %v6581, 0
    %v6640 = vsel %vm4541, %v6582, 0
    %v6643 = vsel %vm4541, %v6583, 0
    %6645 = vmatprep.subr.bf16.mxu0 %v6628
    %6646 = vmatpush1.bf16.msra.mxu0 %v6627
    %6647 = vmatprep.subr.bf16.mxu0 0
    %6648 = vmatpush1.bf16.msra.mxu0 0
    %6649 = vmatprep.subr.bf16.mxu0 0
    %6650 = vmatpush1.bf16.msra.mxu0 0
    %6651 = vmatprep.subr.bf16.mxu0 0
    %6652 = vmatpush1.bf16.msra.mxu0 0
    %6653 = vmatprep.subr.bf16.mxu0 0
    %6654 = vmatpush1.bf16.msra.mxu0 0
    %6655 = vmatprep.subr.bf16.mxu0 0
    %6656 = vmatpush1.bf16.msra.mxu0 0
    %6657 = vmatprep.subr.bf16.mxu0 0
    %6658 = vmatpush1.bf16.msra.mxu0 0
    %6659 = vmatprep.subr.bf16.mxu0 0
    %6660 = vmatpush1.bf16.msra.mxu0 0
    %6661 = vmatprep.subr.bf16.mxu0 0
    %6662 = vmatpush1.bf16.msra.mxu0 0
    %6663 = vmatprep.subr.bf16.mxu0 0
    %6664 = vmatpush1.bf16.msra.mxu0 0
    %6665 = vmatprep.subr.bf16.mxu0 0
    %6666 = vmatpush1.bf16.msra.mxu0 0
    %6667 = vmatprep.subr.bf16.mxu0 0
    %6668 = vmatpush1.bf16.msra.mxu0 0
    %6669 = vmatprep.subr.bf16.mxu0 0
    %6670 = vmatpush1.bf16.msra.mxu0 0
    %6671 = vmatprep.subr.bf16.mxu0 0
    %6672 = vmatpush1.bf16.msra.mxu0 0
    %6673 = vmatprep.subr.bf16.mxu0 0
    %6674 = vmatpush1.bf16.msra.mxu0 0
    %6675 = vmatprep.subr.bf16.mxu0 0
    %6676 = vmatpush1.bf16.msra.mxu0 0
    %6677 = vmatprep.mubr.bf16.mxu0 0
    %6678 = vmatmul.mubr.bf16.gmra.mrb[0].mxu0 %v6634
    %v6679 = vpop.f32.mrb[0].mxu0
    %v6680 = vadd.f32 %v6608, %v6679
    %v6681 = vpop.f32.mrb[0].mxu0
    %v6682 = vadd.f32 %v6612, %v6681
    %v6683 = vpop.f32.mrb[0].mxu0
    %v6684 = vadd.f32 %v6608, %v6683
    %v6685 = vpop.f32.mrb[0].mxu0
    %v6686 = vadd.f32 %v6612, %v6685
    %6687 = vmatprep.mubr.bf16.mxu0 0
    %6688 = vmatmul.mubr.bf16.gmra.mrb[0].mxu0 %v6637
    %v6689 = vpop.f32.mrb[0].mxu0
    %v6690 = vadd.f32 %v6608, %v6689
    %v6691 = vpop.f32.mrb[0].mxu0
    %v6692 = vadd.f32 %v6612, %v6691
    %v6693 = vpop.f32.mrb[0].mxu0
    %v6694 = vadd.f32 %v6608, %v6693
    %v6695 = vpop.f32.mrb[0].mxu0
    %v6696 = vadd.f32 %v6612, %v6695
    %6697 = vmatprep.mubr.bf16.mxu0 0
    %6698 = vmatmul.mubr.bf16.gmra.mrb[0].mxu0 %v6640
    %v6699 = vpop.f32.mrb[0].mxu0
    %v6700 = vadd.f32 %v6608, %v6699
    %v6701 = vpop.f32.mrb[0].mxu0
    %v6702 = vadd.f32 %v6612, %v6701
    %v6703 = vpop.f32.mrb[0].mxu0
    %v6704 = vadd.f32 %v6608, %v6703
    %v6705 = vpop.f32.mrb[0].mxu0
    %v6706 = vadd.f32 %v6612, %v6705
    %6707 = vmatprep.mubr.bf16.mxu0 0
    %6708 = vmatmul.mubr.bf16.gmra.mrb[0].mxu0 %v6643
    %v6709 = vpop.f32.mrb[0].mxu0
    %v6710 = vadd.f32 %v6608, %v6709
    %v6711 = vpop.f32.mrb[0].mxu0
    %v6712 = vadd.f32 %v6612, %v6711
    %v6713 = vpop.f32.mrb[0].mxu0
    %v6714 = vadd.f32 %v6608, %v6713
    %v6715 = vpop.f32.mrb[0].mxu0
    %v6716 = vadd.f32 %v6612, %v6715
    %6717 = vdwg.mxu0
    %6718 = vmatprep.subr.bf16.mxu0 0
    %6719 = vmatpush1.bf16.msra.mxu0 %v6629
    %6720 = vmatprep.subr.bf16.mxu0 0
    %6721 = vmatpush1.bf16.msra.mxu0 0
    %6722 = vmatprep.subr.bf16.mxu0 0
    %6723 = vmatpush1.bf16.msra.mxu0 0
    %6724 = vmatprep.subr.bf16.mxu0 0
    %6725 = vmatpush1.bf16.msra.mxu0 0
    %6726 = vmatprep.subr.bf16.mxu0 0
    %6727 = vmatpush1.bf16.msra.mxu0 0
    %6728 = vmatprep.subr.bf16.mxu0 0
    %6729 = vmatpush1.bf16.msra.mxu0 0
    %6730 = vmatprep.subr.bf16.mxu0 0
    %6731 = vmatpush1.bf16.msra.mxu0 0
    %6732 = vmatprep.subr.bf16.mxu0 0
    %6733 = vmatpush1.bf16.msra.mxu0 0
    %6734 = vmatprep.subr.bf16.mxu0 0
    %6735 = vmatpush1.bf16.msra.mxu0 0
    %6736 = vmatprep.subr.bf16.mxu0 0
    %6737 = vmatpush1.bf16.msra.mxu0 0
    %6738 = vmatprep.subr.bf16.mxu0 0
    %6739 = vmatpush1.bf16.msra.mxu0 0
    %6740 = vmatprep.subr.bf16.mxu0 0
    %6741 = vmatpush1.bf16.msra.mxu0 0
    %6742 = vmatprep.subr.bf16.mxu0 0
    %6743 = vmatpush1.bf16.msra.mxu0 0
    %6744 = vmatprep.subr.bf16.mxu0 0
    %6745 = vmatpush1.bf16.msra.mxu0 0
    %6746 = vmatprep.subr.bf16.mxu0 0
    %6747 = vmatpush1.bf16.msra.mxu0 0
    %6748 = vmatprep.subr.bf16.mxu0 0
    %6749 = vmatpush1.bf16.msra.mxu0 0
    %6750 = vmatprep.mubr.bf16.mxu0 0
    %6751 = vmatmul.mubr.bf16.gmra.mrb[0].mxu0 %v6634
    %v6752 = vpop.f32.mrb[0].mxu0
    %v6753 = vadd.f32 %v6616, %v6752
    %v6754 = vpop.f32.mrb[0].mxu0
    %v6755 = vpop.f32.mrb[0].mxu0
    %v6756 = vadd.f32 %v6616, %v6755
    %v6757 = vpop.f32.mrb[0].mxu0
    %6758 = vmatprep.mubr.bf16.mxu0 0
    %6759 = vmatmul.mubr.bf16.gmra.mrb[0].mxu0 %v6637
    %v6760 = vpop.f32.mrb[0].mxu0
    %v6761 = vadd.f32 %v6616, %v6760
    %v6762 = vpop.f32.mrb[0].mxu0
    %v6763 = vpop.f32.mrb[0].mxu0
    %v6764 = vadd.f32 %v6616, %v6763
    %v6765 = vpop.f32.mrb[0].mxu0
    %6766 = vmatprep.mubr.bf16.mxu0 0
    %6767 = vmatmul.mubr.bf16.gmra.mrb[0].mxu0 %v6640
    %v6768 = vpop.f32.mrb[0].mxu0
    %v6769 = vadd.f32 %v6616, %v6768
    %v6770 = vpop.f32.mrb[0].mxu0
    %v6771 = vpop.f32.mrb[0].mxu0
    %v6772 = vadd.f32 %v6616, %v6771
    %v6773 = vpop.f32.mrb[0].mxu0
    %6774 = vmatprep.mubr.bf16.mxu0 0
    %6775 = vmatmul.mubr.bf16.gmra.mrb[0].mxu0 %v6643
    %v6776 = vpop.f32.mrb[0].mxu0
    %v6777 = vadd.f32 %v6616, %v6776
    %v6778 = vpop.f32.mrb[0].mxu0
    %v6779 = vpop.f32.mrb[0].mxu0
    %v6780 = vadd.f32 %v6616, %v6779
    %v6781 = vpop.f32.mrb[0].mxu0
    %6782 = vdwg.mxu0
    %6783 = vst [vmem:[#allocation2] sm:$0xff] %v6680
    %6784 = vst [vmem:[#allocation2 + $0x8] sm:$0xff] %v6682
    %6785 = vst [vmem:[#allocation2 + $0x10] sm:$0xff] %v6753
    %6786 = vst [vmem:[#allocation2 + $0x18] sm:$0xff] %v6684
    %6787 = vst [vmem:[#allocation2 + $0x20] sm:$0xff] %v6686
    %6788 = vst [vmem:[#allocation2 + $0x28] sm:$0xff] %v6756
    %6789 = vst [vmem:[#allocation2 + $0x30] sm:$0xff] %v6690
    %6790 = vst [vmem:[#allocation2 + $0x38] sm:$0xff] %v6692
    %6791 = vst [vmem:[#allocation2 + $0x40] sm:$0xff] %v6761
    %6792 = vst [vmem:[#allocation2 + $0x48] sm:$0xff] %v6694
    %6793 = vst [vmem:[#allocation2 + $0x50] sm:$0xff] %v6696
    %6794 = vst [vmem:[#allocation2 + $0x58] sm:$0xff] %v6764
    %6795 = vst [vmem:[#allocation2 + $0x60] sm:$0xff] %v6700
    %6796 = vst [vmem:[#allocation2 + $0x68] sm:$0xff] %v6702
    %6797 = vst [vmem:[#allocation2 + $0x70] sm:$0xff] %v6769
    %6798 = vst [vmem:[#allocation2 + $0x78] sm:$0xff] %v6704
    %6799 = vst [vmem:[#allocation2 + $0x80] sm:$0xff] %v6706
    %6800 = vst [vmem:[#allocation2 + $0x88] sm:$0xff] %v6772
    %6801 = vst [vmem:[#allocation2 + $0x90] sm:$0xff] %v6710
    %6802 = vst [vmem:[#allocation2 + $0x98] sm:$0xff] %v6712
    %6803 = vst [vmem:[#allocation2 + $0xa0] sm:$0xff] %v6777
    %6804 = vst [vmem:[#allocation2 + $0xa8] sm:$0xff] %v6714
    %6805 = vst [vmem:[#allocation2 + $0xb0] sm:$0xff] %v6716
    %6806 = vst [vmem:[#allocation2 + $0xb8] sm:$0xff] %v6780
    %v6807 = vld [vmem:[#allocation31] sm:$0xff]
    %v6808 = vld [vmem:[#allocation31 + $0x8] sm:$0xf]
    %v6809 = vld [vmem:[#allocation31 + $0xc] sm:$0xff]
    %v6810 = vld [vmem:[#allocation31 + $0x14] sm:$0xf]
    %v6811 = vld [vmem:[#allocation2] sm:$0xff]
    %v6812 = vld [vmem:[#allocation2 + $0x8] sm:$0xff]
    %v6813 = vld [vmem:[#allocation2 + $0x10] sm:$0xff]
    %v6818 = vunpack.c.l.b16 %v6807
    %v6819 = vunpack.c.h.b16 %v6807
    %v6820 = vunpack.c.l.b16 %v6808
    %v6821 = vunpack.c.l.b16 %v6809
    %v6822 = vunpack.c.h.b16 %v6809
    %v6823 = vunpack.c.l.b16 %v6810
    %v6824 = vpack.c.b16 %v6821, %v6818
    %v6825 = vpack.c.b16 %v6822, %v6819
    %v6826 = vpack.c.b16 %v6823, %v6820
    %6830 = vmatprep.subr.bf16.mxu0 %v6825
    %6831 = vmatpush1.bf16.msra.mxu0 %v6824
    %6832 = vmatprep.subr.bf16.mxu0 0
    %6833 = vmatpush1.bf16.msra.mxu0 0
    %6834 = vmatprep.subr.bf16.mxu0 0
    %6835 = vmatpush1.bf16.msra.mxu0 0
    %6836 = vmatprep.subr.bf16.mxu0 0
    %6837 = vmatpush1.bf16.msra.mxu0 0
    %6838 = vmatprep.subr.bf16.mxu0 0
    %6839 = vmatpush1.bf16.msra.mxu0 0
    %6840 = vmatprep.subr.bf16.mxu0 0
    %6841 = vmatpush1.bf16.msra.mxu0 0
    %6842 = vmatprep.subr.bf16.mxu0 0
    %6843 = vmatpush1.bf16.msra.mxu0 0
    %6844 = vmatprep.subr.bf16.mxu0 0
    %6845 = vmatpush1.bf16.msra.mxu0 0
    %6846 = vmatprep.subr.bf16.mxu0 0
    %6847 = vmatpush1.bf16.msra.mxu0 0
    %6848 = vmatprep.subr.bf16.mxu0 0
    %6849 = vmatpush1.bf16.msra.mxu0 0
    %6850 = vmatprep.subr.bf16.mxu0 0
    %6851 = vmatpush1.bf16.msra.mxu0 0
    %6852 = vmatprep.subr.bf16.mxu0 0
    %6853 = vmatpush1.bf16.msra.mxu0 0
    %6854 = vmatprep.subr.bf16.mxu0 0
    %6855 = vmatpush1.bf16.msra.mxu0 0
    %6856 = vmatprep.subr.bf16.mxu0 0
    %6857 = vmatpush1.bf16.msra.mxu0 0
    %6858 = vmatprep.subr.bf16.mxu0 0
    %6859 = vmatpush1.bf16.msra.mxu0 0
    %6860 = vmatprep.subr.bf16.mxu0 0
    %6861 = vmatpush1.bf16.msra.mxu0 0
    %6862 = vmatprep.mubr.bf16.mxu0 0
    %6863 = vmatmul.mubr.bf16.gmra.mrb[0].mxu0 %v4542
    %v6864 = vpop.f32.mrb[0].mxu0
    %v6865 = vadd.f32 0.0, %v6864
    %v6866 = vpop.f32.mrb[0].mxu0
    %v6867 = vadd.f32 0.0, %v6866
    %v6868 = vpop.f32.mrb[0].mxu0
    %v6869 = vpop.f32.mrb[0].mxu0
    %6870 = vdwg.mxu0
    %6871 = vmatprep.subr.bf16.mxu0 0
    %6872 = vmatpush1.bf16.msra.mxu0 %v6826
    %6873 = vmatprep.subr.bf16.mxu0 0
    %6874 = vmatpush1.bf16.msra.mxu0 0
    %6875 = vmatprep.subr.bf16.mxu0 0
    %6876 = vmatpush1.bf16.msra.mxu0 0
    %6877 = vmatprep.subr.bf16.mxu0 0
    %6878 = vmatpush1.bf16.msra.mxu0 0
    %6879 = vmatprep.subr.bf16.mxu0 0
    %6880 = vmatpush1.bf16.msra.mxu0 0
    %6881 = vmatprep.subr.bf16.mxu0 0
    %6882 = vmatpush1.bf16.msra.mxu0 0
    %6883 = vmatprep.subr.bf16.mxu0 0
    %6884 = vmatpush1.bf16.msra.mxu0 0
    %6885 = vmatprep.subr.bf16.mxu0 0
    %6886 = vmatpush1.bf16.msra.mxu0 0
    %6887 = vmatprep.subr.bf16.mxu0 0
    %6888 = vmatpush1.bf16.msra.mxu0 0
    %6889 = vmatprep.subr.bf16.mxu0 0
    %6890 = vmatpush1.bf16.msra.mxu0 0
    %6891 = vmatprep.subr.bf16.mxu0 0
    %6892 = vmatpush1.bf16.msra.mxu0 0
    %6893 = vmatprep.subr.bf16.mxu0 0
    %6894 = vmatpush1.bf16.msra.mxu0 0
    %6895 = vmatprep.subr.bf16.mxu0 0
    %6896 = vmatpush1.bf16.msra.mxu0 0
    %6897 = vmatprep.subr.bf16.mxu0 0
    %6898 = vmatpush1.bf16.msra.mxu0 0
    %6899 = vmatprep.subr.bf16.mxu0 0
    %6900 = vmatpush1.bf16.msra.mxu0 0
    %6901 = vmatprep.subr.bf16.mxu0 0
    %6902 = vmatpush1.bf16.msra.mxu0 0
    %6903 = vmatprep.mubr.bf16.mxu0 0
    %6904 = vmatmul.mubr.bf16.gmra.mrb[0].mxu0 %v4542
    %v6905 = vpop.f32.mrb[0].mxu0
    %v6906 = vadd.f32 0.0, %v6905
    %v6907 = vpop.f32.mrb[0].mxu0
    %v6908 = vpop.f32.mrb[0].mxu0
    %v6909 = vpop.f32.mrb[0].mxu0
    %6910 = vdwg.mxu0
    %v6911 = vadd.f32 %v6811, %v6865
    %v6912 = vxor.u32 %v6911, 2147483648
    %v6913 = vmul.f32 %v6912, 1.442695
    %v6914 = vpow.pop %v6913
    %v6915 = vadd.f32 %v6914, 1.0
    %v6916 = vrcp.pop %v6915
    %v6917 = vmul.f32 1.0, %v6916
    %v6918 = vadd.f32 %v6812, %v6867
    %v6919 = vxor.u32 %v6918, 2147483648
    %v6920 = vmul.f32 %v6919, 1.442695
    %v6921 = vpow.pop %v6920
    %v6922 = vadd.f32 %v6921, 1.0
    %v6923 = vrcp.pop %v6922
    %v6924 = vmul.f32 1.0, %v6923
    %v6925 = vlaneseq
    %v6926 = vshrl.u32 %v6925, 7
    %v6927 = vsub.s32 1, %v6926
    %v6928 = vrot.slane %v6584, %v6927
    %v6929 = vadd.f32 %v6906, %v6928
    %v6930 = vmul.f32 %v6917, %v6929
    %v6931 = vadd.f32 %v6813, %v6930
    %v6932 = vtanh.pop %v6931
    %v6933 = vsub.f32 1.0, %v6924
    %v6934 = vmul.f32 %v6933, %v6932
    %v6935 = vmul.f32 %v6924, 0.0
    %v6936 = vadd.f32 %v6934, %v6935
    %v6937 = vld [vmem:[#allocation2 + $0x18] sm:$0xff]
    %v6938 = vld [vmem:[#allocation2 + $0x20] sm:$0xff]
    %v6939 = vld [vmem:[#allocation2 + $0x28] sm:$0xff]
    %v6940 = vpack.c.bf16 %v6936, %v6936
    %v6942 = vsel %vm4541, %v6940, 0
    %6944 = vmatprep.subr.bf16.mxu0 %v6825
    %6945 = vmatpush1.bf16.msra.mxu0 %v6824
    %6946 = vmatprep.subr.bf16.mxu0 0
    %6947 = vmatpush1.bf16.msra.mxu0 0
    %6948 = vmatprep.subr.bf16.mxu0 0
    %6949 = vmatpush1.bf16.msra.mxu0 0
    %6950 = vmatprep.subr.bf16.mxu0 0
    %6951 = vmatpush1.bf16.msra.mxu0 0
    %6952 = vmatprep.subr.bf16.mxu0 0
    %6953 = vmatpush1.bf16.msra.mxu0 0
    %6954 = vmatprep.subr.bf16.mxu0 0
    %6955 = vmatpush1.bf16.msra.mxu0 0
    %6956 = vmatprep.subr.bf16.mxu0 0
    %6957 = vmatpush1.bf16.msra.mxu0 0
    %6958 = vmatprep.subr.bf16.mxu0 0
    %6959 = vmatpush1.bf16.msra.mxu0 0
    %6960 = vmatprep.subr.bf16.mxu0 0
    %6961 = vmatpush1.bf16.msra.mxu0 0
    %6962 = vmatprep.subr.bf16.mxu0 0
    %6963 = vmatpush1.bf16.msra.mxu0 0
    %6964 = vmatprep.subr.bf16.mxu0 0
    %6965 = vmatpush1.bf16.msra.mxu0 0
    %6966 = vmatprep.subr.bf16.mxu0 0
    %6967 = vmatpush1.bf16.msra.mxu0 0
    %6968 = vmatprep.subr.bf16.mxu0 0
    %6969 = vmatpush1.bf16.msra.mxu0 0
    %6970 = vmatprep.subr.bf16.mxu0 0
    %6971 = vmatpush1.bf16.msra.mxu0 0
    %6972 = vmatprep.subr.bf16.mxu0 0
    %6973 = vmatpush1.bf16.msra.mxu0 0
    %6974 = vmatprep.subr.bf16.mxu0 0
    %6975 = vmatpush1.bf16.msra.mxu0 0
    %6976 = vmatprep.mubr.bf16.mxu0 0
    %6977 = vmatmul.mubr.bf16.gmra.mrb[0].mxu0 %v6942
    %v6978 = vpop.f32.mrb[0].mxu0
    %v6979 = vadd.f32 0.0, %v6978
    %v6980 = vpop.f32.mrb[0].mxu0
    %v6981 = vadd.f32 0.0, %v6980
    %v6982 = vpop.f32.mrb[0].mxu0
    %v6983 = vpop.f32.mrb[0].mxu0
    %6984 = vdwg.mxu0
    %6985 = vmatprep.subr.bf16.mxu0 0
    %6986 = vmatpush1.bf16.msra.mxu0 %v6826
    %6987 = vmatprep.subr.bf16.mxu0 0
    %6988 = vmatpush1.bf16.msra.mxu0 0
    %6989 = vmatprep.subr.bf16.mxu0 0
    %6990 = vmatpush1.bf16.msra.mxu0 0
    %6991 = vmatprep.subr.bf16.mxu0 0
    %6992 = vmatpush1.bf16.msra.mxu0 0
    %6993 = vmatprep.subr.bf16.mxu0 0
    %6994 = vmatpush1.bf16.msra.mxu0 0
    %6995 = vmatprep.subr.bf16.mxu0 0
    %6996 = vmatpush1.bf16.msra.mxu0 0
    %6997 = vmatprep.subr.bf16.mxu0 0
    %6998 = vmatpush1.bf16.msra.mxu0 0
    %6999 = vmatprep.subr.bf16.mxu0 0
    %7000 = vmatpush1.bf16.msra.mxu0 0
    %7001 = vmatprep.subr.bf16.mxu0 0
    %7002 = vmatpush1.bf16.msra.mxu0 0
    %7003 = vmatprep.subr.bf16.mxu0 0
    %7004 = vmatpush1.bf16.msra.mxu0 0
    %7005 = vmatprep.subr.bf16.mxu0 0
    %7006 = vmatpush1.bf16.msra.mxu0 0
    %7007 = vmatprep.subr.bf16.mxu0 0
    %7008 = vmatpush1.bf16.msra.mxu0 0
    %7009 = vmatprep.subr.bf16.mxu0 0
    %7010 = vmatpush1.bf16.msra.mxu0 0
    %7011 = vmatprep.subr.bf16.mxu0 0
    %7012 = vmatpush1.bf16.msra.mxu0 0
    %7013 = vmatprep.subr.bf16.mxu0 0
    %7014 = vmatpush1.bf16.msra.mxu0 0
    %7015 = vmatprep.subr.bf16.mxu0 0
    %7016 = vmatpush1.bf16.msra.mxu0 0
    %7017 = vmatprep.mubr.bf16.mxu0 0
    %7018 = vmatmul.mubr.bf16.gmra.mrb[0].mxu0 %v6942
    %v7019 = vpop.f32.mrb[0].mxu0
    %v7020 = vadd.f32 0.0, %v7019
    %v7021 = vpop.f32.mrb[0].mxu0
    %v7022 = vpop.f32.mrb[0].mxu0
    %v7023 = vpop.f32.mrb[0].mxu0
    %7024 = vdwg.mxu0
    %v7025 = vadd.f32 %v6937, %v6979
    %v7026 = vxor.u32 %v7025, 2147483648
    %v7027 = vmul.f32 %v7026, 1.442695
    %v7028 = vpow.pop %v7027
    %v7029 = vadd.f32 %v7028, 1.0
    %v7030 = vrcp.pop %v7029
    %v7031 = vmul.f32 1.0, %v7030
    %v7032 = vadd.f32 %v6938, %v6981
    %v7033 = vxor.u32 %v7032, 2147483648
    %v7034 = vmul.f32 %v7033, 1.442695
    %v7035 = vpow.pop %v7034
    %v7036 = vadd.f32 %v7035, 1.0
    %v7037 = vrcp.pop %v7036
    %v7038 = vmul.f32 1.0, %v7037
    %v7039 = vadd.f32 %v7020, %v6928
    %v7040 = vmul.f32 %v7031, %v7039
    %v7041 = vadd.f32 %v6939, %v7040
    %v7042 = vtanh.pop %v7041
    %v7043 = vsub.f32 1.0, %v7038
    %v7044 = vmul.f32 %v7043, %v7042
    %v7045 = vmul.f32 %v7038, %v6936
    %v7046 = vadd.f32 %v7044, %v7045
    %v7047 = vld [vmem:[#allocation2 + $0x30] sm:$0xff]
    %v7048 = vld [vmem:[#allocation2 + $0x38] sm:$0xff]
    %v7049 = vld [vmem:[#allocation2 + $0x40] sm:$0xff]
    %v7050 = vpack.c.bf16 %v7046, %v7046
    %v7052 = vsel %vm4541, %v7050, 0
    %7054 = vmatprep.subr.bf16.mxu0 %v6825
    %7055 = vmatpush1.bf16.msra.mxu0 %v6824
    %7056 = vmatprep.subr.bf16.mxu0 0
    %7057 = vmatpush1.bf16.msra.mxu0 0
    %7058 = vmatprep.subr.bf16.mxu0 0
    %7059 = vmatpush1.bf16.msra.mxu0 0
    %7060 = vmatprep.subr.bf16.mxu0 0
    %7061 = vmatpush1.bf16.msra.mxu0 0
    %7062 = vmatprep.subr.bf16.mxu0 0
    %7063 = vmatpush1.bf16.msra.mxu0 0
    %7064 = vmatprep.subr.bf16.mxu0 0
    %7065 = vmatpush1.bf16.msra.mxu0 0
    %7066 = vmatprep.subr.bf16.mxu0 0
    %7067 = vmatpush1.bf16.msra.mxu0 0
    %7068 = vmatprep.subr.bf16.mxu0 0
    %7069 = vmatpush1.bf16.msra.mxu0 0
    %7070 = vmatprep.subr.bf16.mxu0 0
    %7071 = vmatpush1.bf16.msra.mxu0 0
    %7072 = vmatprep.subr.bf16.mxu0 0
    %7073 = vmatpush1.bf16.msra.mxu0 0
    %7074 = vmatprep.subr.bf16.mxu0 0
    %7075 = vmatpush1.bf16.msra.mxu0 0
    %7076 = vmatprep.subr.bf16.mxu0 0
    %7077 = vmatpush1.bf16.msra.mxu0 0
    %7078 = vmatprep.subr.bf16.mxu0 0
    %7079 = vmatpush1.bf16.msra.mxu0 0
    %7080 = vmatprep.subr.bf16.mxu0 0
    %7081 = vmatpush1.bf16.msra.mxu0 0
    %7082 = vmatprep.subr.bf16.mxu0 0
    %7083 = vmatpush1.bf16.msra.mxu0 0
    %7084 = vmatprep.subr.bf16.mxu0 0
    %7085 = vmatpush1.bf16.msra.mxu0 0
    %7086 = vmatprep.mubr.bf16.mxu0 0
    %7087 = vmatmul.mubr.bf16.gmra.mrb[0].mxu0 %v7052
    %v7088 = vpop.f32.mrb[0].mxu0
    %v7089 = vadd.f32 0.0, %v7088
    %v7090 = vpop.f32.mrb[0].mxu0
    %v7091 = vadd.f32 0.0, %v7090
    %v7092 = vpop.f32.mrb[0].mxu0
    %v7093 = vpop.f32.mrb[0].mxu0
    %7094 = vdwg.mxu0
    %7095 = vmatprep.subr.bf16.mxu0 0
    %7096 = vmatpush1.bf16.msra.mxu0 %v6826
    %7097 = vmatprep.subr.bf16.mxu0 0
    %7098 = vmatpush1.bf16.msra.mxu0 0
    %7099 = vmatprep.subr.bf16.mxu0 0
    %7100 = vmatpush1.bf16.msra.mxu0 0
    %7101 = vmatprep.subr.bf16.mxu0 0
    %7102 = vmatpush1.bf16.msra.mxu0 0
    %7103 = vmatprep.subr.bf16.mxu0 0
    %7104 = vmatpush1.bf16.msra.mxu0 0
    %7105 = vmatprep.subr.bf16.mxu0 0
    %7106 = vmatpush1.bf16.msra.mxu0 0
    %7107 = vmatprep.subr.bf16.mxu0 0
    %7108 = vmatpush1.bf16.msra.mxu0 0
    %7109 = vmatprep.subr.bf16.mxu0 0
    %7110 = vmatpush1.bf16.msra.mxu0 0
    %7111 = vmatprep.subr.bf16.mxu0 0
    %7112 = vmatpush1.bf16.msra.mxu0 0
    %7113 = vmatprep.subr.bf16.mxu0 0
    %7114 = vmatpush1.bf16.msra.mxu0 0
    %7115 = vmatprep.subr.bf16.mxu0 0
    %7116 = vmatpush1.bf16.msra.mxu0 0
    %7117 = vmatprep.subr.bf16.mxu0 0
    %7118 = vmatpush1.bf16.msra.mxu0 0
    %7119 = vmatprep.subr.bf16.mxu0 0
    %7120 = vmatpush1.bf16.msra.mxu0 0
    %7121 = vmatprep.subr.bf16.mxu0 0
    %7122 = vmatpush1.bf16.msra.mxu0 0
    %7123 = vmatprep.subr.bf16.mxu0 0
    %7124 = vmatpush1.bf16.msra.mxu0 0
    %7125 = vmatprep.subr.bf16.mxu0 0
    %7126 = vmatpush1.bf16.msra.mxu0 0
    %7127 = vmatprep.mubr.bf16.mxu0 0
    %7128 = vmatmul.mubr.bf16.gmra.mrb[0].mxu0 %v7052
    %v7129 = vpop.f32.mrb[0].mxu0
    %v7130 = vadd.f32 0.0, %v7129
    %v7131 = vpop.f32.mrb[0].mxu0
    %v7132 = vpop.f32.mrb[0].mxu0
    %v7133 = vpop.f32.mrb[0].mxu0
    %7134 = vdwg.mxu0
    %v7135 = vadd.f32 %v7047, %v7089
    %v7136 = vxor.u32 %v7135, 2147483648
    %v7137 = vmul.f32 %v7136, 1.442695
    %v7138 = vpow.pop %v7137
    %v7139 = vadd.f32 %v7138, 1.0
    %v7140 = vrcp.pop %v7139
    %v7141 = vmul.f32 1.0, %v7140
    %v7142 = vadd.f32 %v7048, %v7091
    %v7143 = vxor.u32 %v7142, 2147483648
    %v7144 = vmul.f32 %v7143, 1.442695
    %v7145 = vpow.pop %v7144
    %v7146 = vadd.f32 %v7145, 1.0
    %v7147 = vrcp.pop %v7146
    %v7148 = vmul.f32 1.0, %v7147
    %v7149 = vadd.f32 %v7130, %v6928
    %v7150 = vmul.f32 %v7141, %v7149
    %v7151 = vadd.f32 %v7049, %v7150
    %v7152 = vtanh.pop %v7151
    %v7153 = vsub.f32 1.0, %v7148
    %v7154 = vmul.f32 %v7153, %v7152
    %v7155 = vmul.f32 %v7148, %v7046
    %v7156 = vadd.f32 %v7154, %v7155
    %v7157 = vld [vmem:[#allocation2 + $0x48] sm:$0xff]
    %v7158 = vld [vmem:[#allocation2 + $0x50] sm:$0xff]
    %v7159 = vld [vmem:[#allocation2 + $0x58] sm:$0xff]
    %v7160 = vpack.c.bf16 %v7156, %v7156
    %v7162 = vsel %vm4541, %v7160, 0
    %7164 = vmatprep.subr.bf16.mxu0 %v6825
    %7165 = vmatpush1.bf16.msra.mxu0 %v6824
    %7166 = vmatprep.subr.bf16.mxu0 0
    %7167 = vmatpush1.bf16.msra.mxu0 0
    %7168 = vmatprep.subr.bf16.mxu0 0
    %7169 = vmatpush1.bf16.msra.mxu0 0
    %7170 = vmatprep.subr.bf16.mxu0 0
    %7171 = vmatpush1.bf16.msra.mxu0 0
    %7172 = vmatprep.subr.bf16.mxu0 0
    %7173 = vmatpush1.bf16.msra.mxu0 0
    %7174 = vmatprep.subr.bf16.mxu0 0
    %7175 = vmatpush1.bf16.msra.mxu0 0
    %7176 = vmatprep.subr.bf16.mxu0 0
    %7177 = vmatpush1.bf16.msra.mxu0 0
    %7178 = vmatprep.subr.bf16.mxu0 0
    %7179 = vmatpush1.bf16.msra.mxu0 0
    %7180 = vmatprep.subr.bf16.mxu0 0
    %7181 = vmatpush1.bf16.msra.mxu0 0
    %7182 = vmatprep.subr.bf16.mxu0 0
    %7183 = vmatpush1.bf16.msra.mxu0 0
    %7184 = vmatprep.subr.bf16.mxu0 0
    %7185 = vmatpush1.bf16.msra.mxu0 0
    %7186 = vmatprep.subr.bf16.mxu0 0
    %7187 = vmatpush1.bf16.msra.mxu0 0
    %7188 = vmatprep.subr.bf16.mxu0 0
    %7189 = vmatpush1.bf16.msra.mxu0 0
    %7190 = vmatprep.subr.bf16.mxu0 0
    %7191 = vmatpush1.bf16.msra.mxu0 0
    %7192 = vmatprep.subr.bf16.mxu0 0
    %7193 = vmatpush1.bf16.msra.mxu0 0
    %7194 = vmatprep.subr.bf16.mxu0 0
    %7195 = vmatpush1.bf16.msra.mxu0 0
    %7196 = vmatprep.mubr.bf16.mxu0 0
    %7197 = vmatmul.mubr.bf16.gmra.mrb[0].mxu0 %v7162
    %v7198 = vpop.f32.mrb[0].mxu0
    %v7199 = vadd.f32 0.0, %v7198
    %v7200 = vpop.f32.mrb[0].mxu0
    %v7201 = vadd.f32 0.0, %v7200
    %v7202 = vpop.f32.mrb[0].mxu0
    %v7203 = vpop.f32.mrb[0].mxu0
    %7204 = vdwg.mxu0
    %7205 = vmatprep.subr.bf16.mxu0 0
    %7206 = vmatpush1.bf16.msra.mxu0 %v6826
    %7207 = vmatprep.subr.bf16.mxu0 0
    %7208 = vmatpush1.bf16.msra.mxu0 0
    %7209 = vmatprep.subr.bf16.mxu0 0
    %7210 = vmatpush1.bf16.msra.mxu0 0
    %7211 = vmatprep.subr.bf16.mxu0 0
    %7212 = vmatpush1.bf16.msra.mxu0 0
    %7213 = vmatprep.subr.bf16.mxu0 0
    %7214 = vmatpush1.bf16.msra.mxu0 0
    %7215 = vmatprep.subr.bf16.mxu0 0
    %7216 = vmatpush1.bf16.msra.mxu0 0
    %7217 = vmatprep.subr.bf16.mxu0 0
    %7218 = vmatpush1.bf16.msra.mxu0 0
    %7219 = vmatprep.subr.bf16.mxu0 0
    %7220 = vmatpush1.bf16.msra.mxu0 0
    %7221 = vmatprep.subr.bf16.mxu0 0
    %7222 = vmatpush1.bf16.msra.mxu0 0
    %7223 = vmatprep.subr.bf16.mxu0 0
    %7224 = vmatpush1.bf16.msra.mxu0 0
    %7225 = vmatprep.subr.bf16.mxu0 0
    %7226 = vmatpush1.bf16.msra.mxu0 0
    %7227 = vmatprep.subr.bf16.mxu0 0
    %7228 = vmatpush1.bf16.msra.mxu0 0
    %7229 = vmatprep.subr.bf16.mxu0 0
    %7230 = vmatpush1.bf16.msra.mxu0 0
    %7231 = vmatprep.subr.bf16.mxu0 0
    %7232 = vmatpush1.bf16.msra.mxu0 0
    %7233 = vmatprep.subr.bf16.mxu0 0
    %7234 = vmatpush1.bf16.msra.mxu0 0
    %7235 = vmatprep.subr.bf16.mxu0 0
    %7236 = vmatpush1.bf16.msra.mxu0 0
    %7237 = vmatprep.mubr.bf16.mxu0 0
    %7238 = vmatmul.mubr.bf16.gmra.mrb[0].mxu0 %v7162
    %v7239 = vpop.f32.mrb[0].mxu0
    %v7240 = vadd.f32 0.0, %v7239
    %v7241 = vpop.f32.mrb[0].mxu0
    %v7242 = vpop.f32.mrb[0].mxu0
    %v7243 = vpop.f32.mrb[0].mxu0
    %7244 = vdwg.mxu0
    %v7245 = vadd.f32 %v7157, %v7199
    %v7246 = vxor.u32 %v7245, 2147483648
    %v7247 = vmul.f32 %v7246, 1.442695
    %v7248 = vpow.pop %v7247
    %v7249 = vadd.f32 %v7248, 1.0
    %v7250 = vrcp.pop %v7249
    %v7251 = vmul.f32 1.0, %v7250
    %v7252 = vadd.f32 %v7158, %v7201
    %v7253 = vxor.u32 %v7252, 2147483648
    %v7254 = vmul.f32 %v7253, 1.442695
    %v7255 = vpow.pop %v7254
    %v7256 = vadd.f32 %v7255, 1.0
    %v7257 = vrcp.pop %v7256
    %v7258 = vmul.f32 1.0, %v7257
    %v7259 = vadd.f32 %v7240, %v6928
    %v7260 = vmul.f32 %v7251, %v7259
    %v7261 = vadd.f32 %v7159, %v7260
    %v7262 = vtanh.pop %v7261
    %v7263 = vsub.f32 1.0, %v7258
    %v7264 = vmul.f32 %v7263, %v7262
    %v7265 = vmul.f32 %v7258, %v7156
    %v7266 = vadd.f32 %v7264, %v7265
    %v7267 = vld [vmem:[#allocation2 + $0x60] sm:$0xff]
    %v7268 = vld [vmem:[#allocation2 + $0x68] sm:$0xff]
    %v7269 = vld [vmem:[#allocation2 + $0x70] sm:$0xff]
    %v7270 = vpack.c.bf16 %v7266, %v7266
    %v7272 = vsel %vm4541, %v7270, 0
    %7274 = vmatprep.subr.bf16.mxu0 %v6825
    %7275 = vmatpush1.bf16.msra.mxu0 %v6824
    %7276 = vmatprep.subr.bf16.mxu0 0
    %7277 = vmatpush1.bf16.msra.mxu0 0
    %7278 = vmatprep.subr.bf16.mxu0 0
    %7279 = vmatpush1.bf16.msra.mxu0 0
    %7280 = vmatprep.subr.bf16.mxu0 0
    %7281 = vmatpush1.bf16.msra.mxu0 0
    %7282 = vmatprep.subr.bf16.mxu0 0
    %7283 = vmatpush1.bf16.msra.mxu0 0
    %7284 = vmatprep.subr.bf16.mxu0 0
    %7285 = vmatpush1.bf16.msra.mxu0 0
    %7286 = vmatprep.subr.bf16.mxu0 0
    %7287 = vmatpush1.bf16.msra.mxu0 0
    %7288 = vmatprep.subr.bf16.mxu0 0
    %7289 = vmatpush1.bf16.msra.mxu0 0
    %7290 = vmatprep.subr.bf16.mxu0 0
    %7291 = vmatpush1.bf16.msra.mxu0 0
    %7292 = vmatprep.subr.bf16.mxu0 0
    %7293 = vmatpush1.bf16.msra.mxu0 0
    %7294 = vmatprep.subr.bf16.mxu0 0
    %7295 = vmatpush1.bf16.msra.mxu0 0
    %7296 = vmatprep.subr.bf16.mxu0 0
    %7297 = vmatpush1.bf16.msra.mxu0 0
    %7298 = vmatprep.subr.bf16.mxu0 0
    %7299 = vmatpush1.bf16.msra.mxu0 0
    %7300 = vmatprep.subr.bf16.mxu0 0
    %7301 = vmatpush1.bf16.msra.mxu0 0
    %7302 = vmatprep.subr.bf16.mxu0 0
    %7303 = vmatpush1.bf16.msra.mxu0 0
    %7304 = vmatprep.subr.bf16.mxu0 0
    %7305 = vmatpush1.bf16.msra.mxu0 0
    %7306 = vmatprep.mubr.bf16.mxu0 0
    %7307 = vmatmul.mubr.bf16.gmra.mrb[0].mxu0 %v7272
    %v7308 = vpop.f32.mrb[0].mxu0
    %v7309 = vadd.f32 0.0, %v7308
    %v7310 = vpop.f32.mrb[0].mxu0
    %v7311 = vadd.f32 0.0, %v7310
    %v7312 = vpop.f32.mrb[0].mxu0
    %v7313 = vpop.f32.mrb[0].mxu0
    %7314 = vdwg.mxu0
    %7315 = vmatprep.subr.bf16.mxu0 0
    %7316 = vmatpush1.bf16.msra.mxu0 %v6826
    %7317 = vmatprep.subr.bf16.mxu0 0
    %7318 = vmatpush1.bf16.msra.mxu0 0
    %7319 = vmatprep.subr.bf16.mxu0 0
    %7320 = vmatpush1.bf16.msra.mxu0 0
    %7321 = vmatprep.subr.bf16.mxu0 0
    %7322 = vmatpush1.bf16.msra.mxu0 0
    %7323 = vmatprep.subr.bf16.mxu0 0
    %7324 = vmatpush1.bf16.msra.mxu0 0
    %7325 = vmatprep.subr.bf16.mxu0 0
    %7326 = vmatpush1.bf16.msra.mxu0 0
    %7327 = vmatprep.subr.bf16.mxu0 0
    %7328 = vmatpush1.bf16.msra.mxu0 0
    %7329 = vmatprep.subr.bf16.mxu0 0
    %7330 = vmatpush1.bf16.msra.mxu0 0
    %7331 = vmatprep.subr.bf16.mxu0 0
    %7332 = vmatpush1.bf16.msra.mxu0 0
    %7333 = vmatprep.subr.bf16.mxu0 0
    %7334 = vmatpush1.bf16.msra.mxu0 0
    %7335 = vmatprep.subr.bf16.mxu0 0
    %7336 = vmatpush1.bf16.msra.mxu0 0
    %7337 = vmatprep.subr.bf16.mxu0 0
    %7338 = vmatpush1.bf16.msra.mxu0 0
    %7339 = vmatprep.subr.bf16.mxu0 0
    %7340 = vmatpush1.bf16.msra.mxu0 0
    %7341 = vmatprep.subr.bf16.mxu0 0
    %7342 = vmatpush1.bf16.msra.mxu0 0
    %7343 = vmatprep.subr.bf16.mxu0 0
    %7344 = vmatpush1.bf16.msra.mxu0 0
    %7345 = vmatprep.subr.bf16.mxu0 0
    %7346 = vmatpush1.bf16.msra.mxu0 0
    %7347 = vmatprep.mubr.bf16.mxu0 0
    %7348 = vmatmul.mubr.bf16.gmra.mrb[0].mxu0 %v7272
    %v7349 = vpop.f32.mrb[0].mxu0
    %v7350 = vadd.f32 0.0, %v7349
    %v7351 = vpop.f32.mrb[0].mxu0
    %v7352 = vpop.f32.mrb[0].mxu0
    %v7353 = vpop.f32.mrb[0].mxu0
    %7354 = vdwg.mxu0
    %v7355 = vadd.f32 %v7267, %v7309
    %v7356 = vxor.u32 %v7355, 2147483648
    %v7357 = vmul.f32 %v7356, 1.442695
    %v7358 = vpow.pop %v7357
    %v7359 = vadd.f32 %v7358, 1.0
    %v7360 = vrcp.pop %v7359
    %v7361 = vmul.f32 1.0, %v7360
    %v7362 = vadd.f32 %v7268, %v7311
    %v7363 = vxor.u32 %v7362, 2147483648
    %v7364 = vmul.f32 %v7363, 1.442695
    %v7365 = vpow.pop %v7364
    %v7366 = vadd.f32 %v7365, 1.0
    %v7367 = vrcp.pop %v7366
    %v7368 = vmul.f32 1.0, %v7367
    %v7369 = vadd.f32 %v7350, %v6928
    %v7370 = vmul.f32 %v7361, %v7369
    %v7371 = vadd.f32 %v7269, %v7370
    %v7372 = vtanh.pop %v7371
    %v7373 = vsub.f32 1.0, %v7368
    %v7374 = vmul.f32 %v7373, %v7372
    %v7375 = vmul.f32 %v7368, %v7266
    %v7376 = vadd.f32 %v7374, %v7375
    %v7377 = vld [vmem:[#allocation2 + $0x78] sm:$0xff]
    %v7378 = vld [vmem:[#allocation2 + $0x80] sm:$0xff]
    %v7379 = vld [vmem:[#allocation2 + $0x88] sm:$0xff]
    %v7380 = vpack.c.bf16 %v7376, %v7376
    %v7382 = vsel %vm4541, %v7380, 0
    %7384 = vmatprep.subr.bf16.mxu0 %v6825
    %7385 = vmatpush1.bf16.msra.mxu0 %v6824
    %7386 = vmatprep.subr.bf16.mxu0 0
    %7387 = vmatpush1.bf16.msra.mxu0 0
    %7388 = vmatprep.subr.bf16.mxu0 0
    %7389 = vmatpush1.bf16.msra.mxu0 0
    %7390 = vmatprep.subr.bf16.mxu0 0
    %7391 = vmatpush1.bf16.msra.mxu0 0
    %7392 = vmatprep.subr.bf16.mxu0 0
    %7393 = vmatpush1.bf16.msra.mxu0 0
    %7394 = vmatprep.subr.bf16.mxu0 0
    %7395 = vmatpush1.bf16.msra.mxu0 0
    %7396 = vmatprep.subr.bf16.mxu0 0
    %7397 = vmatpush1.bf16.msra.mxu0 0
    %7398 = vmatprep.subr.bf16.mxu0 0
    %7399 = vmatpush1.bf16.msra.mxu0 0
    %7400 = vmatprep.subr.bf16.mxu0 0
    %7401 = vmatpush1.bf16.msra.mxu0 0
    %7402 = vmatprep.subr.bf16.mxu0 0
    %7403 = vmatpush1.bf16.msra.mxu0 0
    %7404 = vmatprep.subr.bf16.mxu0 0
    %7405 = vmatpush1.bf16.msra.mxu0 0
    %7406 = vmatprep.subr.bf16.mxu0 0
    %7407 = vmatpush1.bf16.msra.mxu0 0
    %7408 = vmatprep.subr.bf16.mxu0 0
    %7409 = vmatpush1.bf16.msra.mxu0 0
    %7410 = vmatprep.subr.bf16.mxu0 0
    %7411 = vmatpush1.bf16.msra.mxu0 0
    %7412 = vmatprep.subr.bf16.mxu0 0
    %7413 = vmatpush1.bf16.msra.mxu0 0
    %7414 = vmatprep.subr.bf16.mxu0 0
    %7415 = vmatpush1.bf16.msra.mxu0 0
    %7416 = vmatprep.mubr.bf16.mxu0 0
    %7417 = vmatmul.mubr.bf16.gmra.mrb[0].mxu0 %v7382
    %v7418 = vpop.f32.mrb[0].mxu0
    %v7419 = vadd.f32 0.0, %v7418
    %v7420 = vpop.f32.mrb[0].mxu0
    %v7421 = vadd.f32 0.0, %v7420
    %v7422 = vpop.f32.mrb[0].mxu0
    %v7423 = vpop.f32.mrb[0].mxu0
    %7424 = vdwg.mxu0
    %7425 = vmatprep.subr.bf16.mxu0 0
    %7426 = vmatpush1.bf16.msra.mxu0 %v6826
    %7427 = vmatprep.subr.bf16.mxu0 0
    %7428 = vmatpush1.bf16.msra.mxu0 0
    %7429 = vmatprep.subr.bf16.mxu0 0
    %7430 = vmatpush1.bf16.msra.mxu0 0
    %7431 = vmatprep.subr.bf16.mxu0 0
    %7432 = vmatpush1.bf16.msra.mxu0 0
    %7433 = vmatprep.subr.bf16.mxu0 0
    %7434 = vmatpush1.bf16.msra.mxu0 0
    %7435 = vmatprep.subr.bf16.mxu0 0
    %7436 = vmatpush1.bf16.msra.mxu0 0
    %7437 = vmatprep.subr.bf16.mxu0 0
    %7438 = vmatpush1.bf16.msra.mxu0 0
    %7439 = vmatprep.subr.bf16.mxu0 0
    %7440 = vmatpush1.bf16.msra.mxu0 0
    %7441 = vmatprep.subr.bf16.mxu0 0
    %7442 = vmatpush1.bf16.msra.mxu0 0
    %7443 = vmatprep.subr.bf16.mxu0 0
    %7444 = vmatpush1.bf16.msra.mxu0 0
    %7445 = vmatprep.subr.bf16.mxu0 0
    %7446 = vmatpush1.bf16.msra.mxu0 0
    %7447 = vmatprep.subr.bf16.mxu0 0
    %7448 = vmatpush1.bf16.msra.mxu0 0
    %7449 = vmatprep.subr.bf16.mxu0 0
    %7450 = vmatpush1.bf16.msra.mxu0 0
    %7451 = vmatprep.subr.bf16.mxu0 0
    %7452 = vmatpush1.bf16.msra.mxu0 0
    %7453 = vmatprep.subr.bf16.mxu0 0
    %7454 = vmatpush1.bf16.msra.mxu0 0
    %7455 = vmatprep.subr.bf16.mxu0 0
    %7456 = vmatpush1.bf16.msra.mxu0 0
    %7457 = vmatprep.mubr.bf16.mxu0 0
    %7458 = vmatmul.mubr.bf16.gmra.mrb[0].mxu0 %v7382
    %v7459 = vpop.f32.mrb[0].mxu0
    %v7460 = vadd.f32 0.0, %v7459
    %v7461 = vpop.f32.mrb[0].mxu0
    %v7462 = vpop.f32.mrb[0].mxu0
    %v7463 = vpop.f32.mrb[0].mxu0
    %7464 = vdwg.mxu0
    %v7465 = vadd.f32 %v7377, %v7419
    %v7466 = vxor.u32 %v7465, 2147483648
    %v7467 = vmul.f32 %v7466, 1.442695
    %v7468 = vpow.pop %v7467
    %v7469 = vadd.f32 %v7468, 1.0
    %v7470 = vrcp.pop %v7469
    %v7471 = vmul.f32 1.0, %v7470
    %v7472 = vadd.f32 %v7378, %v7421
    %v7473 = vxor.u32 %v7472, 2147483648
    %v7474 = vmul.f32 %v7473, 1.442695
    %v7475 = vpow.pop %v7474
    %v7476 = vadd.f32 %v7475, 1.0
    %v7477 = vrcp.pop %v7476
    %v7478 = vmul.f32 1.0, %v7477
    %v7479 = vadd.f32 %v7460, %v6928
    %v7480 = vmul.f32 %v7471, %v7479
    %v7481 = vadd.f32 %v7379, %v7480
    %v7482 = vtanh.pop %v7481
    %v7483 = vsub.f32 1.0, %v7478
    %v7484 = vmul.f32 %v7483, %v7482
    %v7485 = vmul.f32 %v7478, %v7376
    %v7486 = vadd.f32 %v7484, %v7485
    %v7487 = vld [vmem:[#allocation2 + $0x90] sm:$0xff]
    %v7488 = vld [vmem:[#allocation2 + $0x98] sm:$0xff]
    %v7489 = vld [vmem:[#allocation2 + $0xa0] sm:$0xff]
    %v7490 = vpack.c.bf16 %v7486, %v7486
    %v7492 = vsel %vm4541, %v7490, 0
    %7494 = vmatprep.subr.bf16.mxu0 %v6825
    %7495 = vmatpush1.bf16.msra.mxu0 %v6824
    %7496 = vmatprep.subr.bf16.mxu0 0
    %7497 = vmatpush1.bf16.msra.mxu0 0
    %7498 = vmatprep.subr.bf16.mxu0 0
    %7499 = vmatpush1.bf16.msra.mxu0 0
    %7500 = vmatprep.subr.bf16.mxu0 0
    %7501 = vmatpush1.bf16.msra.mxu0 0
    %7502 = vmatprep.subr.bf16.mxu0 0
    %7503 = vmatpush1.bf16.msra.mxu0 0
    %7504 = vmatprep.subr.bf16.mxu0 0
    %7505 = vmatpush1.bf16.msra.mxu0 0
    %7506 = vmatprep.subr.bf16.mxu0 0
    %7507 = vmatpush1.bf16.msra.mxu0 0
    %7508 = vmatprep.subr.bf16.mxu0 0
    %7509 = vmatpush1.bf16.msra.mxu0 0
    %7510 = vmatprep.subr.bf16.mxu0 0
    %7511 = vmatpush1.bf16.msra.mxu0 0
    %7512 = vmatprep.subr.bf16.mxu0 0
    %7513 = vmatpush1.bf16.msra.mxu0 0
    %7514 = vmatprep.subr.bf16.mxu0 0
    %7515 = vmatpush1.bf16.msra.mxu0 0
    %7516 = vmatprep.subr.bf16.mxu0 0
    %7517 = vmatpush1.bf16.msra.mxu0 0
    %7518 = vmatprep.subr.bf16.mxu0 0
    %7519 = vmatpush1.bf16.msra.mxu0 0
    %7520 = vmatprep.subr.bf16.mxu0 0
    %7521 = vmatpush1.bf16.msra.mxu0 0
    %7522 = vmatprep.subr.bf16.mxu0 0
    %7523 = vmatpush1.bf16.msra.mxu0 0
    %7524 = vmatprep.subr.bf16.mxu0 0
    %7525 = vmatpush1.bf16.msra.mxu0 0
    %7526 = vmatprep.mubr.bf16.mxu0 0
    %7527 = vmatmul.mubr.bf16.gmra.mrb[0].mxu0 %v7492
    %v7528 = vpop.f32.mrb[0].mxu0
    %v7529 = vadd.f32 0.0, %v7528
    %v7530 = vpop.f32.mrb[0].mxu0
    %v7531 = vadd.f32 0.0, %v7530
    %v7532 = vpop.f32.mrb[0].mxu0
    %v7533 = vpop.f32.mrb[0].mxu0
    %7534 = vdwg.mxu0
    %7535 = vmatprep.subr.bf16.mxu0 0
    %7536 = vmatpush1.bf16.msra.mxu0 %v6826
    %7537 = vmatprep.subr.bf16.mxu0 0
    %7538 = vmatpush1.bf16.msra.mxu0 0
    %7539 = vmatprep.subr.bf16.mxu0 0
    %7540 = vmatpush1.bf16.msra.mxu0 0
    %7541 = vmatprep.subr.bf16.mxu0 0
    %7542 = vmatpush1.bf16.msra.mxu0 0
    %7543 = vmatprep.subr.bf16.mxu0 0
    %7544 = vmatpush1.bf16.msra.mxu0 0
    %7545 = vmatprep.subr.bf16.mxu0 0
    %7546 = vmatpush1.bf16.msra.mxu0 0
    %7547 = vmatprep.subr.bf16.mxu0 0
    %7548 = vmatpush1.bf16.msra.mxu0 0
    %7549 = vmatprep.subr.bf16.mxu0 0
    %7550 = vmatpush1.bf16.msra.mxu0 0
    %7551 = vmatprep.subr.bf16.mxu0 0
    %7552 = vmatpush1.bf16.msra.mxu0 0
    %7553 = vmatprep.subr.bf16.mxu0 0
    %7554 = vmatpush1.bf16.msra.mxu0 0
    %7555 = vmatprep.subr.bf16.mxu0 0
    %7556 = vmatpush1.bf16.msra.mxu0 0
    %7557 = vmatprep.subr.bf16.mxu0 0
    %7558 = vmatpush1.bf16.msra.mxu0 0
    %7559 = vmatprep.subr.bf16.mxu0 0
    %7560 = vmatpush1.bf16.msra.mxu0 0
    %7561 = vmatprep.subr.bf16.mxu0 0
    %7562 = vmatpush1.bf16.msra.mxu0 0
    %7563 = vmatprep.subr.bf16.mxu0 0
    %7564 = vmatpush1.bf16.msra.mxu0 0
    %7565 = vmatprep.subr.bf16.mxu0 0
    %7566 = vmatpush1.bf16.msra.mxu0 0
    %7567 = vmatprep.mubr.bf16.mxu0 0
    %7568 = vmatmul.mubr.bf16.gmra.mrb[0].mxu0 %v7492
    %v7569 = vpop.f32.mrb[0].mxu0
    %v7570 = vadd.f32 0.0, %v7569
    %v7571 = vpop.f32.mrb[0].mxu0
    %v7572 = vpop.f32.mrb[0].mxu0
    %v7573 = vpop.f32.mrb[0].mxu0
    %7574 = vdwg.mxu0
    %v7575 = vadd.f32 %v7487, %v7529
    %v7576 = vxor.u32 %v7575, 2147483648
    %v7577 = vmul.f32 %v7576, 1.442695
    %v7578 = vpow.pop %v7577
    %v7579 = vadd.f32 %v7578, 1.0
    %v7580 = vrcp.pop %v7579
    %v7581 = vmul.f32 1.0, %v7580
    %v7582 = vadd.f32 %v7488, %v7531
    %v7583 = vxor.u32 %v7582, 2147483648
    %v7584 = vmul.f32 %v7583, 1.442695
    %v7585 = vpow.pop %v7584
    %v7586 = vadd.f32 %v7585, 1.0
    %v7587 = vrcp.pop %v7586
    %v7588 = vmul.f32 1.0, %v7587
    %v7589 = vadd.f32 %v7570, %v6928
    %v7590 = vmul.f32 %v7581, %v7589
    %v7591 = vadd.f32 %v7489, %v7590
    %v7592 = vtanh.pop %v7591
    %v7593 = vsub.f32 1.0, %v7588
    %v7594 = vmul.f32 %v7593, %v7592
    %v7595 = vmul.f32 %v7588, %v7486
    %v7596 = vadd.f32 %v7594, %v7595
    %v7597 = vld [vmem:[#allocation2 + $0xa8] sm:$0xff]
    %v7598 = vld [vmem:[#allocation2 + $0xb0] sm:$0xff]
    %v7599 = vld [vmem:[#allocation2 + $0xb8] sm:$0xff]
    %v7600 = vpack.c.bf16 %v7596, %v7596
    %v7602 = vsel %vm4541, %v7600, 0
    %7604 = vmatprep.subr.bf16.mxu0 %v6825
    %7605 = vmatpush1.bf16.msra.mxu0 %v6824
    %7606 = vmatprep.subr.bf16.mxu0 0
    %7607 = vmatpush1.bf16.msra.mxu0 0
    %7608 = vmatprep.subr.bf16.mxu0 0
    %7609 = vmatpush1.bf16.msra.mxu0 0
    %7610 = vmatprep.subr.bf16.mxu0 0
    %7611 = vmatpush1.bf16.msra.mxu0 0
    %7612 = vmatprep.subr.bf16.mxu0 0
    %7613 = vmatpush1.bf16.msra.mxu0 0
    %7614 = vmatprep.subr.bf16.mxu0 0
    %7615 = vmatpush1.bf16.msra.mxu0 0
    %7616 = vmatprep.subr.bf16.mxu0 0
    %7617 = vmatpush1.bf16.msra.mxu0 0
    %7618 = vmatprep.subr.bf16.mxu0 0
    %7619 = vmatpush1.bf16.msra.mxu0 0
    %7620 = vmatprep.subr.bf16.mxu0 0
    %7621 = vmatpush1.bf16.msra.mxu0 0
    %7622 = vmatprep.subr.bf16.mxu0 0
    %7623 = vmatpush1.bf16.msra.mxu0 0
    %7624 = vmatprep.subr.bf16.mxu0 0
    %7625 = vmatpush1.bf16.msra.mxu0 0
    %7626 = vmatprep.subr.bf16.mxu0 0
    %7627 = vmatpush1.bf16.msra.mxu0 0
    %7628 = vmatprep.subr.bf16.mxu0 0
    %7629 = vmatpush1.bf16.msra.mxu0 0
    %7630 = vmatprep.subr.bf16.mxu0 0
    %7631 = vmatpush1.bf16.msra.mxu0 0
    %7632 = vmatprep.subr.bf16.mxu0 0
    %7633 = vmatpush1.bf16.msra.mxu0 0
    %7634 = vmatprep.subr.bf16.mxu0 0
    %7635 = vmatpush1.bf16.msra.mxu0 0
    %7636 = vmatprep.mubr.bf16.mxu0 0
    %7637 = vmatmul.mubr.bf16.gmra.mrb[0].mxu0 %v7602
    %v7638 = vpop.f32.mrb[0].mxu0
    %v7639 = vadd.f32 0.0, %v7638
    %v7640 = vpop.f32.mrb[0].mxu0
    %v7641 = vadd.f32 0.0, %v7640
    %v7642 = vpop.f32.mrb[0].mxu0
    %v7643 = vpop.f32.mrb[0].mxu0
    %7644 = vdwg.mxu0
    %7645 = vmatprep.subr.bf16.mxu0 0
    %7646 = vmatpush1.bf16.msra.mxu0 %v6826
    %7647 = vmatprep.subr.bf16.mxu0 0
    %7648 = vmatpush1.bf16.msra.mxu0 0
    %7649 = vmatprep.subr.bf16.mxu0 0
    %7650 = vmatpush1.bf16.msra.mxu0 0
    %7651 = vmatprep.subr.bf16.mxu0 0
    %7652 = vmatpush1.bf16.msra.mxu0 0
    %7653 = vmatprep.subr.bf16.mxu0 0
    %7654 = vmatpush1.bf16.msra.mxu0 0
    %7655 = vmatprep.subr.bf16.mxu0 0
    %7656 = vmatpush1.bf16.msra.mxu0 0
    %7657 = vmatprep.subr.bf16.mxu0 0
    %7658 = vmatpush1.bf16.msra.mxu0 0
    %7659 = vmatprep.subr.bf16.mxu0 0
    %7660 = vmatpush1.bf16.msra.mxu0 0
    %7661 = vmatprep.subr.bf16.mxu0 0
    %7662 = vmatpush1.bf16.msra.mxu0 0
    %7663 = vmatprep.subr.bf16.mxu0 0
    %7664 = vmatpush1.bf16.msra.mxu0 0
    %7665 = vmatprep.subr.bf16.mxu0 0
    %7666 = vmatpush1.bf16.msra.mxu0 0
    %7667 = vmatprep.subr.bf16.mxu0 0
    %7668 = vmatpush1.bf16.msra.mxu0 0
    %7669 = vmatprep.subr.bf16.mxu0 0
    %7670 = vmatpush1.bf16.msra.mxu0 0
    %7671 = vmatprep.subr.bf16.mxu0 0
    %7672 = vmatpush1.bf16.msra.mxu0 0
    %7673 = vmatprep.subr.bf16.mxu0 0
    %7674 = vmatpush1.bf16.msra.mxu0 0
    %7675 = vmatprep.subr.bf16.mxu0 0
    %7676 = vmatpush1.bf16.msra.mxu0 0
    %7677 = vmatprep.mubr.bf16.mxu0 0
    %7678 = vmatmul.mubr.bf16.gmra.mrb[0].mxu0 %v7602
    %v7679 = vpop.f32.mrb[0].mxu0
    %v7680 = vadd.f32 0.0, %v7679
    %v7681 = vpop.f32.mrb[0].mxu0
    %v7682 = vpop.f32.mrb[0].mxu0
    %v7683 = vpop.f32.mrb[0].mxu0
    %7684 = vdwg.mxu0
    %v7685 = vadd.f32 %v7597, %v7639
    %v7686 = vxor.u32 %v7685, 2147483648
    %v7687 = vmul.f32 %v7686, 1.442695
    %v7688 = vpow.pop %v7687
    %v7689 = vadd.f32 %v7688, 1.0
    %v7690 = vrcp.pop %v7689
    %v7691 = vmul.f32 1.0, %v7690
    %v7692 = vadd.f32 %v7598, %v7641
    %v7693 = vxor.u32 %v7692, 2147483648
    %v7694 = vmul.f32 %v7693, 1.442695
    %v7695 = vpow.pop %v7694
    %v7696 = vadd.f32 %v7695, 1.0
    %v7697 = vrcp.pop %v7696
    %v7698 = vmul.f32 1.0, %v7697
    %v7699 = vadd.f32 %v7680, %v6928
    %v7700 = vmul.f32 %v7691, %v7699
    %v7701 = vadd.f32 %v7599, %v7700
    %v7702 = vtanh.pop %v7701
    %v7703 = vsub.f32 1.0, %v7698
    %v7704 = vmul.f32 %v7703, %v7702
    %v7705 = vmul.f32 %v7698, %v7596
    %v7706 = vadd.f32 %v7704, %v7705
    %v7707 = vxor.u32 %v7706, 2147483648
    %v7708 = vmul.f32 %v7707, 1.442695
    %v7709 = vpow.pop %v7708
    %v7710 = vadd.f32 %v7709, 1.0
    %v7711 = vrcp.pop %v7710
    %v7712 = vmul.f32 1.0, %v7711
    %v7713 = vpack.c.bf16 %v7712, %v7712
    %v7714 = vld [vmem:[%s21] sm:$0xf]
    %v7715 = vld [vmem:[%s21 + $0x4] sm:$0xf]
    %v7716 = vld [vmem:[#allocation34] sm:$0x1]
    %v7718 = vlaneseq
    %v7719 = vshrl.u32 %v7718, 7
    %v7720 = vsub.s32 0, %v7719
    %v7721 = vrot.slane %v7716, %v7720
    %v7725 = vunpack.c.l.b16 %v7714
    %v7726 = vunpack.c.l.b16 %v7715
    %v7727 = vpack.c.b16 %v7726, %v7725
    %v7730 = vsel %vm4541, %v7713, 0
    %7732 = vmatprep.subr.bf16.mxu0 0
    %7733 = vmatpush1.bf16.msra.mxu0 %v7727
    %7734 = vmatprep.subr.bf16.mxu0 0
    %7735 = vmatpush1.bf16.msra.mxu0 0
    %7736 = vmatprep.subr.bf16.mxu0 0
    %7737 = vmatpush1.bf16.msra.mxu0 0
    %7738 = vmatprep.subr.bf16.mxu0 0
    %7739 = vmatpush1.bf16.msra.mxu0 0
    %7740 = vmatprep.subr.bf16.mxu0 0
    %7741 = vmatpush1.bf16.msra.mxu0 0
    %7742 = vmatprep.subr.bf16.mxu0 0
    %7743 = vmatpush1.bf16.msra.mxu0 0
    %7744 = vmatprep.subr.bf16.mxu0 0
    %7745 = vmatpush1.bf16.msra.mxu0 0
    %7746 = vmatprep.subr.bf16.mxu0 0
    %7747 = vmatpush1.bf16.msra.mxu0 0
    %7748 = vmatprep.subr.bf16.mxu0 0
    %7749 = vmatpush1.bf16.msra.mxu0 0
    %7750 = vmatprep.subr.bf16.mxu0 0
    %7751 = vmatpush1.bf16.msra.mxu0 0
    %7752 = vmatprep.subr.bf16.mxu0 0
    %7753 = vmatpush1.bf16.msra.mxu0 0
    %7754 = vmatprep.subr.bf16.mxu0 0
    %7755 = vmatpush1.bf16.msra.mxu0 0
    %7756 = vmatprep.subr.bf16.mxu0 0
    %7757 = vmatpush1.bf16.msra.mxu0 0
    %7758 = vmatprep.subr.bf16.mxu0 0
    %7759 = vmatpush1.bf16.msra.mxu0 0
    %7760 = vmatprep.subr.bf16.mxu0 0
    %7761 = vmatpush1.bf16.msra.mxu0 0
    %7762 = vmatprep.subr.bf16.mxu0 0
    %7763 = vmatpush1.bf16.msra.mxu0 0
    %7764 = vmatprep.mubr.bf16.mxu0 0
    %7765 = vmatmul.mubr.bf16.gmra.mrb[0].mxu0 %v7730
    %v7766 = vpop.f32.mrb[0].mxu0
    %v7767 = vadd.f32 %v7721, %v7766
    %v7768 = vpop.f32.mrb[0].mxu0
    %v7769 = vpop.f32.mrb[0].mxu0
    %v7770 = vpop.f32.mrb[0].mxu0
    %7771 = vdwg.mxu0
    %vm7772 = vcmp.ge.f32.partialorder %v7767, 0.0
    %v7773 = vmul.f32 %v7767, 0.01
    %v7774 = vsel %vm7772, %v7767, %v7773
    %vm7775 = vcmask 39936
    %7776 = vst.msk [vmem:[%s23] sm:$0xff] %vm7775, %v7774
    // Predicated region
    $region166: #{sleep_stage_forward.1} parent=1 // pred_check
      _
    $region167: #{sleep_stage_forward.1} parent=1 // pred_check_branch
      %7778 = sbr.rel (0) target = $region169
    $region168: #{sleep_stage_forward.1} parent=1 // pred_region
      _
    $region169: #{sleep_stage_forward.1} parent=1 // pred_fallthru
      _
    // Predicated region
    $region170: #{sleep_stage_forward.1} parent=1 // pred_check
      _
    $region171: #{sleep_stage_forward.1} parent=1 // pred_check_branch
      %7780 = sbr.rel (0) target = $region173
    $region172: #{sleep_stage_forward.1} parent=1 // pred_region
      _
    $region173: #{sleep_stage_forward.1} parent=1 // pred_fallthru
      _
    %7781 = vsyncpa [#allocation9], 1
    %7782 = vsyncpa [#allocation11], 1
    %7783 = vsyncpa [#allocation14], 1
    %7784 = vsyncpa [#allocation17], 1
    %7785 = vsyncpa [#allocation20], 1
    %7786 = vsyncpa [#allocation23], 1
    %7787 = vsyncpa [#allocation26], 1
    %7788 = vsyncpa [#allocation29], 1
    %7789 = vsyncpa [#allocation32], 1
    %7790 = vsyncpa [#allocation35], 1

</llo_original>
